<compile_context>
chip_gen: v6e
topology: v6e:2x2x1
jax: 0.10.0
libtpu: 0.0.40
codegen_flags: <defaults>
</compile_context>

<pallas_src>
import jax
import jax.numpy as jnp
from jax.experimental import pallas as pl
from jax.experimental.pallas import tpu as pltpu


MAX_BN_TILE = 64   # rows of the flattened B*N axis per grid step (VMEM-sized)


# ---------------------------------------------------------------------------
# In-kernel helpers (batched MXU matmuls with f32 accumulation)
# ---------------------------------------------------------------------------
def _bmm(a, b):
    """(G, M, K) @ (G, K, N) -> (G, M, N)."""
    return jax.lax.dot_general(
        a, b, (((2,), (1,)), ((0,), (0,))), preferred_element_type=jnp.float32
    )


def _bmm_nt(a, b):
    """(G, M, K) @ (G, N, K)^T -> (G, M, N)."""
    return jax.lax.dot_general(
        a, b, (((2,), (2,)), ((0,), (0,))), preferred_element_type=jnp.float32
    )


def _softmax_last(x):
    """Stable softmax over the last axis; 1/sum on the EUP (approx reciprocal).

    The approx-reciprocal error is a per-row scale factor, which the
    downstream cosine similarity is invariant to, so accuracy is unaffected.
    """
    x = x - jnp.max(x, axis=-1, keepdims=True)
    e = jnp.exp(x)
    return e * pl.reciprocal(jnp.sum(e, axis=-1, keepdims=True), approx=True)


# ---------------------------------------------------------------------------
# Fused MemoryGate kernel (one BN tile per grid step)
# ---------------------------------------------------------------------------
def _memory_gate_kernel(x_ref, inq_ref, mem_ref, h_ref, wq_ref, wk_ref, wv_ref,
                        o_ref):
    """Per-grid-step block shapes (bn = BN tile, E = 3 experts,
    D = mem_hid, M = memory_size, H = hidden_size):

      x_ref   : (bn, T, in_dim)     tile of the raw input
      inq_ref : (in_dim, D)         input_query (un-broadcast, resident)
      mem_ref : (bn, M, D)          memory, broadcast to ONE tile (resident)
      h_ref   : (E, bn, T, H)       tile of the stacked expert hidden states
      wq_ref  : (E, bn, H, D)       hid_query, broadcast to ONE tile (resident)
      wk_ref  : (E, bn, H, D)       key weights                     (resident)
      wv_ref  : (E, bn, H, D)       value weights                   (resident)
      o_ref   : (E, bn, T)          cosine-similarity routing scores
    """
    E = h_ref.shape[0]
    in_dim = x_ref.shape[-1]

    # ---- query_mem ------------------------------------------------------
    # in_dim is tiny (3): do the input projection on the VPU as broadcast
    # FMAs instead of a K=3 MXU matmul.
    x = x_ref[...]                                   # (bn, T, in_dim)
    inq = inq_ref[...]                               # (in_dim, D)
    q = x[:, :, 0:1] * inq[0:1, :]                   # (bn, T, D)
    for k in range(1, in_dim):                       # static unroll (in_dim=3)
        q = q + x[:, :, k:k + 1] * inq[k:k + 1, :]

    mem = mem_ref[...]                               # (bn, M, D)
    score = _softmax_last(_bmm_nt(q, mem))           # (bn, T, M)
    memories = _bmm(score, mem)                      # (bn, T, D)
    mem_sq = jnp.sum(memories * memories, axis=-1)   # (bn, T)

    # ---- per-expert self-attention over T + cosine similarity ------------
    for e in range(E):                               # E == 3, static unroll
        h_e = h_ref[e]                               # (bn, T, H)
        q_e = _bmm(h_e, wq_ref[e])                   # (bn, T, D)
        k_e = _bmm(h_e, wk_ref[e])                   # (bn, T, D)
        v_e = _bmm(h_e, wv_ref[e])                   # (bn, T, D)

        att = _softmax_last(_bmm_nt(q_e, k_e))       # (bn, T, T), unscaled
        out = _bmm(att, v_e)                         # (bn, T, D)

        out_sq = jnp.sum(out * out, axis=-1)         # (bn, T)
        dot = jnp.sum(memories * out, axis=-1)       # (bn, T)
        # CosineSimilarity(dim=-1, eps=1e-8):
        #   dot / max(|m|*|a|, 1e-8) == dot * rsqrt(max(|m|^2*|a|^2, 1e-16))
        o_ref[e] = dot * jax.lax.rsqrt(jnp.maximum(mem_sq * out_sq, 1e-16))


def _pick_bn_tile(bn, max_tile):
    """Largest multiple-of-8 divisor of bn that is <= max_tile (or bn itself)."""
    if bn <= max_tile:
        return bn
    best = 0
    for t in range(8, max_tile + 1, 8):
        if bn % t == 0:
            best = t
    if best:
        return best
    # TODO(synk): pad B*N to a multiple of 8 instead of one oversized tile
    # when B*N is large and has no multiple-of-8 divisor <= max_tile.
    return bn


# ---------------------------------------------------------------------------
# Wrapper
# ---------------------------------------------------------------------------
def memory_gate(params, x, hidden, *, max_bn_tile=MAX_BN_TILE):
    """MemoryGate forward.

    x:      (B, N, T, in_dim)
    hidden: list of 3 tensors (B, N, T, hidden_size)
    returns (B, N, T, 3) routing scores (pre-softmax), matching the reference.
    """
    B, N, T, in_dim = x.shape
    E = len(hidden)
    H = hidden[0].shape[-1]
    M, D = params["memory"].shape
    BN = B * N
    f32 = jnp.float32

    bn_tile = _pick_bn_tile(BN, max_bn_tile)
    grid = (BN // bn_tile,)

    x3 = x.reshape(BN, T, in_dim).astype(f32)
    h4 = jnp.stack([h.reshape(BN, T, H) for h in hidden], axis=0).astype(f32)

    inq = params["input_query"].astype(f32)                       # (in_dim, D)
    # Broadcast the tiny parameter matrices only to ONE tile of the batch so
    # every in-kernel contraction is a plain batched matmul.  With a constant
    # index_map these blocks are DMA'd once and stay resident in VMEM.
    mem_t = jnp.broadcast_to(params["memory"].astype(f32)[None],
                             (bn_tile, M, D))
    wq = jnp.stack(list(params["hid_query"]), axis=0).astype(f32)  # (E, H, D)
    wk = jnp.stack(list(params["key"]), axis=0).astype(f32)
    wv = jnp.stack(list(params["value"]), axis=0).astype(f32)
    wq_t = jnp.broadcast_to(wq[:, None], (E, bn_tile, H, D))
    wk_t = jnp.broadcast_to(wk[:, None], (E, bn_tile, H, D))
    wv_t = jnp.broadcast_to(wv[:, None], (E, bn_tile, H, D))

    scores = pl.pallas_call(
        _memory_gate_kernel,
        out_shape=jax.ShapeDtypeStruct((E, BN, T), f32),
        grid=grid,
        in_specs=[
            pl.BlockSpec((bn_tile, T, in_dim), lambda i: (i, 0, 0)),
            pl.BlockSpec((in_dim, D), lambda i: (0, 0)),
            pl.BlockSpec((bn_tile, M, D), lambda i: (0, 0, 0)),
            pl.BlockSpec((E, bn_tile, T, H), lambda i: (0, i, 0, 0)),
            pl.BlockSpec((E, bn_tile, H, D), lambda i: (0, 0, 0, 0)),
            pl.BlockSpec((E, bn_tile, H, D), lambda i: (0, 0, 0, 0)),
            pl.BlockSpec((E, bn_tile, H, D), lambda i: (0, 0, 0, 0)),
        ],
        out_specs=pl.BlockSpec((E, bn_tile, T), lambda i: (0, i, 0)),
        compiler_params=pltpu.CompilerParams(
            # BN tiles are independent -> megacore can split them on v7x.
            dimension_semantics=("parallel",),
            # Padded working set at bn_tile=64 is ~32 MB incl. double buffers:
            # fits v7x's 64 MiB with headroom, and v5e/v6e easily.
            vmem_limit_bytes=48 * 1024 * 1024,
        ),
    )(x3, inq, mem_t, h4, wq_t, wk_t, wv_t)

    # (E, BN, T) -> (B, N, T, E); the score tensor is tiny, so this XLA
    # transpose is negligible next to the h reads.
    return jnp.transpose(scores, (1, 2, 0)).reshape(B, N, T, E)


# ---------------------------------------------------------------------------
# Pure-JAX reference (mirrors the PyTorch module) for correctness checking
# ---------------------------------------------------------------------------
def _memory_gate_reference(params, x, hidden):
    hp = jax.lax.Precision.HIGHEST
    mem = params["memory"]
    q = jnp.einsum("bntd,dk->bntk", x, params["input_query"], precision=hp)
    energy = jnp.einsum("bntk,mk->bntm", q, mem, precision=hp)
    score = jax.nn.softmax(energy, axis=-1)
    memories = jnp.einsum("bntm,mk->bntk", score, mem, precision=hp)
    sims = []
    for i, h in enumerate(hidden):
        qh = jnp.einsum("bnth,hk->bntk", h, params["hid_query"][i], precision=hp)
        kh = jnp.einsum("bnth,hk->bntk", h, params["key"][i], precision=hp)
        vh = jnp.einsum("bnth,hk->bntk", h, params["value"][i], precision=hp)
        e = jnp.einsum("bntk,bnsk->bnts", qh, kh, precision=hp)
        a = jax.nn.softmax(e, axis=-1)
        out = jnp.einsum("bnts,bnsk->bntk", a, vh, precision=hp)
        nm = jnp.sqrt(jnp.sum(memories * memories, axis=-1))
        no = jnp.sqrt(jnp.sum(out * out, axis=-1))
        sims.append(
            jnp.sum(memories * out, axis=-1) / jnp.maximum(nm * no, 1e-8)
        )
    return jnp.stack(sims, axis=-1)


# ---------------------------------------------------------------------------
# Main
# ---------------------------------------------------------------------------
if __name__ == "__main__":
    B, N, T = 2, 4, 12          # batch, nodes, sequence length
    HIDDEN_SIZE = 32
    MEM_HID = 32
    MEM_SIZE = 20
    INPUT_DIM = 3               # module default input_dim
    NUM_EXPERTS = 3

    root = jax.random.PRNGKey(0)
    keys = jax.random.split(root, 17)
    params = {
        "memory": jax.random.normal(keys[0], (MEM_SIZE, MEM_HID), jnp.float32),
        "hid_query": [
            jax.random.normal(keys[1 + i], (HIDDEN_SIZE, MEM_HID), jnp.float32)
            for i in range(NUM_EXPERTS)
        ],
        "key": [
            jax.random.normal(keys[4 + i], (HIDDEN_SIZE, MEM_HID), jnp.float32)
            for i in range(NUM_EXPERTS)
        ],
        "value": [
            jax.random.normal(keys[7 + i], (HIDDEN_SIZE, MEM_HID), jnp.float32)
            for i in range(NUM_EXPERTS)
        ],
        "input_query": jax.random.normal(
            keys[10], (INPUT_DIM, MEM_HID), jnp.float32
        ),
        # We1 / We2 are parameters of the module but unused by forward().
        "We1": jax.random.normal(keys[11], (N, MEM_SIZE), jnp.float32),
        "We2": jax.random.normal(keys[12], (N, MEM_SIZE), jnp.float32),
    }

    x = jax.random.normal(keys[13], (B, N, T, INPUT_DIM), jnp.float32)
    hidden = [
        jax.random.normal(keys[14 + i], (B, N, T, HIDDEN_SIZE), jnp.float32)
        for i in range(NUM_EXPERTS)
    ]

    gate = jax.jit(memory_gate)
    scores = jax.block_until_ready(gate(params, x, hidden))

    assert scores.shape == (B, N, T, NUM_EXPERTS), scores.shape
    assert bool(jnp.all(jnp.isfinite(scores)))

    ref = _memory_gate_reference(params, x, hidden)
    max_err = float(jnp.max(jnp.abs(scores - ref)))
    assert max_err < 2e-2, f"mismatch vs reference: {max_err}"

    print("KERNEL_OK")
</pallas_src>

<mosaic_0001>
module attributes {stable_mosaic.version = 11 : i64} {
  func.func @_memory_gate_kernel(%arg0: i32, %arg1: memref<8x12x3xf32, #tpu.memory_space<vmem>>, %arg2: memref<3x32xf32, #tpu.memory_space<vmem>>, %arg3: memref<8x20x32xf32, #tpu.memory_space<vmem>>, %arg4: memref<3x8x12x32xf32, #tpu.memory_space<vmem>>, %arg5: memref<3x8x32x32xf32, #tpu.memory_space<vmem>>, %arg6: memref<3x8x32x32xf32, #tpu.memory_space<vmem>>, %arg7: memref<3x8x32x32xf32, #tpu.memory_space<vmem>>, %arg8: memref<3x8x12xf32, #tpu.memory_space<vmem>>) attributes {dimension_semantics = [#tpu.dimension_semantics<parallel>], iteration_bounds = array<i64: 1>, scalar_prefetch = 0 : i64, scratch_operands = 0 : i64, tpu.core_type = #tpu.core_type<tc>, window_params = [{transform_indices = @transform_0, window_bounds = array<i64: 8, 12, 3>}, {pipeline_mode = #tpu.pipeline_mode<synchronous>, transform_indices = @transform_1, window_bounds = array<i64: 3, 32>}, {pipeline_mode = #tpu.pipeline_mode<synchronous>, transform_indices = @transform_2, window_bounds = array<i64: 8, 20, 32>}, {transform_indices = @transform_3, window_bounds = array<i64: 3, 8, 12, 32>}, {pipeline_mode = #tpu.pipeline_mode<synchronous>, transform_indices = @transform_4, window_bounds = array<i64: 3, 8, 32, 32>}, {pipeline_mode = #tpu.pipeline_mode<synchronous>, transform_indices = @transform_5, window_bounds = array<i64: 3, 8, 32, 32>}, {pipeline_mode = #tpu.pipeline_mode<synchronous>, transform_indices = @transform_6, window_bounds = array<i64: 3, 8, 32, 32>}, {transform_indices = @transform_7, window_bounds = array<i64: 3, 8, 12>}]} {
    %c0 = arith.constant 0 : index
    %c0_0 = arith.constant 0 : index
    %c0_1 = arith.constant 0 : index
    %0 = vector.load %arg1[%c0, %c0_0, %c0_1] : memref<8x12x3xf32, #tpu.memory_space<vmem>>, vector<8x12x3xf32>
    %c0_2 = arith.constant 0 : index
    %c0_3 = arith.constant 0 : index
    %1 = vector.load %arg2[%c0_2, %c0_3] : memref<3x32xf32, #tpu.memory_space<vmem>>, vector<3x32xf32>
    %2 = vector.extract_strided_slice %0 {offsets = [0, 0, 0], sizes = [8, 12, 1], strides = [1, 1, 1]} : vector<8x12x3xf32> to vector<8x12x1xf32>
    %3 = vector.extract_strided_slice %1 {offsets = [0, 0], sizes = [1, 32], strides = [1, 1]} : vector<3x32xf32> to vector<1x32xf32>
    %4 = vector.shape_cast %3 : vector<1x32xf32> to vector<1x1x32xf32>
    %5 = vector.broadcast %2 : vector<8x12x1xf32> to vector<8x12x32xf32>
    %6 = vector.broadcast %4 : vector<1x1x32xf32> to vector<8x12x32xf32>
    %7 = arith.mulf %5, %6 : vector<8x12x32xf32>
    %8 = vector.extract_strided_slice %0 {offsets = [0, 0, 1], sizes = [8, 12, 1], strides = [1, 1, 1]} : vector<8x12x3xf32> to vector<8x12x1xf32>
    %9 = vector.extract_strided_slice %1 {offsets = [1, 0], sizes = [1, 32], strides = [1, 1]} : vector<3x32xf32> to vector<1x32xf32>
    %10 = vector.shape_cast %9 : vector<1x32xf32> to vector<1x1x32xf32>
    %11 = vector.broadcast %8 : vector<8x12x1xf32> to vector<8x12x32xf32>
    %12 = vector.broadcast %10 : vector<1x1x32xf32> to vector<8x12x32xf32>
    %13 = arith.mulf %11, %12 : vector<8x12x32xf32>
    %14 = arith.addf %7, %13 : vector<8x12x32xf32>
    %15 = vector.extract_strided_slice %0 {offsets = [0, 0, 2], sizes = [8, 12, 1], strides = [1, 1, 1]} : vector<8x12x3xf32> to vector<8x12x1xf32>
    %16 = vector.extract_strided_slice %1 {offsets = [2, 0], sizes = [1, 32], strides = [1, 1]} : vector<3x32xf32> to vector<1x32xf32>
    %17 = vector.shape_cast %16 : vector<1x32xf32> to vector<1x1x32xf32>
    %18 = vector.broadcast %15 : vector<8x12x1xf32> to vector<8x12x32xf32>
    %19 = vector.broadcast %17 : vector<1x1x32xf32> to vector<8x12x32xf32>
    %20 = arith.mulf %18, %19 : vector<8x12x32xf32>
    %21 = arith.addf %14, %20 : vector<8x12x32xf32>
    %c0_4 = arith.constant 0 : index
    %c0_5 = arith.constant 0 : index
    %c0_6 = arith.constant 0 : index
    %22 = vector.load %arg3[%c0_4, %c0_5, %c0_6] : memref<8x20x32xf32, #tpu.memory_space<vmem>>, vector<8x20x32xf32>
    %cst = arith.constant dense<0.000000e+00> : vector<8x12x20xf32>
    %23 = tpu.matmul %21, %22, %cst {dimension_numbers = #tpu.dot_dimension_numbers<[2], [2], [1], [1], [0, 0, 0, 1, 1, 1], [0], [0]>} : vector<8x12x32xf32>, vector<8x20x32xf32>, vector<8x12x20xf32> -> vector<8x12x20xf32>
    %cst_7 = arith.constant dense<0xFF800000> : vector<8x12xf32>
    %24 = vector.multi_reduction <maximumf>, %23, %cst_7 [2] : vector<8x12x20xf32> to vector<8x12xf32>
    %25 = vector.shape_cast %24 : vector<8x12xf32> to vector<8x12x1xf32>
    %26 = vector.broadcast %25 : vector<8x12x1xf32> to vector<8x12x20xf32>
    %27 = arith.subf %23, %26 : vector<8x12x20xf32>
    %28 = math.exp %27 : vector<8x12x20xf32>
    %cst_8 = arith.constant dense<0.000000e+00> : vector<8x12xf32>
    %29 = vector.multi_reduction <add>, %28, %cst_8 [2] : vector<8x12x20xf32> to vector<8x12xf32>
    %30 = vector.shape_cast %29 : vector<8x12xf32> to vector<8x12x1xf32>
    %31 = tpu.reciprocal %30 {approx = true} : vector<8x12x1xf32> -> vector<8x12x1xf32>
    %32 = vector.broadcast %31 : vector<8x12x1xf32> to vector<8x12x20xf32>
    %33 = arith.mulf %28, %32 : vector<8x12x20xf32>
    %cst_9 = arith.constant dense<0.000000e+00> : vector<8x12x32xf32>
    %34 = tpu.matmul %33, %22, %cst_9 {dimension_numbers = #tpu.dot_dimension_numbers<[2], [1], [1], [2], [0, 0, 0, 1, 1, 2], [0], [0]>} : vector<8x12x20xf32>, vector<8x20x32xf32>, vector<8x12x32xf32> -> vector<8x12x32xf32>
    %35 = arith.mulf %34, %34 : vector<8x12x32xf32>
    %cst_10 = arith.constant dense<0.000000e+00> : vector<8x12xf32>
    %36 = vector.multi_reduction <add>, %35, %cst_10 [2] : vector<8x12x32xf32> to vector<8x12xf32>
    %c0_11 = arith.constant 0 : index
    %c0_12 = arith.constant 0 : index
    %c0_13 = arith.constant 0 : index
    %c0_14 = arith.constant 0 : index
    %37 = vector.load %arg4[%c0_11, %c0_12, %c0_13, %c0_14] : memref<3x8x12x32xf32, #tpu.memory_space<vmem>>, vector<1x8x12x32xf32>
    %38 = vector.shape_cast %37 : vector<1x8x12x32xf32> to vector<8x12x32xf32>
    %c0_15 = arith.constant 0 : index
    %c0_16 = arith.constant 0 : index
    %c0_17 = arith.constant 0 : index
    %c0_18 = arith.constant 0 : index
    %39 = vector.load %arg5[%c0_15, %c0_16, %c0_17, %c0_18] : memref<3x8x32x32xf32, #tpu.memory_space<vmem>>, vector<1x8x32x32xf32>
    %40 = vector.shape_cast %39 : vector<1x8x32x32xf32> to vector<8x32x32xf32>
    %cst_19 = arith.constant dense<0.000000e+00> : vector<8x12x32xf32>
    %41 = tpu.matmul %38, %40, %cst_19 {dimension_numbers = #tpu.dot_dimension_numbers<[2], [1], [1], [2], [0, 0, 0, 1, 1, 2], [0], [0]>} : vector<8x12x32xf32>, vector<8x32x32xf32>, vector<8x12x32xf32> -> vector<8x12x32xf32>
    %c0_20 = arith.constant 0 : index
    %c0_21 = arith.constant 0 : index
    %c0_22 = arith.constant 0 : index
    %c0_23 = arith.constant 0 : index
    %42 = vector.load %arg6[%c0_20, %c0_21, %c0_22, %c0_23] : memref<3x8x32x32xf32, #tpu.memory_space<vmem>>, vector<1x8x32x32xf32>
    %43 = vector.shape_cast %42 : vector<1x8x32x32xf32> to vector<8x32x32xf32>
    %cst_24 = arith.constant dense<0.000000e+00> : vector<8x12x32xf32>
    %44 = tpu.matmul %38, %43, %cst_24 {dimension_numbers = #tpu.dot_dimension_numbers<[2], [1], [1], [2], [0, 0, 0, 1, 1, 2], [0], [0]>} : vector<8x12x32xf32>, vector<8x32x32xf32>, vector<8x12x32xf32> -> vector<8x12x32xf32>
    %c0_25 = arith.constant 0 : index
    %c0_26 = arith.constant 0 : index
    %c0_27 = arith.constant 0 : index
    %c0_28 = arith.constant 0 : index
    %45 = vector.load %arg7[%c0_25, %c0_26, %c0_27, %c0_28] : memref<3x8x32x32xf32, #tpu.memory_space<vmem>>, vector<1x8x32x32xf32>
    %46 = vector.shape_cast %45 : vector<1x8x32x32xf32> to vector<8x32x32xf32>
    %cst_29 = arith.constant dense<0.000000e+00> : vector<8x12x32xf32>
    %47 = tpu.matmul %38, %46, %cst_29 {dimension_numbers = #tpu.dot_dimension_numbers<[2], [1], [1], [2], [0, 0, 0, 1, 1, 2], [0], [0]>} : vector<8x12x32xf32>, vector<8x32x32xf32>, vector<8x12x32xf32> -> vector<8x12x32xf32>
    %cst_30 = arith.constant dense<0.000000e+00> : vector<8x12x12xf32>
    %48 = tpu.matmul %41, %44, %cst_30 {dimension_numbers = #tpu.dot_dimension_numbers<[2], [2], [1], [1], [0, 0, 0, 1, 1, 1], [0], [0]>} : vector<8x12x32xf32>, vector<8x12x32xf32>, vector<8x12x12xf32> -> vector<8x12x12xf32>
    %cst_31 = arith.constant dense<0xFF800000> : vector<8x12xf32>
    %49 = vector.multi_reduction <maximumf>, %48, %cst_31 [2] : vector<8x12x12xf32> to vector<8x12xf32>
    %50 = vector.shape_cast %49 : vector<8x12xf32> to vector<8x12x1xf32>
    %51 = vector.broadcast %50 : vector<8x12x1xf32> to vector<8x12x12xf32>
    %52 = arith.subf %48, %51 : vector<8x12x12xf32>
    %53 = math.exp %52 : vector<8x12x12xf32>
    %cst_32 = arith.constant dense<0.000000e+00> : vector<8x12xf32>
    %54 = vector.multi_reduction <add>, %53, %cst_32 [2] : vector<8x12x12xf32> to vector<8x12xf32>
    %55 = vector.shape_cast %54 : vector<8x12xf32> to vector<8x12x1xf32>
    %56 = tpu.reciprocal %55 {approx = true} : vector<8x12x1xf32> -> vector<8x12x1xf32>
    %57 = vector.broadcast %56 : vector<8x12x1xf32> to vector<8x12x12xf32>
    %58 = arith.mulf %53, %57 : vector<8x12x12xf32>
    %cst_33 = arith.constant dense<0.000000e+00> : vector<8x12x32xf32>
    %59 = tpu.matmul %58, %47, %cst_33 {dimension_numbers = #tpu.dot_dimension_numbers<[2], [1], [1], [2], [0, 0, 0, 1, 1, 2], [0], [0]>} : vector<8x12x12xf32>, vector<8x12x32xf32>, vector<8x12x32xf32> -> vector<8x12x32xf32>
    %60 = arith.mulf %59, %59 : vector<8x12x32xf32>
    %cst_34 = arith.constant dense<0.000000e+00> : vector<8x12xf32>
    %61 = vector.multi_reduction <add>, %60, %cst_34 [2] : vector<8x12x32xf32> to vector<8x12xf32>
    %62 = arith.mulf %34, %59 : vector<8x12x32xf32>
    %cst_35 = arith.constant dense<0.000000e+00> : vector<8x12xf32>
    %63 = vector.multi_reduction <add>, %62, %cst_35 [2] : vector<8x12x32xf32> to vector<8x12xf32>
    %64 = arith.mulf %36, %61 : vector<8x12xf32>
    %cst_36 = arith.constant 1.000000e-16 : f32
    %65 = vector.broadcast %cst_36 : f32 to vector<8x12xf32>
    %66 = arith.maximumf %64, %65 : vector<8x12xf32>
    %67 = math.rsqrt %66 : vector<8x12xf32>
    %68 = arith.mulf %63, %67 : vector<8x12xf32>
    %c0_37 = arith.constant 0 : index
    %c0_38 = arith.constant 0 : index
    %c0_39 = arith.constant 0 : index
    %69 = vector.load %arg8[%c0_37, %c0_38, %c0_39] : memref<3x8x12xf32, #tpu.memory_space<vmem>>, vector<1x8x12xf32>
    %70 = vector.shape_cast %69 : vector<1x8x12xf32> to vector<8x12xf32>
    %71 = vector.shape_cast %68 : vector<8x12xf32> to vector<1x8x12xf32>
    tpu.vector_store %arg8[%c0_37, %c0_38, %c0_39], %71 {strides = array<i32>} : memref<3x8x12xf32, #tpu.memory_space<vmem>>, vector<1x8x12xf32>,
    %c1 = arith.constant 1 : index
    %c0_40 = arith.constant 0 : index
    %c0_41 = arith.constant 0 : index
    %c0_42 = arith.constant 0 : index
    %72 = vector.load %arg4[%c1, %c0_40, %c0_41, %c0_42] : memref<3x8x12x32xf32, #tpu.memory_space<vmem>>, vector<1x8x12x32xf32>
    %73 = vector.shape_cast %72 : vector<1x8x12x32xf32> to vector<8x12x32xf32>
    %c1_43 = arith.constant 1 : index
    %c0_44 = arith.constant 0 : index
    %c0_45 = arith.constant 0 : index
    %c0_46 = arith.constant 0 : index
    %74 = vector.load %arg5[%c1_43, %c0_44, %c0_45, %c0_46] : memref<3x8x32x32xf32, #tpu.memory_space<vmem>>, vector<1x8x32x32xf32>
    %75 = vector.shape_cast %74 : vector<1x8x32x32xf32> to vector<8x32x32xf32>
    %cst_47 = arith.constant dense<0.000000e+00> : vector<8x12x32xf32>
    %76 = tpu.matmul %73, %75, %cst_47 {dimension_numbers = #tpu.dot_dimension_numbers<[2], [1], [1], [2], [0, 0, 0, 1, 1, 2], [0], [0]>} : vector<8x12x32xf32>, vector<8x32x32xf32>, vector<8x12x32xf32> -> vector<8x12x32xf32>
    %c1_48 = arith.constant 1 : index
    %c0_49 = arith.constant 0 : index
    %c0_50 = arith.constant 0 : index
    %c0_51 = arith.constant 0 : index
    %77 = vector.load %arg6[%c1_48, %c0_49, %c0_50, %c0_51] : memref<3x8x32x32xf32, #tpu.memory_space<vmem>>, vector<1x8x32x32xf32>
    %78 = vector.shape_cast %77 : vector<1x8x32x32xf32> to vector<8x32x32xf32>
    %cst_52 = arith.constant dense<0.000000e+00> : vector<8x12x32xf32>
    %79 = tpu.matmul %73, %78, %cst_52 {dimension_numbers = #tpu.dot_dimension_numbers<[2], [1], [1], [2], [0, 0, 0, 1, 1, 2], [0], [0]>} : vector<8x12x32xf32>, vector<8x32x32xf32>, vector<8x12x32xf32> -> vector<8x12x32xf32>
    %c1_53 = arith.constant 1 : index
    %c0_54 = arith.constant 0 : index
    %c0_55 = arith.constant 0 : index
    %c0_56 = arith.constant 0 : index
    %80 = vector.load %arg7[%c1_53, %c0_54, %c0_55, %c0_56] : memref<3x8x32x32xf32, #tpu.memory_space<vmem>>, vector<1x8x32x32xf32>
    %81 = vector.shape_cast %80 : vector<1x8x32x32xf32> to vector<8x32x32xf32>
    %cst_57 = arith.constant dense<0.000000e+00> : vector<8x12x32xf32>
    %82 = tpu.matmul %73, %81, %cst_57 {dimension_numbers = #tpu.dot_dimension_numbers<[2], [1], [1], [2], [0, 0, 0, 1, 1, 2], [0], [0]>} : vector<8x12x32xf32>, vector<8x32x32xf32>, vector<8x12x32xf32> -> vector<8x12x32xf32>
    %cst_58 = arith.constant dense<0.000000e+00> : vector<8x12x12xf32>
    %83 = tpu.matmul %76, %79, %cst_58 {dimension_numbers = #tpu.dot_dimension_numbers<[2], [2], [1], [1], [0, 0, 0, 1, 1, 1], [0], [0]>} : vector<8x12x32xf32>, vector<8x12x32xf32>, vector<8x12x12xf32> -> vector<8x12x12xf32>
    %cst_59 = arith.constant dense<0xFF800000> : vector<8x12xf32>
    %84 = vector.multi_reduction <maximumf>, %83, %cst_59 [2] : vector<8x12x12xf32> to vector<8x12xf32>
    %85 = vector.shape_cast %84 : vector<8x12xf32> to vector<8x12x1xf32>
    %86 = vector.broadcast %85 : vector<8x12x1xf32> to vector<8x12x12xf32>
    %87 = arith.subf %83, %86 : vector<8x12x12xf32>
    %88 = math.exp %87 : vector<8x12x12xf32>
    %cst_60 = arith.constant dense<0.000000e+00> : vector<8x12xf32>
    %89 = vector.multi_reduction <add>, %88, %cst_60 [2] : vector<8x12x12xf32> to vector<8x12xf32>
    %90 = vector.shape_cast %89 : vector<8x12xf32> to vector<8x12x1xf32>
    %91 = tpu.reciprocal %90 {approx = true} : vector<8x12x1xf32> -> vector<8x12x1xf32>
    %92 = vector.broadcast %91 : vector<8x12x1xf32> to vector<8x12x12xf32>
    %93 = arith.mulf %88, %92 : vector<8x12x12xf32>
    %cst_61 = arith.constant dense<0.000000e+00> : vector<8x12x32xf32>
    %94 = tpu.matmul %93, %82, %cst_61 {dimension_numbers = #tpu.dot_dimension_numbers<[2], [1], [1], [2], [0, 0, 0, 1, 1, 2], [0], [0]>} : vector<8x12x12xf32>, vector<8x12x32xf32>, vector<8x12x32xf32> -> vector<8x12x32xf32>
    %95 = arith.mulf %94, %94 : vector<8x12x32xf32>
    %cst_62 = arith.constant dense<0.000000e+00> : vector<8x12xf32>
    %96 = vector.multi_reduction <add>, %95, %cst_62 [2] : vector<8x12x32xf32> to vector<8x12xf32>
    %97 = arith.mulf %34, %94 : vector<8x12x32xf32>
    %cst_63 = arith.constant dense<0.000000e+00> : vector<8x12xf32>
    %98 = vector.multi_reduction <add>, %97, %cst_63 [2] : vector<8x12x32xf32> to vector<8x12xf32>
    %99 = arith.mulf %36, %96 : vector<8x12xf32>
    %cst_64 = arith.constant 1.000000e-16 : f32
    %100 = vector.broadcast %cst_64 : f32 to vector<8x12xf32>
    %101 = arith.maximumf %99, %100 : vector<8x12xf32>
    %102 = math.rsqrt %101 : vector<8x12xf32>
    %103 = arith.mulf %98, %102 : vector<8x12xf32>
    %c1_65 = arith.constant 1 : index
    %c0_66 = arith.constant 0 : index
    %c0_67 = arith.constant 0 : index
    %104 = vector.load %arg8[%c1_65, %c0_66, %c0_67] : memref<3x8x12xf32, #tpu.memory_space<vmem>>, vector<1x8x12xf32>
    %105 = vector.shape_cast %104 : vector<1x8x12xf32> to vector<8x12xf32>
    %106 = vector.shape_cast %103 : vector<8x12xf32> to vector<1x8x12xf32>
    tpu.vector_store %arg8[%c1_65, %c0_66, %c0_67], %106 {strides = array<i32>} : memref<3x8x12xf32, #tpu.memory_space<vmem>>, vector<1x8x12xf32>,
    %c2 = arith.constant 2 : index
    %c0_68 = arith.constant 0 : index
    %c0_69 = arith.constant 0 : index
    %c0_70 = arith.constant 0 : index
    %107 = vector.load %arg4[%c2, %c0_68, %c0_69, %c0_70] : memref<3x8x12x32xf32, #tpu.memory_space<vmem>>, vector<1x8x12x32xf32>
    %108 = vector.shape_cast %107 : vector<1x8x12x32xf32> to vector<8x12x32xf32>
    %c2_71 = arith.constant 2 : index
    %c0_72 = arith.constant 0 : index
    %c0_73 = arith.constant 0 : index
    %c0_74 = arith.constant 0 : index
    %109 = vector.load %arg5[%c2_71, %c0_72, %c0_73, %c0_74] : memref<3x8x32x32xf32, #tpu.memory_space<vmem>>, vector<1x8x32x32xf32>
    %110 = vector.shape_cast %109 : vector<1x8x32x32xf32> to vector<8x32x32xf32>
    %cst_75 = arith.constant dense<0.000000e+00> : vector<8x12x32xf32>
    %111 = tpu.matmul %108, %110, %cst_75 {dimension_numbers = #tpu.dot_dimension_numbers<[2], [1], [1], [2], [0, 0, 0, 1, 1, 2], [0], [0]>} : vector<8x12x32xf32>, vector<8x32x32xf32>, vector<8x12x32xf32> -> vector<8x12x32xf32>
    %c2_76 = arith.constant 2 : index
    %c0_77 = arith.constant 0 : index
    %c0_78 = arith.constant 0 : index
    %c0_79 = arith.constant 0 : index
    %112 = vector.load %arg6[%c2_76, %c0_77, %c0_78, %c0_79] : memref<3x8x32x32xf32, #tpu.memory_space<vmem>>, vector<1x8x32x32xf32>
    %113 = vector.shape_cast %112 : vector<1x8x32x32xf32> to vector<8x32x32xf32>
    %cst_80 = arith.constant dense<0.000000e+00> : vector<8x12x32xf32>
    %114 = tpu.matmul %108, %113, %cst_80 {dimension_numbers = #tpu.dot_dimension_numbers<[2], [1], [1], [2], [0, 0, 0, 1, 1, 2], [0], [0]>} : vector<8x12x32xf32>, vector<8x32x32xf32>, vector<8x12x32xf32> -> vector<8x12x32xf32>
    %c2_81 = arith.constant 2 : index
    %c0_82 = arith.constant 0 : index
    %c0_83 = arith.constant 0 : index
    %c0_84 = arith.constant 0 : index
    %115 = vector.load %arg7[%c2_81, %c0_82, %c0_83, %c0_84] : memref<3x8x32x32xf32, #tpu.memory_space<vmem>>, vector<1x8x32x32xf32>
    %116 = vector.shape_cast %115 : vector<1x8x32x32xf32> to vector<8x32x32xf32>
    %cst_85 = arith.constant dense<0.000000e+00> : vector<8x12x32xf32>
    %117 = tpu.matmul %108, %116, %cst_85 {dimension_numbers = #tpu.dot_dimension_numbers<[2], [1], [1], [2], [0, 0, 0, 1, 1, 2], [0], [0]>} : vector<8x12x32xf32>, vector<8x32x32xf32>, vector<8x12x32xf32> -> vector<8x12x32xf32>
    %cst_86 = arith.constant dense<0.000000e+00> : vector<8x12x12xf32>
    %118 = tpu.matmul %111, %114, %cst_86 {dimension_numbers = #tpu.dot_dimension_numbers<[2], [2], [1], [1], [0, 0, 0, 1, 1, 1], [0], [0]>} : vector<8x12x32xf32>, vector<8x12x32xf32>, vector<8x12x12xf32> -> vector<8x12x12xf32>
    %cst_87 = arith.constant dense<0xFF800000> : vector<8x12xf32>
    %119 = vector.multi_reduction <maximumf>, %118, %cst_87 [2] : vector<8x12x12xf32> to vector<8x12xf32>
    %120 = vector.shape_cast %119 : vector<8x12xf32> to vector<8x12x1xf32>
    %121 = vector.broadcast %120 : vector<8x12x1xf32> to vector<8x12x12xf32>
    %122 = arith.subf %118, %121 : vector<8x12x12xf32>
    %123 = math.exp %122 : vector<8x12x12xf32>
    %cst_88 = arith.constant dense<0.000000e+00> : vector<8x12xf32>
    %124 = vector.multi_reduction <add>, %123, %cst_88 [2] : vector<8x12x12xf32> to vector<8x12xf32>
    %125 = vector.shape_cast %124 : vector<8x12xf32> to vector<8x12x1xf32>
    %126 = tpu.reciprocal %125 {approx = true} : vector<8x12x1xf32> -> vector<8x12x1xf32>
    %127 = vector.broadcast %126 : vector<8x12x1xf32> to vector<8x12x12xf32>
    %128 = arith.mulf %123, %127 : vector<8x12x12xf32>
    %cst_89 = arith.constant dense<0.000000e+00> : vector<8x12x32xf32>
    %129 = tpu.matmul %128, %117, %cst_89 {dimension_numbers = #tpu.dot_dimension_numbers<[2], [1], [1], [2], [0, 0, 0, 1, 1, 2], [0], [0]>} : vector<8x12x12xf32>, vector<8x12x32xf32>, vector<8x12x32xf32> -> vector<8x12x32xf32>
    %130 = arith.mulf %129, %129 : vector<8x12x32xf32>
    %cst_90 = arith.constant dense<0.000000e+00> : vector<8x12xf32>
    %131 = vector.multi_reduction <add>, %130, %cst_90 [2] : vector<8x12x32xf32> to vector<8x12xf32>
    %132 = arith.mulf %34, %129 : vector<8x12x32xf32>
    %cst_91 = arith.constant dense<0.000000e+00> : vector<8x12xf32>
    %133 = vector.multi_reduction <add>, %132, %cst_91 [2] : vector<8x12x32xf32> to vector<8x12xf32>
    %134 = arith.mulf %36, %131 : vector<8x12xf32>
    %cst_92 = arith.constant 1.000000e-16 : f32
    %135 = vector.broadcast %cst_92 : f32 to vector<8x12xf32>
    %136 = arith.maximumf %134, %135 : vector<8x12xf32>
    %137 = math.rsqrt %136 : vector<8x12xf32>
    %138 = arith.mulf %133, %137 : vector<8x12xf32>
    %c2_93 = arith.constant 2 : index
    %c0_94 = arith.constant 0 : index
    %c0_95 = arith.constant 0 : index
    %139 = vector.load %arg8[%c2_93, %c0_94, %c0_95] : memref<3x8x12xf32, #tpu.memory_space<vmem>>, vector<1x8x12xf32>
    %140 = vector.shape_cast %139 : vector<1x8x12xf32> to vector<8x12xf32>
    %141 = vector.shape_cast %138 : vector<8x12xf32> to vector<1x8x12xf32>
    tpu.vector_store %arg8[%c2_93, %c0_94, %c0_95], %141 {strides = array<i32>} : memref<3x8x12xf32, #tpu.memory_space<vmem>>, vector<1x8x12xf32>,
    return
  }
  func.func @transform_0(%arg0: i32) -> (i32, i32, i32) {
    %c0_i32 = arith.constant 0 : i32
    %c0_i32_0 = arith.constant 0 : i32
    %c0_i32_1 = arith.constant 0 : i32
    return %arg0, %c0_i32, %c0_i32_0 : i32, i32, i32
  }
  func.func @transform_1(%arg0: i32) -> (i32, i32) {
    %c0_i32 = arith.constant 0 : i32
    %c0_i32_0 = arith.constant 0 : i32
    %c0_i32_1 = arith.constant 0 : i32
    return %c0_i32, %c0_i32_0 : i32, i32
  }
  func.func @transform_2(%arg0: i32) -> (i32, i32, i32) {
    %c0_i32 = arith.constant 0 : i32
    %c0_i32_0 = arith.constant 0 : i32
    %c0_i32_1 = arith.constant 0 : i32
    %c0_i32_2 = arith.constant 0 : i32
    return %c0_i32, %c0_i32_0, %c0_i32_1 : i32, i32, i32
  }
  func.func @transform_3(%arg0: i32) -> (i32, i32, i32, i32) {
    %c0_i32 = arith.constant 0 : i32
    %c0_i32_0 = arith.constant 0 : i32
    %c0_i32_1 = arith.constant 0 : i32
    %c0_i32_2 = arith.constant 0 : i32
    return %c0_i32, %arg0, %c0_i32_0, %c0_i32_1 : i32, i32, i32, i32
  }
  func.func @transform_4(%arg0: i32) -> (i32, i32, i32, i32) {
    %c0_i32 = arith.constant 0 : i32
    %c0_i32_0 = arith.constant 0 : i32
    %c0_i32_1 = arith.constant 0 : i32
    %c0_i32_2 = arith.constant 0 : i32
    %c0_i32_3 = arith.constant 0 : i32
    return %c0_i32, %c0_i32_0, %c0_i32_1, %c0_i32_2 : i32, i32, i32, i32
  }
  func.func @transform_5(%arg0: i32) -> (i32, i32, i32, i32) {
    %c0_i32 = arith.constant 0 : i32
    %c0_i32_0 = arith.constant 0 : i32
    %c0_i32_1 = arith.constant 0 : i32
    %c0_i32_2 = arith.constant 0 : i32
    %c0_i32_3 = arith.constant 0 : i32
    return %c0_i32, %c0_i32_0, %c0_i32_1, %c0_i32_2 : i32, i32, i32, i32
  }
  func.func @transform_6(%arg0: i32) -> (i32, i32, i32, i32) {
    %c0_i32 = arith.constant 0 : i32
    %c0_i32_0 = arith.constant 0 : i32
    %c0_i32_1 = arith.constant 0 : i32
    %c0_i32_2 = arith.constant 0 : i32
    %c0_i32_3 = arith.constant 0 : i32
    return %c0_i32, %c0_i32_0, %c0_i32_1, %c0_i32_2 : i32, i32, i32, i32
  }
  func.func @transform_7(%arg0: i32) -> (i32, i32, i32) {
    %c0_i32 = arith.constant 0 : i32
    %c0_i32_0 = arith.constant 0 : i32
    %c0_i32_1 = arith.constant 0 : i32
    return %c0_i32, %arg0, %c0_i32_0 : i32, i32, i32
  }
}

</mosaic_0001>

<llo_original>
// kernel: memory_gate.1
$region0: #{memory_gate.1}
  #allocation0 [shape = 'u32[]', space=smem, size = 0x4, offset = 0x4, fixed_abs, tag = 'smem constant byte address 0x4 - core index']
  #allocation1 [shape = 'u32[144,128]{1,0:T(1,128)}', space=vmem, size = 0x12000, scoped, tag = 'internal scratch']
  %s0 = inlined_call_operand.vmem [shape: f32[8,12,3], index: 0, kind: input, shape index: {}]
  %s1 = inlined_call_operand.vmem [shape: f32[3,32], index: 1, kind: input, shape index: {}]
  %s2 = inlined_call_operand.vmem [shape: f32[8,20,32], index: 2, kind: input, shape index: {}]
  %s3 = inlined_call_operand.vmem [shape: f32[3,8,12,32], index: 3, kind: input, shape index: {}]
  %s4 = inlined_call_operand.vmem [shape: f32[3,8,32,32], index: 4, kind: input, shape index: {}]
  %s5 = inlined_call_operand.vmem [shape: f32[3,8,32,32], index: 5, kind: input, shape index: {}]
  %s6 = inlined_call_operand.vmem [shape: f32[3,8,32,32], index: 6, kind: input, shape index: {}]
  %s7 = inlined_call_operand.vmem [shape: f32[3,8,12], index: 7, kind: output, shape index: {}]
  %s8 = sld [smem:[#allocation0]]
  $region38: #{memory_gate.1} parent=0
    _
  %s10 = ssub.s32 1, %s8
  %s11 = scalar_select 0, %s10, %s8
  // Predicated region
  $region2: #{memory_gate.1} parent=0 // pred_check
    _
  $region3: #{memory_gate.1} parent=0 // pred_check_branch
    %13 = sbr.rel (0) target = $region5
  $region4: #{memory_gate.1} parent=0 // pred_region
    _
  $region5: #{memory_gate.1} parent=0 // pred_fallthru
    _
  // Predicated region
  $region6: #{memory_gate.1} parent=0 // pred_check
    _
  $region7: #{memory_gate.1} parent=0 // pred_check_branch
    %15 = sbr.rel (0) target = $region9
  $region8: #{memory_gate.1} parent=0 // pred_region
    _
  $region9: #{memory_gate.1} parent=0 // pred_fallthru
    _
  // Predicated region
  $region10: #{memory_gate.1} parent=0 // pred_check
    _
  $region11: #{memory_gate.1} parent=0 // pred_check_branch
    %17 = sbr.rel (0) target = $region13
  $region12: #{memory_gate.1} parent=0 // pred_region
    _
  $region13: #{memory_gate.1} parent=0 // pred_fallthru
    _
  // Predicated region
  $region14: #{memory_gate.1} parent=0 // pred_check
    _
  $region15: #{memory_gate.1} parent=0 // pred_check_branch
    %19 = sbr.rel (0) target = $region17
  $region16: #{memory_gate.1} parent=0 // pred_region
    _
  $region17: #{memory_gate.1} parent=0 // pred_fallthru
    _
  // Predicated region
  $region18: #{memory_gate.1} parent=0 // pred_check
    _
  $region19: #{memory_gate.1} parent=0 // pred_check_branch
    %21 = sbr.rel (0) target = $region21
  $region20: #{memory_gate.1} parent=0 // pred_region
    _
  $region21: #{memory_gate.1} parent=0 // pred_fallthru
    _
  // Predicated region
  $region22: #{memory_gate.1} parent=0 // pred_check
    _
  $region23: #{memory_gate.1} parent=0 // pred_check_branch
    %23 = sbr.rel (0) target = $region25
  $region24: #{memory_gate.1} parent=0 // pred_region
    _
  $region25: #{memory_gate.1} parent=0 // pred_fallthru
    _
  // Predicated region
  $region26: #{memory_gate.1} parent=0 // pred_check
    _
  $region27: #{memory_gate.1} parent=0 // pred_check_branch
    %25 = sbr.rel (0) target = $region29
  $region28: #{memory_gate.1} parent=0 // pred_region
    _
  $region29: #{memory_gate.1} parent=0 // pred_fallthru
    _
  %v26 = vld [vmem:[%s0] sm:$0xff]
  %v27 = vld [vmem:[%s0 + $0x8] sm:$0xf]
  %v28 = vld [vmem:[%s0 + $0x10] sm:$0xff]
  %v29 = vld [vmem:[%s0 + $0x18] sm:$0xf]
  %v30 = vld [vmem:[%s0 + $0x20] sm:$0xff]
  %v31 = vld [vmem:[%s0 + $0x28] sm:$0xf]
  %v32 = vld [vmem:[%s0 + $0x30] sm:$0xff]
  %v33 = vld [vmem:[%s0 + $0x38] sm:$0xf]
  %v34 = vld [vmem:[%s0 + $0x40] sm:$0xff]
  %v35 = vld [vmem:[%s0 + $0x48] sm:$0xf]
  %v36 = vld [vmem:[%s0 + $0x50] sm:$0xff]
  %v37 = vld [vmem:[%s0 + $0x58] sm:$0xf]
  %v38 = vld [vmem:[%s0 + $0x60] sm:$0xff]
  %v39 = vld [vmem:[%s0 + $0x68] sm:$0xf]
  %v40 = vld [vmem:[%s0 + $0x70] sm:$0xff]
  %v41 = vld [vmem:[%s0 + $0x78] sm:$0xf]
  %v42 = vld [vmem:[%s1] sm:$0x7]
  %44 = vset.pattern.permute.xlu0 0
  %45 = vperm.xlu0 %44, %v26
  %v46 = vpop.permute.xlu0 %45
  %49 = vset.pattern.permute.xlu0 0
  %50 = vperm.xlu0 %49, %v27
  %v51 = vpop.permute.xlu0 %50
  %54 = vset.pattern.permute.xlu0 0
  %55 = vperm.xlu0 %54, %v28
  %v56 = vpop.permute.xlu0 %55
  %59 = vset.pattern.permute.xlu0 0
  %60 = vperm.xlu0 %59, %v29
  %v61 = vpop.permute.xlu0 %60
  %64 = vset.pattern.permute.xlu0 0
  %65 = vperm.xlu0 %64, %v30
  %v66 = vpop.permute.xlu0 %65
  %69 = vset.pattern.permute.xlu0 0
  %70 = vperm.xlu0 %69, %v31
  %v71 = vpop.permute.xlu0 %70
  %74 = vset.pattern.permute.xlu0 0
  %75 = vperm.xlu0 %74, %v32
  %v76 = vpop.permute.xlu0 %75
  %79 = vset.pattern.permute.xlu0 0
  %80 = vperm.xlu0 %79, %v33
  %v81 = vpop.permute.xlu0 %80
  %84 = vset.pattern.permute.xlu0 0
  %85 = vperm.xlu0 %84, %v34
  %v86 = vpop.permute.xlu0 %85
  %89 = vset.pattern.permute.xlu0 0
  %90 = vperm.xlu0 %89, %v35
  %v91 = vpop.permute.xlu0 %90
  %94 = vset.pattern.permute.xlu0 0
  %95 = vperm.xlu0 %94, %v36
  %v96 = vpop.permute.xlu0 %95
  %99 = vset.pattern.permute.xlu0 0
  %100 = vperm.xlu0 %99, %v37
  %v101 = vpop.permute.xlu0 %100
  %104 = vset.pattern.permute.xlu0 0
  %105 = vperm.xlu0 %104, %v38
  %v106 = vpop.permute.xlu0 %105
  %109 = vset.pattern.permute.xlu0 0
  %110 = vperm.xlu0 %109, %v39
  %v111 = vpop.permute.xlu0 %110
  %114 = vset.pattern.permute.xlu0 0
  %115 = vperm.xlu0 %114, %v40
  %v116 = vpop.permute.xlu0 %115
  %119 = vset.pattern.permute.xlu0 0
  %120 = vperm.xlu0 %119, %v41
  %v121 = vpop.permute.xlu0 %120
  %v123 = vlaneseq
  %v124 = vshrl.u32 %v123, 7
  %v125 = vsub.s32 0, %v124
  %v126 = vrot.slane %v42, %v125
  %v127 = vmul.f32 %v46, %v126
  %v128 = vmul.f32 %v51, %v126
  %v129 = vmul.f32 %v56, %v126
  %v130 = vmul.f32 %v61, %v126
  %v131 = vmul.f32 %v66, %v126
  %v132 = vmul.f32 %v71, %v126
  %v133 = vmul.f32 %v76, %v126
  %v134 = vmul.f32 %v81, %v126
  %v135 = vmul.f32 %v86, %v126
  %v136 = vmul.f32 %v91, %v126
  %v137 = vmul.f32 %v96, %v126
  %v138 = vmul.f32 %v101, %v126
  %v139 = vmul.f32 %v106, %v126
  %v140 = vmul.f32 %v111, %v126
  %v141 = vmul.f32 %v116, %v126
  %v142 = vmul.f32 %v121, %v126
  %143 = vset.pattern.permute.xlu0 1
  %144 = vperm.xlu0 %143, %v26
  %v145 = vpop.permute.xlu0 %144
  %147 = vset.pattern.permute.xlu0 1
  %148 = vperm.xlu0 %147, %v27
  %v149 = vpop.permute.xlu0 %148
  %151 = vset.pattern.permute.xlu0 1
  %152 = vperm.xlu0 %151, %v28
  %v153 = vpop.permute.xlu0 %152
  %155 = vset.pattern.permute.xlu0 1
  %156 = vperm.xlu0 %155, %v29
  %v157 = vpop.permute.xlu0 %156
  %159 = vset.pattern.permute.xlu0 1
  %160 = vperm.xlu0 %159, %v30
  %v161 = vpop.permute.xlu0 %160
  %163 = vset.pattern.permute.xlu0 1
  %164 = vperm.xlu0 %163, %v31
  %v165 = vpop.permute.xlu0 %164
  %167 = vset.pattern.permute.xlu0 1
  %168 = vperm.xlu0 %167, %v32
  %v169 = vpop.permute.xlu0 %168
  %171 = vset.pattern.permute.xlu0 1
  %172 = vperm.xlu0 %171, %v33
  %v173 = vpop.permute.xlu0 %172
  %175 = vset.pattern.permute.xlu0 1
  %176 = vperm.xlu0 %175, %v34
  %v177 = vpop.permute.xlu0 %176
  %179 = vset.pattern.permute.xlu0 1
  %180 = vperm.xlu0 %179, %v35
  %v181 = vpop.permute.xlu0 %180
  %183 = vset.pattern.permute.xlu0 1
  %184 = vperm.xlu0 %183, %v36
  %v185 = vpop.permute.xlu0 %184
  %187 = vset.pattern.permute.xlu0 1
  %188 = vperm.xlu0 %187, %v37
  %v189 = vpop.permute.xlu0 %188
  %191 = vset.pattern.permute.xlu0 1
  %192 = vperm.xlu0 %191, %v38
  %v193 = vpop.permute.xlu0 %192
  %195 = vset.pattern.permute.xlu0 1
  %196 = vperm.xlu0 %195, %v39
  %v197 = vpop.permute.xlu0 %196
  %199 = vset.pattern.permute.xlu0 1
  %200 = vperm.xlu0 %199, %v40
  %v201 = vpop.permute.xlu0 %200
  %203 = vset.pattern.permute.xlu0 1
  %204 = vperm.xlu0 %203, %v41
  %v205 = vpop.permute.xlu0 %204
  %v207 = vlaneseq
  %v208 = vshrl.u32 %v207, 7
  %v209 = vsub.s32 1, %v208
  %v210 = vrot.slane %v42, %v209
  %v211 = vmul.f32 %v145, %v210
  %v212 = vmul.f32 %v149, %v210
  %v213 = vmul.f32 %v153, %v210
  %v214 = vmul.f32 %v157, %v210
  %v215 = vmul.f32 %v161, %v210
  %v216 = vmul.f32 %v165, %v210
  %v217 = vmul.f32 %v169, %v210
  %v218 = vmul.f32 %v173, %v210
  %v219 = vmul.f32 %v177, %v210
  %v220 = vmul.f32 %v181, %v210
  %v221 = vmul.f32 %v185, %v210
  %v222 = vmul.f32 %v189, %v210
  %v223 = vmul.f32 %v193, %v210
  %v224 = vmul.f32 %v197, %v210
  %v225 = vmul.f32 %v201, %v210
  %v226 = vmul.f32 %v205, %v210
  %v227 = vadd.f32 %v127, %v211
  %v228 = vadd.f32 %v128, %v212
  %v229 = vadd.f32 %v129, %v213
  %v230 = vadd.f32 %v130, %v214
  %v231 = vadd.f32 %v131, %v215
  %v232 = vadd.f32 %v132, %v216
  %v233 = vadd.f32 %v133, %v217
  %v234 = vadd.f32 %v134, %v218
  %v235 = vadd.f32 %v135, %v219
  %v236 = vadd.f32 %v136, %v220
  %v237 = vadd.f32 %v137, %v221
  %v238 = vadd.f32 %v138, %v222
  %v239 = vadd.f32 %v139, %v223
  %v240 = vadd.f32 %v140, %v224
  %v241 = vadd.f32 %v141, %v225
  %v242 = vadd.f32 %v142, %v226
  %243 = vset.pattern.permute.xlu0 2
  %244 = vperm.xlu0 %243, %v26
  %v245 = vpop.permute.xlu0 %244
  %247 = vset.pattern.permute.xlu0 2
  %248 = vperm.xlu0 %247, %v27
  %v249 = vpop.permute.xlu0 %248
  %251 = vset.pattern.permute.xlu0 2
  %252 = vperm.xlu0 %251, %v28
  %v253 = vpop.permute.xlu0 %252
  %255 = vset.pattern.permute.xlu0 2
  %256 = vperm.xlu0 %255, %v29
  %v257 = vpop.permute.xlu0 %256
  %259 = vset.pattern.permute.xlu0 2
  %260 = vperm.xlu0 %259, %v30
  %v261 = vpop.permute.xlu0 %260
  %263 = vset.pattern.permute.xlu0 2
  %264 = vperm.xlu0 %263, %v31
  %v265 = vpop.permute.xlu0 %264
  %267 = vset.pattern.permute.xlu0 2
  %268 = vperm.xlu0 %267, %v32
  %v269 = vpop.permute.xlu0 %268
  %271 = vset.pattern.permute.xlu0 2
  %272 = vperm.xlu0 %271, %v33
  %v273 = vpop.permute.xlu0 %272
  %275 = vset.pattern.permute.xlu0 2
  %276 = vperm.xlu0 %275, %v34
  %v277 = vpop.permute.xlu0 %276
  %279 = vset.pattern.permute.xlu0 2
  %280 = vperm.xlu0 %279, %v35
  %v281 = vpop.permute.xlu0 %280
  %283 = vset.pattern.permute.xlu0 2
  %284 = vperm.xlu0 %283, %v36
  %v285 = vpop.permute.xlu0 %284
  %287 = vset.pattern.permute.xlu0 2
  %288 = vperm.xlu0 %287, %v37
  %v289 = vpop.permute.xlu0 %288
  %291 = vset.pattern.permute.xlu0 2
  %292 = vperm.xlu0 %291, %v38
  %v293 = vpop.permute.xlu0 %292
  %295 = vset.pattern.permute.xlu0 2
  %296 = vperm.xlu0 %295, %v39
  %v297 = vpop.permute.xlu0 %296
  %299 = vset.pattern.permute.xlu0 2
  %300 = vperm.xlu0 %299, %v40
  %v301 = vpop.permute.xlu0 %300
  %303 = vset.pattern.permute.xlu0 2
  %304 = vperm.xlu0 %303, %v41
  %v305 = vpop.permute.xlu0 %304
  %v307 = vlaneseq
  %v308 = vshrl.u32 %v307, 7
  %v309 = vsub.s32 2, %v308
  %v310 = vrot.slane %v42, %v309
  %v311 = vmul.f32 %v245, %v310
  %v312 = vmul.f32 %v249, %v310
  %v313 = vmul.f32 %v253, %v310
  %v314 = vmul.f32 %v257, %v310
  %v315 = vmul.f32 %v261, %v310
  %v316 = vmul.f32 %v265, %v310
  %v317 = vmul.f32 %v269, %v310
  %v318 = vmul.f32 %v273, %v310
  %v319 = vmul.f32 %v277, %v310
  %v320 = vmul.f32 %v281, %v310
  %v321 = vmul.f32 %v285, %v310
  %v322 = vmul.f32 %v289, %v310
  %v323 = vmul.f32 %v293, %v310
  %v324 = vmul.f32 %v297, %v310
  %v325 = vmul.f32 %v301, %v310
  %v326 = vmul.f32 %v305, %v310
  %v327 = vadd.f32 %v227, %v311
  %v328 = vadd.f32 %v228, %v312
  %v329 = vadd.f32 %v229, %v313
  %v330 = vadd.f32 %v230, %v314
  %v331 = vadd.f32 %v231, %v315
  %v332 = vadd.f32 %v232, %v316
  %v333 = vadd.f32 %v233, %v317
  %v334 = vadd.f32 %v234, %v318
  %v335 = vadd.f32 %v235, %v319
  %v336 = vadd.f32 %v236, %v320
  %v337 = vadd.f32 %v237, %v321
  %v338 = vadd.f32 %v238, %v322
  %v339 = vadd.f32 %v239, %v323
  %v340 = vadd.f32 %v240, %v324
  %v341 = vadd.f32 %v241, %v325
  %v342 = vadd.f32 %v242, %v326
  %v343 = vld [vmem:[%s2] sm:$0xff]
  %v344 = vld [vmem:[%s2 + $0x8] sm:$0xff]
  %v345 = vld [vmem:[%s2 + $0x10] sm:$0xf]
  %v346 = vld [vmem:[%s2 + $0x18] sm:$0xff]
  %v347 = vld [vmem:[%s2 + $0x20] sm:$0xff]
  %v348 = vld [vmem:[%s2 + $0x28] sm:$0xf]
  %v349 = vld [vmem:[%s2 + $0x30] sm:$0xff]
  %v350 = vld [vmem:[%s2 + $0x38] sm:$0xff]
  %v351 = vld [vmem:[%s2 + $0x40] sm:$0xf]
  %v352 = vld [vmem:[%s2 + $0x48] sm:$0xff]
  %v353 = vld [vmem:[%s2 + $0x50] sm:$0xff]
  %v354 = vld [vmem:[%s2 + $0x58] sm:$0xf]
  %v355 = vld [vmem:[%s2 + $0x60] sm:$0xff]
  %v356 = vld [vmem:[%s2 + $0x68] sm:$0xff]
  %v357 = vld [vmem:[%s2 + $0x70] sm:$0xf]
  %v358 = vld [vmem:[%s2 + $0x78] sm:$0xff]
  %v359 = vld [vmem:[%s2 + $0x80] sm:$0xff]
  %v360 = vld [vmem:[%s2 + $0x88] sm:$0xf]
  %v361 = vld [vmem:[%s2 + $0x90] sm:$0xff]
  %v362 = vld [vmem:[%s2 + $0x98] sm:$0xff]
  %v363 = vld [vmem:[%s2 + $0xa0] sm:$0xf]
  %v364 = vld [vmem:[%s2 + $0xa8] sm:$0xff]
  %v365 = vld [vmem:[%s2 + $0xb0] sm:$0xff]
  %v366 = vld [vmem:[%s2 + $0xb8] sm:$0xf]
  %vm367 = vcmask 261120
  %v369 = vsel %vm367, %v327, 0
  %v372 = vsel %vm367, %v328, 0
  %v375 = vsel %vm367, %v343, 0
  %v378 = vsel %vm367, %v344, 0
  %v381 = vsel %vm367, %v345, 0
  %383 = vmatprep.subr.mxu0 0.0
  %384 = vmatpush1.xpose.msra.mxu0 0.0
  %385 = vmatprep.subr.mxu0 0.0
  %386 = vmatpush1.xpose.msra.mxu0 0.0
  %387 = vmatprep.subr.mxu0 0.0
  %388 = vmatpush1.xpose.msra.mxu0 0.0
  %389 = vmatprep.subr.mxu0 0.0
  %390 = vmatpush1.xpose.msra.mxu0 0.0
  %391 = vmatprep.subr.mxu0 0.0
  %392 = vmatpush1.xpose.msra.mxu0 0.0
  %393 = vmatprep.subr.mxu0 0.0
  %394 = vmatpush1.xpose.msra.mxu0 0.0
  %395 = vmatprep.subr.mxu0 0.0
  %396 = vmatpush1.xpose.msra.mxu0 0.0
  %397 = vmatprep.subr.mxu0 0.0
  %398 = vmatpush1.xpose.msra.mxu0 0.0
  %399 = vmatprep.subr.mxu0 0.0
  %400 = vmatpush1.xpose.msra.mxu0 0.0
  %401 = vmatprep.subr.mxu0 0.0
  %402 = vmatpush1.xpose.msra.mxu0 0.0
  %403 = vmatprep.subr.mxu0 0.0
  %404 = vmatpush1.xpose.msra.mxu0 0.0
  %405 = vmatprep.subr.mxu0 0.0
  %406 = vmatpush1.xpose.msra.mxu0 0.0
  %407 = vmatprep.subr.mxu0 0.0
  %408 = vmatpush1.xpose.msra.mxu0 0.0
  %409 = vmatprep.subr.mxu0 0.0
  %410 = vmatpush1.xpose.msra.mxu0 %v381
  %411 = vmatprep.subr.mxu0 0.0
  %412 = vmatpush1.xpose.msra.mxu0 %v378
  %413 = vmatprep.subr.mxu0 0.0
  %414 = vmatpush1.xpose.msra.mxu0 %v375
  %415 = vmatprep.subr.mxu0 0.0
  %416 = vmatpush2.xpose.msra.mxu0 0.0
  %417 = vmatprep.subr.mxu0 0.0
  %418 = vmatpush2.xpose.msra.mxu0 0.0
  %419 = vmatprep.subr.mxu0 0.0
  %420 = vmatpush2.xpose.msra.mxu0 0.0
  %421 = vmatprep.subr.mxu0 0.0
  %422 = vmatpush2.xpose.msra.mxu0 0.0
  %423 = vmatprep.subr.mxu0 0.0
  %424 = vmatpush2.xpose.msra.mxu0 0.0
  %425 = vmatprep.subr.mxu0 0.0
  %426 = vmatpush2.xpose.msra.mxu0 0.0
  %427 = vmatprep.subr.mxu0 0.0
  %428 = vmatpush2.xpose.msra.mxu0 0.0
  %429 = vmatprep.subr.mxu0 0.0
  %430 = vmatpush2.xpose.msra.mxu0 0.0
  %431 = vmatprep.subr.mxu0 0.0
  %432 = vmatpush2.xpose.msra.mxu0 0.0
  %433 = vmatprep.subr.mxu0 0.0
  %434 = vmatpush2.xpose.msra.mxu0 0.0
  %435 = vmatprep.subr.mxu0 0.0
  %436 = vmatpush2.xpose.msra.mxu0 0.0
  %437 = vmatprep.subr.mxu0 0.0
  %438 = vmatpush2.xpose.msra.mxu0 0.0
  %439 = vmatprep.subr.mxu0 0.0
  %440 = vmatpush2.xpose.msra.mxu0 0.0
  %441 = vmatprep.subr.mxu0 0.0
  %442 = vmatpush2.xpose.msra.mxu0 0.0
  %443 = vmatprep.subr.mxu0 0.0
  %444 = vmatpush2.xpose.msra.mxu0 0.0
  %445 = vmatprep.subr.mxu0 0.0
  %446 = vmatpush2.xpose.msra.mxu0 0.0
  %447 = vmatprep.mubr.f32.mxu0 0.0
  %448 = vmatmul.mubr.f32.gmra.mxu0 %v369
  %v449 = vpop.f32.mrf.mxu0
  %v450 = vadd.f32 0.0, %v449
  %v451 = vpop.f32.mrf.mxu0
  %452 = vmatprep.mubr.f32.mxu0 0.0
  %453 = vmatmul.mubr.f32.gmra.mxu0 %v372
  %v454 = vpop.f32.mrf.mxu0
  %v455 = vadd.f32 0.0, %v454
  %v456 = vpop.f32.mrf.mxu0
  %457 = vdwg.mxu0
  %v459 = vsel %vm367, %v329, 0
  %v462 = vsel %vm367, %v330, 0
  %v465 = vsel %vm367, %v346, 0
  %v468 = vsel %vm367, %v347, 0
  %v471 = vsel %vm367, %v348, 0
  %473 = vmatprep.subr.mxu0 0.0
  %474 = vmatpush1.xpose.msra.mxu0 0.0
  %475 = vmatprep.subr.mxu0 0.0
  %476 = vmatpush1.xpose.msra.mxu0 0.0
  %477 = vmatprep.subr.mxu0 0.0
  %478 = vmatpush1.xpose.msra.mxu0 0.0
  %479 = vmatprep.subr.mxu0 0.0
  %480 = vmatpush1.xpose.msra.mxu0 0.0
  %481 = vmatprep.subr.mxu0 0.0
  %482 = vmatpush1.xpose.msra.mxu0 0.0
  %483 = vmatprep.subr.mxu0 0.0
  %484 = vmatpush1.xpose.msra.mxu0 0.0
  %485 = vmatprep.subr.mxu0 0.0
  %486 = vmatpush1.xpose.msra.mxu0 0.0
  %487 = vmatprep.subr.mxu0 0.0
  %488 = vmatpush1.xpose.msra.mxu0 0.0
  %489 = vmatprep.subr.mxu0 0.0
  %490 = vmatpush1.xpose.msra.mxu0 0.0
  %491 = vmatprep.subr.mxu0 0.0
  %492 = vmatpush1.xpose.msra.mxu0 0.0
  %493 = vmatprep.subr.mxu0 0.0
  %494 = vmatpush1.xpose.msra.mxu0 0.0
  %495 = vmatprep.subr.mxu0 0.0
  %496 = vmatpush1.xpose.msra.mxu0 0.0
  %497 = vmatprep.subr.mxu0 0.0
  %498 = vmatpush1.xpose.msra.mxu0 0.0
  %499 = vmatprep.subr.mxu0 0.0
  %500 = vmatpush1.xpose.msra.mxu0 %v471
  %501 = vmatprep.subr.mxu0 0.0
  %502 = vmatpush1.xpose.msra.mxu0 %v468
  %503 = vmatprep.subr.mxu0 0.0
  %504 = vmatpush1.xpose.msra.mxu0 %v465
  %505 = vmatprep.subr.mxu0 0.0
  %506 = vmatpush2.xpose.msra.mxu0 0.0
  %507 = vmatprep.subr.mxu0 0.0
  %508 = vmatpush2.xpose.msra.mxu0 0.0
  %509 = vmatprep.subr.mxu0 0.0
  %510 = vmatpush2.xpose.msra.mxu0 0.0
  %511 = vmatprep.subr.mxu0 0.0
  %512 = vmatpush2.xpose.msra.mxu0 0.0
  %513 = vmatprep.subr.mxu0 0.0
  %514 = vmatpush2.xpose.msra.mxu0 0.0
  %515 = vmatprep.subr.mxu0 0.0
  %516 = vmatpush2.xpose.msra.mxu0 0.0
  %517 = vmatprep.subr.mxu0 0.0
  %518 = vmatpush2.xpose.msra.mxu0 0.0
  %519 = vmatprep.subr.mxu0 0.0
  %520 = vmatpush2.xpose.msra.mxu0 0.0
  %521 = vmatprep.subr.mxu0 0.0
  %522 = vmatpush2.xpose.msra.mxu0 0.0
  %523 = vmatprep.subr.mxu0 0.0
  %524 = vmatpush2.xpose.msra.mxu0 0.0
  %525 = vmatprep.subr.mxu0 0.0
  %526 = vmatpush2.xpose.msra.mxu0 0.0
  %527 = vmatprep.subr.mxu0 0.0
  %528 = vmatpush2.xpose.msra.mxu0 0.0
  %529 = vmatprep.subr.mxu0 0.0
  %530 = vmatpush2.xpose.msra.mxu0 0.0
  %531 = vmatprep.subr.mxu0 0.0
  %532 = vmatpush2.xpose.msra.mxu0 0.0
  %533 = vmatprep.subr.mxu0 0.0
  %534 = vmatpush2.xpose.msra.mxu0 0.0
  %535 = vmatprep.subr.mxu0 0.0
  %536 = vmatpush2.xpose.msra.mxu0 0.0
  %537 = vmatprep.mubr.f32.mxu0 0.0
  %538 = vmatmul.mubr.f32.gmra.mxu0 %v459
  %v539 = vpop.f32.mrf.mxu0
  %v540 = vadd.f32 0.0, %v539
  %v541 = vpop.f32.mrf.mxu0
  %542 = vmatprep.mubr.f32.mxu0 0.0
  %543 = vmatmul.mubr.f32.gmra.mxu0 %v462
  %v544 = vpop.f32.mrf.mxu0
  %v545 = vadd.f32 0.0, %v544
  %v546 = vpop.f32.mrf.mxu0
  %547 = vdwg.mxu0
  %v549 = vsel %vm367, %v331, 0
  %v552 = vsel %vm367, %v332, 0
  %v555 = vsel %vm367, %v349, 0
  %v558 = vsel %vm367, %v350, 0
  %v561 = vsel %vm367, %v351, 0
  %563 = vmatprep.subr.mxu0 0.0
  %564 = vmatpush1.xpose.msra.mxu0 0.0
  %565 = vmatprep.subr.mxu0 0.0
  %566 = vmatpush1.xpose.msra.mxu0 0.0
  %567 = vmatprep.subr.mxu0 0.0
  %568 = vmatpush1.xpose.msra.mxu0 0.0
  %569 = vmatprep.subr.mxu0 0.0
  %570 = vmatpush1.xpose.msra.mxu0 0.0
  %571 = vmatprep.subr.mxu0 0.0
  %572 = vmatpush1.xpose.msra.mxu0 0.0
  %573 = vmatprep.subr.mxu0 0.0
  %574 = vmatpush1.xpose.msra.mxu0 0.0
  %575 = vmatprep.subr.mxu0 0.0
  %576 = vmatpush1.xpose.msra.mxu0 0.0
  %577 = vmatprep.subr.mxu0 0.0
  %578 = vmatpush1.xpose.msra.mxu0 0.0
  %579 = vmatprep.subr.mxu0 0.0
  %580 = vmatpush1.xpose.msra.mxu0 0.0
  %581 = vmatprep.subr.mxu0 0.0
  %582 = vmatpush1.xpose.msra.mxu0 0.0
  %583 = vmatprep.subr.mxu0 0.0
  %584 = vmatpush1.xpose.msra.mxu0 0.0
  %585 = vmatprep.subr.mxu0 0.0
  %586 = vmatpush1.xpose.msra.mxu0 0.0
  %587 = vmatprep.subr.mxu0 0.0
  %588 = vmatpush1.xpose.msra.mxu0 0.0
  %589 = vmatprep.subr.mxu0 0.0
  %590 = vmatpush1.xpose.msra.mxu0 %v561
  %591 = vmatprep.subr.mxu0 0.0
  %592 = vmatpush1.xpose.msra.mxu0 %v558
  %593 = vmatprep.subr.mxu0 0.0
  %594 = vmatpush1.xpose.msra.mxu0 %v555
  %595 = vmatprep.subr.mxu0 0.0
  %596 = vmatpush2.xpose.msra.mxu0 0.0
  %597 = vmatprep.subr.mxu0 0.0
  %598 = vmatpush2.xpose.msra.mxu0 0.0
  %599 = vmatprep.subr.mxu0 0.0
  %600 = vmatpush2.xpose.msra.mxu0 0.0
  %601 = vmatprep.subr.mxu0 0.0
  %602 = vmatpush2.xpose.msra.mxu0 0.0
  %603 = vmatprep.subr.mxu0 0.0
  %604 = vmatpush2.xpose.msra.mxu0 0.0
  %605 = vmatprep.subr.mxu0 0.0
  %606 = vmatpush2.xpose.msra.mxu0 0.0
  %607 = vmatprep.subr.mxu0 0.0
  %608 = vmatpush2.xpose.msra.mxu0 0.0
  %609 = vmatprep.subr.mxu0 0.0
  %610 = vmatpush2.xpose.msra.mxu0 0.0
  %611 = vmatprep.subr.mxu0 0.0
  %612 = vmatpush2.xpose.msra.mxu0 0.0
  %613 = vmatprep.subr.mxu0 0.0
  %614 = vmatpush2.xpose.msra.mxu0 0.0
  %615 = vmatprep.subr.mxu0 0.0
  %616 = vmatpush2.xpose.msra.mxu0 0.0
  %617 = vmatprep.subr.mxu0 0.0
  %618 = vmatpush2.xpose.msra.mxu0 0.0
  %619 = vmatprep.subr.mxu0 0.0
  %620 = vmatpush2.xpose.msra.mxu0 0.0
  %621 = vmatprep.subr.mxu0 0.0
  %622 = vmatpush2.xpose.msra.mxu0 0.0
  %623 = vmatprep.subr.mxu0 0.0
  %624 = vmatpush2.xpose.msra.mxu0 0.0
  %625 = vmatprep.subr.mxu0 0.0
  %626 = vmatpush2.xpose.msra.mxu0 0.0
  %627 = vmatprep.mubr.f32.mxu0 0.0
  %628 = vmatmul.mubr.f32.gmra.mxu0 %v549
  %v629 = vpop.f32.mrf.mxu0
  %v630 = vadd.f32 0.0, %v629
  %v631 = vpop.f32.mrf.mxu0
  %632 = vmatprep.mubr.f32.mxu0 0.0
  %633 = vmatmul.mubr.f32.gmra.mxu0 %v552
  %v634 = vpop.f32.mrf.mxu0
  %v635 = vadd.f32 0.0, %v634
  %v636 = vpop.f32.mrf.mxu0
  %637 = vdwg.mxu0
  %v639 = vsel %vm367, %v333, 0
  %v642 = vsel %vm367, %v334, 0
  %v645 = vsel %vm367, %v352, 0
  %v648 = vsel %vm367, %v353, 0
  %v651 = vsel %vm367, %v354, 0
  %653 = vmatprep.subr.mxu0 0.0
  %654 = vmatpush1.xpose.msra.mxu0 0.0
  %655 = vmatprep.subr.mxu0 0.0
  %656 = vmatpush1.xpose.msra.mxu0 0.0
  %657 = vmatprep.subr.mxu0 0.0
  %658 = vmatpush1.xpose.msra.mxu0 0.0
  %659 = vmatprep.subr.mxu0 0.0
  %660 = vmatpush1.xpose.msra.mxu0 0.0
  %661 = vmatprep.subr.mxu0 0.0
  %662 = vmatpush1.xpose.msra.mxu0 0.0
  %663 = vmatprep.subr.mxu0 0.0
  %664 = vmatpush1.xpose.msra.mxu0 0.0
  %665 = vmatprep.subr.mxu0 0.0
  %666 = vmatpush1.xpose.msra.mxu0 0.0
  %667 = vmatprep.subr.mxu0 0.0
  %668 = vmatpush1.xpose.msra.mxu0 0.0
  %669 = vmatprep.subr.mxu0 0.0
  %670 = vmatpush1.xpose.msra.mxu0 0.0
  %671 = vmatprep.subr.mxu0 0.0
  %672 = vmatpush1.xpose.msra.mxu0 0.0
  %673 = vmatprep.subr.mxu0 0.0
  %674 = vmatpush1.xpose.msra.mxu0 0.0
  %675 = vmatprep.subr.mxu0 0.0
  %676 = vmatpush1.xpose.msra.mxu0 0.0
  %677 = vmatprep.subr.mxu0 0.0
  %678 = vmatpush1.xpose.msra.mxu0 0.0
  %679 = vmatprep.subr.mxu0 0.0
  %680 = vmatpush1.xpose.msra.mxu0 %v651
  %681 = vmatprep.subr.mxu0 0.0
  %682 = vmatpush1.xpose.msra.mxu0 %v648
  %683 = vmatprep.subr.mxu0 0.0
  %684 = vmatpush1.xpose.msra.mxu0 %v645
  %685 = vmatprep.subr.mxu0 0.0
  %686 = vmatpush2.xpose.msra.mxu0 0.0
  %687 = vmatprep.subr.mxu0 0.0
  %688 = vmatpush2.xpose.msra.mxu0 0.0
  %689 = vmatprep.subr.mxu0 0.0
  %690 = vmatpush2.xpose.msra.mxu0 0.0
  %691 = vmatprep.subr.mxu0 0.0
  %692 = vmatpush2.xpose.msra.mxu0 0.0
  %693 = vmatprep.subr.mxu0 0.0
  %694 = vmatpush2.xpose.msra.mxu0 0.0
  %695 = vmatprep.subr.mxu0 0.0
  %696 = vmatpush2.xpose.msra.mxu0 0.0
  %697 = vmatprep.subr.mxu0 0.0
  %698 = vmatpush2.xpose.msra.mxu0 0.0
  %699 = vmatprep.subr.mxu0 0.0
  %700 = vmatpush2.xpose.msra.mxu0 0.0
  %701 = vmatprep.subr.mxu0 0.0
  %702 = vmatpush2.xpose.msra.mxu0 0.0
  %703 = vmatprep.subr.mxu0 0.0
  %704 = vmatpush2.xpose.msra.mxu0 0.0
  %705 = vmatprep.subr.mxu0 0.0
  %706 = vmatpush2.xpose.msra.mxu0 0.0
  %707 = vmatprep.subr.mxu0 0.0
  %708 = vmatpush2.xpose.msra.mxu0 0.0
  %709 = vmatprep.subr.mxu0 0.0
  %710 = vmatpush2.xpose.msra.mxu0 0.0
  %711 = vmatprep.subr.mxu0 0.0
  %712 = vmatpush2.xpose.msra.mxu0 0.0
  %713 = vmatprep.subr.mxu0 0.0
  %714 = vmatpush2.xpose.msra.mxu0 0.0
  %715 = vmatprep.subr.mxu0 0.0
  %716 = vmatpush2.xpose.msra.mxu0 0.0
  %717 = vmatprep.mubr.f32.mxu0 0.0
  %718 = vmatmul.mubr.f32.gmra.mxu0 %v639
  %v719 = vpop.f32.mrf.mxu0
  %v720 = vadd.f32 0.0, %v719
  %v721 = vpop.f32.mrf.mxu0
  %722 = vmatprep.mubr.f32.mxu0 0.0
  %723 = vmatmul.mubr.f32.gmra.mxu0 %v642
  %v724 = vpop.f32.mrf.mxu0
  %v725 = vadd.f32 0.0, %v724
  %v726 = vpop.f32.mrf.mxu0
  %727 = vdwg.mxu0
  %v729 = vsel %vm367, %v335, 0
  %v732 = vsel %vm367, %v336, 0
  %v735 = vsel %vm367, %v355, 0
  %v738 = vsel %vm367, %v356, 0
  %v741 = vsel %vm367, %v357, 0
  %743 = vmatprep.subr.mxu0 0.0
  %744 = vmatpush1.xpose.msra.mxu0 0.0
  %745 = vmatprep.subr.mxu0 0.0
  %746 = vmatpush1.xpose.msra.mxu0 0.0
  %747 = vmatprep.subr.mxu0 0.0
  %748 = vmatpush1.xpose.msra.mxu0 0.0
  %749 = vmatprep.subr.mxu0 0.0
  %750 = vmatpush1.xpose.msra.mxu0 0.0
  %751 = vmatprep.subr.mxu0 0.0
  %752 = vmatpush1.xpose.msra.mxu0 0.0
  %753 = vmatprep.subr.mxu0 0.0
  %754 = vmatpush1.xpose.msra.mxu0 0.0
  %755 = vmatprep.subr.mxu0 0.0
  %756 = vmatpush1.xpose.msra.mxu0 0.0
  %757 = vmatprep.subr.mxu0 0.0
  %758 = vmatpush1.xpose.msra.mxu0 0.0
  %759 = vmatprep.subr.mxu0 0.0
  %760 = vmatpush1.xpose.msra.mxu0 0.0
  %761 = vmatprep.subr.mxu0 0.0
  %762 = vmatpush1.xpose.msra.mxu0 0.0
  %763 = vmatprep.subr.mxu0 0.0
  %764 = vmatpush1.xpose.msra.mxu0 0.0
  %765 = vmatprep.subr.mxu0 0.0
  %766 = vmatpush1.xpose.msra.mxu0 0.0
  %767 = vmatprep.subr.mxu0 0.0
  %768 = vmatpush1.xpose.msra.mxu0 0.0
  %769 = vmatprep.subr.mxu0 0.0
  %770 = vmatpush1.xpose.msra.mxu0 %v741
  %771 = vmatprep.subr.mxu0 0.0
  %772 = vmatpush1.xpose.msra.mxu0 %v738
  %773 = vmatprep.subr.mxu0 0.0
  %774 = vmatpush1.xpose.msra.mxu0 %v735
  %775 = vmatprep.subr.mxu0 0.0
  %776 = vmatpush2.xpose.msra.mxu0 0.0
  %777 = vmatprep.subr.mxu0 0.0
  %778 = vmatpush2.xpose.msra.mxu0 0.0
  %779 = vmatprep.subr.mxu0 0.0
  %780 = vmatpush2.xpose.msra.mxu0 0.0
  %781 = vmatprep.subr.mxu0 0.0
  %782 = vmatpush2.xpose.msra.mxu0 0.0
  %783 = vmatprep.subr.mxu0 0.0
  %784 = vmatpush2.xpose.msra.mxu0 0.0
  %785 = vmatprep.subr.mxu0 0.0
  %786 = vmatpush2.xpose.msra.mxu0 0.0
  %787 = vmatprep.subr.mxu0 0.0
  %788 = vmatpush2.xpose.msra.mxu0 0.0
  %789 = vmatprep.subr.mxu0 0.0
  %790 = vmatpush2.xpose.msra.mxu0 0.0
  %791 = vmatprep.subr.mxu0 0.0
  %792 = vmatpush2.xpose.msra.mxu0 0.0
  %793 = vmatprep.subr.mxu0 0.0
  %794 = vmatpush2.xpose.msra.mxu0 0.0
  %795 = vmatprep.subr.mxu0 0.0
  %796 = vmatpush2.xpose.msra.mxu0 0.0
  %797 = vmatprep.subr.mxu0 0.0
  %798 = vmatpush2.xpose.msra.mxu0 0.0
  %799 = vmatprep.subr.mxu0 0.0
  %800 = vmatpush2.xpose.msra.mxu0 0.0
  %801 = vmatprep.subr.mxu0 0.0
  %802 = vmatpush2.xpose.msra.mxu0 0.0
  %803 = vmatprep.subr.mxu0 0.0
  %804 = vmatpush2.xpose.msra.mxu0 0.0
  %805 = vmatprep.subr.mxu0 0.0
  %806 = vmatpush2.xpose.msra.mxu0 0.0
  %807 = vmatprep.mubr.f32.mxu0 0.0
  %808 = vmatmul.mubr.f32.gmra.mxu0 %v729
  %v809 = vpop.f32.mrf.mxu0
  %v810 = vadd.f32 0.0, %v809
  %v811 = vpop.f32.mrf.mxu0
  %812 = vmatprep.mubr.f32.mxu0 0.0
  %813 = vmatmul.mubr.f32.gmra.mxu0 %v732
  %v814 = vpop.f32.mrf.mxu0
  %v815 = vadd.f32 0.0, %v814
  %v816 = vpop.f32.mrf.mxu0
  %817 = vdwg.mxu0
  %v819 = vsel %vm367, %v337, 0
  %v822 = vsel %vm367, %v338, 0
  %v825 = vsel %vm367, %v358, 0
  %v828 = vsel %vm367, %v359, 0
  %v831 = vsel %vm367, %v360, 0
  %833 = vmatprep.subr.mxu0 0.0
  %834 = vmatpush1.xpose.msra.mxu0 0.0
  %835 = vmatprep.subr.mxu0 0.0
  %836 = vmatpush1.xpose.msra.mxu0 0.0
  %837 = vmatprep.subr.mxu0 0.0
  %838 = vmatpush1.xpose.msra.mxu0 0.0
  %839 = vmatprep.subr.mxu0 0.0
  %840 = vmatpush1.xpose.msra.mxu0 0.0
  %841 = vmatprep.subr.mxu0 0.0
  %842 = vmatpush1.xpose.msra.mxu0 0.0
  %843 = vmatprep.subr.mxu0 0.0
  %844 = vmatpush1.xpose.msra.mxu0 0.0
  %845 = vmatprep.subr.mxu0 0.0
  %846 = vmatpush1.xpose.msra.mxu0 0.0
  %847 = vmatprep.subr.mxu0 0.0
  %848 = vmatpush1.xpose.msra.mxu0 0.0
  %849 = vmatprep.subr.mxu0 0.0
  %850 = vmatpush1.xpose.msra.mxu0 0.0
  %851 = vmatprep.subr.mxu0 0.0
  %852 = vmatpush1.xpose.msra.mxu0 0.0
  %853 = vmatprep.subr.mxu0 0.0
  %854 = vmatpush1.xpose.msra.mxu0 0.0
  %855 = vmatprep.subr.mxu0 0.0
  %856 = vmatpush1.xpose.msra.mxu0 0.0
  %857 = vmatprep.subr.mxu0 0.0
  %858 = vmatpush1.xpose.msra.mxu0 0.0
  %859 = vmatprep.subr.mxu0 0.0
  %860 = vmatpush1.xpose.msra.mxu0 %v831
  %861 = vmatprep.subr.mxu0 0.0
  %862 = vmatpush1.xpose.msra.mxu0 %v828
  %863 = vmatprep.subr.mxu0 0.0
  %864 = vmatpush1.xpose.msra.mxu0 %v825
  %865 = vmatprep.subr.mxu0 0.0
  %866 = vmatpush2.xpose.msra.mxu0 0.0
  %867 = vmatprep.subr.mxu0 0.0
  %868 = vmatpush2.xpose.msra.mxu0 0.0
  %869 = vmatprep.subr.mxu0 0.0
  %870 = vmatpush2.xpose.msra.mxu0 0.0
  %871 = vmatprep.subr.mxu0 0.0
  %872 = vmatpush2.xpose.msra.mxu0 0.0
  %873 = vmatprep.subr.mxu0 0.0
  %874 = vmatpush2.xpose.msra.mxu0 0.0
  %875 = vmatprep.subr.mxu0 0.0
  %876 = vmatpush2.xpose.msra.mxu0 0.0
  %877 = vmatprep.subr.mxu0 0.0
  %878 = vmatpush2.xpose.msra.mxu0 0.0
  %879 = vmatprep.subr.mxu0 0.0
  %880 = vmatpush2.xpose.msra.mxu0 0.0
  %881 = vmatprep.subr.mxu0 0.0
  %882 = vmatpush2.xpose.msra.mxu0 0.0
  %883 = vmatprep.subr.mxu0 0.0
  %884 = vmatpush2.xpose.msra.mxu0 0.0
  %885 = vmatprep.subr.mxu0 0.0
  %886 = vmatpush2.xpose.msra.mxu0 0.0
  %887 = vmatprep.subr.mxu0 0.0
  %888 = vmatpush2.xpose.msra.mxu0 0.0
  %889 = vmatprep.subr.mxu0 0.0
  %890 = vmatpush2.xpose.msra.mxu0 0.0
  %891 = vmatprep.subr.mxu0 0.0
  %892 = vmatpush2.xpose.msra.mxu0 0.0
  %893 = vmatprep.subr.mxu0 0.0
  %894 = vmatpush2.xpose.msra.mxu0 0.0
  %895 = vmatprep.subr.mxu0 0.0
  %896 = vmatpush2.xpose.msra.mxu0 0.0
  %897 = vmatprep.mubr.f32.mxu0 0.0
  %898 = vmatmul.mubr.f32.gmra.mxu0 %v819
  %v899 = vpop.f32.mrf.mxu0
  %v900 = vadd.f32 0.0, %v899
  %v901 = vpop.f32.mrf.mxu0
  %902 = vmatprep.mubr.f32.mxu0 0.0
  %903 = vmatmul.mubr.f32.gmra.mxu0 %v822
  %v904 = vpop.f32.mrf.mxu0
  %v905 = vadd.f32 0.0, %v904
  %v906 = vpop.f32.mrf.mxu0
  %907 = vdwg.mxu0
  %v909 = vsel %vm367, %v339, 0
  %v912 = vsel %vm367, %v340, 0
  %v915 = vsel %vm367, %v361, 0
  %v918 = vsel %vm367, %v362, 0
  %v921 = vsel %vm367, %v363, 0
  %923 = vmatprep.subr.mxu0 0.0
  %924 = vmatpush1.xpose.msra.mxu0 0.0
  %925 = vmatprep.subr.mxu0 0.0
  %926 = vmatpush1.xpose.msra.mxu0 0.0
  %927 = vmatprep.subr.mxu0 0.0
  %928 = vmatpush1.xpose.msra.mxu0 0.0
  %929 = vmatprep.subr.mxu0 0.0
  %930 = vmatpush1.xpose.msra.mxu0 0.0
  %931 = vmatprep.subr.mxu0 0.0
  %932 = vmatpush1.xpose.msra.mxu0 0.0
  %933 = vmatprep.subr.mxu0 0.0
  %934 = vmatpush1.xpose.msra.mxu0 0.0
  %935 = vmatprep.subr.mxu0 0.0
  %936 = vmatpush1.xpose.msra.mxu0 0.0
  %937 = vmatprep.subr.mxu0 0.0
  %938 = vmatpush1.xpose.msra.mxu0 0.0
  %939 = vmatprep.subr.mxu0 0.0
  %940 = vmatpush1.xpose.msra.mxu0 0.0
  %941 = vmatprep.subr.mxu0 0.0
  %942 = vmatpush1.xpose.msra.mxu0 0.0
  %943 = vmatprep.subr.mxu0 0.0
  %944 = vmatpush1.xpose.msra.mxu0 0.0
  %945 = vmatprep.subr.mxu0 0.0
  %946 = vmatpush1.xpose.msra.mxu0 0.0
  %947 = vmatprep.subr.mxu0 0.0
  %948 = vmatpush1.xpose.msra.mxu0 0.0
  %949 = vmatprep.subr.mxu0 0.0
  %950 = vmatpush1.xpose.msra.mxu0 %v921
  %951 = vmatprep.subr.mxu0 0.0
  %952 = vmatpush1.xpose.msra.mxu0 %v918
  %953 = vmatprep.subr.mxu0 0.0
  %954 = vmatpush1.xpose.msra.mxu0 %v915
  %955 = vmatprep.subr.mxu0 0.0
  %956 = vmatpush2.xpose.msra.mxu0 0.0
  %957 = vmatprep.subr.mxu0 0.0
  %958 = vmatpush2.xpose.msra.mxu0 0.0
  %959 = vmatprep.subr.mxu0 0.0
  %960 = vmatpush2.xpose.msra.mxu0 0.0
  %961 = vmatprep.subr.mxu0 0.0
  %962 = vmatpush2.xpose.msra.mxu0 0.0
  %963 = vmatprep.subr.mxu0 0.0
  %964 = vmatpush2.xpose.msra.mxu0 0.0
  %965 = vmatprep.subr.mxu0 0.0
  %966 = vmatpush2.xpose.msra.mxu0 0.0
  %967 = vmatprep.subr.mxu0 0.0
  %968 = vmatpush2.xpose.msra.mxu0 0.0
  %969 = vmatprep.subr.mxu0 0.0
  %970 = vmatpush2.xpose.msra.mxu0 0.0
  %971 = vmatprep.subr.mxu0 0.0
  %972 = vmatpush2.xpose.msra.mxu0 0.0
  %973 = vmatprep.subr.mxu0 0.0
  %974 = vmatpush2.xpose.msra.mxu0 0.0
  %975 = vmatprep.subr.mxu0 0.0
  %976 = vmatpush2.xpose.msra.mxu0 0.0
  %977 = vmatprep.subr.mxu0 0.0
  %978 = vmatpush2.xpose.msra.mxu0 0.0
  %979 = vmatprep.subr.mxu0 0.0
  %980 = vmatpush2.xpose.msra.mxu0 0.0
  %981 = vmatprep.subr.mxu0 0.0
  %982 = vmatpush2.xpose.msra.mxu0 0.0
  %983 = vmatprep.subr.mxu0 0.0
  %984 = vmatpush2.xpose.msra.mxu0 0.0
  %985 = vmatprep.subr.mxu0 0.0
  %986 = vmatpush2.xpose.msra.mxu0 0.0
  %987 = vmatprep.mubr.f32.mxu0 0.0
  %988 = vmatmul.mubr.f32.gmra.mxu0 %v909
  %v989 = vpop.f32.mrf.mxu0
  %v990 = vadd.f32 0.0, %v989
  %v991 = vpop.f32.mrf.mxu0
  %992 = vmatprep.mubr.f32.mxu0 0.0
  %993 = vmatmul.mubr.f32.gmra.mxu0 %v912
  %v994 = vpop.f32.mrf.mxu0
  %v995 = vadd.f32 0.0, %v994
  %v996 = vpop.f32.mrf.mxu0
  %997 = vdwg.mxu0
  %v999 = vsel %vm367, %v341, 0
  %v1002 = vsel %vm367, %v342, 0
  %v1005 = vsel %vm367, %v364, 0
  %v1008 = vsel %vm367, %v365, 0
  %v1011 = vsel %vm367, %v366, 0
  %1013 = vmatprep.subr.mxu0 0.0
  %1014 = vmatpush1.xpose.msra.mxu0 0.0
  %1015 = vmatprep.subr.mxu0 0.0
  %1016 = vmatpush1.xpose.msra.mxu0 0.0
  %1017 = vmatprep.subr.mxu0 0.0
  %1018 = vmatpush1.xpose.msra.mxu0 0.0
  %1019 = vmatprep.subr.mxu0 0.0
  %1020 = vmatpush1.xpose.msra.mxu0 0.0
  %1021 = vmatprep.subr.mxu0 0.0
  %1022 = vmatpush1.xpose.msra.mxu0 0.0
  %1023 = vmatprep.subr.mxu0 0.0
  %1024 = vmatpush1.xpose.msra.mxu0 0.0
  %1025 = vmatprep.subr.mxu0 0.0
  %1026 = vmatpush1.xpose.msra.mxu0 0.0
  %1027 = vmatprep.subr.mxu0 0.0
  %1028 = vmatpush1.xpose.msra.mxu0 0.0
  %1029 = vmatprep.subr.mxu0 0.0
  %1030 = vmatpush1.xpose.msra.mxu0 0.0
  %1031 = vmatprep.subr.mxu0 0.0
  %1032 = vmatpush1.xpose.msra.mxu0 0.0
  %1033 = vmatprep.subr.mxu0 0.0
  %1034 = vmatpush1.xpose.msra.mxu0 0.0
  %1035 = vmatprep.subr.mxu0 0.0
  %1036 = vmatpush1.xpose.msra.mxu0 0.0
  %1037 = vmatprep.subr.mxu0 0.0
  %1038 = vmatpush1.xpose.msra.mxu0 0.0
  %1039 = vmatprep.subr.mxu0 0.0
  %1040 = vmatpush1.xpose.msra.mxu0 %v1011
  %1041 = vmatprep.subr.mxu0 0.0
  %1042 = vmatpush1.xpose.msra.mxu0 %v1008
  %1043 = vmatprep.subr.mxu0 0.0
  %1044 = vmatpush1.xpose.msra.mxu0 %v1005
  %1045 = vmatprep.subr.mxu0 0.0
  %1046 = vmatpush2.xpose.msra.mxu0 0.0
  %1047 = vmatprep.subr.mxu0 0.0
  %1048 = vmatpush2.xpose.msra.mxu0 0.0
  %1049 = vmatprep.subr.mxu0 0.0
  %1050 = vmatpush2.xpose.msra.mxu0 0.0
  %1051 = vmatprep.subr.mxu0 0.0
  %1052 = vmatpush2.xpose.msra.mxu0 0.0
  %1053 = vmatprep.subr.mxu0 0.0
  %1054 = vmatpush2.xpose.msra.mxu0 0.0
  %1055 = vmatprep.subr.mxu0 0.0
  %1056 = vmatpush2.xpose.msra.mxu0 0.0
  %1057 = vmatprep.subr.mxu0 0.0
  %1058 = vmatpush2.xpose.msra.mxu0 0.0
  %1059 = vmatprep.subr.mxu0 0.0
  %1060 = vmatpush2.xpose.msra.mxu0 0.0
  %1061 = vmatprep.subr.mxu0 0.0
  %1062 = vmatpush2.xpose.msra.mxu0 0.0
  %1063 = vmatprep.subr.mxu0 0.0
  %1064 = vmatpush2.xpose.msra.mxu0 0.0
  %1065 = vmatprep.subr.mxu0 0.0
  %1066 = vmatpush2.xpose.msra.mxu0 0.0
  %1067 = vmatprep.subr.mxu0 0.0
  %1068 = vmatpush2.xpose.msra.mxu0 0.0
  %1069 = vmatprep.subr.mxu0 0.0
  %1070 = vmatpush2.xpose.msra.mxu0 0.0
  %1071 = vmatprep.subr.mxu0 0.0
  %1072 = vmatpush2.xpose.msra.mxu0 0.0
  %1073 = vmatprep.subr.mxu0 0.0
  %1074 = vmatpush2.xpose.msra.mxu0 0.0
  %1075 = vmatprep.subr.mxu0 0.0
  %1076 = vmatpush2.xpose.msra.mxu0 0.0
  %1077 = vmatprep.mubr.f32.mxu0 0.0
  %1078 = vmatmul.mubr.f32.gmra.mxu0 %v999
  %v1079 = vpop.f32.mrf.mxu0
  %v1080 = vadd.f32 0.0, %v1079
  %v1081 = vpop.f32.mrf.mxu0
  %1082 = vmatprep.mubr.f32.mxu0 0.0
  %1083 = vmatmul.mubr.f32.gmra.mxu0 %v1002
  %v1084 = vpop.f32.mrf.mxu0
  %v1085 = vadd.f32 0.0, %v1084
  %v1086 = vpop.f32.mrf.mxu0
  %1087 = vdwg.mxu0
  %vm1088 = vcmask 162816
  %v1089 = vsel %vm1088, %v450, -inf
  %1090 = vmax.xlane.f32.xlu0 %v1089
  %v1091 = vpop.xlane.xlu0 %1090
  %vm1092 = vcmask 158720
  %v1093 = vsel %vm1092, %v455, -inf
  %1094 = vmax.xlane.f32.xlu0 %v1093
  %v1095 = vpop.xlane.xlu0 %1094
  %v1096 = vsel %vm1088, %v540, -inf
  %1097 = vmax.xlane.f32.xlu0 %v1096
  %v1098 = vpop.xlane.xlu0 %1097
  %v1099 = vsel %vm1092, %v545, -inf
  %1100 = vmax.xlane.f32.xlu0 %v1099
  %v1101 = vpop.xlane.xlu0 %1100
  %v1102 = vsel %vm1088, %v630, -inf
  %1103 = vmax.xlane.f32.xlu0 %v1102
  %v1104 = vpop.xlane.xlu0 %1103
  %v1105 = vsel %vm1092, %v635, -inf
  %1106 = vmax.xlane.f32.xlu0 %v1105
  %v1107 = vpop.xlane.xlu0 %1106
  %v1108 = vsel %vm1088, %v720, -inf
  %1109 = vmax.xlane.f32.xlu0 %v1108
  %v1110 = vpop.xlane.xlu0 %1109
  %v1111 = vsel %vm1092, %v725, -inf
  %1112 = vmax.xlane.f32.xlu0 %v1111
  %v1113 = vpop.xlane.xlu0 %1112
  %v1114 = vsel %vm1088, %v810, -inf
  %1115 = vmax.xlane.f32.xlu0 %v1114
  %v1116 = vpop.xlane.xlu0 %1115
  %v1117 = vsel %vm1092, %v815, -inf
  %1118 = vmax.xlane.f32.xlu0 %v1117
  %v1119 = vpop.xlane.xlu0 %1118
  %v1120 = vsel %vm1088, %v900, -inf
  %1121 = vmax.xlane.f32.xlu0 %v1120
  %v1122 = vpop.xlane.xlu0 %1121
  %v1123 = vsel %vm1092, %v905, -inf
  %1124 = vmax.xlane.f32.xlu0 %v1123
  %v1125 = vpop.xlane.xlu0 %1124
  %v1126 = vsel %vm1088, %v990, -inf
  %1127 = vmax.xlane.f32.xlu0 %v1126
  %v1128 = vpop.xlane.xlu0 %1127
  %v1129 = vsel %vm1092, %v995, -inf
  %1130 = vmax.xlane.f32.xlu0 %v1129
  %v1131 = vpop.xlane.xlu0 %1130
  %v1132 = vsel %vm1088, %v1080, -inf
  %1133 = vmax.xlane.f32.xlu0 %v1132
  %v1134 = vpop.xlane.xlu0 %1133
  %v1135 = vsel %vm1092, %v1085, -inf
  %1136 = vmax.xlane.f32.xlu0 %v1135
  %v1137 = vpop.xlane.xlu0 %1136
  %v1138 = vsub.f32 %v450, %v1091
  %v1139 = vsub.f32 %v455, %v1095
  %v1140 = vsub.f32 %v540, %v1098
  %v1141 = vsub.f32 %v545, %v1101
  %v1142 = vsub.f32 %v630, %v1104
  %v1143 = vsub.f32 %v635, %v1107
  %v1144 = vsub.f32 %v720, %v1110
  %v1145 = vsub.f32 %v725, %v1113
  %v1146 = vsub.f32 %v810, %v1116
  %v1147 = vsub.f32 %v815, %v1119
  %v1148 = vsub.f32 %v900, %v1122
  %v1149 = vsub.f32 %v905, %v1125
  %v1150 = vsub.f32 %v990, %v1128
  %v1151 = vsub.f32 %v995, %v1131
  %v1152 = vsub.f32 %v1080, %v1134
  %v1153 = vsub.f32 %v1085, %v1137
  %v1154 = vmul.f32 %v1138, 1.442695
  %v1155 = vpow.pop %v1154
  %v1156 = vmul.f32 %v1139, 1.442695
  %v1157 = vpow.pop %v1156
  %v1158 = vmul.f32 %v1140, 1.442695
  %v1159 = vpow.pop %v1158
  %v1160 = vmul.f32 %v1141, 1.442695
  %v1161 = vpow.pop %v1160
  %v1162 = vmul.f32 %v1142, 1.442695
  %v1163 = vpow.pop %v1162
  %v1164 = vmul.f32 %v1143, 1.442695
  %v1165 = vpow.pop %v1164
  %v1166 = vmul.f32 %v1144, 1.442695
  %v1167 = vpow.pop %v1166
  %v1168 = vmul.f32 %v1145, 1.442695
  %v1169 = vpow.pop %v1168
  %v1170 = vmul.f32 %v1146, 1.442695
  %v1171 = vpow.pop %v1170
  %v1172 = vmul.f32 %v1147, 1.442695
  %v1173 = vpow.pop %v1172
  %v1174 = vmul.f32 %v1148, 1.442695
  %v1175 = vpow.pop %v1174
  %v1176 = vmul.f32 %v1149, 1.442695
  %v1177 = vpow.pop %v1176
  %v1178 = vmul.f32 %v1150, 1.442695
  %v1179 = vpow.pop %v1178
  %v1180 = vmul.f32 %v1151, 1.442695
  %v1181 = vpow.pop %v1180
  %v1182 = vmul.f32 %v1152, 1.442695
  %v1183 = vpow.pop %v1182
  %v1184 = vmul.f32 %v1153, 1.442695
  %v1185 = vpow.pop %v1184
  %v1186 = vsel %vm1088, %v1155, 0.0
  %1187 = vadd.xlane.f32.xlu0 %v1186
  %v1188 = vpop.xlane.xlu0 %1187
  %v1189 = vsel %vm1092, %v1157, 0.0
  %1190 = vadd.xlane.f32.xlu0 %v1189
  %v1191 = vpop.xlane.xlu0 %1190
  %v1192 = vsel %vm1088, %v1159, 0.0
  %1193 = vadd.xlane.f32.xlu0 %v1192
  %v1194 = vpop.xlane.xlu0 %1193
  %v1195 = vsel %vm1092, %v1161, 0.0
  %1196 = vadd.xlane.f32.xlu0 %v1195
  %v1197 = vpop.xlane.xlu0 %1196
  %v1198 = vsel %vm1088, %v1163, 0.0
  %1199 = vadd.xlane.f32.xlu0 %v1198
  %v1200 = vpop.xlane.xlu0 %1199
  %v1201 = vsel %vm1092, %v1165, 0.0
  %1202 = vadd.xlane.f32.xlu0 %v1201
  %v1203 = vpop.xlane.xlu0 %1202
  %v1204 = vsel %vm1088, %v1167, 0.0
  %1205 = vadd.xlane.f32.xlu0 %v1204
  %v1206 = vpop.xlane.xlu0 %1205
  %v1207 = vsel %vm1092, %v1169, 0.0
  %1208 = vadd.xlane.f32.xlu0 %v1207
  %v1209 = vpop.xlane.xlu0 %1208
  %v1210 = vsel %vm1088, %v1171, 0.0
  %1211 = vadd.xlane.f32.xlu0 %v1210
  %v1212 = vpop.xlane.xlu0 %1211
  %v1213 = vsel %vm1092, %v1173, 0.0
  %1214 = vadd.xlane.f32.xlu0 %v1213
  %v1215 = vpop.xlane.xlu0 %1214
  %v1216 = vsel %vm1088, %v1175, 0.0
  %1217 = vadd.xlane.f32.xlu0 %v1216
  %v1218 = vpop.xlane.xlu0 %1217
  %v1219 = vsel %vm1092, %v1177, 0.0
  %1220 = vadd.xlane.f32.xlu0 %v1219
  %v1221 = vpop.xlane.xlu0 %1220
  %v1222 = vsel %vm1088, %v1179, 0.0
  %1223 = vadd.xlane.f32.xlu0 %v1222
  %v1224 = vpop.xlane.xlu0 %1223
  %v1225 = vsel %vm1092, %v1181, 0.0
  %1226 = vadd.xlane.f32.xlu0 %v1225
  %v1227 = vpop.xlane.xlu0 %1226
  %v1228 = vsel %vm1088, %v1183, 0.0
  %1229 = vadd.xlane.f32.xlu0 %v1228
  %v1230 = vpop.xlane.xlu0 %1229
  %v1231 = vsel %vm1092, %v1185, 0.0
  %1232 = vadd.xlane.f32.xlu0 %v1231
  %v1233 = vpop.xlane.xlu0 %1232
  %v1234 = vrcp.pop %v1188
  %v1235 = vrcp.pop %v1191
  %v1236 = vrcp.pop %v1194
  %v1237 = vrcp.pop %v1197
  %v1238 = vrcp.pop %v1200
  %v1239 = vrcp.pop %v1203
  %v1240 = vrcp.pop %v1206
  %v1241 = vrcp.pop %v1209
  %v1242 = vrcp.pop %v1212
  %v1243 = vrcp.pop %v1215
  %v1244 = vrcp.pop %v1218
  %v1245 = vrcp.pop %v1221
  %v1246 = vrcp.pop %v1224
  %v1247 = vrcp.pop %v1227
  %v1248 = vrcp.pop %v1230
  %v1249 = vrcp.pop %v1233
  %v1250 = vmul.f32 %v1155, %v1234
  %v1251 = vmul.f32 %v1157, %v1235
  %v1252 = vmul.f32 %v1159, %v1236
  %v1253 = vmul.f32 %v1161, %v1237
  %v1254 = vmul.f32 %v1163, %v1238
  %v1255 = vmul.f32 %v1165, %v1239
  %v1256 = vmul.f32 %v1167, %v1240
  %v1257 = vmul.f32 %v1169, %v1241
  %v1258 = vmul.f32 %v1171, %v1242
  %v1259 = vmul.f32 %v1173, %v1243
  %v1260 = vmul.f32 %v1175, %v1244
  %v1261 = vmul.f32 %v1177, %v1245
  %v1262 = vmul.f32 %v1179, %v1246
  %v1263 = vmul.f32 %v1181, %v1247
  %v1264 = vmul.f32 %v1183, %v1248
  %v1265 = vmul.f32 %v1185, %v1249
  %v1267 = vsel %vm1088, %v1250, 0
  %v1270 = vsel %vm1088, %v1251, 0
  %vm1272 = vcmask 1043456
  %v1273 = vsel %vm1272, %v345, 0
  %1275 = vmatprep.subr.mxu0 0.0
  %1276 = vmatpush1.msra.mxu0 0.0
  %1277 = vmatprep.subr.mxu0 0.0
  %1278 = vmatpush1.msra.mxu0 0.0
  %1279 = vmatprep.subr.mxu0 0.0
  %1280 = vmatpush1.msra.mxu0 0.0
  %1281 = vmatprep.subr.mxu0 0.0
  %1282 = vmatpush1.msra.mxu0 0.0
  %1283 = vmatprep.subr.mxu0 0.0
  %1284 = vmatpush1.msra.mxu0 0.0
  %1285 = vmatprep.subr.mxu0 0.0
  %1286 = vmatpush1.msra.mxu0 0.0
  %1287 = vmatprep.subr.mxu0 0.0
  %1288 = vmatpush1.msra.mxu0 0.0
  %1289 = vmatprep.subr.mxu0 0.0
  %1290 = vmatpush1.msra.mxu0 0.0
  %1291 = vmatprep.subr.mxu0 0.0
  %1292 = vmatpush1.msra.mxu0 0.0
  %1293 = vmatprep.subr.mxu0 0.0
  %1294 = vmatpush1.msra.mxu0 0.0
  %1295 = vmatprep.subr.mxu0 0.0
  %1296 = vmatpush1.msra.mxu0 0.0
  %1297 = vmatprep.subr.mxu0 0.0
  %1298 = vmatpush1.msra.mxu0 0.0
  %1299 = vmatprep.subr.mxu0 0.0
  %1300 = vmatpush1.msra.mxu0 0.0
  %1301 = vmatprep.subr.mxu0 0.0
  %1302 = vmatpush1.msra.mxu0 %v1273
  %1303 = vmatprep.subr.mxu0 0.0
  %1304 = vmatpush1.msra.mxu0 %v344
  %1305 = vmatprep.subr.mxu0 0.0
  %1306 = vmatpush1.msra.mxu0 %v343
  %1307 = vmatprep.subr.mxu0 0.0
  %1308 = vmatpush2.msra.mxu0 0.0
  %1309 = vmatprep.subr.mxu0 0.0
  %1310 = vmatpush2.msra.mxu0 0.0
  %1311 = vmatprep.subr.mxu0 0.0
  %1312 = vmatpush2.msra.mxu0 0.0
  %1313 = vmatprep.subr.mxu0 0.0
  %1314 = vmatpush2.msra.mxu0 0.0
  %1315 = vmatprep.subr.mxu0 0.0
  %1316 = vmatpush2.msra.mxu0 0.0
  %1317 = vmatprep.subr.mxu0 0.0
  %1318 = vmatpush2.msra.mxu0 0.0
  %1319 = vmatprep.subr.mxu0 0.0
  %1320 = vmatpush2.msra.mxu0 0.0
  %1321 = vmatprep.subr.mxu0 0.0
  %1322 = vmatpush2.msra.mxu0 0.0
  %1323 = vmatprep.subr.mxu0 0.0
  %1324 = vmatpush2.msra.mxu0 0.0
  %1325 = vmatprep.subr.mxu0 0.0
  %1326 = vmatpush2.msra.mxu0 0.0
  %1327 = vmatprep.subr.mxu0 0.0
  %1328 = vmatpush2.msra.mxu0 0.0
  %1329 = vmatprep.subr.mxu0 0.0
  %1330 = vmatpush2.msra.mxu0 0.0
  %1331 = vmatprep.subr.mxu0 0.0
  %1332 = vmatpush2.msra.mxu0 0.0
  %1333 = vmatprep.subr.mxu0 0.0
  %1334 = vmatpush2.msra.mxu0 0.0
  %1335 = vmatprep.subr.mxu0 0.0
  %1336 = vmatpush2.msra.mxu0 0.0
  %1337 = vmatprep.subr.mxu0 0.0
  %1338 = vmatpush2.msra.mxu0 0.0
  %1339 = vmatprep.mubr.f32.mxu0 0.0
  %1340 = vmatmul.mubr.f32.gmra.mxu0 %v1267
  %v1341 = vpop.f32.mrf.mxu0
  %v1342 = vadd.f32 0.0, %v1341
  %v1343 = vpop.f32.mrf.mxu0
  %1344 = vmatprep.mubr.f32.mxu0 0.0
  %1345 = vmatmul.mubr.f32.gmra.mxu0 %v1270
  %v1346 = vpop.f32.mrf.mxu0
  %v1347 = vadd.f32 0.0, %v1346
  %v1348 = vpop.f32.mrf.mxu0
  %1349 = vdwg.mxu0
  %v1351 = vsel %vm1088, %v1252, 0
  %v1354 = vsel %vm1088, %v1253, 0
  %v1356 = vsel %vm1272, %v348, 0
  %1358 = vmatprep.subr.mxu0 0.0
  %1359 = vmatpush1.msra.mxu0 0.0
  %1360 = vmatprep.subr.mxu0 0.0
  %1361 = vmatpush1.msra.mxu0 0.0
  %1362 = vmatprep.subr.mxu0 0.0
  %1363 = vmatpush1.msra.mxu0 0.0
  %1364 = vmatprep.subr.mxu0 0.0
  %1365 = vmatpush1.msra.mxu0 0.0
  %1366 = vmatprep.subr.mxu0 0.0
  %1367 = vmatpush1.msra.mxu0 0.0
  %1368 = vmatprep.subr.mxu0 0.0
  %1369 = vmatpush1.msra.mxu0 0.0
  %1370 = vmatprep.subr.mxu0 0.0
  %1371 = vmatpush1.msra.mxu0 0.0
  %1372 = vmatprep.subr.mxu0 0.0
  %1373 = vmatpush1.msra.mxu0 0.0
  %1374 = vmatprep.subr.mxu0 0.0
  %1375 = vmatpush1.msra.mxu0 0.0
  %1376 = vmatprep.subr.mxu0 0.0
  %1377 = vmatpush1.msra.mxu0 0.0
  %1378 = vmatprep.subr.mxu0 0.0
  %1379 = vmatpush1.msra.mxu0 0.0
  %1380 = vmatprep.subr.mxu0 0.0
  %1381 = vmatpush1.msra.mxu0 0.0
  %1382 = vmatprep.subr.mxu0 0.0
  %1383 = vmatpush1.msra.mxu0 0.0
  %1384 = vmatprep.subr.mxu0 0.0
  %1385 = vmatpush1.msra.mxu0 %v1356
  %1386 = vmatprep.subr.mxu0 0.0
  %1387 = vmatpush1.msra.mxu0 %v347
  %1388 = vmatprep.subr.mxu0 0.0
  %1389 = vmatpush1.msra.mxu0 %v346
  %1390 = vmatprep.subr.mxu0 0.0
  %1391 = vmatpush2.msra.mxu0 0.0
  %1392 = vmatprep.subr.mxu0 0.0
  %1393 = vmatpush2.msra.mxu0 0.0
  %1394 = vmatprep.subr.mxu0 0.0
  %1395 = vmatpush2.msra.mxu0 0.0
  %1396 = vmatprep.subr.mxu0 0.0
  %1397 = vmatpush2.msra.mxu0 0.0
  %1398 = vmatprep.subr.mxu0 0.0
  %1399 = vmatpush2.msra.mxu0 0.0
  %1400 = vmatprep.subr.mxu0 0.0
  %1401 = vmatpush2.msra.mxu0 0.0
  %1402 = vmatprep.subr.mxu0 0.0
  %1403 = vmatpush2.msra.mxu0 0.0
  %1404 = vmatprep.subr.mxu0 0.0
  %1405 = vmatpush2.msra.mxu0 0.0
  %1406 = vmatprep.subr.mxu0 0.0
  %1407 = vmatpush2.msra.mxu0 0.0
  %1408 = vmatprep.subr.mxu0 0.0
  %1409 = vmatpush2.msra.mxu0 0.0
  %1410 = vmatprep.subr.mxu0 0.0
  %1411 = vmatpush2.msra.mxu0 0.0
  %1412 = vmatprep.subr.mxu0 0.0
  %1413 = vmatpush2.msra.mxu0 0.0
  %1414 = vmatprep.subr.mxu0 0.0
  %1415 = vmatpush2.msra.mxu0 0.0
  %1416 = vmatprep.subr.mxu0 0.0
  %1417 = vmatpush2.msra.mxu0 0.0
  %1418 = vmatprep.subr.mxu0 0.0
  %1419 = vmatpush2.msra.mxu0 0.0
  %1420 = vmatprep.subr.mxu0 0.0
  %1421 = vmatpush2.msra.mxu0 0.0
  %1422 = vmatprep.mubr.f32.mxu0 0.0
  %1423 = vmatmul.mubr.f32.gmra.mxu0 %v1351
  %v1424 = vpop.f32.mrf.mxu0
  %v1425 = vadd.f32 0.0, %v1424
  %v1426 = vpop.f32.mrf.mxu0
  %1427 = vmatprep.mubr.f32.mxu0 0.0
  %1428 = vmatmul.mubr.f32.gmra.mxu0 %v1354
  %v1429 = vpop.f32.mrf.mxu0
  %v1430 = vadd.f32 0.0, %v1429
  %v1431 = vpop.f32.mrf.mxu0
  %1432 = vdwg.mxu0
  %v1434 = vsel %vm1088, %v1254, 0
  %v1437 = vsel %vm1088, %v1255, 0
  %v1439 = vsel %vm1272, %v351, 0
  %1441 = vmatprep.subr.mxu0 0.0
  %1442 = vmatpush1.msra.mxu0 0.0
  %1443 = vmatprep.subr.mxu0 0.0
  %1444 = vmatpush1.msra.mxu0 0.0
  %1445 = vmatprep.subr.mxu0 0.0
  %1446 = vmatpush1.msra.mxu0 0.0
  %1447 = vmatprep.subr.mxu0 0.0
  %1448 = vmatpush1.msra.mxu0 0.0
  %1449 = vmatprep.subr.mxu0 0.0
  %1450 = vmatpush1.msra.mxu0 0.0
  %1451 = vmatprep.subr.mxu0 0.0
  %1452 = vmatpush1.msra.mxu0 0.0
  %1453 = vmatprep.subr.mxu0 0.0
  %1454 = vmatpush1.msra.mxu0 0.0
  %1455 = vmatprep.subr.mxu0 0.0
  %1456 = vmatpush1.msra.mxu0 0.0
  %1457 = vmatprep.subr.mxu0 0.0
  %1458 = vmatpush1.msra.mxu0 0.0
  %1459 = vmatprep.subr.mxu0 0.0
  %1460 = vmatpush1.msra.mxu0 0.0
  %1461 = vmatprep.subr.mxu0 0.0
  %1462 = vmatpush1.msra.mxu0 0.0
  %1463 = vmatprep.subr.mxu0 0.0
  %1464 = vmatpush1.msra.mxu0 0.0
  %1465 = vmatprep.subr.mxu0 0.0
  %1466 = vmatpush1.msra.mxu0 0.0
  %1467 = vmatprep.subr.mxu0 0.0
  %1468 = vmatpush1.msra.mxu0 %v1439
  %1469 = vmatprep.subr.mxu0 0.0
  %1470 = vmatpush1.msra.mxu0 %v350
  %1471 = vmatprep.subr.mxu0 0.0
  %1472 = vmatpush1.msra.mxu0 %v349
  %1473 = vmatprep.subr.mxu0 0.0
  %1474 = vmatpush2.msra.mxu0 0.0
  %1475 = vmatprep.subr.mxu0 0.0
  %1476 = vmatpush2.msra.mxu0 0.0
  %1477 = vmatprep.subr.mxu0 0.0
  %1478 = vmatpush2.msra.mxu0 0.0
  %1479 = vmatprep.subr.mxu0 0.0
  %1480 = vmatpush2.msra.mxu0 0.0
  %1481 = vmatprep.subr.mxu0 0.0
  %1482 = vmatpush2.msra.mxu0 0.0
  %1483 = vmatprep.subr.mxu0 0.0
  %1484 = vmatpush2.msra.mxu0 0.0
  %1485 = vmatprep.subr.mxu0 0.0
  %1486 = vmatpush2.msra.mxu0 0.0
  %1487 = vmatprep.subr.mxu0 0.0
  %1488 = vmatpush2.msra.mxu0 0.0
  %1489 = vmatprep.subr.mxu0 0.0
  %1490 = vmatpush2.msra.mxu0 0.0
  %1491 = vmatprep.subr.mxu0 0.0
  %1492 = vmatpush2.msra.mxu0 0.0
  %1493 = vmatprep.subr.mxu0 0.0
  %1494 = vmatpush2.msra.mxu0 0.0
  %1495 = vmatprep.subr.mxu0 0.0
  %1496 = vmatpush2.msra.mxu0 0.0
  %1497 = vmatprep.subr.mxu0 0.0
  %1498 = vmatpush2.msra.mxu0 0.0
  %1499 = vmatprep.subr.mxu0 0.0
  %1500 = vmatpush2.msra.mxu0 0.0
  %1501 = vmatprep.subr.mxu0 0.0
  %1502 = vmatpush2.msra.mxu0 0.0
  %1503 = vmatprep.subr.mxu0 0.0
  %1504 = vmatpush2.msra.mxu0 0.0
  %1505 = vmatprep.mubr.f32.mxu0 0.0
  %1506 = vmatmul.mubr.f32.gmra.mxu0 %v1434
  %v1507 = vpop.f32.mrf.mxu0
  %v1508 = vadd.f32 0.0, %v1507
  %v1509 = vpop.f32.mrf.mxu0
  %1510 = vmatprep.mubr.f32.mxu0 0.0
  %1511 = vmatmul.mubr.f32.gmra.mxu0 %v1437
  %v1512 = vpop.f32.mrf.mxu0
  %v1513 = vadd.f32 0.0, %v1512
  %v1514 = vpop.f32.mrf.mxu0
  %1515 = vdwg.mxu0
  %v1517 = vsel %vm1088, %v1256, 0
  %v1520 = vsel %vm1088, %v1257, 0
  %v1522 = vsel %vm1272, %v354, 0
  %1524 = vmatprep.subr.mxu0 0.0
  %1525 = vmatpush1.msra.mxu0 0.0
  %1526 = vmatprep.subr.mxu0 0.0
  %1527 = vmatpush1.msra.mxu0 0.0
  %1528 = vmatprep.subr.mxu0 0.0
  %1529 = vmatpush1.msra.mxu0 0.0
  %1530 = vmatprep.subr.mxu0 0.0
  %1531 = vmatpush1.msra.mxu0 0.0
  %1532 = vmatprep.subr.mxu0 0.0
  %1533 = vmatpush1.msra.mxu0 0.0
  %1534 = vmatprep.subr.mxu0 0.0
  %1535 = vmatpush1.msra.mxu0 0.0
  %1536 = vmatprep.subr.mxu0 0.0
  %1537 = vmatpush1.msra.mxu0 0.0
  %1538 = vmatprep.subr.mxu0 0.0
  %1539 = vmatpush1.msra.mxu0 0.0
  %1540 = vmatprep.subr.mxu0 0.0
  %1541 = vmatpush1.msra.mxu0 0.0
  %1542 = vmatprep.subr.mxu0 0.0
  %1543 = vmatpush1.msra.mxu0 0.0
  %1544 = vmatprep.subr.mxu0 0.0
  %1545 = vmatpush1.msra.mxu0 0.0
  %1546 = vmatprep.subr.mxu0 0.0
  %1547 = vmatpush1.msra.mxu0 0.0
  %1548 = vmatprep.subr.mxu0 0.0
  %1549 = vmatpush1.msra.mxu0 0.0
  %1550 = vmatprep.subr.mxu0 0.0
  %1551 = vmatpush1.msra.mxu0 %v1522
  %1552 = vmatprep.subr.mxu0 0.0
  %1553 = vmatpush1.msra.mxu0 %v353
  %1554 = vmatprep.subr.mxu0 0.0
  %1555 = vmatpush1.msra.mxu0 %v352
  %1556 = vmatprep.subr.mxu0 0.0
  %1557 = vmatpush2.msra.mxu0 0.0
  %1558 = vmatprep.subr.mxu0 0.0
  %1559 = vmatpush2.msra.mxu0 0.0
  %1560 = vmatprep.subr.mxu0 0.0
  %1561 = vmatpush2.msra.mxu0 0.0
  %1562 = vmatprep.subr.mxu0 0.0
  %1563 = vmatpush2.msra.mxu0 0.0
  %1564 = vmatprep.subr.mxu0 0.0
  %1565 = vmatpush2.msra.mxu0 0.0
  %1566 = vmatprep.subr.mxu0 0.0
  %1567 = vmatpush2.msra.mxu0 0.0
  %1568 = vmatprep.subr.mxu0 0.0
  %1569 = vmatpush2.msra.mxu0 0.0
  %1570 = vmatprep.subr.mxu0 0.0
  %1571 = vmatpush2.msra.mxu0 0.0
  %1572 = vmatprep.subr.mxu0 0.0
  %1573 = vmatpush2.msra.mxu0 0.0
  %1574 = vmatprep.subr.mxu0 0.0
  %1575 = vmatpush2.msra.mxu0 0.0
  %1576 = vmatprep.subr.mxu0 0.0
  %1577 = vmatpush2.msra.mxu0 0.0
  %1578 = vmatprep.subr.mxu0 0.0
  %1579 = vmatpush2.msra.mxu0 0.0
  %1580 = vmatprep.subr.mxu0 0.0
  %1581 = vmatpush2.msra.mxu0 0.0
  %1582 = vmatprep.subr.mxu0 0.0
  %1583 = vmatpush2.msra.mxu0 0.0
  %1584 = vmatprep.subr.mxu0 0.0
  %1585 = vmatpush2.msra.mxu0 0.0
  %1586 = vmatprep.subr.mxu0 0.0
  %1587 = vmatpush2.msra.mxu0 0.0
  %1588 = vmatprep.mubr.f32.mxu0 0.0
  %1589 = vmatmul.mubr.f32.gmra.mxu0 %v1517
  %v1590 = vpop.f32.mrf.mxu0
  %v1591 = vadd.f32 0.0, %v1590
  %v1592 = vpop.f32.mrf.mxu0
  %1593 = vmatprep.mubr.f32.mxu0 0.0
  %1594 = vmatmul.mubr.f32.gmra.mxu0 %v1520
  %v1595 = vpop.f32.mrf.mxu0
  %v1596 = vadd.f32 0.0, %v1595
  %v1597 = vpop.f32.mrf.mxu0
  %1598 = vdwg.mxu0
  %v1600 = vsel %vm1088, %v1258, 0
  %v1603 = vsel %vm1088, %v1259, 0
  %v1605 = vsel %vm1272, %v357, 0
  %1607 = vmatprep.subr.mxu0 0.0
  %1608 = vmatpush1.msra.mxu0 0.0
  %1609 = vmatprep.subr.mxu0 0.0
  %1610 = vmatpush1.msra.mxu0 0.0
  %1611 = vmatprep.subr.mxu0 0.0
  %1612 = vmatpush1.msra.mxu0 0.0
  %1613 = vmatprep.subr.mxu0 0.0
  %1614 = vmatpush1.msra.mxu0 0.0
  %1615 = vmatprep.subr.mxu0 0.0
  %1616 = vmatpush1.msra.mxu0 0.0
  %1617 = vmatprep.subr.mxu0 0.0
  %1618 = vmatpush1.msra.mxu0 0.0
  %1619 = vmatprep.subr.mxu0 0.0
  %1620 = vmatpush1.msra.mxu0 0.0
  %1621 = vmatprep.subr.mxu0 0.0
  %1622 = vmatpush1.msra.mxu0 0.0
  %1623 = vmatprep.subr.mxu0 0.0
  %1624 = vmatpush1.msra.mxu0 0.0
  %1625 = vmatprep.subr.mxu0 0.0
  %1626 = vmatpush1.msra.mxu0 0.0
  %1627 = vmatprep.subr.mxu0 0.0
  %1628 = vmatpush1.msra.mxu0 0.0
  %1629 = vmatprep.subr.mxu0 0.0
  %1630 = vmatpush1.msra.mxu0 0.0
  %1631 = vmatprep.subr.mxu0 0.0
  %1632 = vmatpush1.msra.mxu0 0.0
  %1633 = vmatprep.subr.mxu0 0.0
  %1634 = vmatpush1.msra.mxu0 %v1605
  %1635 = vmatprep.subr.mxu0 0.0
  %1636 = vmatpush1.msra.mxu0 %v356
  %1637 = vmatprep.subr.mxu0 0.0
  %1638 = vmatpush1.msra.mxu0 %v355
  %1639 = vmatprep.subr.mxu0 0.0
  %1640 = vmatpush2.msra.mxu0 0.0
  %1641 = vmatprep.subr.mxu0 0.0
  %1642 = vmatpush2.msra.mxu0 0.0
  %1643 = vmatprep.subr.mxu0 0.0
  %1644 = vmatpush2.msra.mxu0 0.0
  %1645 = vmatprep.subr.mxu0 0.0
  %1646 = vmatpush2.msra.mxu0 0.0
  %1647 = vmatprep.subr.mxu0 0.0
  %1648 = vmatpush2.msra.mxu0 0.0
  %1649 = vmatprep.subr.mxu0 0.0
  %1650 = vmatpush2.msra.mxu0 0.0
  %1651 = vmatprep.subr.mxu0 0.0
  %1652 = vmatpush2.msra.mxu0 0.0
  %1653 = vmatprep.subr.mxu0 0.0
  %1654 = vmatpush2.msra.mxu0 0.0
  %1655 = vmatprep.subr.mxu0 0.0
  %1656 = vmatpush2.msra.mxu0 0.0
  %1657 = vmatprep.subr.mxu0 0.0
  %1658 = vmatpush2.msra.mxu0 0.0
  %1659 = vmatprep.subr.mxu0 0.0
  %1660 = vmatpush2.msra.mxu0 0.0
  %1661 = vmatprep.subr.mxu0 0.0
  %1662 = vmatpush2.msra.mxu0 0.0
  %1663 = vmatprep.subr.mxu0 0.0
  %1664 = vmatpush2.msra.mxu0 0.0
  %1665 = vmatprep.subr.mxu0 0.0
  %1666 = vmatpush2.msra.mxu0 0.0
  %1667 = vmatprep.subr.mxu0 0.0
  %1668 = vmatpush2.msra.mxu0 0.0
  %1669 = vmatprep.subr.mxu0 0.0
  %1670 = vmatpush2.msra.mxu0 0.0
  %1671 = vmatprep.mubr.f32.mxu0 0.0
  %1672 = vmatmul.mubr.f32.gmra.mxu0 %v1600
  %v1673 = vpop.f32.mrf.mxu0
  %v1674 = vadd.f32 0.0, %v1673
  %v1675 = vpop.f32.mrf.mxu0
  %1676 = vmatprep.mubr.f32.mxu0 0.0
  %1677 = vmatmul.mubr.f32.gmra.mxu0 %v1603
  %v1678 = vpop.f32.mrf.mxu0
  %v1679 = vadd.f32 0.0, %v1678
  %v1680 = vpop.f32.mrf.mxu0
  %1681 = vdwg.mxu0
  %v1683 = vsel %vm1088, %v1260, 0
  %v1686 = vsel %vm1088, %v1261, 0
  %v1688 = vsel %vm1272, %v360, 0
  %1690 = vmatprep.subr.mxu0 0.0
  %1691 = vmatpush1.msra.mxu0 0.0
  %1692 = vmatprep.subr.mxu0 0.0
  %1693 = vmatpush1.msra.mxu0 0.0
  %1694 = vmatprep.subr.mxu0 0.0
  %1695 = vmatpush1.msra.mxu0 0.0
  %1696 = vmatprep.subr.mxu0 0.0
  %1697 = vmatpush1.msra.mxu0 0.0
  %1698 = vmatprep.subr.mxu0 0.0
  %1699 = vmatpush1.msra.mxu0 0.0
  %1700 = vmatprep.subr.mxu0 0.0
  %1701 = vmatpush1.msra.mxu0 0.0
  %1702 = vmatprep.subr.mxu0 0.0
  %1703 = vmatpush1.msra.mxu0 0.0
  %1704 = vmatprep.subr.mxu0 0.0
  %1705 = vmatpush1.msra.mxu0 0.0
  %1706 = vmatprep.subr.mxu0 0.0
  %1707 = vmatpush1.msra.mxu0 0.0
  %1708 = vmatprep.subr.mxu0 0.0
  %1709 = vmatpush1.msra.mxu0 0.0
  %1710 = vmatprep.subr.mxu0 0.0
  %1711 = vmatpush1.msra.mxu0 0.0
  %1712 = vmatprep.subr.mxu0 0.0
  %1713 = vmatpush1.msra.mxu0 0.0
  %1714 = vmatprep.subr.mxu0 0.0
  %1715 = vmatpush1.msra.mxu0 0.0
  %1716 = vmatprep.subr.mxu0 0.0
  %1717 = vmatpush1.msra.mxu0 %v1688
  %1718 = vmatprep.subr.mxu0 0.0
  %1719 = vmatpush1.msra.mxu0 %v359
  %1720 = vmatprep.subr.mxu0 0.0
  %1721 = vmatpush1.msra.mxu0 %v358
  %1722 = vmatprep.subr.mxu0 0.0
  %1723 = vmatpush2.msra.mxu0 0.0
  %1724 = vmatprep.subr.mxu0 0.0
  %1725 = vmatpush2.msra.mxu0 0.0
  %1726 = vmatprep.subr.mxu0 0.0
  %1727 = vmatpush2.msra.mxu0 0.0
  %1728 = vmatprep.subr.mxu0 0.0
  %1729 = vmatpush2.msra.mxu0 0.0
  %1730 = vmatprep.subr.mxu0 0.0
  %1731 = vmatpush2.msra.mxu0 0.0
  %1732 = vmatprep.subr.mxu0 0.0
  %1733 = vmatpush2.msra.mxu0 0.0
  %1734 = vmatprep.subr.mxu0 0.0
  %1735 = vmatpush2.msra.mxu0 0.0
  %1736 = vmatprep.subr.mxu0 0.0
  %1737 = vmatpush2.msra.mxu0 0.0
  %1738 = vmatprep.subr.mxu0 0.0
  %1739 = vmatpush2.msra.mxu0 0.0
  %1740 = vmatprep.subr.mxu0 0.0
  %1741 = vmatpush2.msra.mxu0 0.0
  %1742 = vmatprep.subr.mxu0 0.0
  %1743 = vmatpush2.msra.mxu0 0.0
  %1744 = vmatprep.subr.mxu0 0.0
  %1745 = vmatpush2.msra.mxu0 0.0
  %1746 = vmatprep.subr.mxu0 0.0
  %1747 = vmatpush2.msra.mxu0 0.0
  %1748 = vmatprep.subr.mxu0 0.0
  %1749 = vmatpush2.msra.mxu0 0.0
  %1750 = vmatprep.subr.mxu0 0.0
  %1751 = vmatpush2.msra.mxu0 0.0
  %1752 = vmatprep.subr.mxu0 0.0
  %1753 = vmatpush2.msra.mxu0 0.0
  %1754 = vmatprep.mubr.f32.mxu0 0.0
  %1755 = vmatmul.mubr.f32.gmra.mxu0 %v1683
  %v1756 = vpop.f32.mrf.mxu0
  %v1757 = vadd.f32 0.0, %v1756
  %v1758 = vpop.f32.mrf.mxu0
  %1759 = vmatprep.mubr.f32.mxu0 0.0
  %1760 = vmatmul.mubr.f32.gmra.mxu0 %v1686
  %v1761 = vpop.f32.mrf.mxu0
  %v1762 = vadd.f32 0.0, %v1761
  %v1763 = vpop.f32.mrf.mxu0
  %1764 = vdwg.mxu0
  %v1766 = vsel %vm1088, %v1262, 0
  %v1769 = vsel %vm1088, %v1263, 0
  %v1771 = vsel %vm1272, %v363, 0
  %1773 = vmatprep.subr.mxu0 0.0
  %1774 = vmatpush1.msra.mxu0 0.0
  %1775 = vmatprep.subr.mxu0 0.0
  %1776 = vmatpush1.msra.mxu0 0.0
  %1777 = vmatprep.subr.mxu0 0.0
  %1778 = vmatpush1.msra.mxu0 0.0
  %1779 = vmatprep.subr.mxu0 0.0
  %1780 = vmatpush1.msra.mxu0 0.0
  %1781 = vmatprep.subr.mxu0 0.0
  %1782 = vmatpush1.msra.mxu0 0.0
  %1783 = vmatprep.subr.mxu0 0.0
  %1784 = vmatpush1.msra.mxu0 0.0
  %1785 = vmatprep.subr.mxu0 0.0
  %1786 = vmatpush1.msra.mxu0 0.0
  %1787 = vmatprep.subr.mxu0 0.0
  %1788 = vmatpush1.msra.mxu0 0.0
  %1789 = vmatprep.subr.mxu0 0.0
  %1790 = vmatpush1.msra.mxu0 0.0
  %1791 = vmatprep.subr.mxu0 0.0
  %1792 = vmatpush1.msra.mxu0 0.0
  %1793 = vmatprep.subr.mxu0 0.0
  %1794 = vmatpush1.msra.mxu0 0.0
  %1795 = vmatprep.subr.mxu0 0.0
  %1796 = vmatpush1.msra.mxu0 0.0
  %1797 = vmatprep.subr.mxu0 0.0
  %1798 = vmatpush1.msra.mxu0 0.0
  %1799 = vmatprep.subr.mxu0 0.0
  %1800 = vmatpush1.msra.mxu0 %v1771
  %1801 = vmatprep.subr.mxu0 0.0
  %1802 = vmatpush1.msra.mxu0 %v362
  %1803 = vmatprep.subr.mxu0 0.0
  %1804 = vmatpush1.msra.mxu0 %v361
  %1805 = vmatprep.subr.mxu0 0.0
  %1806 = vmatpush2.msra.mxu0 0.0
  %1807 = vmatprep.subr.mxu0 0.0
  %1808 = vmatpush2.msra.mxu0 0.0
  %1809 = vmatprep.subr.mxu0 0.0
  %1810 = vmatpush2.msra.mxu0 0.0
  %1811 = vmatprep.subr.mxu0 0.0
  %1812 = vmatpush2.msra.mxu0 0.0
  %1813 = vmatprep.subr.mxu0 0.0
  %1814 = vmatpush2.msra.mxu0 0.0
  %1815 = vmatprep.subr.mxu0 0.0
  %1816 = vmatpush2.msra.mxu0 0.0
  %1817 = vmatprep.subr.mxu0 0.0
  %1818 = vmatpush2.msra.mxu0 0.0
  %1819 = vmatprep.subr.mxu0 0.0
  %1820 = vmatpush2.msra.mxu0 0.0
  %1821 = vmatprep.subr.mxu0 0.0
  %1822 = vmatpush2.msra.mxu0 0.0
  %1823 = vmatprep.subr.mxu0 0.0
  %1824 = vmatpush2.msra.mxu0 0.0
  %1825 = vmatprep.subr.mxu0 0.0
  %1826 = vmatpush2.msra.mxu0 0.0
  %1827 = vmatprep.subr.mxu0 0.0
  %1828 = vmatpush2.msra.mxu0 0.0
  %1829 = vmatprep.subr.mxu0 0.0
  %1830 = vmatpush2.msra.mxu0 0.0
  %1831 = vmatprep.subr.mxu0 0.0
  %1832 = vmatpush2.msra.mxu0 0.0
  %1833 = vmatprep.subr.mxu0 0.0
  %1834 = vmatpush2.msra.mxu0 0.0
  %1835 = vmatprep.subr.mxu0 0.0
  %1836 = vmatpush2.msra.mxu0 0.0
  %1837 = vmatprep.mubr.f32.mxu0 0.0
  %1838 = vmatmul.mubr.f32.gmra.mxu0 %v1766
  %v1839 = vpop.f32.mrf.mxu0
  %v1840 = vadd.f32 0.0, %v1839
  %v1841 = vpop.f32.mrf.mxu0
  %1842 = vmatprep.mubr.f32.mxu0 0.0
  %1843 = vmatmul.mubr.f32.gmra.mxu0 %v1769
  %v1844 = vpop.f32.mrf.mxu0
  %v1845 = vadd.f32 0.0, %v1844
  %v1846 = vpop.f32.mrf.mxu0
  %1847 = vdwg.mxu0
  %v1849 = vsel %vm1088, %v1264, 0
  %v1852 = vsel %vm1088, %v1265, 0
  %v1854 = vsel %vm1272, %v366, 0
  %1856 = vmatprep.subr.mxu0 0.0
  %1857 = vmatpush1.msra.mxu0 0.0
  %1858 = vmatprep.subr.mxu0 0.0
  %1859 = vmatpush1.msra.mxu0 0.0
  %1860 = vmatprep.subr.mxu0 0.0
  %1861 = vmatpush1.msra.mxu0 0.0
  %1862 = vmatprep.subr.mxu0 0.0
  %1863 = vmatpush1.msra.mxu0 0.0
  %1864 = vmatprep.subr.mxu0 0.0
  %1865 = vmatpush1.msra.mxu0 0.0
  %1866 = vmatprep.subr.mxu0 0.0
  %1867 = vmatpush1.msra.mxu0 0.0
  %1868 = vmatprep.subr.mxu0 0.0
  %1869 = vmatpush1.msra.mxu0 0.0
  %1870 = vmatprep.subr.mxu0 0.0
  %1871 = vmatpush1.msra.mxu0 0.0
  %1872 = vmatprep.subr.mxu0 0.0
  %1873 = vmatpush1.msra.mxu0 0.0
  %1874 = vmatprep.subr.mxu0 0.0
  %1875 = vmatpush1.msra.mxu0 0.0
  %1876 = vmatprep.subr.mxu0 0.0
  %1877 = vmatpush1.msra.mxu0 0.0
  %1878 = vmatprep.subr.mxu0 0.0
  %1879 = vmatpush1.msra.mxu0 0.0
  %1880 = vmatprep.subr.mxu0 0.0
  %1881 = vmatpush1.msra.mxu0 0.0
  %1882 = vmatprep.subr.mxu0 0.0
  %1883 = vmatpush1.msra.mxu0 %v1854
  %1884 = vmatprep.subr.mxu0 0.0
  %1885 = vmatpush1.msra.mxu0 %v365
  %1886 = vmatprep.subr.mxu0 0.0
  %1887 = vmatpush1.msra.mxu0 %v364
  %1888 = vmatprep.subr.mxu0 0.0
  %1889 = vmatpush2.msra.mxu0 0.0
  %1890 = vmatprep.subr.mxu0 0.0
  %1891 = vmatpush2.msra.mxu0 0.0
  %1892 = vmatprep.subr.mxu0 0.0
  %1893 = vmatpush2.msra.mxu0 0.0
  %1894 = vmatprep.subr.mxu0 0.0
  %1895 = vmatpush2.msra.mxu0 0.0
  %1896 = vmatprep.subr.mxu0 0.0
  %1897 = vmatpush2.msra.mxu0 0.0
  %1898 = vmatprep.subr.mxu0 0.0
  %1899 = vmatpush2.msra.mxu0 0.0
  %1900 = vmatprep.subr.mxu0 0.0
  %1901 = vmatpush2.msra.mxu0 0.0
  %1902 = vmatprep.subr.mxu0 0.0
  %1903 = vmatpush2.msra.mxu0 0.0
  %1904 = vmatprep.subr.mxu0 0.0
  %1905 = vmatpush2.msra.mxu0 0.0
  %1906 = vmatprep.subr.mxu0 0.0
  %1907 = vmatpush2.msra.mxu0 0.0
  %1908 = vmatprep.subr.mxu0 0.0
  %1909 = vmatpush2.msra.mxu0 0.0
  %1910 = vmatprep.subr.mxu0 0.0
  %1911 = vmatpush2.msra.mxu0 0.0
  %1912 = vmatprep.subr.mxu0 0.0
  %1913 = vmatpush2.msra.mxu0 0.0
  %1914 = vmatprep.subr.mxu0 0.0
  %1915 = vmatpush2.msra.mxu0 0.0
  %1916 = vmatprep.subr.mxu0 0.0
  %1917 = vmatpush2.msra.mxu0 0.0
  %1918 = vmatprep.subr.mxu0 0.0
  %1919 = vmatpush2.msra.mxu0 0.0
  %1920 = vmatprep.mubr.f32.mxu0 0.0
  %1921 = vmatmul.mubr.f32.gmra.mxu0 %v1849
  %v1922 = vpop.f32.mrf.mxu0
  %v1923 = vadd.f32 0.0, %v1922
  %v1924 = vpop.f32.mrf.mxu0
  %1925 = vmatprep.mubr.f32.mxu0 0.0
  %1926 = vmatmul.mubr.f32.gmra.mxu0 %v1852
  %v1927 = vpop.f32.mrf.mxu0
  %v1928 = vadd.f32 0.0, %v1927
  %v1929 = vpop.f32.mrf.mxu0
  %1930 = vdwg.mxu0
  %v1931 = vmul.f32 %v1342, %v1342
  %v1932 = vmul.f32 %v1347, %v1347
  %v1933 = vmul.f32 %v1425, %v1425
  %v1934 = vmul.f32 %v1430, %v1430
  %v1935 = vmul.f32 %v1508, %v1508
  %v1936 = vmul.f32 %v1513, %v1513
  %v1937 = vmul.f32 %v1591, %v1591
  %v1938 = vmul.f32 %v1596, %v1596
  %v1939 = vmul.f32 %v1674, %v1674
  %v1940 = vmul.f32 %v1679, %v1679
  %v1941 = vmul.f32 %v1757, %v1757
  %v1942 = vmul.f32 %v1762, %v1762
  %v1943 = vmul.f32 %v1840, %v1840
  %v1944 = vmul.f32 %v1845, %v1845
  %v1945 = vmul.f32 %v1923, %v1923
  %v1946 = vmul.f32 %v1928, %v1928
  %v1947 = vsel %vm367, %v1931, 0.0
  %1948 = vadd.xlane.f32.xlu0 %v1947
  %v1949 = vpop.xlane.xlu0 %1948
  %vm1950 = vcmask 257024
  %v1951 = vsel %vm1950, %v1932, 0.0
  %1952 = vadd.xlane.f32.xlu0 %v1951
  %v1953 = vpop.xlane.xlu0 %1952
  %v1954 = vsel %vm367, %v1933, 0.0
  %1955 = vadd.xlane.f32.xlu0 %v1954
  %v1956 = vpop.xlane.xlu0 %1955
  %v1957 = vsel %vm1950, %v1934, 0.0
  %1958 = vadd.xlane.f32.xlu0 %v1957
  %v1959 = vpop.xlane.xlu0 %1958
  %v1960 = vsel %vm367, %v1935, 0.0
  %1961 = vadd.xlane.f32.xlu0 %v1960
  %v1962 = vpop.xlane.xlu0 %1961
  %v1963 = vsel %vm1950, %v1936, 0.0
  %1964 = vadd.xlane.f32.xlu0 %v1963
  %v1965 = vpop.xlane.xlu0 %1964
  %v1966 = vsel %vm367, %v1937, 0.0
  %1967 = vadd.xlane.f32.xlu0 %v1966
  %v1968 = vpop.xlane.xlu0 %1967
  %v1969 = vsel %vm1950, %v1938, 0.0
  %1970 = vadd.xlane.f32.xlu0 %v1969
  %v1971 = vpop.xlane.xlu0 %1970
  %v1972 = vsel %vm367, %v1939, 0.0
  %1973 = vadd.xlane.f32.xlu0 %v1972
  %v1974 = vpop.xlane.xlu0 %1973
  %v1975 = vsel %vm1950, %v1940, 0.0
  %1976 = vadd.xlane.f32.xlu0 %v1975
  %v1977 = vpop.xlane.xlu0 %1976
  %v1978 = vsel %vm367, %v1941, 0.0
  %1979 = vadd.xlane.f32.xlu0 %v1978
  %v1980 = vpop.xlane.xlu0 %1979
  %v1981 = vsel %vm1950, %v1942, 0.0
  %1982 = vadd.xlane.f32.xlu0 %v1981
  %v1983 = vpop.xlane.xlu0 %1982
  %v1984 = vsel %vm367, %v1943, 0.0
  %1985 = vadd.xlane.f32.xlu0 %v1984
  %v1986 = vpop.xlane.xlu0 %1985
  %v1987 = vsel %vm1950, %v1944, 0.0
  %1988 = vadd.xlane.f32.xlu0 %v1987
  %v1989 = vpop.xlane.xlu0 %1988
  %v1990 = vsel %vm367, %v1945, 0.0
  %1991 = vadd.xlane.f32.xlu0 %v1990
  %v1992 = vpop.xlane.xlu0 %1991
  %v1993 = vsel %vm1950, %v1946, 0.0
  %1994 = vadd.xlane.f32.xlu0 %v1993
  %v1995 = vpop.xlane.xlu0 %1994
  %v1996 = vld [vmem:[%s3] sm:$0xff]
  %v1997 = vld [vmem:[%s3 + $0x8] sm:$0xf]
  %v1998 = vld [vmem:[%s3 + $0x10] sm:$0xff]
  %v1999 = vld [vmem:[%s3 + $0x18] sm:$0xf]
  %v2000 = vld [vmem:[%s3 + $0x20] sm:$0xff]
  %v2001 = vld [vmem:[%s3 + $0x28] sm:$0xf]
  %v2002 = vld [vmem:[%s3 + $0x30] sm:$0xff]
  %v2003 = vld [vmem:[%s3 + $0x38] sm:$0xf]
  %v2004 = vld [vmem:[%s3 + $0x40] sm:$0xff]
  %v2005 = vld [vmem:[%s3 + $0x48] sm:$0xf]
  %v2006 = vld [vmem:[%s3 + $0x50] sm:$0xff]
  %v2007 = vld [vmem:[%s3 + $0x58] sm:$0xf]
  %v2008 = vld [vmem:[%s3 + $0x60] sm:$0xff]
  %v2009 = vld [vmem:[%s3 + $0x68] sm:$0xf]
  %v2010 = vld [vmem:[%s3 + $0x70] sm:$0xff]
  %v2011 = vld [vmem:[%s3 + $0x78] sm:$0xf]
  %v2012 = vld [vmem:[%s4] sm:$0xff]
  %v2013 = vld [vmem:[%s4 + $0x8] sm:$0xff]
  %v2014 = vld [vmem:[%s4 + $0x10] sm:$0xff]
  %v2015 = vld [vmem:[%s4 + $0x18] sm:$0xff]
  %v2016 = vld [vmem:[%s4 + $0x20] sm:$0xff]
  %v2017 = vld [vmem:[%s4 + $0x28] sm:$0xff]
  %v2018 = vld [vmem:[%s4 + $0x30] sm:$0xff]
  %v2019 = vld [vmem:[%s4 + $0x38] sm:$0xff]
  %v2020 = vld [vmem:[%s4 + $0x40] sm:$0xff]
  %v2021 = vld [vmem:[%s4 + $0x48] sm:$0xff]
  %v2022 = vld [vmem:[%s4 + $0x50] sm:$0xff]
  %v2023 = vld [vmem:[%s4 + $0x58] sm:$0xff]
  %v2024 = vld [vmem:[%s4 + $0x60] sm:$0xff]
  %v2025 = vld [vmem:[%s4 + $0x68] sm:$0xff]
  %v2026 = vld [vmem:[%s4 + $0x70] sm:$0xff]
  %v2027 = vld [vmem:[%s4 + $0x78] sm:$0xff]
  %v2028 = vld [vmem:[%s4 + $0x80] sm:$0xff]
  %v2029 = vld [vmem:[%s4 + $0x88] sm:$0xff]
  %v2030 = vld [vmem:[%s4 + $0x90] sm:$0xff]
  %v2031 = vld [vmem:[%s4 + $0x98] sm:$0xff]
  %v2032 = vld [vmem:[%s4 + $0xa0] sm:$0xff]
  %v2033 = vld [vmem:[%s4 + $0xa8] sm:$0xff]
  %v2034 = vld [vmem:[%s4 + $0xb0] sm:$0xff]
  %v2035 = vld [vmem:[%s4 + $0xb8] sm:$0xff]
  %v2036 = vld [vmem:[%s4 + $0xc0] sm:$0xff]
  %v2037 = vld [vmem:[%s4 + $0xc8] sm:$0xff]
  %v2038 = vld [vmem:[%s4 + $0xd0] sm:$0xff]
  %v2039 = vld [vmem:[%s4 + $0xd8] sm:$0xff]
  %v2040 = vld [vmem:[%s4 + $0xe0] sm:$0xff]
  %v2041 = vld [vmem:[%s4 + $0xe8] sm:$0xff]
  %v2042 = vld [vmem:[%s4 + $0xf0] sm:$0xff]
  %v2043 = vld [vmem:[%s4 + $0xf8] sm:$0xff]
  %v2045 = vsel %vm367, %v1996, 0
  %v2048 = vsel %vm367, %v1997, 0
  %2050 = vmatprep.subr.mxu0 0.0
  %2051 = vmatpush1.msra.mxu0 0.0
  %2052 = vmatprep.subr.mxu0 0.0
  %2053 = vmatpush1.msra.mxu0 0.0
  %2054 = vmatprep.subr.mxu0 0.0
  %2055 = vmatpush1.msra.mxu0 0.0
  %2056 = vmatprep.subr.mxu0 0.0
  %2057 = vmatpush1.msra.mxu0 0.0
  %2058 = vmatprep.subr.mxu0 0.0
  %2059 = vmatpush1.msra.mxu0 0.0
  %2060 = vmatprep.subr.mxu0 0.0
  %2061 = vmatpush1.msra.mxu0 0.0
  %2062 = vmatprep.subr.mxu0 0.0
  %2063 = vmatpush1.msra.mxu0 0.0
  %2064 = vmatprep.subr.mxu0 0.0
  %2065 = vmatpush1.msra.mxu0 0.0
  %2066 = vmatprep.subr.mxu0 0.0
  %2067 = vmatpush1.msra.mxu0 0.0
  %2068 = vmatprep.subr.mxu0 0.0
  %2069 = vmatpush1.msra.mxu0 0.0
  %2070 = vmatprep.subr.mxu0 0.0
  %2071 = vmatpush1.msra.mxu0 0.0
  %2072 = vmatprep.subr.mxu0 0.0
  %2073 = vmatpush1.msra.mxu0 0.0
  %2074 = vmatprep.subr.mxu0 0.0
  %2075 = vmatpush1.msra.mxu0 %v2015
  %2076 = vmatprep.subr.mxu0 0.0
  %2077 = vmatpush1.msra.mxu0 %v2014
  %2078 = vmatprep.subr.mxu0 0.0
  %2079 = vmatpush1.msra.mxu0 %v2013
  %2080 = vmatprep.subr.mxu0 0.0
  %2081 = vmatpush1.msra.mxu0 %v2012
  %2082 = vmatprep.subr.mxu0 0.0
  %2083 = vmatpush2.msra.mxu0 0.0
  %2084 = vmatprep.subr.mxu0 0.0
  %2085 = vmatpush2.msra.mxu0 0.0
  %2086 = vmatprep.subr.mxu0 0.0
  %2087 = vmatpush2.msra.mxu0 0.0
  %2088 = vmatprep.subr.mxu0 0.0
  %2089 = vmatpush2.msra.mxu0 0.0
  %2090 = vmatprep.subr.mxu0 0.0
  %2091 = vmatpush2.msra.mxu0 0.0
  %2092 = vmatprep.subr.mxu0 0.0
  %2093 = vmatpush2.msra.mxu0 0.0
  %2094 = vmatprep.subr.mxu0 0.0
  %2095 = vmatpush2.msra.mxu0 0.0
  %2096 = vmatprep.subr.mxu0 0.0
  %2097 = vmatpush2.msra.mxu0 0.0
  %2098 = vmatprep.subr.mxu0 0.0
  %2099 = vmatpush2.msra.mxu0 0.0
  %2100 = vmatprep.subr.mxu0 0.0
  %2101 = vmatpush2.msra.mxu0 0.0
  %2102 = vmatprep.subr.mxu0 0.0
  %2103 = vmatpush2.msra.mxu0 0.0
  %2104 = vmatprep.subr.mxu0 0.0
  %2105 = vmatpush2.msra.mxu0 0.0
  %2106 = vmatprep.subr.mxu0 0.0
  %2107 = vmatpush2.msra.mxu0 0.0
  %2108 = vmatprep.subr.mxu0 0.0
  %2109 = vmatpush2.msra.mxu0 0.0
  %2110 = vmatprep.subr.mxu0 0.0
  %2111 = vmatpush2.msra.mxu0 0.0
  %2112 = vmatprep.subr.mxu0 0.0
  %2113 = vmatpush2.msra.mxu0 0.0
  %2114 = vmatprep.mubr.f32.mxu0 0.0
  %2115 = vmatmul.mubr.f32.gmra.mxu0 %v2045
  %v2116 = vpop.f32.mrf.mxu0
  %v2117 = vadd.f32 0.0, %v2116
  %v2118 = vpop.f32.mrf.mxu0
  %2119 = vmatprep.mubr.f32.mxu0 0.0
  %2120 = vmatmul.mubr.f32.gmra.mxu0 %v2048
  %v2121 = vpop.f32.mrf.mxu0
  %v2122 = vadd.f32 0.0, %v2121
  %v2123 = vpop.f32.mrf.mxu0
  %2124 = vdwg.mxu0
  %v2126 = vsel %vm367, %v1998, 0
  %v2129 = vsel %vm367, %v1999, 0
  %2131 = vmatprep.subr.mxu0 0.0
  %2132 = vmatpush1.msra.mxu0 0.0
  %2133 = vmatprep.subr.mxu0 0.0
  %2134 = vmatpush1.msra.mxu0 0.0
  %2135 = vmatprep.subr.mxu0 0.0
  %2136 = vmatpush1.msra.mxu0 0.0
  %2137 = vmatprep.subr.mxu0 0.0
  %2138 = vmatpush1.msra.mxu0 0.0
  %2139 = vmatprep.subr.mxu0 0.0
  %2140 = vmatpush1.msra.mxu0 0.0
  %2141 = vmatprep.subr.mxu0 0.0
  %2142 = vmatpush1.msra.mxu0 0.0
  %2143 = vmatprep.subr.mxu0 0.0
  %2144 = vmatpush1.msra.mxu0 0.0
  %2145 = vmatprep.subr.mxu0 0.0
  %2146 = vmatpush1.msra.mxu0 0.0
  %2147 = vmatprep.subr.mxu0 0.0
  %2148 = vmatpush1.msra.mxu0 0.0
  %2149 = vmatprep.subr.mxu0 0.0
  %2150 = vmatpush1.msra.mxu0 0.0
  %2151 = vmatprep.subr.mxu0 0.0
  %2152 = vmatpush1.msra.mxu0 0.0
  %2153 = vmatprep.subr.mxu0 0.0
  %2154 = vmatpush1.msra.mxu0 0.0
  %2155 = vmatprep.subr.mxu0 0.0
  %2156 = vmatpush1.msra.mxu0 %v2019
  %2157 = vmatprep.subr.mxu0 0.0
  %2158 = vmatpush1.msra.mxu0 %v2018
  %2159 = vmatprep.subr.mxu0 0.0
  %2160 = vmatpush1.msra.mxu0 %v2017
  %2161 = vmatprep.subr.mxu0 0.0
  %2162 = vmatpush1.msra.mxu0 %v2016
  %2163 = vmatprep.subr.mxu0 0.0
  %2164 = vmatpush2.msra.mxu0 0.0
  %2165 = vmatprep.subr.mxu0 0.0
  %2166 = vmatpush2.msra.mxu0 0.0
  %2167 = vmatprep.subr.mxu0 0.0
  %2168 = vmatpush2.msra.mxu0 0.0
  %2169 = vmatprep.subr.mxu0 0.0
  %2170 = vmatpush2.msra.mxu0 0.0
  %2171 = vmatprep.subr.mxu0 0.0
  %2172 = vmatpush2.msra.mxu0 0.0
  %2173 = vmatprep.subr.mxu0 0.0
  %2174 = vmatpush2.msra.mxu0 0.0
  %2175 = vmatprep.subr.mxu0 0.0
  %2176 = vmatpush2.msra.mxu0 0.0
  %2177 = vmatprep.subr.mxu0 0.0
  %2178 = vmatpush2.msra.mxu0 0.0
  %2179 = vmatprep.subr.mxu0 0.0
  %2180 = vmatpush2.msra.mxu0 0.0
  %2181 = vmatprep.subr.mxu0 0.0
  %2182 = vmatpush2.msra.mxu0 0.0
  %2183 = vmatprep.subr.mxu0 0.0
  %2184 = vmatpush2.msra.mxu0 0.0
  %2185 = vmatprep.subr.mxu0 0.0
  %2186 = vmatpush2.msra.mxu0 0.0
  %2187 = vmatprep.subr.mxu0 0.0
  %2188 = vmatpush2.msra.mxu0 0.0
  %2189 = vmatprep.subr.mxu0 0.0
  %2190 = vmatpush2.msra.mxu0 0.0
  %2191 = vmatprep.subr.mxu0 0.0
  %2192 = vmatpush2.msra.mxu0 0.0
  %2193 = vmatprep.subr.mxu0 0.0
  %2194 = vmatpush2.msra.mxu0 0.0
  %2195 = vmatprep.mubr.f32.mxu0 0.0
  %2196 = vmatmul.mubr.f32.gmra.mxu0 %v2126
  %v2197 = vpop.f32.mrf.mxu0
  %v2198 = vadd.f32 0.0, %v2197
  %v2199 = vpop.f32.mrf.mxu0
  %2200 = vmatprep.mubr.f32.mxu0 0.0
  %2201 = vmatmul.mubr.f32.gmra.mxu0 %v2129
  %v2202 = vpop.f32.mrf.mxu0
  %v2203 = vadd.f32 0.0, %v2202
  %v2204 = vpop.f32.mrf.mxu0
  %2205 = vdwg.mxu0
  %v2207 = vsel %vm367, %v2000, 0
  %v2210 = vsel %vm367, %v2001, 0
  %2212 = vmatprep.subr.mxu0 0.0
  %2213 = vmatpush1.msra.mxu0 0.0
  %2214 = vmatprep.subr.mxu0 0.0
  %2215 = vmatpush1.msra.mxu0 0.0
  %2216 = vmatprep.subr.mxu0 0.0
  %2217 = vmatpush1.msra.mxu0 0.0
  %2218 = vmatprep.subr.mxu0 0.0
  %2219 = vmatpush1.msra.mxu0 0.0
  %2220 = vmatprep.subr.mxu0 0.0
  %2221 = vmatpush1.msra.mxu0 0.0
  %2222 = vmatprep.subr.mxu0 0.0
  %2223 = vmatpush1.msra.mxu0 0.0
  %2224 = vmatprep.subr.mxu0 0.0
  %2225 = vmatpush1.msra.mxu0 0.0
  %2226 = vmatprep.subr.mxu0 0.0
  %2227 = vmatpush1.msra.mxu0 0.0
  %2228 = vmatprep.subr.mxu0 0.0
  %2229 = vmatpush1.msra.mxu0 0.0
  %2230 = vmatprep.subr.mxu0 0.0
  %2231 = vmatpush1.msra.mxu0 0.0
  %2232 = vmatprep.subr.mxu0 0.0
  %2233 = vmatpush1.msra.mxu0 0.0
  %2234 = vmatprep.subr.mxu0 0.0
  %2235 = vmatpush1.msra.mxu0 0.0
  %2236 = vmatprep.subr.mxu0 0.0
  %2237 = vmatpush1.msra.mxu0 %v2023
  %2238 = vmatprep.subr.mxu0 0.0
  %2239 = vmatpush1.msra.mxu0 %v2022
  %2240 = vmatprep.subr.mxu0 0.0
  %2241 = vmatpush1.msra.mxu0 %v2021
  %2242 = vmatprep.subr.mxu0 0.0
  %2243 = vmatpush1.msra.mxu0 %v2020
  %2244 = vmatprep.subr.mxu0 0.0
  %2245 = vmatpush2.msra.mxu0 0.0
  %2246 = vmatprep.subr.mxu0 0.0
  %2247 = vmatpush2.msra.mxu0 0.0
  %2248 = vmatprep.subr.mxu0 0.0
  %2249 = vmatpush2.msra.mxu0 0.0
  %2250 = vmatprep.subr.mxu0 0.0
  %2251 = vmatpush2.msra.mxu0 0.0
  %2252 = vmatprep.subr.mxu0 0.0
  %2253 = vmatpush2.msra.mxu0 0.0
  %2254 = vmatprep.subr.mxu0 0.0
  %2255 = vmatpush2.msra.mxu0 0.0
  %2256 = vmatprep.subr.mxu0 0.0
  %2257 = vmatpush2.msra.mxu0 0.0
  %2258 = vmatprep.subr.mxu0 0.0
  %2259 = vmatpush2.msra.mxu0 0.0
  %2260 = vmatprep.subr.mxu0 0.0
  %2261 = vmatpush2.msra.mxu0 0.0
  %2262 = vmatprep.subr.mxu0 0.0
  %2263 = vmatpush2.msra.mxu0 0.0
  %2264 = vmatprep.subr.mxu0 0.0
  %2265 = vmatpush2.msra.mxu0 0.0
  %2266 = vmatprep.subr.mxu0 0.0
  %2267 = vmatpush2.msra.mxu0 0.0
  %2268 = vmatprep.subr.mxu0 0.0
  %2269 = vmatpush2.msra.mxu0 0.0
  %2270 = vmatprep.subr.mxu0 0.0
  %2271 = vmatpush2.msra.mxu0 0.0
  %2272 = vmatprep.subr.mxu0 0.0
  %2273 = vmatpush2.msra.mxu0 0.0
  %2274 = vmatprep.subr.mxu0 0.0
  %2275 = vmatpush2.msra.mxu0 0.0
  %2276 = vmatprep.mubr.f32.mxu0 0.0
  %2277 = vmatmul.mubr.f32.gmra.mxu0 %v2207
  %v2278 = vpop.f32.mrf.mxu0
  %v2279 = vadd.f32 0.0, %v2278
  %v2280 = vpop.f32.mrf.mxu0
  %2281 = vmatprep.mubr.f32.mxu0 0.0
  %2282 = vmatmul.mubr.f32.gmra.mxu0 %v2210
  %v2283 = vpop.f32.mrf.mxu0
  %v2284 = vadd.f32 0.0, %v2283
  %v2285 = vpop.f32.mrf.mxu0
  %2286 = vdwg.mxu0
  %v2288 = vsel %vm367, %v2002, 0
  %v2291 = vsel %vm367, %v2003, 0
  %2293 = vmatprep.subr.mxu0 0.0
  %2294 = vmatpush1.msra.mxu0 0.0
  %2295 = vmatprep.subr.mxu0 0.0
  %2296 = vmatpush1.msra.mxu0 0.0
  %2297 = vmatprep.subr.mxu0 0.0
  %2298 = vmatpush1.msra.mxu0 0.0
  %2299 = vmatprep.subr.mxu0 0.0
  %2300 = vmatpush1.msra.mxu0 0.0
  %2301 = vmatprep.subr.mxu0 0.0
  %2302 = vmatpush1.msra.mxu0 0.0
  %2303 = vmatprep.subr.mxu0 0.0
  %2304 = vmatpush1.msra.mxu0 0.0
  %2305 = vmatprep.subr.mxu0 0.0
  %2306 = vmatpush1.msra.mxu0 0.0
  %2307 = vmatprep.subr.mxu0 0.0
  %2308 = vmatpush1.msra.mxu0 0.0
  %2309 = vmatprep.subr.mxu0 0.0
  %2310 = vmatpush1.msra.mxu0 0.0
  %2311 = vmatprep.subr.mxu0 0.0
  %2312 = vmatpush1.msra.mxu0 0.0
  %2313 = vmatprep.subr.mxu0 0.0
  %2314 = vmatpush1.msra.mxu0 0.0
  %2315 = vmatprep.subr.mxu0 0.0
  %2316 = vmatpush1.msra.mxu0 0.0
  %2317 = vmatprep.subr.mxu0 0.0
  %2318 = vmatpush1.msra.mxu0 %v2027
  %2319 = vmatprep.subr.mxu0 0.0
  %2320 = vmatpush1.msra.mxu0 %v2026
  %2321 = vmatprep.subr.mxu0 0.0
  %2322 = vmatpush1.msra.mxu0 %v2025
  %2323 = vmatprep.subr.mxu0 0.0
  %2324 = vmatpush1.msra.mxu0 %v2024
  %2325 = vmatprep.subr.mxu0 0.0
  %2326 = vmatpush2.msra.mxu0 0.0
  %2327 = vmatprep.subr.mxu0 0.0
  %2328 = vmatpush2.msra.mxu0 0.0
  %2329 = vmatprep.subr.mxu0 0.0
  %2330 = vmatpush2.msra.mxu0 0.0
  %2331 = vmatprep.subr.mxu0 0.0
  %2332 = vmatpush2.msra.mxu0 0.0
  %2333 = vmatprep.subr.mxu0 0.0
  %2334 = vmatpush2.msra.mxu0 0.0
  %2335 = vmatprep.subr.mxu0 0.0
  %2336 = vmatpush2.msra.mxu0 0.0
  %2337 = vmatprep.subr.mxu0 0.0
  %2338 = vmatpush2.msra.mxu0 0.0
  %2339 = vmatprep.subr.mxu0 0.0
  %2340 = vmatpush2.msra.mxu0 0.0
  %2341 = vmatprep.subr.mxu0 0.0
  %2342 = vmatpush2.msra.mxu0 0.0
  %2343 = vmatprep.subr.mxu0 0.0
  %2344 = vmatpush2.msra.mxu0 0.0
  %2345 = vmatprep.subr.mxu0 0.0
  %2346 = vmatpush2.msra.mxu0 0.0
  %2347 = vmatprep.subr.mxu0 0.0
  %2348 = vmatpush2.msra.mxu0 0.0
  %2349 = vmatprep.subr.mxu0 0.0
  %2350 = vmatpush2.msra.mxu0 0.0
  %2351 = vmatprep.subr.mxu0 0.0
  %2352 = vmatpush2.msra.mxu0 0.0
  %2353 = vmatprep.subr.mxu0 0.0
  %2354 = vmatpush2.msra.mxu0 0.0
  %2355 = vmatprep.subr.mxu0 0.0
  %2356 = vmatpush2.msra.mxu0 0.0
  %2357 = vmatprep.mubr.f32.mxu0 0.0
  %2358 = vmatmul.mubr.f32.gmra.mxu0 %v2288
  %v2359 = vpop.f32.mrf.mxu0
  %v2360 = vadd.f32 0.0, %v2359
  %v2361 = vpop.f32.mrf.mxu0
  %2362 = vmatprep.mubr.f32.mxu0 0.0
  %2363 = vmatmul.mubr.f32.gmra.mxu0 %v2291
  %v2364 = vpop.f32.mrf.mxu0
  %v2365 = vadd.f32 0.0, %v2364
  %v2366 = vpop.f32.mrf.mxu0
  %2367 = vdwg.mxu0
  %v2369 = vsel %vm367, %v2004, 0
  %v2372 = vsel %vm367, %v2005, 0
  %2374 = vmatprep.subr.mxu0 0.0
  %2375 = vmatpush1.msra.mxu0 0.0
  %2376 = vmatprep.subr.mxu0 0.0
  %2377 = vmatpush1.msra.mxu0 0.0
  %2378 = vmatprep.subr.mxu0 0.0
  %2379 = vmatpush1.msra.mxu0 0.0
  %2380 = vmatprep.subr.mxu0 0.0
  %2381 = vmatpush1.msra.mxu0 0.0
  %2382 = vmatprep.subr.mxu0 0.0
  %2383 = vmatpush1.msra.mxu0 0.0
  %2384 = vmatprep.subr.mxu0 0.0
  %2385 = vmatpush1.msra.mxu0 0.0
  %2386 = vmatprep.subr.mxu0 0.0
  %2387 = vmatpush1.msra.mxu0 0.0
  %2388 = vmatprep.subr.mxu0 0.0
  %2389 = vmatpush1.msra.mxu0 0.0
  %2390 = vmatprep.subr.mxu0 0.0
  %2391 = vmatpush1.msra.mxu0 0.0
  %2392 = vmatprep.subr.mxu0 0.0
  %2393 = vmatpush1.msra.mxu0 0.0
  %2394 = vmatprep.subr.mxu0 0.0
  %2395 = vmatpush1.msra.mxu0 0.0
  %2396 = vmatprep.subr.mxu0 0.0
  %2397 = vmatpush1.msra.mxu0 0.0
  %2398 = vmatprep.subr.mxu0 0.0
  %2399 = vmatpush1.msra.mxu0 %v2031
  %2400 = vmatprep.subr.mxu0 0.0
  %2401 = vmatpush1.msra.mxu0 %v2030
  %2402 = vmatprep.subr.mxu0 0.0
  %2403 = vmatpush1.msra.mxu0 %v2029
  %2404 = vmatprep.subr.mxu0 0.0
  %2405 = vmatpush1.msra.mxu0 %v2028
  %2406 = vmatprep.subr.mxu0 0.0
  %2407 = vmatpush2.msra.mxu0 0.0
  %2408 = vmatprep.subr.mxu0 0.0
  %2409 = vmatpush2.msra.mxu0 0.0
  %2410 = vmatprep.subr.mxu0 0.0
  %2411 = vmatpush2.msra.mxu0 0.0
  %2412 = vmatprep.subr.mxu0 0.0
  %2413 = vmatpush2.msra.mxu0 0.0
  %2414 = vmatprep.subr.mxu0 0.0
  %2415 = vmatpush2.msra.mxu0 0.0
  %2416 = vmatprep.subr.mxu0 0.0
  %2417 = vmatpush2.msra.mxu0 0.0
  %2418 = vmatprep.subr.mxu0 0.0
  %2419 = vmatpush2.msra.mxu0 0.0
  %2420 = vmatprep.subr.mxu0 0.0
  %2421 = vmatpush2.msra.mxu0 0.0
  %2422 = vmatprep.subr.mxu0 0.0
  %2423 = vmatpush2.msra.mxu0 0.0
  %2424 = vmatprep.subr.mxu0 0.0
  %2425 = vmatpush2.msra.mxu0 0.0
  %2426 = vmatprep.subr.mxu0 0.0
  %2427 = vmatpush2.msra.mxu0 0.0
  %2428 = vmatprep.subr.mxu0 0.0
  %2429 = vmatpush2.msra.mxu0 0.0
  %2430 = vmatprep.subr.mxu0 0.0
  %2431 = vmatpush2.msra.mxu0 0.0
  %2432 = vmatprep.subr.mxu0 0.0
  %2433 = vmatpush2.msra.mxu0 0.0
  %2434 = vmatprep.subr.mxu0 0.0
  %2435 = vmatpush2.msra.mxu0 0.0
  %2436 = vmatprep.subr.mxu0 0.0
  %2437 = vmatpush2.msra.mxu0 0.0
  %2438 = vmatprep.mubr.f32.mxu0 0.0
  %2439 = vmatmul.mubr.f32.gmra.mxu0 %v2369
  %v2440 = vpop.f32.mrf.mxu0
  %v2441 = vadd.f32 0.0, %v2440
  %v2442 = vpop.f32.mrf.mxu0
  %2443 = vmatprep.mubr.f32.mxu0 0.0
  %2444 = vmatmul.mubr.f32.gmra.mxu0 %v2372
  %v2445 = vpop.f32.mrf.mxu0
  %v2446 = vadd.f32 0.0, %v2445
  %v2447 = vpop.f32.mrf.mxu0
  %2448 = vdwg.mxu0
  %v2450 = vsel %vm367, %v2006, 0
  %v2453 = vsel %vm367, %v2007, 0
  %2455 = vmatprep.subr.mxu0 0.0
  %2456 = vmatpush1.msra.mxu0 0.0
  %2457 = vmatprep.subr.mxu0 0.0
  %2458 = vmatpush1.msra.mxu0 0.0
  %2459 = vmatprep.subr.mxu0 0.0
  %2460 = vmatpush1.msra.mxu0 0.0
  %2461 = vmatprep.subr.mxu0 0.0
  %2462 = vmatpush1.msra.mxu0 0.0
  %2463 = vmatprep.subr.mxu0 0.0
  %2464 = vmatpush1.msra.mxu0 0.0
  %2465 = vmatprep.subr.mxu0 0.0
  %2466 = vmatpush1.msra.mxu0 0.0
  %2467 = vmatprep.subr.mxu0 0.0
  %2468 = vmatpush1.msra.mxu0 0.0
  %2469 = vmatprep.subr.mxu0 0.0
  %2470 = vmatpush1.msra.mxu0 0.0
  %2471 = vmatprep.subr.mxu0 0.0
  %2472 = vmatpush1.msra.mxu0 0.0
  %2473 = vmatprep.subr.mxu0 0.0
  %2474 = vmatpush1.msra.mxu0 0.0
  %2475 = vmatprep.subr.mxu0 0.0
  %2476 = vmatpush1.msra.mxu0 0.0
  %2477 = vmatprep.subr.mxu0 0.0
  %2478 = vmatpush1.msra.mxu0 0.0
  %2479 = vmatprep.subr.mxu0 0.0
  %2480 = vmatpush1.msra.mxu0 %v2035
  %2481 = vmatprep.subr.mxu0 0.0
  %2482 = vmatpush1.msra.mxu0 %v2034
  %2483 = vmatprep.subr.mxu0 0.0
  %2484 = vmatpush1.msra.mxu0 %v2033
  %2485 = vmatprep.subr.mxu0 0.0
  %2486 = vmatpush1.msra.mxu0 %v2032
  %2487 = vmatprep.subr.mxu0 0.0
  %2488 = vmatpush2.msra.mxu0 0.0
  %2489 = vmatprep.subr.mxu0 0.0
  %2490 = vmatpush2.msra.mxu0 0.0
  %2491 = vmatprep.subr.mxu0 0.0
  %2492 = vmatpush2.msra.mxu0 0.0
  %2493 = vmatprep.subr.mxu0 0.0
  %2494 = vmatpush2.msra.mxu0 0.0
  %2495 = vmatprep.subr.mxu0 0.0
  %2496 = vmatpush2.msra.mxu0 0.0
  %2497 = vmatprep.subr.mxu0 0.0
  %2498 = vmatpush2.msra.mxu0 0.0
  %2499 = vmatprep.subr.mxu0 0.0
  %2500 = vmatpush2.msra.mxu0 0.0
  %2501 = vmatprep.subr.mxu0 0.0
  %2502 = vmatpush2.msra.mxu0 0.0
  %2503 = vmatprep.subr.mxu0 0.0
  %2504 = vmatpush2.msra.mxu0 0.0
  %2505 = vmatprep.subr.mxu0 0.0
  %2506 = vmatpush2.msra.mxu0 0.0
  %2507 = vmatprep.subr.mxu0 0.0
  %2508 = vmatpush2.msra.mxu0 0.0
  %2509 = vmatprep.subr.mxu0 0.0
  %2510 = vmatpush2.msra.mxu0 0.0
  %2511 = vmatprep.subr.mxu0 0.0
  %2512 = vmatpush2.msra.mxu0 0.0
  %2513 = vmatprep.subr.mxu0 0.0
  %2514 = vmatpush2.msra.mxu0 0.0
  %2515 = vmatprep.subr.mxu0 0.0
  %2516 = vmatpush2.msra.mxu0 0.0
  %2517 = vmatprep.subr.mxu0 0.0
  %2518 = vmatpush2.msra.mxu0 0.0
  %2519 = vmatprep.mubr.f32.mxu0 0.0
  %2520 = vmatmul.mubr.f32.gmra.mxu0 %v2450
  %v2521 = vpop.f32.mrf.mxu0
  %v2522 = vadd.f32 0.0, %v2521
  %v2523 = vpop.f32.mrf.mxu0
  %2524 = vmatprep.mubr.f32.mxu0 0.0
  %2525 = vmatmul.mubr.f32.gmra.mxu0 %v2453
  %v2526 = vpop.f32.mrf.mxu0
  %v2527 = vadd.f32 0.0, %v2526
  %v2528 = vpop.f32.mrf.mxu0
  %2529 = vdwg.mxu0
  %v2531 = vsel %vm367, %v2008, 0
  %v2534 = vsel %vm367, %v2009, 0
  %2536 = vmatprep.subr.mxu0 0.0
  %2537 = vmatpush1.msra.mxu0 0.0
  %2538 = vmatprep.subr.mxu0 0.0
  %2539 = vmatpush1.msra.mxu0 0.0
  %2540 = vmatprep.subr.mxu0 0.0
  %2541 = vmatpush1.msra.mxu0 0.0
  %2542 = vmatprep.subr.mxu0 0.0
  %2543 = vmatpush1.msra.mxu0 0.0
  %2544 = vmatprep.subr.mxu0 0.0
  %2545 = vmatpush1.msra.mxu0 0.0
  %2546 = vmatprep.subr.mxu0 0.0
  %2547 = vmatpush1.msra.mxu0 0.0
  %2548 = vmatprep.subr.mxu0 0.0
  %2549 = vmatpush1.msra.mxu0 0.0
  %2550 = vmatprep.subr.mxu0 0.0
  %2551 = vmatpush1.msra.mxu0 0.0
  %2552 = vmatprep.subr.mxu0 0.0
  %2553 = vmatpush1.msra.mxu0 0.0
  %2554 = vmatprep.subr.mxu0 0.0
  %2555 = vmatpush1.msra.mxu0 0.0
  %2556 = vmatprep.subr.mxu0 0.0
  %2557 = vmatpush1.msra.mxu0 0.0
  %2558 = vmatprep.subr.mxu0 0.0
  %2559 = vmatpush1.msra.mxu0 0.0
  %2560 = vmatprep.subr.mxu0 0.0
  %2561 = vmatpush1.msra.mxu0 %v2039
  %2562 = vmatprep.subr.mxu0 0.0
  %2563 = vmatpush1.msra.mxu0 %v2038
  %2564 = vmatprep.subr.mxu0 0.0
  %2565 = vmatpush1.msra.mxu0 %v2037
  %2566 = vmatprep.subr.mxu0 0.0
  %2567 = vmatpush1.msra.mxu0 %v2036
  %2568 = vmatprep.subr.mxu0 0.0
  %2569 = vmatpush2.msra.mxu0 0.0
  %2570 = vmatprep.subr.mxu0 0.0
  %2571 = vmatpush2.msra.mxu0 0.0
  %2572 = vmatprep.subr.mxu0 0.0
  %2573 = vmatpush2.msra.mxu0 0.0
  %2574 = vmatprep.subr.mxu0 0.0
  %2575 = vmatpush2.msra.mxu0 0.0
  %2576 = vmatprep.subr.mxu0 0.0
  %2577 = vmatpush2.msra.mxu0 0.0
  %2578 = vmatprep.subr.mxu0 0.0
  %2579 = vmatpush2.msra.mxu0 0.0
  %2580 = vmatprep.subr.mxu0 0.0
  %2581 = vmatpush2.msra.mxu0 0.0
  %2582 = vmatprep.subr.mxu0 0.0
  %2583 = vmatpush2.msra.mxu0 0.0
  %2584 = vmatprep.subr.mxu0 0.0
  %2585 = vmatpush2.msra.mxu0 0.0
  %2586 = vmatprep.subr.mxu0 0.0
  %2587 = vmatpush2.msra.mxu0 0.0
  %2588 = vmatprep.subr.mxu0 0.0
  %2589 = vmatpush2.msra.mxu0 0.0
  %2590 = vmatprep.subr.mxu0 0.0
  %2591 = vmatpush2.msra.mxu0 0.0
  %2592 = vmatprep.subr.mxu0 0.0
  %2593 = vmatpush2.msra.mxu0 0.0
  %2594 = vmatprep.subr.mxu0 0.0
  %2595 = vmatpush2.msra.mxu0 0.0
  %2596 = vmatprep.subr.mxu0 0.0
  %2597 = vmatpush2.msra.mxu0 0.0
  %2598 = vmatprep.subr.mxu0 0.0
  %2599 = vmatpush2.msra.mxu0 0.0
  %2600 = vmatprep.mubr.f32.mxu0 0.0
  %2601 = vmatmul.mubr.f32.gmra.mxu0 %v2531
  %v2602 = vpop.f32.mrf.mxu0
  %v2603 = vadd.f32 0.0, %v2602
  %v2604 = vpop.f32.mrf.mxu0
  %2605 = vmatprep.mubr.f32.mxu0 0.0
  %2606 = vmatmul.mubr.f32.gmra.mxu0 %v2534
  %v2607 = vpop.f32.mrf.mxu0
  %v2608 = vadd.f32 0.0, %v2607
  %v2609 = vpop.f32.mrf.mxu0
  %2610 = vdwg.mxu0
  %v2612 = vsel %vm367, %v2010, 0
  %v2615 = vsel %vm367, %v2011, 0
  %2617 = vmatprep.subr.mxu0 0.0
  %2618 = vmatpush1.msra.mxu0 0.0
  %2619 = vmatprep.subr.mxu0 0.0
  %2620 = vmatpush1.msra.mxu0 0.0
  %2621 = vmatprep.subr.mxu0 0.0
  %2622 = vmatpush1.msra.mxu0 0.0
  %2623 = vmatprep.subr.mxu0 0.0
  %2624 = vmatpush1.msra.mxu0 0.0
  %2625 = vmatprep.subr.mxu0 0.0
  %2626 = vmatpush1.msra.mxu0 0.0
  %2627 = vmatprep.subr.mxu0 0.0
  %2628 = vmatpush1.msra.mxu0 0.0
  %2629 = vmatprep.subr.mxu0 0.0
  %2630 = vmatpush1.msra.mxu0 0.0
  %2631 = vmatprep.subr.mxu0 0.0
  %2632 = vmatpush1.msra.mxu0 0.0
  %2633 = vmatprep.subr.mxu0 0.0
  %2634 = vmatpush1.msra.mxu0 0.0
  %2635 = vmatprep.subr.mxu0 0.0
  %2636 = vmatpush1.msra.mxu0 0.0
  %2637 = vmatprep.subr.mxu0 0.0
  %2638 = vmatpush1.msra.mxu0 0.0
  %2639 = vmatprep.subr.mxu0 0.0
  %2640 = vmatpush1.msra.mxu0 0.0
  %2641 = vmatprep.subr.mxu0 0.0
  %2642 = vmatpush1.msra.mxu0 %v2043
  %2643 = vmatprep.subr.mxu0 0.0
  %2644 = vmatpush1.msra.mxu0 %v2042
  %2645 = vmatprep.subr.mxu0 0.0
  %2646 = vmatpush1.msra.mxu0 %v2041
  %2647 = vmatprep.subr.mxu0 0.0
  %2648 = vmatpush1.msra.mxu0 %v2040
  %2649 = vmatprep.subr.mxu0 0.0
  %2650 = vmatpush2.msra.mxu0 0.0
  %2651 = vmatprep.subr.mxu0 0.0
  %2652 = vmatpush2.msra.mxu0 0.0
  %2653 = vmatprep.subr.mxu0 0.0
  %2654 = vmatpush2.msra.mxu0 0.0
  %2655 = vmatprep.subr.mxu0 0.0
  %2656 = vmatpush2.msra.mxu0 0.0
  %2657 = vmatprep.subr.mxu0 0.0
  %2658 = vmatpush2.msra.mxu0 0.0
  %2659 = vmatprep.subr.mxu0 0.0
  %2660 = vmatpush2.msra.mxu0 0.0
  %2661 = vmatprep.subr.mxu0 0.0
  %2662 = vmatpush2.msra.mxu0 0.0
  %2663 = vmatprep.subr.mxu0 0.0
  %2664 = vmatpush2.msra.mxu0 0.0
  %2665 = vmatprep.subr.mxu0 0.0
  %2666 = vmatpush2.msra.mxu0 0.0
  %2667 = vmatprep.subr.mxu0 0.0
  %2668 = vmatpush2.msra.mxu0 0.0
  %2669 = vmatprep.subr.mxu0 0.0
  %2670 = vmatpush2.msra.mxu0 0.0
  %2671 = vmatprep.subr.mxu0 0.0
  %2672 = vmatpush2.msra.mxu0 0.0
  %2673 = vmatprep.subr.mxu0 0.0
  %2674 = vmatpush2.msra.mxu0 0.0
  %2675 = vmatprep.subr.mxu0 0.0
  %2676 = vmatpush2.msra.mxu0 0.0
  %2677 = vmatprep.subr.mxu0 0.0
  %2678 = vmatpush2.msra.mxu0 0.0
  %2679 = vmatprep.subr.mxu0 0.0
  %2680 = vmatpush2.msra.mxu0 0.0
  %2681 = vmatprep.mubr.f32.mxu0 0.0
  %2682 = vmatmul.mubr.f32.gmra.mxu0 %v2612
  %v2683 = vpop.f32.mrf.mxu0
  %v2684 = vadd.f32 0.0, %v2683
  %v2685 = vpop.f32.mrf.mxu0
  %2686 = vmatprep.mubr.f32.mxu0 0.0
  %2687 = vmatmul.mubr.f32.gmra.mxu0 %v2615
  %v2688 = vpop.f32.mrf.mxu0
  %v2689 = vadd.f32 0.0, %v2688
  %v2690 = vpop.f32.mrf.mxu0
  %2691 = vdwg.mxu0
  %v2692 = vld [vmem:[%s5] sm:$0xff]
  %v2693 = vld [vmem:[%s5 + $0x8] sm:$0xff]
  %v2694 = vld [vmem:[%s5 + $0x10] sm:$0xff]
  %v2695 = vld [vmem:[%s5 + $0x18] sm:$0xff]
  %v2696 = vld [vmem:[%s5 + $0x20] sm:$0xff]
  %v2697 = vld [vmem:[%s5 + $0x28] sm:$0xff]
  %v2698 = vld [vmem:[%s5 + $0x30] sm:$0xff]
  %v2699 = vld [vmem:[%s5 + $0x38] sm:$0xff]
  %v2700 = vld [vmem:[%s5 + $0x40] sm:$0xff]
  %v2701 = vld [vmem:[%s5 + $0x48] sm:$0xff]
  %v2702 = vld [vmem:[%s5 + $0x50] sm:$0xff]
  %v2703 = vld [vmem:[%s5 + $0x58] sm:$0xff]
  %v2704 = vld [vmem:[%s5 + $0x60] sm:$0xff]
  %v2705 = vld [vmem:[%s5 + $0x68] sm:$0xff]
  %v2706 = vld [vmem:[%s5 + $0x70] sm:$0xff]
  %v2707 = vld [vmem:[%s5 + $0x78] sm:$0xff]
  %v2708 = vld [vmem:[%s5 + $0x80] sm:$0xff]
  %v2709 = vld [vmem:[%s5 + $0x88] sm:$0xff]
  %v2710 = vld [vmem:[%s5 + $0x90] sm:$0xff]
  %v2711 = vld [vmem:[%s5 + $0x98] sm:$0xff]
  %v2712 = vld [vmem:[%s5 + $0xa0] sm:$0xff]
  %v2713 = vld [vmem:[%s5 + $0xa8] sm:$0xff]
  %v2714 = vld [vmem:[%s5 + $0xb0] sm:$0xff]
  %v2715 = vld [vmem:[%s5 + $0xb8] sm:$0xff]
  %v2716 = vld [vmem:[%s5 + $0xc0] sm:$0xff]
  %v2717 = vld [vmem:[%s5 + $0xc8] sm:$0xff]
  %v2718 = vld [vmem:[%s5 + $0xd0] sm:$0xff]
  %v2719 = vld [vmem:[%s5 + $0xd8] sm:$0xff]
  %v2720 = vld [vmem:[%s5 + $0xe0] sm:$0xff]
  %v2721 = vld [vmem:[%s5 + $0xe8] sm:$0xff]
  %v2722 = vld [vmem:[%s5 + $0xf0] sm:$0xff]
  %v2723 = vld [vmem:[%s5 + $0xf8] sm:$0xff]
  %2724 = vmatprep.subr.mxu0 0.0
  %2725 = vmatpush1.msra.mxu0 0.0
  %2726 = vmatprep.subr.mxu0 0.0
  %2727 = vmatpush1.msra.mxu0 0.0
  %2728 = vmatprep.subr.mxu0 0.0
  %2729 = vmatpush1.msra.mxu0 0.0
  %2730 = vmatprep.subr.mxu0 0.0
  %2731 = vmatpush1.msra.mxu0 0.0
  %2732 = vmatprep.subr.mxu0 0.0
  %2733 = vmatpush1.msra.mxu0 0.0
  %2734 = vmatprep.subr.mxu0 0.0
  %2735 = vmatpush1.msra.mxu0 0.0
  %2736 = vmatprep.subr.mxu0 0.0
  %2737 = vmatpush1.msra.mxu0 0.0
  %2738 = vmatprep.subr.mxu0 0.0
  %2739 = vmatpush1.msra.mxu0 0.0
  %2740 = vmatprep.subr.mxu0 0.0
  %2741 = vmatpush1.msra.mxu0 0.0
  %2742 = vmatprep.subr.mxu0 0.0
  %2743 = vmatpush1.msra.mxu0 0.0
  %2744 = vmatprep.subr.mxu0 0.0
  %2745 = vmatpush1.msra.mxu0 0.0
  %2746 = vmatprep.subr.mxu0 0.0
  %2747 = vmatpush1.msra.mxu0 0.0
  %2748 = vmatprep.subr.mxu0 0.0
  %2749 = vmatpush1.msra.mxu0 %v2695
  %2750 = vmatprep.subr.mxu0 0.0
  %2751 = vmatpush1.msra.mxu0 %v2694
  %2752 = vmatprep.subr.mxu0 0.0
  %2753 = vmatpush1.msra.mxu0 %v2693
  %2754 = vmatprep.subr.mxu0 0.0
  %2755 = vmatpush1.msra.mxu0 %v2692
  %2756 = vmatprep.subr.mxu0 0.0
  %2757 = vmatpush2.msra.mxu0 0.0
  %2758 = vmatprep.subr.mxu0 0.0
  %2759 = vmatpush2.msra.mxu0 0.0
  %2760 = vmatprep.subr.mxu0 0.0
  %2761 = vmatpush2.msra.mxu0 0.0
  %2762 = vmatprep.subr.mxu0 0.0
  %2763 = vmatpush2.msra.mxu0 0.0
  %2764 = vmatprep.subr.mxu0 0.0
  %2765 = vmatpush2.msra.mxu0 0.0
  %2766 = vmatprep.subr.mxu0 0.0
  %2767 = vmatpush2.msra.mxu0 0.0
  %2768 = vmatprep.subr.mxu0 0.0
  %2769 = vmatpush2.msra.mxu0 0.0
  %2770 = vmatprep.subr.mxu0 0.0
  %2771 = vmatpush2.msra.mxu0 0.0
  %2772 = vmatprep.subr.mxu0 0.0
  %2773 = vmatpush2.msra.mxu0 0.0
  %2774 = vmatprep.subr.mxu0 0.0
  %2775 = vmatpush2.msra.mxu0 0.0
  %2776 = vmatprep.subr.mxu0 0.0
  %2777 = vmatpush2.msra.mxu0 0.0
  %2778 = vmatprep.subr.mxu0 0.0
  %2779 = vmatpush2.msra.mxu0 0.0
  %2780 = vmatprep.subr.mxu0 0.0
  %2781 = vmatpush2.msra.mxu0 0.0
  %2782 = vmatprep.subr.mxu0 0.0
  %2783 = vmatpush2.msra.mxu0 0.0
  %2784 = vmatprep.subr.mxu0 0.0
  %2785 = vmatpush2.msra.mxu0 0.0
  %2786 = vmatprep.subr.mxu0 0.0
  %2787 = vmatpush2.msra.mxu0 0.0
  %2788 = vmatprep.mubr.f32.mxu0 0.0
  %2789 = vmatmul.mubr.f32.gmra.mxu0 %v2045
  %v2790 = vpop.f32.mrf.mxu0
  %v2791 = vadd.f32 0.0, %v2790
  %v2792 = vpop.f32.mrf.mxu0
  %2793 = vmatprep.mubr.f32.mxu0 0.0
  %2794 = vmatmul.mubr.f32.gmra.mxu0 %v2048
  %v2795 = vpop.f32.mrf.mxu0
  %v2796 = vadd.f32 0.0, %v2795
  %v2797 = vpop.f32.mrf.mxu0
  %2798 = vdwg.mxu0
  %2799 = vmatprep.subr.mxu0 0.0
  %2800 = vmatpush1.msra.mxu0 0.0
  %2801 = vmatprep.subr.mxu0 0.0
  %2802 = vmatpush1.msra.mxu0 0.0
  %2803 = vmatprep.subr.mxu0 0.0
  %2804 = vmatpush1.msra.mxu0 0.0
  %2805 = vmatprep.subr.mxu0 0.0
  %2806 = vmatpush1.msra.mxu0 0.0
  %2807 = vmatprep.subr.mxu0 0.0
  %2808 = vmatpush1.msra.mxu0 0.0
  %2809 = vmatprep.subr.mxu0 0.0
  %2810 = vmatpush1.msra.mxu0 0.0
  %2811 = vmatprep.subr.mxu0 0.0
  %2812 = vmatpush1.msra.mxu0 0.0
  %2813 = vmatprep.subr.mxu0 0.0
  %2814 = vmatpush1.msra.mxu0 0.0
  %2815 = vmatprep.subr.mxu0 0.0
  %2816 = vmatpush1.msra.mxu0 0.0
  %2817 = vmatprep.subr.mxu0 0.0
  %2818 = vmatpush1.msra.mxu0 0.0
  %2819 = vmatprep.subr.mxu0 0.0
  %2820 = vmatpush1.msra.mxu0 0.0
  %2821 = vmatprep.subr.mxu0 0.0
  %2822 = vmatpush1.msra.mxu0 0.0
  %2823 = vmatprep.subr.mxu0 0.0
  %2824 = vmatpush1.msra.mxu0 %v2699
  %2825 = vmatprep.subr.mxu0 0.0
  %2826 = vmatpush1.msra.mxu0 %v2698
  %2827 = vmatprep.subr.mxu0 0.0
  %2828 = vmatpush1.msra.mxu0 %v2697
  %2829 = vmatprep.subr.mxu0 0.0
  %2830 = vmatpush1.msra.mxu0 %v2696
  %2831 = vmatprep.subr.mxu0 0.0
  %2832 = vmatpush2.msra.mxu0 0.0
  %2833 = vmatprep.subr.mxu0 0.0
  %2834 = vmatpush2.msra.mxu0 0.0
  %2835 = vmatprep.subr.mxu0 0.0
  %2836 = vmatpush2.msra.mxu0 0.0
  %2837 = vmatprep.subr.mxu0 0.0
  %2838 = vmatpush2.msra.mxu0 0.0
  %2839 = vmatprep.subr.mxu0 0.0
  %2840 = vmatpush2.msra.mxu0 0.0
  %2841 = vmatprep.subr.mxu0 0.0
  %2842 = vmatpush2.msra.mxu0 0.0
  %2843 = vmatprep.subr.mxu0 0.0
  %2844 = vmatpush2.msra.mxu0 0.0
  %2845 = vmatprep.subr.mxu0 0.0
  %2846 = vmatpush2.msra.mxu0 0.0
  %2847 = vmatprep.subr.mxu0 0.0
  %2848 = vmatpush2.msra.mxu0 0.0
  %2849 = vmatprep.subr.mxu0 0.0
  %2850 = vmatpush2.msra.mxu0 0.0
  %2851 = vmatprep.subr.mxu0 0.0
  %2852 = vmatpush2.msra.mxu0 0.0
  %2853 = vmatprep.subr.mxu0 0.0
  %2854 = vmatpush2.msra.mxu0 0.0
  %2855 = vmatprep.subr.mxu0 0.0
  %2856 = vmatpush2.msra.mxu0 0.0
  %2857 = vmatprep.subr.mxu0 0.0
  %2858 = vmatpush2.msra.mxu0 0.0
  %2859 = vmatprep.subr.mxu0 0.0
  %2860 = vmatpush2.msra.mxu0 0.0
  %2861 = vmatprep.subr.mxu0 0.0
  %2862 = vmatpush2.msra.mxu0 0.0
  %2863 = vmatprep.mubr.f32.mxu0 0.0
  %2864 = vmatmul.mubr.f32.gmra.mxu0 %v2126
  %v2865 = vpop.f32.mrf.mxu0
  %v2866 = vadd.f32 0.0, %v2865
  %v2867 = vpop.f32.mrf.mxu0
  %2868 = vmatprep.mubr.f32.mxu0 0.0
  %2869 = vmatmul.mubr.f32.gmra.mxu0 %v2129
  %v2870 = vpop.f32.mrf.mxu0
  %v2871 = vadd.f32 0.0, %v2870
  %v2872 = vpop.f32.mrf.mxu0
  %2873 = vdwg.mxu0
  %2874 = vmatprep.subr.mxu0 0.0
  %2875 = vmatpush1.msra.mxu0 0.0
  %2876 = vmatprep.subr.mxu0 0.0
  %2877 = vmatpush1.msra.mxu0 0.0
  %2878 = vmatprep.subr.mxu0 0.0
  %2879 = vmatpush1.msra.mxu0 0.0
  %2880 = vmatprep.subr.mxu0 0.0
  %2881 = vmatpush1.msra.mxu0 0.0
  %2882 = vmatprep.subr.mxu0 0.0
  %2883 = vmatpush1.msra.mxu0 0.0
  %2884 = vmatprep.subr.mxu0 0.0
  %2885 = vmatpush1.msra.mxu0 0.0
  %2886 = vmatprep.subr.mxu0 0.0
  %2887 = vmatpush1.msra.mxu0 0.0
  %2888 = vmatprep.subr.mxu0 0.0
  %2889 = vmatpush1.msra.mxu0 0.0
  %2890 = vmatprep.subr.mxu0 0.0
  %2891 = vmatpush1.msra.mxu0 0.0
  %2892 = vmatprep.subr.mxu0 0.0
  %2893 = vmatpush1.msra.mxu0 0.0
  %2894 = vmatprep.subr.mxu0 0.0
  %2895 = vmatpush1.msra.mxu0 0.0
  %2896 = vmatprep.subr.mxu0 0.0
  %2897 = vmatpush1.msra.mxu0 0.0
  %2898 = vmatprep.subr.mxu0 0.0
  %2899 = vmatpush1.msra.mxu0 %v2703
  %2900 = vmatprep.subr.mxu0 0.0
  %2901 = vmatpush1.msra.mxu0 %v2702
  %2902 = vmatprep.subr.mxu0 0.0
  %2903 = vmatpush1.msra.mxu0 %v2701
  %2904 = vmatprep.subr.mxu0 0.0
  %2905 = vmatpush1.msra.mxu0 %v2700
  %2906 = vmatprep.subr.mxu0 0.0
  %2907 = vmatpush2.msra.mxu0 0.0
  %2908 = vmatprep.subr.mxu0 0.0
  %2909 = vmatpush2.msra.mxu0 0.0
  %2910 = vmatprep.subr.mxu0 0.0
  %2911 = vmatpush2.msra.mxu0 0.0
  %2912 = vmatprep.subr.mxu0 0.0
  %2913 = vmatpush2.msra.mxu0 0.0
  %2914 = vmatprep.subr.mxu0 0.0
  %2915 = vmatpush2.msra.mxu0 0.0
  %2916 = vmatprep.subr.mxu0 0.0
  %2917 = vmatpush2.msra.mxu0 0.0
  %2918 = vmatprep.subr.mxu0 0.0
  %2919 = vmatpush2.msra.mxu0 0.0
  %2920 = vmatprep.subr.mxu0 0.0
  %2921 = vmatpush2.msra.mxu0 0.0
  %2922 = vmatprep.subr.mxu0 0.0
  %2923 = vmatpush2.msra.mxu0 0.0
  %2924 = vmatprep.subr.mxu0 0.0
  %2925 = vmatpush2.msra.mxu0 0.0
  %2926 = vmatprep.subr.mxu0 0.0
  %2927 = vmatpush2.msra.mxu0 0.0
  %2928 = vmatprep.subr.mxu0 0.0
  %2929 = vmatpush2.msra.mxu0 0.0
  %2930 = vmatprep.subr.mxu0 0.0
  %2931 = vmatpush2.msra.mxu0 0.0
  %2932 = vmatprep.subr.mxu0 0.0
  %2933 = vmatpush2.msra.mxu0 0.0
  %2934 = vmatprep.subr.mxu0 0.0
  %2935 = vmatpush2.msra.mxu0 0.0
  %2936 = vmatprep.subr.mxu0 0.0
  %2937 = vmatpush2.msra.mxu0 0.0
  %2938 = vmatprep.mubr.f32.mxu0 0.0
  %2939 = vmatmul.mubr.f32.gmra.mxu0 %v2207
  %v2940 = vpop.f32.mrf.mxu0
  %v2941 = vadd.f32 0.0, %v2940
  %v2942 = vpop.f32.mrf.mxu0
  %2943 = vmatprep.mubr.f32.mxu0 0.0
  %2944 = vmatmul.mubr.f32.gmra.mxu0 %v2210
  %v2945 = vpop.f32.mrf.mxu0
  %v2946 = vadd.f32 0.0, %v2945
  %v2947 = vpop.f32.mrf.mxu0
  %2948 = vdwg.mxu0
  %2949 = vmatprep.subr.mxu0 0.0
  %2950 = vmatpush1.msra.mxu0 0.0
  %2951 = vmatprep.subr.mxu0 0.0
  %2952 = vmatpush1.msra.mxu0 0.0
  %2953 = vmatprep.subr.mxu0 0.0
  %2954 = vmatpush1.msra.mxu0 0.0
  %2955 = vmatprep.subr.mxu0 0.0
  %2956 = vmatpush1.msra.mxu0 0.0
  %2957 = vmatprep.subr.mxu0 0.0
  %2958 = vmatpush1.msra.mxu0 0.0
  %2959 = vmatprep.subr.mxu0 0.0
  %2960 = vmatpush1.msra.mxu0 0.0
  %2961 = vmatprep.subr.mxu0 0.0
  %2962 = vmatpush1.msra.mxu0 0.0
  %2963 = vmatprep.subr.mxu0 0.0
  %2964 = vmatpush1.msra.mxu0 0.0
  %2965 = vmatprep.subr.mxu0 0.0
  %2966 = vmatpush1.msra.mxu0 0.0
  %2967 = vmatprep.subr.mxu0 0.0
  %2968 = vmatpush1.msra.mxu0 0.0
  %2969 = vmatprep.subr.mxu0 0.0
  %2970 = vmatpush1.msra.mxu0 0.0
  %2971 = vmatprep.subr.mxu0 0.0
  %2972 = vmatpush1.msra.mxu0 0.0
  %2973 = vmatprep.subr.mxu0 0.0
  %2974 = vmatpush1.msra.mxu0 %v2707
  %2975 = vmatprep.subr.mxu0 0.0
  %2976 = vmatpush1.msra.mxu0 %v2706
  %2977 = vmatprep.subr.mxu0 0.0
  %2978 = vmatpush1.msra.mxu0 %v2705
  %2979 = vmatprep.subr.mxu0 0.0
  %2980 = vmatpush1.msra.mxu0 %v2704
  %2981 = vmatprep.subr.mxu0 0.0
  %2982 = vmatpush2.msra.mxu0 0.0
  %2983 = vmatprep.subr.mxu0 0.0
  %2984 = vmatpush2.msra.mxu0 0.0
  %2985 = vmatprep.subr.mxu0 0.0
  %2986 = vmatpush2.msra.mxu0 0.0
  %2987 = vmatprep.subr.mxu0 0.0
  %2988 = vmatpush2.msra.mxu0 0.0
  %2989 = vmatprep.subr.mxu0 0.0
  %2990 = vmatpush2.msra.mxu0 0.0
  %2991 = vmatprep.subr.mxu0 0.0
  %2992 = vmatpush2.msra.mxu0 0.0
  %2993 = vmatprep.subr.mxu0 0.0
  %2994 = vmatpush2.msra.mxu0 0.0
  %2995 = vmatprep.subr.mxu0 0.0
  %2996 = vmatpush2.msra.mxu0 0.0
  %2997 = vmatprep.subr.mxu0 0.0
  %2998 = vmatpush2.msra.mxu0 0.0
  %2999 = vmatprep.subr.mxu0 0.0
  %3000 = vmatpush2.msra.mxu0 0.0
  %3001 = vmatprep.subr.mxu0 0.0
  %3002 = vmatpush2.msra.mxu0 0.0
  %3003 = vmatprep.subr.mxu0 0.0
  %3004 = vmatpush2.msra.mxu0 0.0
  %3005 = vmatprep.subr.mxu0 0.0
  %3006 = vmatpush2.msra.mxu0 0.0
  %3007 = vmatprep.subr.mxu0 0.0
  %3008 = vmatpush2.msra.mxu0 0.0
  %3009 = vmatprep.subr.mxu0 0.0
  %3010 = vmatpush2.msra.mxu0 0.0
  %3011 = vmatprep.subr.mxu0 0.0
  %3012 = vmatpush2.msra.mxu0 0.0
  %3013 = vmatprep.mubr.f32.mxu0 0.0
  %3014 = vmatmul.mubr.f32.gmra.mxu0 %v2288
  %v3015 = vpop.f32.mrf.mxu0
  %v3016 = vadd.f32 0.0, %v3015
  %v3017 = vpop.f32.mrf.mxu0
  %3018 = vmatprep.mubr.f32.mxu0 0.0
  %3019 = vmatmul.mubr.f32.gmra.mxu0 %v2291
  %v3020 = vpop.f32.mrf.mxu0
  %v3021 = vadd.f32 0.0, %v3020
  %v3022 = vpop.f32.mrf.mxu0
  %3023 = vdwg.mxu0
  %3024 = vmatprep.subr.mxu0 0.0
  %3025 = vmatpush1.msra.mxu0 0.0
  %3026 = vmatprep.subr.mxu0 0.0
  %3027 = vmatpush1.msra.mxu0 0.0
  %3028 = vmatprep.subr.mxu0 0.0
  %3029 = vmatpush1.msra.mxu0 0.0
  %3030 = vmatprep.subr.mxu0 0.0
  %3031 = vmatpush1.msra.mxu0 0.0
  %3032 = vmatprep.subr.mxu0 0.0
  %3033 = vmatpush1.msra.mxu0 0.0
  %3034 = vmatprep.subr.mxu0 0.0
  %3035 = vmatpush1.msra.mxu0 0.0
  %3036 = vmatprep.subr.mxu0 0.0
  %3037 = vmatpush1.msra.mxu0 0.0
  %3038 = vmatprep.subr.mxu0 0.0
  %3039 = vmatpush1.msra.mxu0 0.0
  %3040 = vmatprep.subr.mxu0 0.0
  %3041 = vmatpush1.msra.mxu0 0.0
  %3042 = vmatprep.subr.mxu0 0.0
  %3043 = vmatpush1.msra.mxu0 0.0
  %3044 = vmatprep.subr.mxu0 0.0
  %3045 = vmatpush1.msra.mxu0 0.0
  %3046 = vmatprep.subr.mxu0 0.0
  %3047 = vmatpush1.msra.mxu0 0.0
  %3048 = vmatprep.subr.mxu0 0.0
  %3049 = vmatpush1.msra.mxu0 %v2711
  %3050 = vmatprep.subr.mxu0 0.0
  %3051 = vmatpush1.msra.mxu0 %v2710
  %3052 = vmatprep.subr.mxu0 0.0
  %3053 = vmatpush1.msra.mxu0 %v2709
  %3054 = vmatprep.subr.mxu0 0.0
  %3055 = vmatpush1.msra.mxu0 %v2708
  %3056 = vmatprep.subr.mxu0 0.0
  %3057 = vmatpush2.msra.mxu0 0.0
  %3058 = vmatprep.subr.mxu0 0.0
  %3059 = vmatpush2.msra.mxu0 0.0
  %3060 = vmatprep.subr.mxu0 0.0
  %3061 = vmatpush2.msra.mxu0 0.0
  %3062 = vmatprep.subr.mxu0 0.0
  %3063 = vmatpush2.msra.mxu0 0.0
  %3064 = vmatprep.subr.mxu0 0.0
  %3065 = vmatpush2.msra.mxu0 0.0
  %3066 = vmatprep.subr.mxu0 0.0
  %3067 = vmatpush2.msra.mxu0 0.0
  %3068 = vmatprep.subr.mxu0 0.0
  %3069 = vmatpush2.msra.mxu0 0.0
  %3070 = vmatprep.subr.mxu0 0.0
  %3071 = vmatpush2.msra.mxu0 0.0
  %3072 = vmatprep.subr.mxu0 0.0
  %3073 = vmatpush2.msra.mxu0 0.0
  %3074 = vmatprep.subr.mxu0 0.0
  %3075 = vmatpush2.msra.mxu0 0.0
  %3076 = vmatprep.subr.mxu0 0.0
  %3077 = vmatpush2.msra.mxu0 0.0
  %3078 = vmatprep.subr.mxu0 0.0
  %3079 = vmatpush2.msra.mxu0 0.0
  %3080 = vmatprep.subr.mxu0 0.0
  %3081 = vmatpush2.msra.mxu0 0.0
  %3082 = vmatprep.subr.mxu0 0.0
  %3083 = vmatpush2.msra.mxu0 0.0
  %3084 = vmatprep.subr.mxu0 0.0
  %3085 = vmatpush2.msra.mxu0 0.0
  %3086 = vmatprep.subr.mxu0 0.0
  %3087 = vmatpush2.msra.mxu0 0.0
  %3088 = vmatprep.mubr.f32.mxu0 0.0
  %3089 = vmatmul.mubr.f32.gmra.mxu0 %v2369
  %v3090 = vpop.f32.mrf.mxu0
  %v3091 = vadd.f32 0.0, %v3090
  %v3092 = vpop.f32.mrf.mxu0
  %3093 = vmatprep.mubr.f32.mxu0 0.0
  %3094 = vmatmul.mubr.f32.gmra.mxu0 %v2372
  %v3095 = vpop.f32.mrf.mxu0
  %v3096 = vadd.f32 0.0, %v3095
  %v3097 = vpop.f32.mrf.mxu0
  %3098 = vdwg.mxu0
  %3099 = vmatprep.subr.mxu0 0.0
  %3100 = vmatpush1.msra.mxu0 0.0
  %3101 = vmatprep.subr.mxu0 0.0
  %3102 = vmatpush1.msra.mxu0 0.0
  %3103 = vmatprep.subr.mxu0 0.0
  %3104 = vmatpush1.msra.mxu0 0.0
  %3105 = vmatprep.subr.mxu0 0.0
  %3106 = vmatpush1.msra.mxu0 0.0
  %3107 = vmatprep.subr.mxu0 0.0
  %3108 = vmatpush1.msra.mxu0 0.0
  %3109 = vmatprep.subr.mxu0 0.0
  %3110 = vmatpush1.msra.mxu0 0.0
  %3111 = vmatprep.subr.mxu0 0.0
  %3112 = vmatpush1.msra.mxu0 0.0
  %3113 = vmatprep.subr.mxu0 0.0
  %3114 = vmatpush1.msra.mxu0 0.0
  %3115 = vmatprep.subr.mxu0 0.0
  %3116 = vmatpush1.msra.mxu0 0.0
  %3117 = vmatprep.subr.mxu0 0.0
  %3118 = vmatpush1.msra.mxu0 0.0
  %3119 = vmatprep.subr.mxu0 0.0
  %3120 = vmatpush1.msra.mxu0 0.0
  %3121 = vmatprep.subr.mxu0 0.0
  %3122 = vmatpush1.msra.mxu0 0.0
  %3123 = vmatprep.subr.mxu0 0.0
  %3124 = vmatpush1.msra.mxu0 %v2715
  %3125 = vmatprep.subr.mxu0 0.0
  %3126 = vmatpush1.msra.mxu0 %v2714
  %3127 = vmatprep.subr.mxu0 0.0
  %3128 = vmatpush1.msra.mxu0 %v2713
  %3129 = vmatprep.subr.mxu0 0.0
  %3130 = vmatpush1.msra.mxu0 %v2712
  %3131 = vmatprep.subr.mxu0 0.0
  %3132 = vmatpush2.msra.mxu0 0.0
  %3133 = vmatprep.subr.mxu0 0.0
  %3134 = vmatpush2.msra.mxu0 0.0
  %3135 = vmatprep.subr.mxu0 0.0
  %3136 = vmatpush2.msra.mxu0 0.0
  %3137 = vmatprep.subr.mxu0 0.0
  %3138 = vmatpush2.msra.mxu0 0.0
  %3139 = vmatprep.subr.mxu0 0.0
  %3140 = vmatpush2.msra.mxu0 0.0
  %3141 = vmatprep.subr.mxu0 0.0
  %3142 = vmatpush2.msra.mxu0 0.0
  %3143 = vmatprep.subr.mxu0 0.0
  %3144 = vmatpush2.msra.mxu0 0.0
  %3145 = vmatprep.subr.mxu0 0.0
  %3146 = vmatpush2.msra.mxu0 0.0
  %3147 = vmatprep.subr.mxu0 0.0
  %3148 = vmatpush2.msra.mxu0 0.0
  %3149 = vmatprep.subr.mxu0 0.0
  %3150 = vmatpush2.msra.mxu0 0.0
  %3151 = vmatprep.subr.mxu0 0.0
  %3152 = vmatpush2.msra.mxu0 0.0
  %3153 = vmatprep.subr.mxu0 0.0
  %3154 = vmatpush2.msra.mxu0 0.0
  %3155 = vmatprep.subr.mxu0 0.0
  %3156 = vmatpush2.msra.mxu0 0.0
  %3157 = vmatprep.subr.mxu0 0.0
  %3158 = vmatpush2.msra.mxu0 0.0
  %3159 = vmatprep.subr.mxu0 0.0
  %3160 = vmatpush2.msra.mxu0 0.0
  %3161 = vmatprep.subr.mxu0 0.0
  %3162 = vmatpush2.msra.mxu0 0.0
  %3163 = vmatprep.mubr.f32.mxu0 0.0
  %3164 = vmatmul.mubr.f32.gmra.mxu0 %v2450
  %v3165 = vpop.f32.mrf.mxu0
  %v3166 = vadd.f32 0.0, %v3165
  %v3167 = vpop.f32.mrf.mxu0
  %3168 = vmatprep.mubr.f32.mxu0 0.0
  %3169 = vmatmul.mubr.f32.gmra.mxu0 %v2453
  %v3170 = vpop.f32.mrf.mxu0
  %v3171 = vadd.f32 0.0, %v3170
  %v3172 = vpop.f32.mrf.mxu0
  %3173 = vdwg.mxu0
  %3174 = vmatprep.subr.mxu0 0.0
  %3175 = vmatpush1.msra.mxu0 0.0
  %3176 = vmatprep.subr.mxu0 0.0
  %3177 = vmatpush1.msra.mxu0 0.0
  %3178 = vmatprep.subr.mxu0 0.0
  %3179 = vmatpush1.msra.mxu0 0.0
  %3180 = vmatprep.subr.mxu0 0.0
  %3181 = vmatpush1.msra.mxu0 0.0
  %3182 = vmatprep.subr.mxu0 0.0
  %3183 = vmatpush1.msra.mxu0 0.0
  %3184 = vmatprep.subr.mxu0 0.0
  %3185 = vmatpush1.msra.mxu0 0.0
  %3186 = vmatprep.subr.mxu0 0.0
  %3187 = vmatpush1.msra.mxu0 0.0
  %3188 = vmatprep.subr.mxu0 0.0
  %3189 = vmatpush1.msra.mxu0 0.0
  %3190 = vmatprep.subr.mxu0 0.0
  %3191 = vmatpush1.msra.mxu0 0.0
  %3192 = vmatprep.subr.mxu0 0.0
  %3193 = vmatpush1.msra.mxu0 0.0
  %3194 = vmatprep.subr.mxu0 0.0
  %3195 = vmatpush1.msra.mxu0 0.0
  %3196 = vmatprep.subr.mxu0 0.0
  %3197 = vmatpush1.msra.mxu0 0.0
  %3198 = vmatprep.subr.mxu0 0.0
  %3199 = vmatpush1.msra.mxu0 %v2719
  %3200 = vmatprep.subr.mxu0 0.0
  %3201 = vmatpush1.msra.mxu0 %v2718
  %3202 = vmatprep.subr.mxu0 0.0
  %3203 = vmatpush1.msra.mxu0 %v2717
  %3204 = vmatprep.subr.mxu0 0.0
  %3205 = vmatpush1.msra.mxu0 %v2716
  %3206 = vmatprep.subr.mxu0 0.0
  %3207 = vmatpush2.msra.mxu0 0.0
  %3208 = vmatprep.subr.mxu0 0.0
  %3209 = vmatpush2.msra.mxu0 0.0
  %3210 = vmatprep.subr.mxu0 0.0
  %3211 = vmatpush2.msra.mxu0 0.0
  %3212 = vmatprep.subr.mxu0 0.0
  %3213 = vmatpush2.msra.mxu0 0.0
  %3214 = vmatprep.subr.mxu0 0.0
  %3215 = vmatpush2.msra.mxu0 0.0
  %3216 = vmatprep.subr.mxu0 0.0
  %3217 = vmatpush2.msra.mxu0 0.0
  %3218 = vmatprep.subr.mxu0 0.0
  %3219 = vmatpush2.msra.mxu0 0.0
  %3220 = vmatprep.subr.mxu0 0.0
  %3221 = vmatpush2.msra.mxu0 0.0
  %3222 = vmatprep.subr.mxu0 0.0
  %3223 = vmatpush2.msra.mxu0 0.0
  %3224 = vmatprep.subr.mxu0 0.0
  %3225 = vmatpush2.msra.mxu0 0.0
  %3226 = vmatprep.subr.mxu0 0.0
  %3227 = vmatpush2.msra.mxu0 0.0
  %3228 = vmatprep.subr.mxu0 0.0
  %3229 = vmatpush2.msra.mxu0 0.0
  %3230 = vmatprep.subr.mxu0 0.0
  %3231 = vmatpush2.msra.mxu0 0.0
  %3232 = vmatprep.subr.mxu0 0.0
  %3233 = vmatpush2.msra.mxu0 0.0
  %3234 = vmatprep.subr.mxu0 0.0
  %3235 = vmatpush2.msra.mxu0 0.0
  %3236 = vmatprep.subr.mxu0 0.0
  %3237 = vmatpush2.msra.mxu0 0.0
  %3238 = vmatprep.mubr.f32.mxu0 0.0
  %3239 = vmatmul.mubr.f32.gmra.mxu0 %v2531
  %v3240 = vpop.f32.mrf.mxu0
  %v3241 = vadd.f32 0.0, %v3240
  %v3242 = vpop.f32.mrf.mxu0
  %3243 = vmatprep.mubr.f32.mxu0 0.0
  %3244 = vmatmul.mubr.f32.gmra.mxu0 %v2534
  %v3245 = vpop.f32.mrf.mxu0
  %v3246 = vadd.f32 0.0, %v3245
  %v3247 = vpop.f32.mrf.mxu0
  %3248 = vdwg.mxu0
  %3249 = vmatprep.subr.mxu0 0.0
  %3250 = vmatpush1.msra.mxu0 0.0
  %3251 = vmatprep.subr.mxu0 0.0
  %3252 = vmatpush1.msra.mxu0 0.0
  %3253 = vmatprep.subr.mxu0 0.0
  %3254 = vmatpush1.msra.mxu0 0.0
  %3255 = vmatprep.subr.mxu0 0.0
  %3256 = vmatpush1.msra.mxu0 0.0
  %3257 = vmatprep.subr.mxu0 0.0
  %3258 = vmatpush1.msra.mxu0 0.0
  %3259 = vmatprep.subr.mxu0 0.0
  %3260 = vmatpush1.msra.mxu0 0.0
  %3261 = vmatprep.subr.mxu0 0.0
  %3262 = vmatpush1.msra.mxu0 0.0
  %3263 = vmatprep.subr.mxu0 0.0
  %3264 = vmatpush1.msra.mxu0 0.0
  %3265 = vmatprep.subr.mxu0 0.0
  %3266 = vmatpush1.msra.mxu0 0.0
  %3267 = vmatprep.subr.mxu0 0.0
  %3268 = vmatpush1.msra.mxu0 0.0
  %3269 = vmatprep.subr.mxu0 0.0
  %3270 = vmatpush1.msra.mxu0 0.0
  %3271 = vmatprep.subr.mxu0 0.0
  %3272 = vmatpush1.msra.mxu0 0.0
  %3273 = vmatprep.subr.mxu0 0.0
  %3274 = vmatpush1.msra.mxu0 %v2723
  %3275 = vmatprep.subr.mxu0 0.0
  %3276 = vmatpush1.msra.mxu0 %v2722
  %3277 = vmatprep.subr.mxu0 0.0
  %3278 = vmatpush1.msra.mxu0 %v2721
  %3279 = vmatprep.subr.mxu0 0.0
  %3280 = vmatpush1.msra.mxu0 %v2720
  %3281 = vmatprep.subr.mxu0 0.0
  %3282 = vmatpush2.msra.mxu0 0.0
  %3283 = vmatprep.subr.mxu0 0.0
  %3284 = vmatpush2.msra.mxu0 0.0
  %3285 = vmatprep.subr.mxu0 0.0
  %3286 = vmatpush2.msra.mxu0 0.0
  %3287 = vmatprep.subr.mxu0 0.0
  %3288 = vmatpush2.msra.mxu0 0.0
  %3289 = vmatprep.subr.mxu0 0.0
  %3290 = vmatpush2.msra.mxu0 0.0
  %3291 = vmatprep.subr.mxu0 0.0
  %3292 = vmatpush2.msra.mxu0 0.0
  %3293 = vmatprep.subr.mxu0 0.0
  %3294 = vmatpush2.msra.mxu0 0.0
  %3295 = vmatprep.subr.mxu0 0.0
  %3296 = vmatpush2.msra.mxu0 0.0
  %3297 = vmatprep.subr.mxu0 0.0
  %3298 = vmatpush2.msra.mxu0 0.0
  %3299 = vmatprep.subr.mxu0 0.0
  %3300 = vmatpush2.msra.mxu0 0.0
  %3301 = vmatprep.subr.mxu0 0.0
  %3302 = vmatpush2.msra.mxu0 0.0
  %3303 = vmatprep.subr.mxu0 0.0
  %3304 = vmatpush2.msra.mxu0 0.0
  %3305 = vmatprep.subr.mxu0 0.0
  %3306 = vmatpush2.msra.mxu0 0.0
  %3307 = vmatprep.subr.mxu0 0.0
  %3308 = vmatpush2.msra.mxu0 0.0
  %3309 = vmatprep.subr.mxu0 0.0
  %3310 = vmatpush2.msra.mxu0 0.0
  %3311 = vmatprep.subr.mxu0 0.0
  %3312 = vmatpush2.msra.mxu0 0.0
  %3313 = vmatprep.mubr.f32.mxu0 0.0
  %3314 = vmatmul.mubr.f32.gmra.mxu0 %v2612
  %v3315 = vpop.f32.mrf.mxu0
  %v3316 = vadd.f32 0.0, %v3315
  %v3317 = vpop.f32.mrf.mxu0
  %3318 = vmatprep.mubr.f32.mxu0 0.0
  %3319 = vmatmul.mubr.f32.gmra.mxu0 %v2615
  %v3320 = vpop.f32.mrf.mxu0
  %v3321 = vadd.f32 0.0, %v3320
  %v3322 = vpop.f32.mrf.mxu0
  %3323 = vdwg.mxu0
  %v3324 = vld [vmem:[%s6] sm:$0xff]
  %v3325 = vld [vmem:[%s6 + $0x8] sm:$0xff]
  %v3326 = vld [vmem:[%s6 + $0x10] sm:$0xff]
  %v3327 = vld [vmem:[%s6 + $0x18] sm:$0xff]
  %v3328 = vld [vmem:[%s6 + $0x20] sm:$0xff]
  %v3329 = vld [vmem:[%s6 + $0x28] sm:$0xff]
  %v3330 = vld [vmem:[%s6 + $0x30] sm:$0xff]
  %v3331 = vld [vmem:[%s6 + $0x38] sm:$0xff]
  %v3332 = vld [vmem:[%s6 + $0x40] sm:$0xff]
  %v3333 = vld [vmem:[%s6 + $0x48] sm:$0xff]
  %v3334 = vld [vmem:[%s6 + $0x50] sm:$0xff]
  %v3335 = vld [vmem:[%s6 + $0x58] sm:$0xff]
  %v3336 = vld [vmem:[%s6 + $0x60] sm:$0xff]
  %v3337 = vld [vmem:[%s6 + $0x68] sm:$0xff]
  %v3338 = vld [vmem:[%s6 + $0x70] sm:$0xff]
  %v3339 = vld [vmem:[%s6 + $0x78] sm:$0xff]
  %v3340 = vld [vmem:[%s6 + $0x80] sm:$0xff]
  %v3341 = vld [vmem:[%s6 + $0x88] sm:$0xff]
  %v3342 = vld [vmem:[%s6 + $0x90] sm:$0xff]
  %v3343 = vld [vmem:[%s6 + $0x98] sm:$0xff]
  %v3344 = vld [vmem:[%s6 + $0xa0] sm:$0xff]
  %v3345 = vld [vmem:[%s6 + $0xa8] sm:$0xff]
  %v3346 = vld [vmem:[%s6 + $0xb0] sm:$0xff]
  %v3347 = vld [vmem:[%s6 + $0xb8] sm:$0xff]
  %v3348 = vld [vmem:[%s6 + $0xc0] sm:$0xff]
  %v3349 = vld [vmem:[%s6 + $0xc8] sm:$0xff]
  %v3350 = vld [vmem:[%s6 + $0xd0] sm:$0xff]
  %v3351 = vld [vmem:[%s6 + $0xd8] sm:$0xff]
  %v3352 = vld [vmem:[%s6 + $0xe0] sm:$0xff]
  %v3353 = vld [vmem:[%s6 + $0xe8] sm:$0xff]
  %v3354 = vld [vmem:[%s6 + $0xf0] sm:$0xff]
  %v3355 = vld [vmem:[%s6 + $0xf8] sm:$0xff]
  %3356 = vmatprep.subr.mxu0 0.0
  %3357 = vmatpush1.msra.mxu0 0.0
  %3358 = vmatprep.subr.mxu0 0.0
  %3359 = vmatpush1.msra.mxu0 0.0
  %3360 = vmatprep.subr.mxu0 0.0
  %3361 = vmatpush1.msra.mxu0 0.0
  %3362 = vmatprep.subr.mxu0 0.0
  %3363 = vmatpush1.msra.mxu0 0.0
  %3364 = vmatprep.subr.mxu0 0.0
  %3365 = vmatpush1.msra.mxu0 0.0
  %3366 = vmatprep.subr.mxu0 0.0
  %3367 = vmatpush1.msra.mxu0 0.0
  %3368 = vmatprep.subr.mxu0 0.0
  %3369 = vmatpush1.msra.mxu0 0.0
  %3370 = vmatprep.subr.mxu0 0.0
  %3371 = vmatpush1.msra.mxu0 0.0
  %3372 = vmatprep.subr.mxu0 0.0
  %3373 = vmatpush1.msra.mxu0 0.0
  %3374 = vmatprep.subr.mxu0 0.0
  %3375 = vmatpush1.msra.mxu0 0.0
  %3376 = vmatprep.subr.mxu0 0.0
  %3377 = vmatpush1.msra.mxu0 0.0
  %3378 = vmatprep.subr.mxu0 0.0
  %3379 = vmatpush1.msra.mxu0 0.0
  %3380 = vmatprep.subr.mxu0 0.0
  %3381 = vmatpush1.msra.mxu0 %v3327
  %3382 = vmatprep.subr.mxu0 0.0
  %3383 = vmatpush1.msra.mxu0 %v3326
  %3384 = vmatprep.subr.mxu0 0.0
  %3385 = vmatpush1.msra.mxu0 %v3325
  %3386 = vmatprep.subr.mxu0 0.0
  %3387 = vmatpush1.msra.mxu0 %v3324
  %3388 = vmatprep.subr.mxu0 0.0
  %3389 = vmatpush2.msra.mxu0 0.0
  %3390 = vmatprep.subr.mxu0 0.0
  %3391 = vmatpush2.msra.mxu0 0.0
  %3392 = vmatprep.subr.mxu0 0.0
  %3393 = vmatpush2.msra.mxu0 0.0
  %3394 = vmatprep.subr.mxu0 0.0
  %3395 = vmatpush2.msra.mxu0 0.0
  %3396 = vmatprep.subr.mxu0 0.0
  %3397 = vmatpush2.msra.mxu0 0.0
  %3398 = vmatprep.subr.mxu0 0.0
  %3399 = vmatpush2.msra.mxu0 0.0
  %3400 = vmatprep.subr.mxu0 0.0
  %3401 = vmatpush2.msra.mxu0 0.0
  %3402 = vmatprep.subr.mxu0 0.0
  %3403 = vmatpush2.msra.mxu0 0.0
  %3404 = vmatprep.subr.mxu0 0.0
  %3405 = vmatpush2.msra.mxu0 0.0
  %3406 = vmatprep.subr.mxu0 0.0
  %3407 = vmatpush2.msra.mxu0 0.0
  %3408 = vmatprep.subr.mxu0 0.0
  %3409 = vmatpush2.msra.mxu0 0.0
  %3410 = vmatprep.subr.mxu0 0.0
  %3411 = vmatpush2.msra.mxu0 0.0
  %3412 = vmatprep.subr.mxu0 0.0
  %3413 = vmatpush2.msra.mxu0 0.0
  %3414 = vmatprep.subr.mxu0 0.0
  %3415 = vmatpush2.msra.mxu0 0.0
  %3416 = vmatprep.subr.mxu0 0.0
  %3417 = vmatpush2.msra.mxu0 0.0
  %3418 = vmatprep.subr.mxu0 0.0
  %3419 = vmatpush2.msra.mxu0 0.0
  %3420 = vmatprep.mubr.f32.mxu0 0.0
  %3421 = vmatmul.mubr.f32.gmra.mxu0 %v2045
  %v3422 = vpop.f32.mrf.mxu0
  %v3423 = vadd.f32 0.0, %v3422
  %v3424 = vpop.f32.mrf.mxu0
  %3425 = vmatprep.mubr.f32.mxu0 0.0
  %3426 = vmatmul.mubr.f32.gmra.mxu0 %v2048
  %v3427 = vpop.f32.mrf.mxu0
  %v3428 = vadd.f32 0.0, %v3427
  %v3429 = vpop.f32.mrf.mxu0
  %3430 = vdwg.mxu0
  %3431 = vmatprep.subr.mxu0 0.0
  %3432 = vmatpush1.msra.mxu0 0.0
  %3433 = vmatprep.subr.mxu0 0.0
  %3434 = vmatpush1.msra.mxu0 0.0
  %3435 = vmatprep.subr.mxu0 0.0
  %3436 = vmatpush1.msra.mxu0 0.0
  %3437 = vmatprep.subr.mxu0 0.0
  %3438 = vmatpush1.msra.mxu0 0.0
  %3439 = vmatprep.subr.mxu0 0.0
  %3440 = vmatpush1.msra.mxu0 0.0
  %3441 = vmatprep.subr.mxu0 0.0
  %3442 = vmatpush1.msra.mxu0 0.0
  %3443 = vmatprep.subr.mxu0 0.0
  %3444 = vmatpush1.msra.mxu0 0.0
  %3445 = vmatprep.subr.mxu0 0.0
  %3446 = vmatpush1.msra.mxu0 0.0
  %3447 = vmatprep.subr.mxu0 0.0
  %3448 = vmatpush1.msra.mxu0 0.0
  %3449 = vmatprep.subr.mxu0 0.0
  %3450 = vmatpush1.msra.mxu0 0.0
  %3451 = vmatprep.subr.mxu0 0.0
  %3452 = vmatpush1.msra.mxu0 0.0
  %3453 = vmatprep.subr.mxu0 0.0
  %3454 = vmatpush1.msra.mxu0 0.0
  %3455 = vmatprep.subr.mxu0 0.0
  %3456 = vmatpush1.msra.mxu0 %v3331
  %3457 = vmatprep.subr.mxu0 0.0
  %3458 = vmatpush1.msra.mxu0 %v3330
  %3459 = vmatprep.subr.mxu0 0.0
  %3460 = vmatpush1.msra.mxu0 %v3329
  %3461 = vmatprep.subr.mxu0 0.0
  %3462 = vmatpush1.msra.mxu0 %v3328
  %3463 = vmatprep.subr.mxu0 0.0
  %3464 = vmatpush2.msra.mxu0 0.0
  %3465 = vmatprep.subr.mxu0 0.0
  %3466 = vmatpush2.msra.mxu0 0.0
  %3467 = vmatprep.subr.mxu0 0.0
  %3468 = vmatpush2.msra.mxu0 0.0
  %3469 = vmatprep.subr.mxu0 0.0
  %3470 = vmatpush2.msra.mxu0 0.0
  %3471 = vmatprep.subr.mxu0 0.0
  %3472 = vmatpush2.msra.mxu0 0.0
  %3473 = vmatprep.subr.mxu0 0.0
  %3474 = vmatpush2.msra.mxu0 0.0
  %3475 = vmatprep.subr.mxu0 0.0
  %3476 = vmatpush2.msra.mxu0 0.0
  %3477 = vmatprep.subr.mxu0 0.0
  %3478 = vmatpush2.msra.mxu0 0.0
  %3479 = vmatprep.subr.mxu0 0.0
  %3480 = vmatpush2.msra.mxu0 0.0
  %3481 = vmatprep.subr.mxu0 0.0
  %3482 = vmatpush2.msra.mxu0 0.0
  %3483 = vmatprep.subr.mxu0 0.0
  %3484 = vmatpush2.msra.mxu0 0.0
  %3485 = vmatprep.subr.mxu0 0.0
  %3486 = vmatpush2.msra.mxu0 0.0
  %3487 = vmatprep.subr.mxu0 0.0
  %3488 = vmatpush2.msra.mxu0 0.0
  %3489 = vmatprep.subr.mxu0 0.0
  %3490 = vmatpush2.msra.mxu0 0.0
  %3491 = vmatprep.subr.mxu0 0.0
  %3492 = vmatpush2.msra.mxu0 0.0
  %3493 = vmatprep.subr.mxu0 0.0
  %3494 = vmatpush2.msra.mxu0 0.0
  %3495 = vmatprep.mubr.f32.mxu0 0.0
  %3496 = vmatmul.mubr.f32.gmra.mxu0 %v2126
  %v3497 = vpop.f32.mrf.mxu0
  %v3498 = vadd.f32 0.0, %v3497
  %v3499 = vpop.f32.mrf.mxu0
  %3500 = vmatprep.mubr.f32.mxu0 0.0
  %3501 = vmatmul.mubr.f32.gmra.mxu0 %v2129
  %v3502 = vpop.f32.mrf.mxu0
  %v3503 = vadd.f32 0.0, %v3502
  %v3504 = vpop.f32.mrf.mxu0
  %3505 = vdwg.mxu0
  %3506 = vmatprep.subr.mxu0 0.0
  %3507 = vmatpush1.msra.mxu0 0.0
  %3508 = vmatprep.subr.mxu0 0.0
  %3509 = vmatpush1.msra.mxu0 0.0
  %3510 = vmatprep.subr.mxu0 0.0
  %3511 = vmatpush1.msra.mxu0 0.0
  %3512 = vmatprep.subr.mxu0 0.0
  %3513 = vmatpush1.msra.mxu0 0.0
  %3514 = vmatprep.subr.mxu0 0.0
  %3515 = vmatpush1.msra.mxu0 0.0
  %3516 = vmatprep.subr.mxu0 0.0
  %3517 = vmatpush1.msra.mxu0 0.0
  %3518 = vmatprep.subr.mxu0 0.0
  %3519 = vmatpush1.msra.mxu0 0.0
  %3520 = vmatprep.subr.mxu0 0.0
  %3521 = vmatpush1.msra.mxu0 0.0
  %3522 = vmatprep.subr.mxu0 0.0
  %3523 = vmatpush1.msra.mxu0 0.0
  %3524 = vmatprep.subr.mxu0 0.0
  %3525 = vmatpush1.msra.mxu0 0.0
  %3526 = vmatprep.subr.mxu0 0.0
  %3527 = vmatpush1.msra.mxu0 0.0
  %3528 = vmatprep.subr.mxu0 0.0
  %3529 = vmatpush1.msra.mxu0 0.0
  %3530 = vmatprep.subr.mxu0 0.0
  %3531 = vmatpush1.msra.mxu0 %v3335
  %3532 = vmatprep.subr.mxu0 0.0
  %3533 = vmatpush1.msra.mxu0 %v3334
  %3534 = vmatprep.subr.mxu0 0.0
  %3535 = vmatpush1.msra.mxu0 %v3333
  %3536 = vmatprep.subr.mxu0 0.0
  %3537 = vmatpush1.msra.mxu0 %v3332
  %3538 = vmatprep.subr.mxu0 0.0
  %3539 = vmatpush2.msra.mxu0 0.0
  %3540 = vmatprep.subr.mxu0 0.0
  %3541 = vmatpush2.msra.mxu0 0.0
  %3542 = vmatprep.subr.mxu0 0.0
  %3543 = vmatpush2.msra.mxu0 0.0
  %3544 = vmatprep.subr.mxu0 0.0
  %3545 = vmatpush2.msra.mxu0 0.0
  %3546 = vmatprep.subr.mxu0 0.0
  %3547 = vmatpush2.msra.mxu0 0.0
  %3548 = vmatprep.subr.mxu0 0.0
  %3549 = vmatpush2.msra.mxu0 0.0
  %3550 = vmatprep.subr.mxu0 0.0
  %3551 = vmatpush2.msra.mxu0 0.0
  %3552 = vmatprep.subr.mxu0 0.0
  %3553 = vmatpush2.msra.mxu0 0.0
  %3554 = vmatprep.subr.mxu0 0.0
  %3555 = vmatpush2.msra.mxu0 0.0
  %3556 = vmatprep.subr.mxu0 0.0
  %3557 = vmatpush2.msra.mxu0 0.0
  %3558 = vmatprep.subr.mxu0 0.0
  %3559 = vmatpush2.msra.mxu0 0.0
  %3560 = vmatprep.subr.mxu0 0.0
  %3561 = vmatpush2.msra.mxu0 0.0
  %3562 = vmatprep.subr.mxu0 0.0
  %3563 = vmatpush2.msra.mxu0 0.0
  %3564 = vmatprep.subr.mxu0 0.0
  %3565 = vmatpush2.msra.mxu0 0.0
  %3566 = vmatprep.subr.mxu0 0.0
  %3567 = vmatpush2.msra.mxu0 0.0
  %3568 = vmatprep.subr.mxu0 0.0
  %3569 = vmatpush2.msra.mxu0 0.0
  %3570 = vmatprep.mubr.f32.mxu0 0.0
  %3571 = vmatmul.mubr.f32.gmra.mxu0 %v2207
  %v3572 = vpop.f32.mrf.mxu0
  %v3573 = vadd.f32 0.0, %v3572
  %v3574 = vpop.f32.mrf.mxu0
  %3575 = vmatprep.mubr.f32.mxu0 0.0
  %3576 = vmatmul.mubr.f32.gmra.mxu0 %v2210
  %v3577 = vpop.f32.mrf.mxu0
  %v3578 = vadd.f32 0.0, %v3577
  %v3579 = vpop.f32.mrf.mxu0
  %3580 = vdwg.mxu0
  %3581 = vmatprep.subr.mxu0 0.0
  %3582 = vmatpush1.msra.mxu0 0.0
  %3583 = vmatprep.subr.mxu0 0.0
  %3584 = vmatpush1.msra.mxu0 0.0
  %3585 = vmatprep.subr.mxu0 0.0
  %3586 = vmatpush1.msra.mxu0 0.0
  %3587 = vmatprep.subr.mxu0 0.0
  %3588 = vmatpush1.msra.mxu0 0.0
  %3589 = vmatprep.subr.mxu0 0.0
  %3590 = vmatpush1.msra.mxu0 0.0
  %3591 = vmatprep.subr.mxu0 0.0
  %3592 = vmatpush1.msra.mxu0 0.0
  %3593 = vmatprep.subr.mxu0 0.0
  %3594 = vmatpush1.msra.mxu0 0.0
  %3595 = vmatprep.subr.mxu0 0.0
  %3596 = vmatpush1.msra.mxu0 0.0
  %3597 = vmatprep.subr.mxu0 0.0
  %3598 = vmatpush1.msra.mxu0 0.0
  %3599 = vmatprep.subr.mxu0 0.0
  %3600 = vmatpush1.msra.mxu0 0.0
  %3601 = vmatprep.subr.mxu0 0.0
  %3602 = vmatpush1.msra.mxu0 0.0
  %3603 = vmatprep.subr.mxu0 0.0
  %3604 = vmatpush1.msra.mxu0 0.0
  %3605 = vmatprep.subr.mxu0 0.0
  %3606 = vmatpush1.msra.mxu0 %v3339
  %3607 = vmatprep.subr.mxu0 0.0
  %3608 = vmatpush1.msra.mxu0 %v3338
  %3609 = vmatprep.subr.mxu0 0.0
  %3610 = vmatpush1.msra.mxu0 %v3337
  %3611 = vmatprep.subr.mxu0 0.0
  %3612 = vmatpush1.msra.mxu0 %v3336
  %3613 = vmatprep.subr.mxu0 0.0
  %3614 = vmatpush2.msra.mxu0 0.0
  %3615 = vmatprep.subr.mxu0 0.0
  %3616 = vmatpush2.msra.mxu0 0.0
  %3617 = vmatprep.subr.mxu0 0.0
  %3618 = vmatpush2.msra.mxu0 0.0
  %3619 = vmatprep.subr.mxu0 0.0
  %3620 = vmatpush2.msra.mxu0 0.0
  %3621 = vmatprep.subr.mxu0 0.0
  %3622 = vmatpush2.msra.mxu0 0.0
  %3623 = vmatprep.subr.mxu0 0.0
  %3624 = vmatpush2.msra.mxu0 0.0
  %3625 = vmatprep.subr.mxu0 0.0
  %3626 = vmatpush2.msra.mxu0 0.0
  %3627 = vmatprep.subr.mxu0 0.0
  %3628 = vmatpush2.msra.mxu0 0.0
  %3629 = vmatprep.subr.mxu0 0.0
  %3630 = vmatpush2.msra.mxu0 0.0
  %3631 = vmatprep.subr.mxu0 0.0
  %3632 = vmatpush2.msra.mxu0 0.0
  %3633 = vmatprep.subr.mxu0 0.0
  %3634 = vmatpush2.msra.mxu0 0.0
  %3635 = vmatprep.subr.mxu0 0.0
  %3636 = vmatpush2.msra.mxu0 0.0
  %3637 = vmatprep.subr.mxu0 0.0
  %3638 = vmatpush2.msra.mxu0 0.0
  %3639 = vmatprep.subr.mxu0 0.0
  %3640 = vmatpush2.msra.mxu0 0.0
  %3641 = vmatprep.subr.mxu0 0.0
  %3642 = vmatpush2.msra.mxu0 0.0
  %3643 = vmatprep.subr.mxu0 0.0
  %3644 = vmatpush2.msra.mxu0 0.0
  %3645 = vmatprep.mubr.f32.mxu0 0.0
  %3646 = vmatmul.mubr.f32.gmra.mxu0 %v2288
  %v3647 = vpop.f32.mrf.mxu0
  %v3648 = vadd.f32 0.0, %v3647
  %v3649 = vpop.f32.mrf.mxu0
  %3650 = vmatprep.mubr.f32.mxu0 0.0
  %3651 = vmatmul.mubr.f32.gmra.mxu0 %v2291
  %v3652 = vpop.f32.mrf.mxu0
  %v3653 = vadd.f32 0.0, %v3652
  %v3654 = vpop.f32.mrf.mxu0
  %3655 = vdwg.mxu0
  %3656 = vmatprep.subr.mxu0 0.0
  %3657 = vmatpush1.msra.mxu0 0.0
  %3658 = vmatprep.subr.mxu0 0.0
  %3659 = vmatpush1.msra.mxu0 0.0
  %3660 = vmatprep.subr.mxu0 0.0
  %3661 = vmatpush1.msra.mxu0 0.0
  %3662 = vmatprep.subr.mxu0 0.0
  %3663 = vmatpush1.msra.mxu0 0.0
  %3664 = vmatprep.subr.mxu0 0.0
  %3665 = vmatpush1.msra.mxu0 0.0
  %3666 = vmatprep.subr.mxu0 0.0
  %3667 = vmatpush1.msra.mxu0 0.0
  %3668 = vmatprep.subr.mxu0 0.0
  %3669 = vmatpush1.msra.mxu0 0.0
  %3670 = vmatprep.subr.mxu0 0.0
  %3671 = vmatpush1.msra.mxu0 0.0
  %3672 = vmatprep.subr.mxu0 0.0
  %3673 = vmatpush1.msra.mxu0 0.0
  %3674 = vmatprep.subr.mxu0 0.0
  %3675 = vmatpush1.msra.mxu0 0.0
  %3676 = vmatprep.subr.mxu0 0.0
  %3677 = vmatpush1.msra.mxu0 0.0
  %3678 = vmatprep.subr.mxu0 0.0
  %3679 = vmatpush1.msra.mxu0 0.0
  %3680 = vmatprep.subr.mxu0 0.0
  %3681 = vmatpush1.msra.mxu0 %v3343
  %3682 = vmatprep.subr.mxu0 0.0
  %3683 = vmatpush1.msra.mxu0 %v3342
  %3684 = vmatprep.subr.mxu0 0.0
  %3685 = vmatpush1.msra.mxu0 %v3341
  %3686 = vmatprep.subr.mxu0 0.0
  %3687 = vmatpush1.msra.mxu0 %v3340
  %3688 = vmatprep.subr.mxu0 0.0
  %3689 = vmatpush2.msra.mxu0 0.0
  %3690 = vmatprep.subr.mxu0 0.0
  %3691 = vmatpush2.msra.mxu0 0.0
  %3692 = vmatprep.subr.mxu0 0.0
  %3693 = vmatpush2.msra.mxu0 0.0
  %3694 = vmatprep.subr.mxu0 0.0
  %3695 = vmatpush2.msra.mxu0 0.0
  %3696 = vmatprep.subr.mxu0 0.0
  %3697 = vmatpush2.msra.mxu0 0.0
  %3698 = vmatprep.subr.mxu0 0.0
  %3699 = vmatpush2.msra.mxu0 0.0
  %3700 = vmatprep.subr.mxu0 0.0
  %3701 = vmatpush2.msra.mxu0 0.0
  %3702 = vmatprep.subr.mxu0 0.0
  %3703 = vmatpush2.msra.mxu0 0.0
  %3704 = vmatprep.subr.mxu0 0.0
  %3705 = vmatpush2.msra.mxu0 0.0
  %3706 = vmatprep.subr.mxu0 0.0
  %3707 = vmatpush2.msra.mxu0 0.0
  %3708 = vmatprep.subr.mxu0 0.0
  %3709 = vmatpush2.msra.mxu0 0.0
  %3710 = vmatprep.subr.mxu0 0.0
  %3711 = vmatpush2.msra.mxu0 0.0
  %3712 = vmatprep.subr.mxu0 0.0
  %3713 = vmatpush2.msra.mxu0 0.0
  %3714 = vmatprep.subr.mxu0 0.0
  %3715 = vmatpush2.msra.mxu0 0.0
  %3716 = vmatprep.subr.mxu0 0.0
  %3717 = vmatpush2.msra.mxu0 0.0
  %3718 = vmatprep.subr.mxu0 0.0
  %3719 = vmatpush2.msra.mxu0 0.0
  %3720 = vmatprep.mubr.f32.mxu0 0.0
  %3721 = vmatmul.mubr.f32.gmra.mxu0 %v2369
  %v3722 = vpop.f32.mrf.mxu0
  %v3723 = vadd.f32 0.0, %v3722
  %v3724 = vpop.f32.mrf.mxu0
  %3725 = vmatprep.mubr.f32.mxu0 0.0
  %3726 = vmatmul.mubr.f32.gmra.mxu0 %v2372
  %v3727 = vpop.f32.mrf.mxu0
  %v3728 = vadd.f32 0.0, %v3727
  %v3729 = vpop.f32.mrf.mxu0
  %3730 = vdwg.mxu0
  %3731 = vmatprep.subr.mxu0 0.0
  %3732 = vmatpush1.msra.mxu0 0.0
  %3733 = vmatprep.subr.mxu0 0.0
  %3734 = vmatpush1.msra.mxu0 0.0
  %3735 = vmatprep.subr.mxu0 0.0
  %3736 = vmatpush1.msra.mxu0 0.0
  %3737 = vmatprep.subr.mxu0 0.0
  %3738 = vmatpush1.msra.mxu0 0.0
  %3739 = vmatprep.subr.mxu0 0.0
  %3740 = vmatpush1.msra.mxu0 0.0
  %3741 = vmatprep.subr.mxu0 0.0
  %3742 = vmatpush1.msra.mxu0 0.0
  %3743 = vmatprep.subr.mxu0 0.0
  %3744 = vmatpush1.msra.mxu0 0.0
  %3745 = vmatprep.subr.mxu0 0.0
  %3746 = vmatpush1.msra.mxu0 0.0
  %3747 = vmatprep.subr.mxu0 0.0
  %3748 = vmatpush1.msra.mxu0 0.0
  %3749 = vmatprep.subr.mxu0 0.0
  %3750 = vmatpush1.msra.mxu0 0.0
  %3751 = vmatprep.subr.mxu0 0.0
  %3752 = vmatpush1.msra.mxu0 0.0
  %3753 = vmatprep.subr.mxu0 0.0
  %3754 = vmatpush1.msra.mxu0 0.0
  %3755 = vmatprep.subr.mxu0 0.0
  %3756 = vmatpush1.msra.mxu0 %v3347
  %3757 = vmatprep.subr.mxu0 0.0
  %3758 = vmatpush1.msra.mxu0 %v3346
  %3759 = vmatprep.subr.mxu0 0.0
  %3760 = vmatpush1.msra.mxu0 %v3345
  %3761 = vmatprep.subr.mxu0 0.0
  %3762 = vmatpush1.msra.mxu0 %v3344
  %3763 = vmatprep.subr.mxu0 0.0
  %3764 = vmatpush2.msra.mxu0 0.0
  %3765 = vmatprep.subr.mxu0 0.0
  %3766 = vmatpush2.msra.mxu0 0.0
  %3767 = vmatprep.subr.mxu0 0.0
  %3768 = vmatpush2.msra.mxu0 0.0
  %3769 = vmatprep.subr.mxu0 0.0
  %3770 = vmatpush2.msra.mxu0 0.0
  %3771 = vmatprep.subr.mxu0 0.0
  %3772 = vmatpush2.msra.mxu0 0.0
  %3773 = vmatprep.subr.mxu0 0.0
  %3774 = vmatpush2.msra.mxu0 0.0
  %3775 = vmatprep.subr.mxu0 0.0
  %3776 = vmatpush2.msra.mxu0 0.0
  %3777 = vmatprep.subr.mxu0 0.0
  %3778 = vmatpush2.msra.mxu0 0.0
  %3779 = vmatprep.subr.mxu0 0.0
  %3780 = vmatpush2.msra.mxu0 0.0
  %3781 = vmatprep.subr.mxu0 0.0
  %3782 = vmatpush2.msra.mxu0 0.0
  %3783 = vmatprep.subr.mxu0 0.0
  %3784 = vmatpush2.msra.mxu0 0.0
  %3785 = vmatprep.subr.mxu0 0.0
  %3786 = vmatpush2.msra.mxu0 0.0
  %3787 = vmatprep.subr.mxu0 0.0
  %3788 = vmatpush2.msra.mxu0 0.0
  %3789 = vmatprep.subr.mxu0 0.0
  %3790 = vmatpush2.msra.mxu0 0.0
  %3791 = vmatprep.subr.mxu0 0.0
  %3792 = vmatpush2.msra.mxu0 0.0
  %3793 = vmatprep.subr.mxu0 0.0
  %3794 = vmatpush2.msra.mxu0 0.0
  %3795 = vmatprep.mubr.f32.mxu0 0.0
  %3796 = vmatmul.mubr.f32.gmra.mxu0 %v2450
  %v3797 = vpop.f32.mrf.mxu0
  %v3798 = vadd.f32 0.0, %v3797
  %v3799 = vpop.f32.mrf.mxu0
  %3800 = vmatprep.mubr.f32.mxu0 0.0
  %3801 = vmatmul.mubr.f32.gmra.mxu0 %v2453
  %v3802 = vpop.f32.mrf.mxu0
  %v3803 = vadd.f32 0.0, %v3802
  %v3804 = vpop.f32.mrf.mxu0
  %3805 = vdwg.mxu0
  %3806 = vmatprep.subr.mxu0 0.0
  %3807 = vmatpush1.msra.mxu0 0.0
  %3808 = vmatprep.subr.mxu0 0.0
  %3809 = vmatpush1.msra.mxu0 0.0
  %3810 = vmatprep.subr.mxu0 0.0
  %3811 = vmatpush1.msra.mxu0 0.0
  %3812 = vmatprep.subr.mxu0 0.0
  %3813 = vmatpush1.msra.mxu0 0.0
  %3814 = vmatprep.subr.mxu0 0.0
  %3815 = vmatpush1.msra.mxu0 0.0
  %3816 = vmatprep.subr.mxu0 0.0
  %3817 = vmatpush1.msra.mxu0 0.0
  %3818 = vmatprep.subr.mxu0 0.0
  %3819 = vmatpush1.msra.mxu0 0.0
  %3820 = vmatprep.subr.mxu0 0.0
  %3821 = vmatpush1.msra.mxu0 0.0
  %3822 = vmatprep.subr.mxu0 0.0
  %3823 = vmatpush1.msra.mxu0 0.0
  %3824 = vmatprep.subr.mxu0 0.0
  %3825 = vmatpush1.msra.mxu0 0.0
  %3826 = vmatprep.subr.mxu0 0.0
  %3827 = vmatpush1.msra.mxu0 0.0
  %3828 = vmatprep.subr.mxu0 0.0
  %3829 = vmatpush1.msra.mxu0 0.0
  %3830 = vmatprep.subr.mxu0 0.0
  %3831 = vmatpush1.msra.mxu0 %v3351
  %3832 = vmatprep.subr.mxu0 0.0
  %3833 = vmatpush1.msra.mxu0 %v3350
  %3834 = vmatprep.subr.mxu0 0.0
  %3835 = vmatpush1.msra.mxu0 %v3349
  %3836 = vmatprep.subr.mxu0 0.0
  %3837 = vmatpush1.msra.mxu0 %v3348
  %3838 = vmatprep.subr.mxu0 0.0
  %3839 = vmatpush2.msra.mxu0 0.0
  %3840 = vmatprep.subr.mxu0 0.0
  %3841 = vmatpush2.msra.mxu0 0.0
  %3842 = vmatprep.subr.mxu0 0.0
  %3843 = vmatpush2.msra.mxu0 0.0
  %3844 = vmatprep.subr.mxu0 0.0
  %3845 = vmatpush2.msra.mxu0 0.0
  %3846 = vmatprep.subr.mxu0 0.0
  %3847 = vmatpush2.msra.mxu0 0.0
  %3848 = vmatprep.subr.mxu0 0.0
  %3849 = vmatpush2.msra.mxu0 0.0
  %3850 = vmatprep.subr.mxu0 0.0
  %3851 = vmatpush2.msra.mxu0 0.0
  %3852 = vmatprep.subr.mxu0 0.0
  %3853 = vmatpush2.msra.mxu0 0.0
  %3854 = vmatprep.subr.mxu0 0.0
  %3855 = vmatpush2.msra.mxu0 0.0
  %3856 = vmatprep.subr.mxu0 0.0
  %3857 = vmatpush2.msra.mxu0 0.0
  %3858 = vmatprep.subr.mxu0 0.0
  %3859 = vmatpush2.msra.mxu0 0.0
  %3860 = vmatprep.subr.mxu0 0.0
  %3861 = vmatpush2.msra.mxu0 0.0
  %3862 = vmatprep.subr.mxu0 0.0
  %3863 = vmatpush2.msra.mxu0 0.0
  %3864 = vmatprep.subr.mxu0 0.0
  %3865 = vmatpush2.msra.mxu0 0.0
  %3866 = vmatprep.subr.mxu0 0.0
  %3867 = vmatpush2.msra.mxu0 0.0
  %3868 = vmatprep.subr.mxu0 0.0
  %3869 = vmatpush2.msra.mxu0 0.0
  %3870 = vmatprep.mubr.f32.mxu0 0.0
  %3871 = vmatmul.mubr.f32.gmra.mxu0 %v2531
  %v3872 = vpop.f32.mrf.mxu0
  %v3873 = vadd.f32 0.0, %v3872
  %v3874 = vpop.f32.mrf.mxu0
  %3875 = vmatprep.mubr.f32.mxu0 0.0
  %3876 = vmatmul.mubr.f32.gmra.mxu0 %v2534
  %v3877 = vpop.f32.mrf.mxu0
  %v3878 = vadd.f32 0.0, %v3877
  %v3879 = vpop.f32.mrf.mxu0
  %3880 = vdwg.mxu0
  %3881 = vmatprep.subr.mxu0 0.0
  %3882 = vmatpush1.msra.mxu0 0.0
  %3883 = vmatprep.subr.mxu0 0.0
  %3884 = vmatpush1.msra.mxu0 0.0
  %3885 = vmatprep.subr.mxu0 0.0
  %3886 = vmatpush1.msra.mxu0 0.0
  %3887 = vmatprep.subr.mxu0 0.0
  %3888 = vmatpush1.msra.mxu0 0.0
  %3889 = vmatprep.subr.mxu0 0.0
  %3890 = vmatpush1.msra.mxu0 0.0
  %3891 = vmatprep.subr.mxu0 0.0
  %3892 = vmatpush1.msra.mxu0 0.0
  %3893 = vmatprep.subr.mxu0 0.0
  %3894 = vmatpush1.msra.mxu0 0.0
  %3895 = vmatprep.subr.mxu0 0.0
  %3896 = vmatpush1.msra.mxu0 0.0
  %3897 = vmatprep.subr.mxu0 0.0
  %3898 = vmatpush1.msra.mxu0 0.0
  %3899 = vmatprep.subr.mxu0 0.0
  %3900 = vmatpush1.msra.mxu0 0.0
  %3901 = vmatprep.subr.mxu0 0.0
  %3902 = vmatpush1.msra.mxu0 0.0
  %3903 = vmatprep.subr.mxu0 0.0
  %3904 = vmatpush1.msra.mxu0 0.0
  %3905 = vmatprep.subr.mxu0 0.0
  %3906 = vmatpush1.msra.mxu0 %v3355
  %3907 = vmatprep.subr.mxu0 0.0
  %3908 = vmatpush1.msra.mxu0 %v3354
  %3909 = vmatprep.subr.mxu0 0.0
  %3910 = vmatpush1.msra.mxu0 %v3353
  %3911 = vmatprep.subr.mxu0 0.0
  %3912 = vmatpush1.msra.mxu0 %v3352
  %3913 = vmatprep.subr.mxu0 0.0
  %3914 = vmatpush2.msra.mxu0 0.0
  %3915 = vmatprep.subr.mxu0 0.0
  %3916 = vmatpush2.msra.mxu0 0.0
  %3917 = vmatprep.subr.mxu0 0.0
  %3918 = vmatpush2.msra.mxu0 0.0
  %3919 = vmatprep.subr.mxu0 0.0
  %3920 = vmatpush2.msra.mxu0 0.0
  %3921 = vmatprep.subr.mxu0 0.0
  %3922 = vmatpush2.msra.mxu0 0.0
  %3923 = vmatprep.subr.mxu0 0.0
  %3924 = vmatpush2.msra.mxu0 0.0
  %3925 = vmatprep.subr.mxu0 0.0
  %3926 = vmatpush2.msra.mxu0 0.0
  %3927 = vmatprep.subr.mxu0 0.0
  %3928 = vmatpush2.msra.mxu0 0.0
  %3929 = vmatprep.subr.mxu0 0.0
  %3930 = vmatpush2.msra.mxu0 0.0
  %3931 = vmatprep.subr.mxu0 0.0
  %3932 = vmatpush2.msra.mxu0 0.0
  %3933 = vmatprep.subr.mxu0 0.0
  %3934 = vmatpush2.msra.mxu0 0.0
  %3935 = vmatprep.subr.mxu0 0.0
  %3936 = vmatpush2.msra.mxu0 0.0
  %3937 = vmatprep.subr.mxu0 0.0
  %3938 = vmatpush2.msra.mxu0 0.0
  %3939 = vmatprep.subr.mxu0 0.0
  %3940 = vmatpush2.msra.mxu0 0.0
  %3941 = vmatprep.subr.mxu0 0.0
  %3942 = vmatpush2.msra.mxu0 0.0
  %3943 = vmatprep.subr.mxu0 0.0
  %3944 = vmatpush2.msra.mxu0 0.0
  %3945 = vmatprep.mubr.f32.mxu0 0.0
  %3946 = vmatmul.mubr.f32.gmra.mxu0 %v2612
  %v3947 = vpop.f32.mrf.mxu0
  %v3948 = vadd.f32 0.0, %v3947
  %v3949 = vpop.f32.mrf.mxu0
  %3950 = vmatprep.mubr.f32.mxu0 0.0
  %3951 = vmatmul.mubr.f32.gmra.mxu0 %v2615
  %v3952 = vpop.f32.mrf.mxu0
  %v3953 = vadd.f32 0.0, %v3952
  %v3954 = vpop.f32.mrf.mxu0
  %3955 = vdwg.mxu0
  %v3957 = vsel %vm367, %v2117, 0
  %v3960 = vsel %vm367, %v2122, 0
  %v3963 = vsel %vm367, %v2791, 0
  %v3966 = vsel %vm367, %v2796, 0
  %3968 = vmatprep.subr.mxu0 0.0
  %3969 = vmatpush1.xpose.msra.mxu0 0.0
  %3970 = vmatprep.subr.mxu0 0.0
  %3971 = vmatpush1.xpose.msra.mxu0 0.0
  %3972 = vmatprep.subr.mxu0 0.0
  %3973 = vmatpush1.xpose.msra.mxu0 0.0
  %3974 = vmatprep.subr.mxu0 0.0
  %3975 = vmatpush1.xpose.msra.mxu0 0.0
  %3976 = vmatprep.subr.mxu0 0.0
  %3977 = vmatpush1.xpose.msra.mxu0 0.0
  %3978 = vmatprep.subr.mxu0 0.0
  %3979 = vmatpush1.xpose.msra.mxu0 0.0
  %3980 = vmatprep.subr.mxu0 0.0
  %3981 = vmatpush1.xpose.msra.mxu0 0.0
  %3982 = vmatprep.subr.mxu0 0.0
  %3983 = vmatpush1.xpose.msra.mxu0 0.0
  %3984 = vmatprep.subr.mxu0 0.0
  %3985 = vmatpush1.xpose.msra.mxu0 0.0
  %3986 = vmatprep.subr.mxu0 0.0
  %3987 = vmatpush1.xpose.msra.mxu0 0.0
  %3988 = vmatprep.subr.mxu0 0.0
  %3989 = vmatpush1.xpose.msra.mxu0 0.0
  %3990 = vmatprep.subr.mxu0 0.0
  %3991 = vmatpush1.xpose.msra.mxu0 0.0
  %3992 = vmatprep.subr.mxu0 0.0
  %3993 = vmatpush1.xpose.msra.mxu0 0.0
  %3994 = vmatprep.subr.mxu0 0.0
  %3995 = vmatpush1.xpose.msra.mxu0 0.0
  %3996 = vmatprep.subr.mxu0 0.0
  %3997 = vmatpush1.xpose.msra.mxu0 %v3966
  %3998 = vmatprep.subr.mxu0 0.0
  %3999 = vmatpush1.xpose.msra.mxu0 %v3963
  %4000 = vmatprep.subr.mxu0 0.0
  %4001 = vmatpush2.xpose.msra.mxu0 0.0
  %4002 = vmatprep.subr.mxu0 0.0
  %4003 = vmatpush2.xpose.msra.mxu0 0.0
  %4004 = vmatprep.subr.mxu0 0.0
  %4005 = vmatpush2.xpose.msra.mxu0 0.0
  %4006 = vmatprep.subr.mxu0 0.0
  %4007 = vmatpush2.xpose.msra.mxu0 0.0
  %4008 = vmatprep.subr.mxu0 0.0
  %4009 = vmatpush2.xpose.msra.mxu0 0.0
  %4010 = vmatprep.subr.mxu0 0.0
  %4011 = vmatpush2.xpose.msra.mxu0 0.0
  %4012 = vmatprep.subr.mxu0 0.0
  %4013 = vmatpush2.xpose.msra.mxu0 0.0
  %4014 = vmatprep.subr.mxu0 0.0
  %4015 = vmatpush2.xpose.msra.mxu0 0.0
  %4016 = vmatprep.subr.mxu0 0.0
  %4017 = vmatpush2.xpose.msra.mxu0 0.0
  %4018 = vmatprep.subr.mxu0 0.0
  %4019 = vmatpush2.xpose.msra.mxu0 0.0
  %4020 = vmatprep.subr.mxu0 0.0
  %4021 = vmatpush2.xpose.msra.mxu0 0.0
  %4022 = vmatprep.subr.mxu0 0.0
  %4023 = vmatpush2.xpose.msra.mxu0 0.0
  %4024 = vmatprep.subr.mxu0 0.0
  %4025 = vmatpush2.xpose.msra.mxu0 0.0
  %4026 = vmatprep.subr.mxu0 0.0
  %4027 = vmatpush2.xpose.msra.mxu0 0.0
  %4028 = vmatprep.subr.mxu0 0.0
  %4029 = vmatpush2.xpose.msra.mxu0 0.0
  %4030 = vmatprep.subr.mxu0 0.0
  %4031 = vmatpush2.xpose.msra.mxu0 0.0
  %4032 = vmatprep.mubr.f32.mxu0 0.0
  %4033 = vmatmul.mubr.f32.gmra.mxu0 %v3957
  %v4034 = vpop.f32.mrf.mxu0
  %v4035 = vadd.f32 0.0, %v4034
  %v4036 = vpop.f32.mrf.mxu0
  %4037 = vmatprep.mubr.f32.mxu0 0.0
  %4038 = vmatmul.mubr.f32.gmra.mxu0 %v3960
  %v4039 = vpop.f32.mrf.mxu0
  %v4040 = vadd.f32 0.0, %v4039
  %v4041 = vpop.f32.mrf.mxu0
  %4042 = vdwg.mxu0
  %v4044 = vsel %vm367, %v2198, 0
  %v4047 = vsel %vm367, %v2203, 0
  %v4050 = vsel %vm367, %v2866, 0
  %v4053 = vsel %vm367, %v2871, 0
  %4055 = vmatprep.subr.mxu0 0.0
  %4056 = vmatpush1.xpose.msra.mxu0 0.0
  %4057 = vmatprep.subr.mxu0 0.0
  %4058 = vmatpush1.xpose.msra.mxu0 0.0
  %4059 = vmatprep.subr.mxu0 0.0
  %4060 = vmatpush1.xpose.msra.mxu0 0.0
  %4061 = vmatprep.subr.mxu0 0.0
  %4062 = vmatpush1.xpose.msra.mxu0 0.0
  %4063 = vmatprep.subr.mxu0 0.0
  %4064 = vmatpush1.xpose.msra.mxu0 0.0
  %4065 = vmatprep.subr.mxu0 0.0
  %4066 = vmatpush1.xpose.msra.mxu0 0.0
  %4067 = vmatprep.subr.mxu0 0.0
  %4068 = vmatpush1.xpose.msra.mxu0 0.0
  %4069 = vmatprep.subr.mxu0 0.0
  %4070 = vmatpush1.xpose.msra.mxu0 0.0
  %4071 = vmatprep.subr.mxu0 0.0
  %4072 = vmatpush1.xpose.msra.mxu0 0.0
  %4073 = vmatprep.subr.mxu0 0.0
  %4074 = vmatpush1.xpose.msra.mxu0 0.0
  %4075 = vmatprep.subr.mxu0 0.0
  %4076 = vmatpush1.xpose.msra.mxu0 0.0
  %4077 = vmatprep.subr.mxu0 0.0
  %4078 = vmatpush1.xpose.msra.mxu0 0.0
  %4079 = vmatprep.subr.mxu0 0.0
  %4080 = vmatpush1.xpose.msra.mxu0 0.0
  %4081 = vmatprep.subr.mxu0 0.0
  %4082 = vmatpush1.xpose.msra.mxu0 0.0
  %4083 = vmatprep.subr.mxu0 0.0
  %4084 = vmatpush1.xpose.msra.mxu0 %v4053
  %4085 = vmatprep.subr.mxu0 0.0
  %4086 = vmatpush1.xpose.msra.mxu0 %v4050
  %4087 = vmatprep.subr.mxu0 0.0
  %4088 = vmatpush2.xpose.msra.mxu0 0.0
  %4089 = vmatprep.subr.mxu0 0.0
  %4090 = vmatpush2.xpose.msra.mxu0 0.0
  %4091 = vmatprep.subr.mxu0 0.0
  %4092 = vmatpush2.xpose.msra.mxu0 0.0
  %4093 = vmatprep.subr.mxu0 0.0
  %4094 = vmatpush2.xpose.msra.mxu0 0.0
  %4095 = vmatprep.subr.mxu0 0.0
  %4096 = vmatpush2.xpose.msra.mxu0 0.0
  %4097 = vmatprep.subr.mxu0 0.0
  %4098 = vmatpush2.xpose.msra.mxu0 0.0
  %4099 = vmatprep.subr.mxu0 0.0
  %4100 = vmatpush2.xpose.msra.mxu0 0.0
  %4101 = vmatprep.subr.mxu0 0.0
  %4102 = vmatpush2.xpose.msra.mxu0 0.0
  %4103 = vmatprep.subr.mxu0 0.0
  %4104 = vmatpush2.xpose.msra.mxu0 0.0
  %4105 = vmatprep.subr.mxu0 0.0
  %4106 = vmatpush2.xpose.msra.mxu0 0.0
  %4107 = vmatprep.subr.mxu0 0.0
  %4108 = vmatpush2.xpose.msra.mxu0 0.0
  %4109 = vmatprep.subr.mxu0 0.0
  %4110 = vmatpush2.xpose.msra.mxu0 0.0
  %4111 = vmatprep.subr.mxu0 0.0
  %4112 = vmatpush2.xpose.msra.mxu0 0.0
  %4113 = vmatprep.subr.mxu0 0.0
  %4114 = vmatpush2.xpose.msra.mxu0 0.0
  %4115 = vmatprep.subr.mxu0 0.0
  %4116 = vmatpush2.xpose.msra.mxu0 0.0
  %4117 = vmatprep.subr.mxu0 0.0
  %4118 = vmatpush2.xpose.msra.mxu0 0.0
  %4119 = vmatprep.mubr.f32.mxu0 0.0
  %4120 = vmatmul.mubr.f32.gmra.mxu0 %v4044
  %v4121 = vpop.f32.mrf.mxu0
  %v4122 = vadd.f32 0.0, %v4121
  %v4123 = vpop.f32.mrf.mxu0
  %4124 = vmatprep.mubr.f32.mxu0 0.0
  %4125 = vmatmul.mubr.f32.gmra.mxu0 %v4047
  %v4126 = vpop.f32.mrf.mxu0
  %v4127 = vadd.f32 0.0, %v4126
  %v4128 = vpop.f32.mrf.mxu0
  %4129 = vdwg.mxu0
  %v4131 = vsel %vm367, %v2279, 0
  %v4134 = vsel %vm367, %v2284, 0
  %v4137 = vsel %vm367, %v2941, 0
  %v4140 = vsel %vm367, %v2946, 0
  %4142 = vmatprep.subr.mxu0 0.0
  %4143 = vmatpush1.xpose.msra.mxu0 0.0
  %4144 = vmatprep.subr.mxu0 0.0
  %4145 = vmatpush1.xpose.msra.mxu0 0.0
  %4146 = vmatprep.subr.mxu0 0.0
  %4147 = vmatpush1.xpose.msra.mxu0 0.0
  %4148 = vmatprep.subr.mxu0 0.0
  %4149 = vmatpush1.xpose.msra.mxu0 0.0
  %4150 = vmatprep.subr.mxu0 0.0
  %4151 = vmatpush1.xpose.msra.mxu0 0.0
  %4152 = vmatprep.subr.mxu0 0.0
  %4153 = vmatpush1.xpose.msra.mxu0 0.0
  %4154 = vmatprep.subr.mxu0 0.0
  %4155 = vmatpush1.xpose.msra.mxu0 0.0
  %4156 = vmatprep.subr.mxu0 0.0
  %4157 = vmatpush1.xpose.msra.mxu0 0.0
  %4158 = vmatprep.subr.mxu0 0.0
  %4159 = vmatpush1.xpose.msra.mxu0 0.0
  %4160 = vmatprep.subr.mxu0 0.0
  %4161 = vmatpush1.xpose.msra.mxu0 0.0
  %4162 = vmatprep.subr.mxu0 0.0
  %4163 = vmatpush1.xpose.msra.mxu0 0.0
  %4164 = vmatprep.subr.mxu0 0.0
  %4165 = vmatpush1.xpose.msra.mxu0 0.0
  %4166 = vmatprep.subr.mxu0 0.0
  %4167 = vmatpush1.xpose.msra.mxu0 0.0
  %4168 = vmatprep.subr.mxu0 0.0
  %4169 = vmatpush1.xpose.msra.mxu0 0.0
  %4170 = vmatprep.subr.mxu0 0.0
  %4171 = vmatpush1.xpose.msra.mxu0 %v4140
  %4172 = vmatprep.subr.mxu0 0.0
  %4173 = vmatpush1.xpose.msra.mxu0 %v4137
  %4174 = vmatprep.subr.mxu0 0.0
  %4175 = vmatpush2.xpose.msra.mxu0 0.0
  %4176 = vmatprep.subr.mxu0 0.0
  %4177 = vmatpush2.xpose.msra.mxu0 0.0
  %4178 = vmatprep.subr.mxu0 0.0
  %4179 = vmatpush2.xpose.msra.mxu0 0.0
  %4180 = vmatprep.subr.mxu0 0.0
  %4181 = vmatpush2.xpose.msra.mxu0 0.0
  %4182 = vmatprep.subr.mxu0 0.0
  %4183 = vmatpush2.xpose.msra.mxu0 0.0
  %4184 = vmatprep.subr.mxu0 0.0
  %4185 = vmatpush2.xpose.msra.mxu0 0.0
  %4186 = vmatprep.subr.mxu0 0.0
  %4187 = vmatpush2.xpose.msra.mxu0 0.0
  %4188 = vmatprep.subr.mxu0 0.0
  %4189 = vmatpush2.xpose.msra.mxu0 0.0
  %4190 = vmatprep.subr.mxu0 0.0
  %4191 = vmatpush2.xpose.msra.mxu0 0.0
  %4192 = vmatprep.subr.mxu0 0.0
  %4193 = vmatpush2.xpose.msra.mxu0 0.0
  %4194 = vmatprep.subr.mxu0 0.0
  %4195 = vmatpush2.xpose.msra.mxu0 0.0
  %4196 = vmatprep.subr.mxu0 0.0
  %4197 = vmatpush2.xpose.msra.mxu0 0.0
  %4198 = vmatprep.subr.mxu0 0.0
  %4199 = vmatpush2.xpose.msra.mxu0 0.0
  %4200 = vmatprep.subr.mxu0 0.0
  %4201 = vmatpush2.xpose.msra.mxu0 0.0
  %4202 = vmatprep.subr.mxu0 0.0
  %4203 = vmatpush2.xpose.msra.mxu0 0.0
  %4204 = vmatprep.subr.mxu0 0.0
  %4205 = vmatpush2.xpose.msra.mxu0 0.0
  %4206 = vmatprep.mubr.f32.mxu0 0.0
  %4207 = vmatmul.mubr.f32.gmra.mxu0 %v4131
  %v4208 = vpop.f32.mrf.mxu0
  %v4209 = vadd.f32 0.0, %v4208
  %v4210 = vpop.f32.mrf.mxu0
  %4211 = vmatprep.mubr.f32.mxu0 0.0
  %4212 = vmatmul.mubr.f32.gmra.mxu0 %v4134
  %v4213 = vpop.f32.mrf.mxu0
  %v4214 = vadd.f32 0.0, %v4213
  %v4215 = vpop.f32.mrf.mxu0
  %4216 = vdwg.mxu0
  %v4218 = vsel %vm367, %v2360, 0
  %v4221 = vsel %vm367, %v2365, 0
  %v4224 = vsel %vm367, %v3016, 0
  %v4227 = vsel %vm367, %v3021, 0
  %4229 = vmatprep.subr.mxu0 0.0
  %4230 = vmatpush1.xpose.msra.mxu0 0.0
  %4231 = vmatprep.subr.mxu0 0.0
  %4232 = vmatpush1.xpose.msra.mxu0 0.0
  %4233 = vmatprep.subr.mxu0 0.0
  %4234 = vmatpush1.xpose.msra.mxu0 0.0
  %4235 = vmatprep.subr.mxu0 0.0
  %4236 = vmatpush1.xpose.msra.mxu0 0.0
  %4237 = vmatprep.subr.mxu0 0.0
  %4238 = vmatpush1.xpose.msra.mxu0 0.0
  %4239 = vmatprep.subr.mxu0 0.0
  %4240 = vmatpush1.xpose.msra.mxu0 0.0
  %4241 = vmatprep.subr.mxu0 0.0
  %4242 = vmatpush1.xpose.msra.mxu0 0.0
  %4243 = vmatprep.subr.mxu0 0.0
  %4244 = vmatpush1.xpose.msra.mxu0 0.0
  %4245 = vmatprep.subr.mxu0 0.0
  %4246 = vmatpush1.xpose.msra.mxu0 0.0
  %4247 = vmatprep.subr.mxu0 0.0
  %4248 = vmatpush1.xpose.msra.mxu0 0.0
  %4249 = vmatprep.subr.mxu0 0.0
  %4250 = vmatpush1.xpose.msra.mxu0 0.0
  %4251 = vmatprep.subr.mxu0 0.0
  %4252 = vmatpush1.xpose.msra.mxu0 0.0
  %4253 = vmatprep.subr.mxu0 0.0
  %4254 = vmatpush1.xpose.msra.mxu0 0.0
  %4255 = vmatprep.subr.mxu0 0.0
  %4256 = vmatpush1.xpose.msra.mxu0 0.0
  %4257 = vmatprep.subr.mxu0 0.0
  %4258 = vmatpush1.xpose.msra.mxu0 %v4227
  %4259 = vmatprep.subr.mxu0 0.0
  %4260 = vmatpush1.xpose.msra.mxu0 %v4224
  %4261 = vmatprep.subr.mxu0 0.0
  %4262 = vmatpush2.xpose.msra.mxu0 0.0
  %4263 = vmatprep.subr.mxu0 0.0
  %4264 = vmatpush2.xpose.msra.mxu0 0.0
  %4265 = vmatprep.subr.mxu0 0.0
  %4266 = vmatpush2.xpose.msra.mxu0 0.0
  %4267 = vmatprep.subr.mxu0 0.0
  %4268 = vmatpush2.xpose.msra.mxu0 0.0
  %4269 = vmatprep.subr.mxu0 0.0
  %4270 = vmatpush2.xpose.msra.mxu0 0.0
  %4271 = vmatprep.subr.mxu0 0.0
  %4272 = vmatpush2.xpose.msra.mxu0 0.0
  %4273 = vmatprep.subr.mxu0 0.0
  %4274 = vmatpush2.xpose.msra.mxu0 0.0
  %4275 = vmatprep.subr.mxu0 0.0
  %4276 = vmatpush2.xpose.msra.mxu0 0.0
  %4277 = vmatprep.subr.mxu0 0.0
  %4278 = vmatpush2.xpose.msra.mxu0 0.0
  %4279 = vmatprep.subr.mxu0 0.0
  %4280 = vmatpush2.xpose.msra.mxu0 0.0
  %4281 = vmatprep.subr.mxu0 0.0
  %4282 = vmatpush2.xpose.msra.mxu0 0.0
  %4283 = vmatprep.subr.mxu0 0.0
  %4284 = vmatpush2.xpose.msra.mxu0 0.0
  %4285 = vmatprep.subr.mxu0 0.0
  %4286 = vmatpush2.xpose.msra.mxu0 0.0
  %4287 = vmatprep.subr.mxu0 0.0
  %4288 = vmatpush2.xpose.msra.mxu0 0.0
  %4289 = vmatprep.subr.mxu0 0.0
  %4290 = vmatpush2.xpose.msra.mxu0 0.0
  %4291 = vmatprep.subr.mxu0 0.0
  %4292 = vmatpush2.xpose.msra.mxu0 0.0
  %4293 = vmatprep.mubr.f32.mxu0 0.0
  %4294 = vmatmul.mubr.f32.gmra.mxu0 %v4218
  %v4295 = vpop.f32.mrf.mxu0
  %v4296 = vadd.f32 0.0, %v4295
  %v4297 = vpop.f32.mrf.mxu0
  %4298 = vmatprep.mubr.f32.mxu0 0.0
  %4299 = vmatmul.mubr.f32.gmra.mxu0 %v4221
  %v4300 = vpop.f32.mrf.mxu0
  %v4301 = vadd.f32 0.0, %v4300
  %v4302 = vpop.f32.mrf.mxu0
  %4303 = vdwg.mxu0
  %v4305 = vsel %vm367, %v2441, 0
  %v4308 = vsel %vm367, %v2446, 0
  %v4311 = vsel %vm367, %v3091, 0
  %v4314 = vsel %vm367, %v3096, 0
  %4316 = vmatprep.subr.mxu0 0.0
  %4317 = vmatpush1.xpose.msra.mxu0 0.0
  %4318 = vmatprep.subr.mxu0 0.0
  %4319 = vmatpush1.xpose.msra.mxu0 0.0
  %4320 = vmatprep.subr.mxu0 0.0
  %4321 = vmatpush1.xpose.msra.mxu0 0.0
  %4322 = vmatprep.subr.mxu0 0.0
  %4323 = vmatpush1.xpose.msra.mxu0 0.0
  %4324 = vmatprep.subr.mxu0 0.0
  %4325 = vmatpush1.xpose.msra.mxu0 0.0
  %4326 = vmatprep.subr.mxu0 0.0
  %4327 = vmatpush1.xpose.msra.mxu0 0.0
  %4328 = vmatprep.subr.mxu0 0.0
  %4329 = vmatpush1.xpose.msra.mxu0 0.0
  %4330 = vmatprep.subr.mxu0 0.0
  %4331 = vmatpush1.xpose.msra.mxu0 0.0
  %4332 = vmatprep.subr.mxu0 0.0
  %4333 = vmatpush1.xpose.msra.mxu0 0.0
  %4334 = vmatprep.subr.mxu0 0.0
  %4335 = vmatpush1.xpose.msra.mxu0 0.0
  %4336 = vmatprep.subr.mxu0 0.0
  %4337 = vmatpush1.xpose.msra.mxu0 0.0
  %4338 = vmatprep.subr.mxu0 0.0
  %4339 = vmatpush1.xpose.msra.mxu0 0.0
  %4340 = vmatprep.subr.mxu0 0.0
  %4341 = vmatpush1.xpose.msra.mxu0 0.0
  %4342 = vmatprep.subr.mxu0 0.0
  %4343 = vmatpush1.xpose.msra.mxu0 0.0
  %4344 = vmatprep.subr.mxu0 0.0
  %4345 = vmatpush1.xpose.msra.mxu0 %v4314
  %4346 = vmatprep.subr.mxu0 0.0
  %4347 = vmatpush1.xpose.msra.mxu0 %v4311
  %4348 = vmatprep.subr.mxu0 0.0
  %4349 = vmatpush2.xpose.msra.mxu0 0.0
  %4350 = vmatprep.subr.mxu0 0.0
  %4351 = vmatpush2.xpose.msra.mxu0 0.0
  %4352 = vmatprep.subr.mxu0 0.0
  %4353 = vmatpush2.xpose.msra.mxu0 0.0
  %4354 = vmatprep.subr.mxu0 0.0
  %4355 = vmatpush2.xpose.msra.mxu0 0.0
  %4356 = vmatprep.subr.mxu0 0.0
  %4357 = vmatpush2.xpose.msra.mxu0 0.0
  %4358 = vmatprep.subr.mxu0 0.0
  %4359 = vmatpush2.xpose.msra.mxu0 0.0
  %4360 = vmatprep.subr.mxu0 0.0
  %4361 = vmatpush2.xpose.msra.mxu0 0.0
  %4362 = vmatprep.subr.mxu0 0.0
  %4363 = vmatpush2.xpose.msra.mxu0 0.0
  %4364 = vmatprep.subr.mxu0 0.0
  %4365 = vmatpush2.xpose.msra.mxu0 0.0
  %4366 = vmatprep.subr.mxu0 0.0
  %4367 = vmatpush2.xpose.msra.mxu0 0.0
  %4368 = vmatprep.subr.mxu0 0.0
  %4369 = vmatpush2.xpose.msra.mxu0 0.0
  %4370 = vmatprep.subr.mxu0 0.0
  %4371 = vmatpush2.xpose.msra.mxu0 0.0
  %4372 = vmatprep.subr.mxu0 0.0
  %4373 = vmatpush2.xpose.msra.mxu0 0.0
  %4374 = vmatprep.subr.mxu0 0.0
  %4375 = vmatpush2.xpose.msra.mxu0 0.0
  %4376 = vmatprep.subr.mxu0 0.0
  %4377 = vmatpush2.xpose.msra.mxu0 0.0
  %4378 = vmatprep.subr.mxu0 0.0
  %4379 = vmatpush2.xpose.msra.mxu0 0.0
  %4380 = vmatprep.mubr.f32.mxu0 0.0
  %4381 = vmatmul.mubr.f32.gmra.mxu0 %v4305
  %v4382 = vpop.f32.mrf.mxu0
  %v4383 = vadd.f32 0.0, %v4382
  %v4384 = vpop.f32.mrf.mxu0
  %4385 = vmatprep.mubr.f32.mxu0 0.0
  %4386 = vmatmul.mubr.f32.gmra.mxu0 %v4308
  %v4387 = vpop.f32.mrf.mxu0
  %v4388 = vadd.f32 0.0, %v4387
  %v4389 = vpop.f32.mrf.mxu0
  %4390 = vdwg.mxu0
  %v4392 = vsel %vm367, %v2522, 0
  %v4395 = vsel %vm367, %v2527, 0
  %v4398 = vsel %vm367, %v3166, 0
  %v4401 = vsel %vm367, %v3171, 0
  %4403 = vmatprep.subr.mxu0 0.0
  %4404 = vmatpush1.xpose.msra.mxu0 0.0
  %4405 = vmatprep.subr.mxu0 0.0
  %4406 = vmatpush1.xpose.msra.mxu0 0.0
  %4407 = vmatprep.subr.mxu0 0.0
  %4408 = vmatpush1.xpose.msra.mxu0 0.0
  %4409 = vmatprep.subr.mxu0 0.0
  %4410 = vmatpush1.xpose.msra.mxu0 0.0
  %4411 = vmatprep.subr.mxu0 0.0
  %4412 = vmatpush1.xpose.msra.mxu0 0.0
  %4413 = vmatprep.subr.mxu0 0.0
  %4414 = vmatpush1.xpose.msra.mxu0 0.0
  %4415 = vmatprep.subr.mxu0 0.0
  %4416 = vmatpush1.xpose.msra.mxu0 0.0
  %4417 = vmatprep.subr.mxu0 0.0
  %4418 = vmatpush1.xpose.msra.mxu0 0.0
  %4419 = vmatprep.subr.mxu0 0.0
  %4420 = vmatpush1.xpose.msra.mxu0 0.0
  %4421 = vmatprep.subr.mxu0 0.0
  %4422 = vmatpush1.xpose.msra.mxu0 0.0
  %4423 = vmatprep.subr.mxu0 0.0
  %4424 = vmatpush1.xpose.msra.mxu0 0.0
  %4425 = vmatprep.subr.mxu0 0.0
  %4426 = vmatpush1.xpose.msra.mxu0 0.0
  %4427 = vmatprep.subr.mxu0 0.0
  %4428 = vmatpush1.xpose.msra.mxu0 0.0
  %4429 = vmatprep.subr.mxu0 0.0
  %4430 = vmatpush1.xpose.msra.mxu0 0.0
  %4431 = vmatprep.subr.mxu0 0.0
  %4432 = vmatpush1.xpose.msra.mxu0 %v4401
  %4433 = vmatprep.subr.mxu0 0.0
  %4434 = vmatpush1.xpose.msra.mxu0 %v4398
  %4435 = vmatprep.subr.mxu0 0.0
  %4436 = vmatpush2.xpose.msra.mxu0 0.0
  %4437 = vmatprep.subr.mxu0 0.0
  %4438 = vmatpush2.xpose.msra.mxu0 0.0
  %4439 = vmatprep.subr.mxu0 0.0
  %4440 = vmatpush2.xpose.msra.mxu0 0.0
  %4441 = vmatprep.subr.mxu0 0.0
  %4442 = vmatpush2.xpose.msra.mxu0 0.0
  %4443 = vmatprep.subr.mxu0 0.0
  %4444 = vmatpush2.xpose.msra.mxu0 0.0
  %4445 = vmatprep.subr.mxu0 0.0
  %4446 = vmatpush2.xpose.msra.mxu0 0.0
  %4447 = vmatprep.subr.mxu0 0.0
  %4448 = vmatpush2.xpose.msra.mxu0 0.0
  %4449 = vmatprep.subr.mxu0 0.0
  %4450 = vmatpush2.xpose.msra.mxu0 0.0
  %4451 = vmatprep.subr.mxu0 0.0
  %4452 = vmatpush2.xpose.msra.mxu0 0.0
  %4453 = vmatprep.subr.mxu0 0.0
  %4454 = vmatpush2.xpose.msra.mxu0 0.0
  %4455 = vmatprep.subr.mxu0 0.0
  %4456 = vmatpush2.xpose.msra.mxu0 0.0
  %4457 = vmatprep.subr.mxu0 0.0
  %4458 = vmatpush2.xpose.msra.mxu0 0.0
  %4459 = vmatprep.subr.mxu0 0.0
  %4460 = vmatpush2.xpose.msra.mxu0 0.0
  %4461 = vmatprep.subr.mxu0 0.0
  %4462 = vmatpush2.xpose.msra.mxu0 0.0
  %4463 = vmatprep.subr.mxu0 0.0
  %4464 = vmatpush2.xpose.msra.mxu0 0.0
  %4465 = vmatprep.subr.mxu0 0.0
  %4466 = vmatpush2.xpose.msra.mxu0 0.0
  %4467 = vmatprep.mubr.f32.mxu0 0.0
  %4468 = vmatmul.mubr.f32.gmra.mxu0 %v4392
  %v4469 = vpop.f32.mrf.mxu0
  %v4470 = vadd.f32 0.0, %v4469
  %v4471 = vpop.f32.mrf.mxu0
  %4472 = vmatprep.mubr.f32.mxu0 0.0
  %4473 = vmatmul.mubr.f32.gmra.mxu0 %v4395
  %v4474 = vpop.f32.mrf.mxu0
  %v4475 = vadd.f32 0.0, %v4474
  %v4476 = vpop.f32.mrf.mxu0
  %4477 = vdwg.mxu0
  %v4479 = vsel %vm367, %v2603, 0
  %v4482 = vsel %vm367, %v2608, 0
  %v4485 = vsel %vm367, %v3241, 0
  %v4488 = vsel %vm367, %v3246, 0
  %4490 = vmatprep.subr.mxu0 0.0
  %4491 = vmatpush1.xpose.msra.mxu0 0.0
  %4492 = vmatprep.subr.mxu0 0.0
  %4493 = vmatpush1.xpose.msra.mxu0 0.0
  %4494 = vmatprep.subr.mxu0 0.0
  %4495 = vmatpush1.xpose.msra.mxu0 0.0
  %4496 = vmatprep.subr.mxu0 0.0
  %4497 = vmatpush1.xpose.msra.mxu0 0.0
  %4498 = vmatprep.subr.mxu0 0.0
  %4499 = vmatpush1.xpose.msra.mxu0 0.0
  %4500 = vmatprep.subr.mxu0 0.0
  %4501 = vmatpush1.xpose.msra.mxu0 0.0
  %4502 = vmatprep.subr.mxu0 0.0
  %4503 = vmatpush1.xpose.msra.mxu0 0.0
  %4504 = vmatprep.subr.mxu0 0.0
  %4505 = vmatpush1.xpose.msra.mxu0 0.0
  %4506 = vmatprep.subr.mxu0 0.0
  %4507 = vmatpush1.xpose.msra.mxu0 0.0
  %4508 = vmatprep.subr.mxu0 0.0
  %4509 = vmatpush1.xpose.msra.mxu0 0.0
  %4510 = vmatprep.subr.mxu0 0.0
  %4511 = vmatpush1.xpose.msra.mxu0 0.0
  %4512 = vmatprep.subr.mxu0 0.0
  %4513 = vmatpush1.xpose.msra.mxu0 0.0
  %4514 = vmatprep.subr.mxu0 0.0
  %4515 = vmatpush1.xpose.msra.mxu0 0.0
  %4516 = vmatprep.subr.mxu0 0.0
  %4517 = vmatpush1.xpose.msra.mxu0 0.0
  %4518 = vmatprep.subr.mxu0 0.0
  %4519 = vmatpush1.xpose.msra.mxu0 %v4488
  %4520 = vmatprep.subr.mxu0 0.0
  %4521 = vmatpush1.xpose.msra.mxu0 %v4485
  %4522 = vmatprep.subr.mxu0 0.0
  %4523 = vmatpush2.xpose.msra.mxu0 0.0
  %4524 = vmatprep.subr.mxu0 0.0
  %4525 = vmatpush2.xpose.msra.mxu0 0.0
  %4526 = vmatprep.subr.mxu0 0.0
  %4527 = vmatpush2.xpose.msra.mxu0 0.0
  %4528 = vmatprep.subr.mxu0 0.0
  %4529 = vmatpush2.xpose.msra.mxu0 0.0
  %4530 = vmatprep.subr.mxu0 0.0
  %4531 = vmatpush2.xpose.msra.mxu0 0.0
  %4532 = vmatprep.subr.mxu0 0.0
  %4533 = vmatpush2.xpose.msra.mxu0 0.0
  %4534 = vmatprep.subr.mxu0 0.0
  %4535 = vmatpush2.xpose.msra.mxu0 0.0
  %4536 = vmatprep.subr.mxu0 0.0
  %4537 = vmatpush2.xpose.msra.mxu0 0.0
  %4538 = vmatprep.subr.mxu0 0.0
  %4539 = vmatpush2.xpose.msra.mxu0 0.0
  %4540 = vmatprep.subr.mxu0 0.0
  %4541 = vmatpush2.xpose.msra.mxu0 0.0
  %4542 = vmatprep.subr.mxu0 0.0
  %4543 = vmatpush2.xpose.msra.mxu0 0.0
  %4544 = vmatprep.subr.mxu0 0.0
  %4545 = vmatpush2.xpose.msra.mxu0 0.0
  %4546 = vmatprep.subr.mxu0 0.0
  %4547 = vmatpush2.xpose.msra.mxu0 0.0
  %4548 = vmatprep.subr.mxu0 0.0
  %4549 = vmatpush2.xpose.msra.mxu0 0.0
  %4550 = vmatprep.subr.mxu0 0.0
  %4551 = vmatpush2.xpose.msra.mxu0 0.0
  %4552 = vmatprep.subr.mxu0 0.0
  %4553 = vmatpush2.xpose.msra.mxu0 0.0
  %4554 = vmatprep.mubr.f32.mxu0 0.0
  %4555 = vmatmul.mubr.f32.gmra.mxu0 %v4479
  %v4556 = vpop.f32.mrf.mxu0
  %v4557 = vadd.f32 0.0, %v4556
  %v4558 = vpop.f32.mrf.mxu0
  %4559 = vmatprep.mubr.f32.mxu0 0.0
  %4560 = vmatmul.mubr.f32.gmra.mxu0 %v4482
  %v4561 = vpop.f32.mrf.mxu0
  %v4562 = vadd.f32 0.0, %v4561
  %v4563 = vpop.f32.mrf.mxu0
  %4564 = vdwg.mxu0
  %v4566 = vsel %vm367, %v2684, 0
  %v4569 = vsel %vm367, %v2689, 0
  %v4572 = vsel %vm367, %v3316, 0
  %v4575 = vsel %vm367, %v3321, 0
  %4577 = vmatprep.subr.mxu0 0.0
  %4578 = vmatpush1.xpose.msra.mxu0 0.0
  %4579 = vmatprep.subr.mxu0 0.0
  %4580 = vmatpush1.xpose.msra.mxu0 0.0
  %4581 = vmatprep.subr.mxu0 0.0
  %4582 = vmatpush1.xpose.msra.mxu0 0.0
  %4583 = vmatprep.subr.mxu0 0.0
  %4584 = vmatpush1.xpose.msra.mxu0 0.0
  %4585 = vmatprep.subr.mxu0 0.0
  %4586 = vmatpush1.xpose.msra.mxu0 0.0
  %4587 = vmatprep.subr.mxu0 0.0
  %4588 = vmatpush1.xpose.msra.mxu0 0.0
  %4589 = vmatprep.subr.mxu0 0.0
  %4590 = vmatpush1.xpose.msra.mxu0 0.0
  %4591 = vmatprep.subr.mxu0 0.0
  %4592 = vmatpush1.xpose.msra.mxu0 0.0
  %4593 = vmatprep.subr.mxu0 0.0
  %4594 = vmatpush1.xpose.msra.mxu0 0.0
  %4595 = vmatprep.subr.mxu0 0.0
  %4596 = vmatpush1.xpose.msra.mxu0 0.0
  %4597 = vmatprep.subr.mxu0 0.0
  %4598 = vmatpush1.xpose.msra.mxu0 0.0
  %4599 = vmatprep.subr.mxu0 0.0
  %4600 = vmatpush1.xpose.msra.mxu0 0.0
  %4601 = vmatprep.subr.mxu0 0.0
  %4602 = vmatpush1.xpose.msra.mxu0 0.0
  %4603 = vmatprep.subr.mxu0 0.0
  %4604 = vmatpush1.xpose.msra.mxu0 0.0
  %4605 = vmatprep.subr.mxu0 0.0
  %4606 = vmatpush1.xpose.msra.mxu0 %v4575
  %4607 = vmatprep.subr.mxu0 0.0
  %4608 = vmatpush1.xpose.msra.mxu0 %v4572
  %4609 = vmatprep.subr.mxu0 0.0
  %4610 = vmatpush2.xpose.msra.mxu0 0.0
  %4611 = vmatprep.subr.mxu0 0.0
  %4612 = vmatpush2.xpose.msra.mxu0 0.0
  %4613 = vmatprep.subr.mxu0 0.0
  %4614 = vmatpush2.xpose.msra.mxu0 0.0
  %4615 = vmatprep.subr.mxu0 0.0
  %4616 = vmatpush2.xpose.msra.mxu0 0.0
  %4617 = vmatprep.subr.mxu0 0.0
  %4618 = vmatpush2.xpose.msra.mxu0 0.0
  %4619 = vmatprep.subr.mxu0 0.0
  %4620 = vmatpush2.xpose.msra.mxu0 0.0
  %4621 = vmatprep.subr.mxu0 0.0
  %4622 = vmatpush2.xpose.msra.mxu0 0.0
  %4623 = vmatprep.subr.mxu0 0.0
  %4624 = vmatpush2.xpose.msra.mxu0 0.0
  %4625 = vmatprep.subr.mxu0 0.0
  %4626 = vmatpush2.xpose.msra.mxu0 0.0
  %4627 = vmatprep.subr.mxu0 0.0
  %4628 = vmatpush2.xpose.msra.mxu0 0.0
  %4629 = vmatprep.subr.mxu0 0.0
  %4630 = vmatpush2.xpose.msra.mxu0 0.0
  %4631 = vmatprep.subr.mxu0 0.0
  %4632 = vmatpush2.xpose.msra.mxu0 0.0
  %4633 = vmatprep.subr.mxu0 0.0
  %4634 = vmatpush2.xpose.msra.mxu0 0.0
  %4635 = vmatprep.subr.mxu0 0.0
  %4636 = vmatpush2.xpose.msra.mxu0 0.0
  %4637 = vmatprep.subr.mxu0 0.0
  %4638 = vmatpush2.xpose.msra.mxu0 0.0
  %4639 = vmatprep.subr.mxu0 0.0
  %4640 = vmatpush2.xpose.msra.mxu0 0.0
  %4641 = vmatprep.mubr.f32.mxu0 0.0
  %4642 = vmatmul.mubr.f32.gmra.mxu0 %v4566
  %v4643 = vpop.f32.mrf.mxu0
  %v4644 = vadd.f32 0.0, %v4643
  %v4645 = vpop.f32.mrf.mxu0
  %4646 = vmatprep.mubr.f32.mxu0 0.0
  %4647 = vmatmul.mubr.f32.gmra.mxu0 %v4569
  %v4648 = vpop.f32.mrf.mxu0
  %v4649 = vadd.f32 0.0, %v4648
  %v4650 = vpop.f32.mrf.mxu0
  %4651 = vdwg.mxu0
  %vm4652 = vcmask 97280
  %v4653 = vsel %vm4652, %v4035, -inf
  %4654 = vmax.xlane.f32.xlu0 %v4653
  %v4655 = vpop.xlane.xlu0 %4654
  %vm4656 = vcmask 93184
  %v4657 = vsel %vm4656, %v4040, -inf
  %4658 = vmax.xlane.f32.xlu0 %v4657
  %v4659 = vpop.xlane.xlu0 %4658
  %v4660 = vsel %vm4652, %v4122, -inf
  %4661 = vmax.xlane.f32.xlu0 %v4660
  %v4662 = vpop.xlane.xlu0 %4661
  %v4663 = vsel %vm4656, %v4127, -inf
  %4664 = vmax.xlane.f32.xlu0 %v4663
  %v4665 = vpop.xlane.xlu0 %4664
  %v4666 = vsel %vm4652, %v4209, -inf
  %4667 = vmax.xlane.f32.xlu0 %v4666
  %v4668 = vpop.xlane.xlu0 %4667
  %v4669 = vsel %vm4656, %v4214, -inf
  %4670 = vmax.xlane.f32.xlu0 %v4669
  %v4671 = vpop.xlane.xlu0 %4670
  %v4672 = vsel %vm4652, %v4296, -inf
  %4673 = vmax.xlane.f32.xlu0 %v4672
  %v4674 = vpop.xlane.xlu0 %4673
  %v4675 = vsel %vm4656, %v4301, -inf
  %4676 = vmax.xlane.f32.xlu0 %v4675
  %v4677 = vpop.xlane.xlu0 %4676
  %v4678 = vsel %vm4652, %v4383, -inf
  %4679 = vmax.xlane.f32.xlu0 %v4678
  %v4680 = vpop.xlane.xlu0 %4679
  %v4681 = vsel %vm4656, %v4388, -inf
  %4682 = vmax.xlane.f32.xlu0 %v4681
  %v4683 = vpop.xlane.xlu0 %4682
  %v4684 = vsel %vm4652, %v4470, -inf
  %4685 = vmax.xlane.f32.xlu0 %v4684
  %v4686 = vpop.xlane.xlu0 %4685
  %v4687 = vsel %vm4656, %v4475, -inf
  %4688 = vmax.xlane.f32.xlu0 %v4687
  %v4689 = vpop.xlane.xlu0 %4688
  %v4690 = vsel %vm4652, %v4557, -inf
  %4691 = vmax.xlane.f32.xlu0 %v4690
  %v4692 = vpop.xlane.xlu0 %4691
  %v4693 = vsel %vm4656, %v4562, -inf
  %4694 = vmax.xlane.f32.xlu0 %v4693
  %v4695 = vpop.xlane.xlu0 %4694
  %v4696 = vsel %vm4652, %v4644, -inf
  %4697 = vmax.xlane.f32.xlu0 %v4696
  %v4698 = vpop.xlane.xlu0 %4697
  %v4699 = vsel %vm4656, %v4649, -inf
  %4700 = vmax.xlane.f32.xlu0 %v4699
  %v4701 = vpop.xlane.xlu0 %4700
  %v4702 = vsub.f32 %v4035, %v4655
  %v4703 = vsub.f32 %v4040, %v4659
  %v4704 = vsub.f32 %v4122, %v4662
  %v4705 = vsub.f32 %v4127, %v4665
  %v4706 = vsub.f32 %v4209, %v4668
  %v4707 = vsub.f32 %v4214, %v4671
  %v4708 = vsub.f32 %v4296, %v4674
  %v4709 = vsub.f32 %v4301, %v4677
  %v4710 = vsub.f32 %v4383, %v4680
  %v4711 = vsub.f32 %v4388, %v4683
  %v4712 = vsub.f32 %v4470, %v4686
  %v4713 = vsub.f32 %v4475, %v4689
  %v4714 = vsub.f32 %v4557, %v4692
  %v4715 = vsub.f32 %v4562, %v4695
  %v4716 = vsub.f32 %v4644, %v4698
  %v4717 = vsub.f32 %v4649, %v4701
  %v4718 = vmul.f32 %v4702, 1.442695
  %v4719 = vpow.pop %v4718
  %v4720 = vmul.f32 %v4703, 1.442695
  %v4721 = vpow.pop %v4720
  %v4722 = vmul.f32 %v4704, 1.442695
  %v4723 = vpow.pop %v4722
  %v4724 = vmul.f32 %v4705, 1.442695
  %v4725 = vpow.pop %v4724
  %v4726 = vmul.f32 %v4706, 1.442695
  %v4727 = vpow.pop %v4726
  %v4728 = vmul.f32 %v4707, 1.442695
  %v4729 = vpow.pop %v4728
  %v4730 = vmul.f32 %v4708, 1.442695
  %v4731 = vpow.pop %v4730
  %v4732 = vmul.f32 %v4709, 1.442695
  %v4733 = vpow.pop %v4732
  %v4734 = vmul.f32 %v4710, 1.442695
  %v4735 = vpow.pop %v4734
  %v4736 = vmul.f32 %v4711, 1.442695
  %v4737 = vpow.pop %v4736
  %v4738 = vmul.f32 %v4712, 1.442695
  %v4739 = vpow.pop %v4738
  %v4740 = vmul.f32 %v4713, 1.442695
  %v4741 = vpow.pop %v4740
  %v4742 = vmul.f32 %v4714, 1.442695
  %v4743 = vpow.pop %v4742
  %v4744 = vmul.f32 %v4715, 1.442695
  %v4745 = vpow.pop %v4744
  %v4746 = vmul.f32 %v4716, 1.442695
  %v4747 = vpow.pop %v4746
  %v4748 = vmul.f32 %v4717, 1.442695
  %v4749 = vpow.pop %v4748
  %v4750 = vsel %vm4652, %v4719, 0.0
  %4751 = vadd.xlane.f32.xlu0 %v4750
  %v4752 = vpop.xlane.xlu0 %4751
  %v4753 = vsel %vm4656, %v4721, 0.0
  %4754 = vadd.xlane.f32.xlu0 %v4753
  %v4755 = vpop.xlane.xlu0 %4754
  %v4756 = vsel %vm4652, %v4723, 0.0
  %4757 = vadd.xlane.f32.xlu0 %v4756
  %v4758 = vpop.xlane.xlu0 %4757
  %v4759 = vsel %vm4656, %v4725, 0.0
  %4760 = vadd.xlane.f32.xlu0 %v4759
  %v4761 = vpop.xlane.xlu0 %4760
  %v4762 = vsel %vm4652, %v4727, 0.0
  %4763 = vadd.xlane.f32.xlu0 %v4762
  %v4764 = vpop.xlane.xlu0 %4763
  %v4765 = vsel %vm4656, %v4729, 0.0
  %4766 = vadd.xlane.f32.xlu0 %v4765
  %v4767 = vpop.xlane.xlu0 %4766
  %v4768 = vsel %vm4652, %v4731, 0.0
  %4769 = vadd.xlane.f32.xlu0 %v4768
  %v4770 = vpop.xlane.xlu0 %4769
  %v4771 = vsel %vm4656, %v4733, 0.0
  %4772 = vadd.xlane.f32.xlu0 %v4771
  %v4773 = vpop.xlane.xlu0 %4772
  %v4774 = vsel %vm4652, %v4735, 0.0
  %4775 = vadd.xlane.f32.xlu0 %v4774
  %v4776 = vpop.xlane.xlu0 %4775
  %v4777 = vsel %vm4656, %v4737, 0.0
  %4778 = vadd.xlane.f32.xlu0 %v4777
  %v4779 = vpop.xlane.xlu0 %4778
  %v4780 = vsel %vm4652, %v4739, 0.0
  %4781 = vadd.xlane.f32.xlu0 %v4780
  %v4782 = vpop.xlane.xlu0 %4781
  %v4783 = vsel %vm4656, %v4741, 0.0
  %4784 = vadd.xlane.f32.xlu0 %v4783
  %v4785 = vpop.xlane.xlu0 %4784
  %v4786 = vsel %vm4652, %v4743, 0.0
  %4787 = vadd.xlane.f32.xlu0 %v4786
  %v4788 = vpop.xlane.xlu0 %4787
  %v4789 = vsel %vm4656, %v4745, 0.0
  %4790 = vadd.xlane.f32.xlu0 %v4789
  %v4791 = vpop.xlane.xlu0 %4790
  %v4792 = vsel %vm4652, %v4747, 0.0
  %4793 = vadd.xlane.f32.xlu0 %v4792
  %v4794 = vpop.xlane.xlu0 %4793
  %v4795 = vsel %vm4656, %v4749, 0.0
  %4796 = vadd.xlane.f32.xlu0 %v4795
  %v4797 = vpop.xlane.xlu0 %4796
  %v4798 = vrcp.pop %v4752
  %v4799 = vrcp.pop %v4755
  %v4800 = vrcp.pop %v4758
  %v4801 = vrcp.pop %v4761
  %v4802 = vrcp.pop %v4764
  %v4803 = vrcp.pop %v4767
  %v4804 = vrcp.pop %v4770
  %v4805 = vrcp.pop %v4773
  %v4806 = vrcp.pop %v4776
  %v4807 = vrcp.pop %v4779
  %v4808 = vrcp.pop %v4782
  %v4809 = vrcp.pop %v4785
  %v4810 = vrcp.pop %v4788
  %v4811 = vrcp.pop %v4791
  %v4812 = vrcp.pop %v4794
  %v4813 = vrcp.pop %v4797
  %v4814 = vmul.f32 %v4719, %v4798
  %v4815 = vmul.f32 %v4721, %v4799
  %v4816 = vmul.f32 %v4723, %v4800
  %v4817 = vmul.f32 %v4725, %v4801
  %v4818 = vmul.f32 %v4727, %v4802
  %v4819 = vmul.f32 %v4729, %v4803
  %v4820 = vmul.f32 %v4731, %v4804
  %v4821 = vmul.f32 %v4733, %v4805
  %v4822 = vmul.f32 %v4735, %v4806
  %v4823 = vmul.f32 %v4737, %v4807
  %v4824 = vmul.f32 %v4739, %v4808
  %v4825 = vmul.f32 %v4741, %v4809
  %v4826 = vmul.f32 %v4743, %v4810
  %v4827 = vmul.f32 %v4745, %v4811
  %v4828 = vmul.f32 %v4747, %v4812
  %v4829 = vmul.f32 %v4749, %v4813
  %v4831 = vsel %vm4652, %v4814, 0
  %v4834 = vsel %vm4652, %v4815, 0
  %v4837 = vsel %vm1272, %v3428, 0
  %4839 = vmatprep.subr.mxu0 0.0
  %4840 = vmatpush1.msra.mxu0 0.0
  %4841 = vmatprep.subr.mxu0 0.0
  %4842 = vmatpush1.msra.mxu0 0.0
  %4843 = vmatprep.subr.mxu0 0.0
  %4844 = vmatpush1.msra.mxu0 0.0
  %4845 = vmatprep.subr.mxu0 0.0
  %4846 = vmatpush1.msra.mxu0 0.0
  %4847 = vmatprep.subr.mxu0 0.0
  %4848 = vmatpush1.msra.mxu0 0.0
  %4849 = vmatprep.subr.mxu0 0.0
  %4850 = vmatpush1.msra.mxu0 0.0
  %4851 = vmatprep.subr.mxu0 0.0
  %4852 = vmatpush1.msra.mxu0 0.0
  %4853 = vmatprep.subr.mxu0 0.0
  %4854 = vmatpush1.msra.mxu0 0.0
  %4855 = vmatprep.subr.mxu0 0.0
  %4856 = vmatpush1.msra.mxu0 0.0
  %4857 = vmatprep.subr.mxu0 0.0
  %4858 = vmatpush1.msra.mxu0 0.0
  %4859 = vmatprep.subr.mxu0 0.0
  %4860 = vmatpush1.msra.mxu0 0.0
  %4861 = vmatprep.subr.mxu0 0.0
  %4862 = vmatpush1.msra.mxu0 0.0
  %4863 = vmatprep.subr.mxu0 0.0
  %4864 = vmatpush1.msra.mxu0 0.0
  %4865 = vmatprep.subr.mxu0 0.0
  %4866 = vmatpush1.msra.mxu0 0.0
  %4867 = vmatprep.subr.mxu0 0.0
  %4868 = vmatpush1.msra.mxu0 %v4837
  %4869 = vmatprep.subr.mxu0 0.0
  %4870 = vmatpush1.msra.mxu0 %v3423
  %4871 = vmatprep.subr.mxu0 0.0
  %4872 = vmatpush2.msra.mxu0 0.0
  %4873 = vmatprep.subr.mxu0 0.0
  %4874 = vmatpush2.msra.mxu0 0.0
  %4875 = vmatprep.subr.mxu0 0.0
  %4876 = vmatpush2.msra.mxu0 0.0
  %4877 = vmatprep.subr.mxu0 0.0
  %4878 = vmatpush2.msra.mxu0 0.0
  %4879 = vmatprep.subr.mxu0 0.0
  %4880 = vmatpush2.msra.mxu0 0.0
  %4881 = vmatprep.subr.mxu0 0.0
  %4882 = vmatpush2.msra.mxu0 0.0
  %4883 = vmatprep.subr.mxu0 0.0
  %4884 = vmatpush2.msra.mxu0 0.0
  %4885 = vmatprep.subr.mxu0 0.0
  %4886 = vmatpush2.msra.mxu0 0.0
  %4887 = vmatprep.subr.mxu0 0.0
  %4888 = vmatpush2.msra.mxu0 0.0
  %4889 = vmatprep.subr.mxu0 0.0
  %4890 = vmatpush2.msra.mxu0 0.0
  %4891 = vmatprep.subr.mxu0 0.0
  %4892 = vmatpush2.msra.mxu0 0.0
  %4893 = vmatprep.subr.mxu0 0.0
  %4894 = vmatpush2.msra.mxu0 0.0
  %4895 = vmatprep.subr.mxu0 0.0
  %4896 = vmatpush2.msra.mxu0 0.0
  %4897 = vmatprep.subr.mxu0 0.0
  %4898 = vmatpush2.msra.mxu0 0.0
  %4899 = vmatprep.subr.mxu0 0.0
  %4900 = vmatpush2.msra.mxu0 0.0
  %4901 = vmatprep.subr.mxu0 0.0
  %4902 = vmatpush2.msra.mxu0 0.0
  %4903 = vmatprep.mubr.f32.mxu0 0.0
  %4904 = vmatmul.mubr.f32.gmra.mxu0 %v4831
  %v4905 = vpop.f32.mrf.mxu0
  %v4906 = vadd.f32 0.0, %v4905
  %v4907 = vpop.f32.mrf.mxu0
  %4908 = vmatprep.mubr.f32.mxu0 0.0
  %4909 = vmatmul.mubr.f32.gmra.mxu0 %v4834
  %v4910 = vpop.f32.mrf.mxu0
  %v4911 = vadd.f32 0.0, %v4910
  %v4912 = vpop.f32.mrf.mxu0
  %4913 = vdwg.mxu0
  %v4915 = vsel %vm4652, %v4816, 0
  %v4918 = vsel %vm4652, %v4817, 0
  %v4921 = vsel %vm1272, %v3503, 0
  %4923 = vmatprep.subr.mxu0 0.0
  %4924 = vmatpush1.msra.mxu0 0.0
  %4925 = vmatprep.subr.mxu0 0.0
  %4926 = vmatpush1.msra.mxu0 0.0
  %4927 = vmatprep.subr.mxu0 0.0
  %4928 = vmatpush1.msra.mxu0 0.0
  %4929 = vmatprep.subr.mxu0 0.0
  %4930 = vmatpush1.msra.mxu0 0.0
  %4931 = vmatprep.subr.mxu0 0.0
  %4932 = vmatpush1.msra.mxu0 0.0
  %4933 = vmatprep.subr.mxu0 0.0
  %4934 = vmatpush1.msra.mxu0 0.0
  %4935 = vmatprep.subr.mxu0 0.0
  %4936 = vmatpush1.msra.mxu0 0.0
  %4937 = vmatprep.subr.mxu0 0.0
  %4938 = vmatpush1.msra.mxu0 0.0
  %4939 = vmatprep.subr.mxu0 0.0
  %4940 = vmatpush1.msra.mxu0 0.0
  %4941 = vmatprep.subr.mxu0 0.0
  %4942 = vmatpush1.msra.mxu0 0.0
  %4943 = vmatprep.subr.mxu0 0.0
  %4944 = vmatpush1.msra.mxu0 0.0
  %4945 = vmatprep.subr.mxu0 0.0
  %4946 = vmatpush1.msra.mxu0 0.0
  %4947 = vmatprep.subr.mxu0 0.0
  %4948 = vmatpush1.msra.mxu0 0.0
  %4949 = vmatprep.subr.mxu0 0.0
  %4950 = vmatpush1.msra.mxu0 0.0
  %4951 = vmatprep.subr.mxu0 0.0
  %4952 = vmatpush1.msra.mxu0 %v4921
  %4953 = vmatprep.subr.mxu0 0.0
  %4954 = vmatpush1.msra.mxu0 %v3498
  %4955 = vmatprep.subr.mxu0 0.0
  %4956 = vmatpush2.msra.mxu0 0.0
  %4957 = vmatprep.subr.mxu0 0.0
  %4958 = vmatpush2.msra.mxu0 0.0
  %4959 = vmatprep.subr.mxu0 0.0
  %4960 = vmatpush2.msra.mxu0 0.0
  %4961 = vmatprep.subr.mxu0 0.0
  %4962 = vmatpush2.msra.mxu0 0.0
  %4963 = vmatprep.subr.mxu0 0.0
  %4964 = vmatpush2.msra.mxu0 0.0
  %4965 = vmatprep.subr.mxu0 0.0
  %4966 = vmatpush2.msra.mxu0 0.0
  %4967 = vmatprep.subr.mxu0 0.0
  %4968 = vmatpush2.msra.mxu0 0.0
  %4969 = vmatprep.subr.mxu0 0.0
  %4970 = vmatpush2.msra.mxu0 0.0
  %4971 = vmatprep.subr.mxu0 0.0
  %4972 = vmatpush2.msra.mxu0 0.0
  %4973 = vmatprep.subr.mxu0 0.0
  %4974 = vmatpush2.msra.mxu0 0.0
  %4975 = vmatprep.subr.mxu0 0.0
  %4976 = vmatpush2.msra.mxu0 0.0
  %4977 = vmatprep.subr.mxu0 0.0
  %4978 = vmatpush2.msra.mxu0 0.0
  %4979 = vmatprep.subr.mxu0 0.0
  %4980 = vmatpush2.msra.mxu0 0.0
  %4981 = vmatprep.subr.mxu0 0.0
  %4982 = vmatpush2.msra.mxu0 0.0
  %4983 = vmatprep.subr.mxu0 0.0
  %4984 = vmatpush2.msra.mxu0 0.0
  %4985 = vmatprep.subr.mxu0 0.0
  %4986 = vmatpush2.msra.mxu0 0.0
  %4987 = vmatprep.mubr.f32.mxu0 0.0
  %4988 = vmatmul.mubr.f32.gmra.mxu0 %v4915
  %v4989 = vpop.f32.mrf.mxu0
  %v4990 = vadd.f32 0.0, %v4989
  %v4991 = vpop.f32.mrf.mxu0
  %4992 = vmatprep.mubr.f32.mxu0 0.0
  %4993 = vmatmul.mubr.f32.gmra.mxu0 %v4918
  %v4994 = vpop.f32.mrf.mxu0
  %v4995 = vadd.f32 0.0, %v4994
  %v4996 = vpop.f32.mrf.mxu0
  %4997 = vdwg.mxu0
  %v4999 = vsel %vm4652, %v4818, 0
  %v5002 = vsel %vm4652, %v4819, 0
  %v5005 = vsel %vm1272, %v3578, 0
  %5007 = vmatprep.subr.mxu0 0.0
  %5008 = vmatpush1.msra.mxu0 0.0
  %5009 = vmatprep.subr.mxu0 0.0
  %5010 = vmatpush1.msra.mxu0 0.0
  %5011 = vmatprep.subr.mxu0 0.0
  %5012 = vmatpush1.msra.mxu0 0.0
  %5013 = vmatprep.subr.mxu0 0.0
  %5014 = vmatpush1.msra.mxu0 0.0
  %5015 = vmatprep.subr.mxu0 0.0
  %5016 = vmatpush1.msra.mxu0 0.0
  %5017 = vmatprep.subr.mxu0 0.0
  %5018 = vmatpush1.msra.mxu0 0.0
  %5019 = vmatprep.subr.mxu0 0.0
  %5020 = vmatpush1.msra.mxu0 0.0
  %5021 = vmatprep.subr.mxu0 0.0
  %5022 = vmatpush1.msra.mxu0 0.0
  %5023 = vmatprep.subr.mxu0 0.0
  %5024 = vmatpush1.msra.mxu0 0.0
  %5025 = vmatprep.subr.mxu0 0.0
  %5026 = vmatpush1.msra.mxu0 0.0
  %5027 = vmatprep.subr.mxu0 0.0
  %5028 = vmatpush1.msra.mxu0 0.0
  %5029 = vmatprep.subr.mxu0 0.0
  %5030 = vmatpush1.msra.mxu0 0.0
  %5031 = vmatprep.subr.mxu0 0.0
  %5032 = vmatpush1.msra.mxu0 0.0
  %5033 = vmatprep.subr.mxu0 0.0
  %5034 = vmatpush1.msra.mxu0 0.0
  %5035 = vmatprep.subr.mxu0 0.0
  %5036 = vmatpush1.msra.mxu0 %v5005
  %5037 = vmatprep.subr.mxu0 0.0
  %5038 = vmatpush1.msra.mxu0 %v3573
  %5039 = vmatprep.subr.mxu0 0.0
  %5040 = vmatpush2.msra.mxu0 0.0
  %5041 = vmatprep.subr.mxu0 0.0
  %5042 = vmatpush2.msra.mxu0 0.0
  %5043 = vmatprep.subr.mxu0 0.0
  %5044 = vmatpush2.msra.mxu0 0.0
  %5045 = vmatprep.subr.mxu0 0.0
  %5046 = vmatpush2.msra.mxu0 0.0
  %5047 = vmatprep.subr.mxu0 0.0
  %5048 = vmatpush2.msra.mxu0 0.0
  %5049 = vmatprep.subr.mxu0 0.0
  %5050 = vmatpush2.msra.mxu0 0.0
  %5051 = vmatprep.subr.mxu0 0.0
  %5052 = vmatpush2.msra.mxu0 0.0
  %5053 = vmatprep.subr.mxu0 0.0
  %5054 = vmatpush2.msra.mxu0 0.0
  %5055 = vmatprep.subr.mxu0 0.0
  %5056 = vmatpush2.msra.mxu0 0.0
  %5057 = vmatprep.subr.mxu0 0.0
  %5058 = vmatpush2.msra.mxu0 0.0
  %5059 = vmatprep.subr.mxu0 0.0
  %5060 = vmatpush2.msra.mxu0 0.0
  %5061 = vmatprep.subr.mxu0 0.0
  %5062 = vmatpush2.msra.mxu0 0.0
  %5063 = vmatprep.subr.mxu0 0.0
  %5064 = vmatpush2.msra.mxu0 0.0
  %5065 = vmatprep.subr.mxu0 0.0
  %5066 = vmatpush2.msra.mxu0 0.0
  %5067 = vmatprep.subr.mxu0 0.0
  %5068 = vmatpush2.msra.mxu0 0.0
  %5069 = vmatprep.subr.mxu0 0.0
  %5070 = vmatpush2.msra.mxu0 0.0
  %5071 = vmatprep.mubr.f32.mxu0 0.0
  %5072 = vmatmul.mubr.f32.gmra.mxu0 %v4999
  %v5073 = vpop.f32.mrf.mxu0
  %v5074 = vadd.f32 0.0, %v5073
  %v5075 = vpop.f32.mrf.mxu0
  %5076 = vmatprep.mubr.f32.mxu0 0.0
  %5077 = vmatmul.mubr.f32.gmra.mxu0 %v5002
  %v5078 = vpop.f32.mrf.mxu0
  %v5079 = vadd.f32 0.0, %v5078
  %v5080 = vpop.f32.mrf.mxu0
  %5081 = vdwg.mxu0
  %v5083 = vsel %vm4652, %v4820, 0
  %v5086 = vsel %vm4652, %v4821, 0
  %v5089 = vsel %vm1272, %v3653, 0
  %5091 = vmatprep.subr.mxu0 0.0
  %5092 = vmatpush1.msra.mxu0 0.0
  %5093 = vmatprep.subr.mxu0 0.0
  %5094 = vmatpush1.msra.mxu0 0.0
  %5095 = vmatprep.subr.mxu0 0.0
  %5096 = vmatpush1.msra.mxu0 0.0
  %5097 = vmatprep.subr.mxu0 0.0
  %5098 = vmatpush1.msra.mxu0 0.0
  %5099 = vmatprep.subr.mxu0 0.0
  %5100 = vmatpush1.msra.mxu0 0.0
  %5101 = vmatprep.subr.mxu0 0.0
  %5102 = vmatpush1.msra.mxu0 0.0
  %5103 = vmatprep.subr.mxu0 0.0
  %5104 = vmatpush1.msra.mxu0 0.0
  %5105 = vmatprep.subr.mxu0 0.0
  %5106 = vmatpush1.msra.mxu0 0.0
  %5107 = vmatprep.subr.mxu0 0.0
  %5108 = vmatpush1.msra.mxu0 0.0
  %5109 = vmatprep.subr.mxu0 0.0
  %5110 = vmatpush1.msra.mxu0 0.0
  %5111 = vmatprep.subr.mxu0 0.0
  %5112 = vmatpush1.msra.mxu0 0.0
  %5113 = vmatprep.subr.mxu0 0.0
  %5114 = vmatpush1.msra.mxu0 0.0
  %5115 = vmatprep.subr.mxu0 0.0
  %5116 = vmatpush1.msra.mxu0 0.0
  %5117 = vmatprep.subr.mxu0 0.0
  %5118 = vmatpush1.msra.mxu0 0.0
  %5119 = vmatprep.subr.mxu0 0.0
  %5120 = vmatpush1.msra.mxu0 %v5089
  %5121 = vmatprep.subr.mxu0 0.0
  %5122 = vmatpush1.msra.mxu0 %v3648
  %5123 = vmatprep.subr.mxu0 0.0
  %5124 = vmatpush2.msra.mxu0 0.0
  %5125 = vmatprep.subr.mxu0 0.0
  %5126 = vmatpush2.msra.mxu0 0.0
  %5127 = vmatprep.subr.mxu0 0.0
  %5128 = vmatpush2.msra.mxu0 0.0
  %5129 = vmatprep.subr.mxu0 0.0
  %5130 = vmatpush2.msra.mxu0 0.0
  %5131 = vmatprep.subr.mxu0 0.0
  %5132 = vmatpush2.msra.mxu0 0.0
  %5133 = vmatprep.subr.mxu0 0.0
  %5134 = vmatpush2.msra.mxu0 0.0
  %5135 = vmatprep.subr.mxu0 0.0
  %5136 = vmatpush2.msra.mxu0 0.0
  %5137 = vmatprep.subr.mxu0 0.0
  %5138 = vmatpush2.msra.mxu0 0.0
  %5139 = vmatprep.subr.mxu0 0.0
  %5140 = vmatpush2.msra.mxu0 0.0
  %5141 = vmatprep.subr.mxu0 0.0
  %5142 = vmatpush2.msra.mxu0 0.0
  %5143 = vmatprep.subr.mxu0 0.0
  %5144 = vmatpush2.msra.mxu0 0.0
  %5145 = vmatprep.subr.mxu0 0.0
  %5146 = vmatpush2.msra.mxu0 0.0
  %5147 = vmatprep.subr.mxu0 0.0
  %5148 = vmatpush2.msra.mxu0 0.0
  %5149 = vmatprep.subr.mxu0 0.0
  %5150 = vmatpush2.msra.mxu0 0.0
  %5151 = vmatprep.subr.mxu0 0.0
  %5152 = vmatpush2.msra.mxu0 0.0
  %5153 = vmatprep.subr.mxu0 0.0
  %5154 = vmatpush2.msra.mxu0 0.0
  %5155 = vmatprep.mubr.f32.mxu0 0.0
  %5156 = vmatmul.mubr.f32.gmra.mxu0 %v5083
  %v5157 = vpop.f32.mrf.mxu0
  %v5158 = vadd.f32 0.0, %v5157
  %v5159 = vpop.f32.mrf.mxu0
  %5160 = vmatprep.mubr.f32.mxu0 0.0
  %5161 = vmatmul.mubr.f32.gmra.mxu0 %v5086
  %v5162 = vpop.f32.mrf.mxu0
  %v5163 = vadd.f32 0.0, %v5162
  %v5164 = vpop.f32.mrf.mxu0
  %5165 = vdwg.mxu0
  %v5167 = vsel %vm4652, %v4822, 0
  %v5170 = vsel %vm4652, %v4823, 0
  %v5173 = vsel %vm1272, %v3728, 0
  %5175 = vmatprep.subr.mxu0 0.0
  %5176 = vmatpush1.msra.mxu0 0.0
  %5177 = vmatprep.subr.mxu0 0.0
  %5178 = vmatpush1.msra.mxu0 0.0
  %5179 = vmatprep.subr.mxu0 0.0
  %5180 = vmatpush1.msra.mxu0 0.0
  %5181 = vmatprep.subr.mxu0 0.0
  %5182 = vmatpush1.msra.mxu0 0.0
  %5183 = vmatprep.subr.mxu0 0.0
  %5184 = vmatpush1.msra.mxu0 0.0
  %5185 = vmatprep.subr.mxu0 0.0
  %5186 = vmatpush1.msra.mxu0 0.0
  %5187 = vmatprep.subr.mxu0 0.0
  %5188 = vmatpush1.msra.mxu0 0.0
  %5189 = vmatprep.subr.mxu0 0.0
  %5190 = vmatpush1.msra.mxu0 0.0
  %5191 = vmatprep.subr.mxu0 0.0
  %5192 = vmatpush1.msra.mxu0 0.0
  %5193 = vmatprep.subr.mxu0 0.0
  %5194 = vmatpush1.msra.mxu0 0.0
  %5195 = vmatprep.subr.mxu0 0.0
  %5196 = vmatpush1.msra.mxu0 0.0
  %5197 = vmatprep.subr.mxu0 0.0
  %5198 = vmatpush1.msra.mxu0 0.0
  %5199 = vmatprep.subr.mxu0 0.0
  %5200 = vmatpush1.msra.mxu0 0.0
  %5201 = vmatprep.subr.mxu0 0.0
  %5202 = vmatpush1.msra.mxu0 0.0
  %5203 = vmatprep.subr.mxu0 0.0
  %5204 = vmatpush1.msra.mxu0 %v5173
  %5205 = vmatprep.subr.mxu0 0.0
  %5206 = vmatpush1.msra.mxu0 %v3723
  %5207 = vmatprep.subr.mxu0 0.0
  %5208 = vmatpush2.msra.mxu0 0.0
  %5209 = vmatprep.subr.mxu0 0.0
  %5210 = vmatpush2.msra.mxu0 0.0
  %5211 = vmatprep.subr.mxu0 0.0
  %5212 = vmatpush2.msra.mxu0 0.0
  %5213 = vmatprep.subr.mxu0 0.0
  %5214 = vmatpush2.msra.mxu0 0.0
  %5215 = vmatprep.subr.mxu0 0.0
  %5216 = vmatpush2.msra.mxu0 0.0
  %5217 = vmatprep.subr.mxu0 0.0
  %5218 = vmatpush2.msra.mxu0 0.0
  %5219 = vmatprep.subr.mxu0 0.0
  %5220 = vmatpush2.msra.mxu0 0.0
  %5221 = vmatprep.subr.mxu0 0.0
  %5222 = vmatpush2.msra.mxu0 0.0
  %5223 = vmatprep.subr.mxu0 0.0
  %5224 = vmatpush2.msra.mxu0 0.0
  %5225 = vmatprep.subr.mxu0 0.0
  %5226 = vmatpush2.msra.mxu0 0.0
  %5227 = vmatprep.subr.mxu0 0.0
  %5228 = vmatpush2.msra.mxu0 0.0
  %5229 = vmatprep.subr.mxu0 0.0
  %5230 = vmatpush2.msra.mxu0 0.0
  %5231 = vmatprep.subr.mxu0 0.0
  %5232 = vmatpush2.msra.mxu0 0.0
  %5233 = vmatprep.subr.mxu0 0.0
  %5234 = vmatpush2.msra.mxu0 0.0
  %5235 = vmatprep.subr.mxu0 0.0
  %5236 = vmatpush2.msra.mxu0 0.0
  %5237 = vmatprep.subr.mxu0 0.0
  %5238 = vmatpush2.msra.mxu0 0.0
  %5239 = vmatprep.mubr.f32.mxu0 0.0
  %5240 = vmatmul.mubr.f32.gmra.mxu0 %v5167
  %v5241 = vpop.f32.mrf.mxu0
  %v5242 = vadd.f32 0.0, %v5241
  %v5243 = vpop.f32.mrf.mxu0
  %5244 = vmatprep.mubr.f32.mxu0 0.0
  %5245 = vmatmul.mubr.f32.gmra.mxu0 %v5170
  %v5246 = vpop.f32.mrf.mxu0
  %v5247 = vadd.f32 0.0, %v5246
  %v5248 = vpop.f32.mrf.mxu0
  %5249 = vdwg.mxu0
  %v5251 = vsel %vm4652, %v4824, 0
  %v5254 = vsel %vm4652, %v4825, 0
  %v5257 = vsel %vm1272, %v3803, 0
  %5259 = vmatprep.subr.mxu0 0.0
  %5260 = vmatpush1.msra.mxu0 0.0
  %5261 = vmatprep.subr.mxu0 0.0
  %5262 = vmatpush1.msra.mxu0 0.0
  %5263 = vmatprep.subr.mxu0 0.0
  %5264 = vmatpush1.msra.mxu0 0.0
  %5265 = vmatprep.subr.mxu0 0.0
  %5266 = vmatpush1.msra.mxu0 0.0
  %5267 = vmatprep.subr.mxu0 0.0
  %5268 = vmatpush1.msra.mxu0 0.0
  %5269 = vmatprep.subr.mxu0 0.0
  %5270 = vmatpush1.msra.mxu0 0.0
  %5271 = vmatprep.subr.mxu0 0.0
  %5272 = vmatpush1.msra.mxu0 0.0
  %5273 = vmatprep.subr.mxu0 0.0
  %5274 = vmatpush1.msra.mxu0 0.0
  %5275 = vmatprep.subr.mxu0 0.0
  %5276 = vmatpush1.msra.mxu0 0.0
  %5277 = vmatprep.subr.mxu0 0.0
  %5278 = vmatpush1.msra.mxu0 0.0
  %5279 = vmatprep.subr.mxu0 0.0
  %5280 = vmatpush1.msra.mxu0 0.0
  %5281 = vmatprep.subr.mxu0 0.0
  %5282 = vmatpush1.msra.mxu0 0.0
  %5283 = vmatprep.subr.mxu0 0.0
  %5284 = vmatpush1.msra.mxu0 0.0
  %5285 = vmatprep.subr.mxu0 0.0
  %5286 = vmatpush1.msra.mxu0 0.0
  %5287 = vmatprep.subr.mxu0 0.0
  %5288 = vmatpush1.msra.mxu0 %v5257
  %5289 = vmatprep.subr.mxu0 0.0
  %5290 = vmatpush1.msra.mxu0 %v3798
  %5291 = vmatprep.subr.mxu0 0.0
  %5292 = vmatpush2.msra.mxu0 0.0
  %5293 = vmatprep.subr.mxu0 0.0
  %5294 = vmatpush2.msra.mxu0 0.0
  %5295 = vmatprep.subr.mxu0 0.0
  %5296 = vmatpush2.msra.mxu0 0.0
  %5297 = vmatprep.subr.mxu0 0.0
  %5298 = vmatpush2.msra.mxu0 0.0
  %5299 = vmatprep.subr.mxu0 0.0
  %5300 = vmatpush2.msra.mxu0 0.0
  %5301 = vmatprep.subr.mxu0 0.0
  %5302 = vmatpush2.msra.mxu0 0.0
  %5303 = vmatprep.subr.mxu0 0.0
  %5304 = vmatpush2.msra.mxu0 0.0
  %5305 = vmatprep.subr.mxu0 0.0
  %5306 = vmatpush2.msra.mxu0 0.0
  %5307 = vmatprep.subr.mxu0 0.0
  %5308 = vmatpush2.msra.mxu0 0.0
  %5309 = vmatprep.subr.mxu0 0.0
  %5310 = vmatpush2.msra.mxu0 0.0
  %5311 = vmatprep.subr.mxu0 0.0
  %5312 = vmatpush2.msra.mxu0 0.0
  %5313 = vmatprep.subr.mxu0 0.0
  %5314 = vmatpush2.msra.mxu0 0.0
  %5315 = vmatprep.subr.mxu0 0.0
  %5316 = vmatpush2.msra.mxu0 0.0
  %5317 = vmatprep.subr.mxu0 0.0
  %5318 = vmatpush2.msra.mxu0 0.0
  %5319 = vmatprep.subr.mxu0 0.0
  %5320 = vmatpush2.msra.mxu0 0.0
  %5321 = vmatprep.subr.mxu0 0.0
  %5322 = vmatpush2.msra.mxu0 0.0
  %5323 = vmatprep.mubr.f32.mxu0 0.0
  %5324 = vmatmul.mubr.f32.gmra.mxu0 %v5251
  %v5325 = vpop.f32.mrf.mxu0
  %v5326 = vadd.f32 0.0, %v5325
  %v5327 = vpop.f32.mrf.mxu0
  %5328 = vmatprep.mubr.f32.mxu0 0.0
  %5329 = vmatmul.mubr.f32.gmra.mxu0 %v5254
  %v5330 = vpop.f32.mrf.mxu0
  %v5331 = vadd.f32 0.0, %v5330
  %v5332 = vpop.f32.mrf.mxu0
  %5333 = vdwg.mxu0
  %v5335 = vsel %vm4652, %v4826, 0
  %v5338 = vsel %vm4652, %v4827, 0
  %v5341 = vsel %vm1272, %v3878, 0
  %5343 = vmatprep.subr.mxu0 0.0
  %5344 = vmatpush1.msra.mxu0 0.0
  %5345 = vmatprep.subr.mxu0 0.0
  %5346 = vmatpush1.msra.mxu0 0.0
  %5347 = vmatprep.subr.mxu0 0.0
  %5348 = vmatpush1.msra.mxu0 0.0
  %5349 = vmatprep.subr.mxu0 0.0
  %5350 = vmatpush1.msra.mxu0 0.0
  %5351 = vmatprep.subr.mxu0 0.0
  %5352 = vmatpush1.msra.mxu0 0.0
  %5353 = vmatprep.subr.mxu0 0.0
  %5354 = vmatpush1.msra.mxu0 0.0
  %5355 = vmatprep.subr.mxu0 0.0
  %5356 = vmatpush1.msra.mxu0 0.0
  %5357 = vmatprep.subr.mxu0 0.0
  %5358 = vmatpush1.msra.mxu0 0.0
  %5359 = vmatprep.subr.mxu0 0.0
  %5360 = vmatpush1.msra.mxu0 0.0
  %5361 = vmatprep.subr.mxu0 0.0
  %5362 = vmatpush1.msra.mxu0 0.0
  %5363 = vmatprep.subr.mxu0 0.0
  %5364 = vmatpush1.msra.mxu0 0.0
  %5365 = vmatprep.subr.mxu0 0.0
  %5366 = vmatpush1.msra.mxu0 0.0
  %5367 = vmatprep.subr.mxu0 0.0
  %5368 = vmatpush1.msra.mxu0 0.0
  %5369 = vmatprep.subr.mxu0 0.0
  %5370 = vmatpush1.msra.mxu0 0.0
  %5371 = vmatprep.subr.mxu0 0.0
  %5372 = vmatpush1.msra.mxu0 %v5341
  %5373 = vmatprep.subr.mxu0 0.0
  %5374 = vmatpush1.msra.mxu0 %v3873
  %5375 = vmatprep.subr.mxu0 0.0
  %5376 = vmatpush2.msra.mxu0 0.0
  %5377 = vmatprep.subr.mxu0 0.0
  %5378 = vmatpush2.msra.mxu0 0.0
  %5379 = vmatprep.subr.mxu0 0.0
  %5380 = vmatpush2.msra.mxu0 0.0
  %5381 = vmatprep.subr.mxu0 0.0
  %5382 = vmatpush2.msra.mxu0 0.0
  %5383 = vmatprep.subr.mxu0 0.0
  %5384 = vmatpush2.msra.mxu0 0.0
  %5385 = vmatprep.subr.mxu0 0.0
  %5386 = vmatpush2.msra.mxu0 0.0
  %5387 = vmatprep.subr.mxu0 0.0
  %5388 = vmatpush2.msra.mxu0 0.0
  %5389 = vmatprep.subr.mxu0 0.0
  %5390 = vmatpush2.msra.mxu0 0.0
  %5391 = vmatprep.subr.mxu0 0.0
  %5392 = vmatpush2.msra.mxu0 0.0
  %5393 = vmatprep.subr.mxu0 0.0
  %5394 = vmatpush2.msra.mxu0 0.0
  %5395 = vmatprep.subr.mxu0 0.0
  %5396 = vmatpush2.msra.mxu0 0.0
  %5397 = vmatprep.subr.mxu0 0.0
  %5398 = vmatpush2.msra.mxu0 0.0
  %5399 = vmatprep.subr.mxu0 0.0
  %5400 = vmatpush2.msra.mxu0 0.0
  %5401 = vmatprep.subr.mxu0 0.0
  %5402 = vmatpush2.msra.mxu0 0.0
  %5403 = vmatprep.subr.mxu0 0.0
  %5404 = vmatpush2.msra.mxu0 0.0
  %5405 = vmatprep.subr.mxu0 0.0
  %5406 = vmatpush2.msra.mxu0 0.0
  %5407 = vmatprep.mubr.f32.mxu0 0.0
  %5408 = vmatmul.mubr.f32.gmra.mxu0 %v5335
  %v5409 = vpop.f32.mrf.mxu0
  %v5410 = vadd.f32 0.0, %v5409
  %v5411 = vpop.f32.mrf.mxu0
  %5412 = vmatprep.mubr.f32.mxu0 0.0
  %5413 = vmatmul.mubr.f32.gmra.mxu0 %v5338
  %v5414 = vpop.f32.mrf.mxu0
  %v5415 = vadd.f32 0.0, %v5414
  %v5416 = vpop.f32.mrf.mxu0
  %5417 = vdwg.mxu0
  %v5419 = vsel %vm4652, %v4828, 0
  %v5422 = vsel %vm4652, %v4829, 0
  %v5425 = vsel %vm1272, %v3953, 0
  %5427 = vmatprep.subr.mxu0 0.0
  %5428 = vmatpush1.msra.mxu0 0.0
  %5429 = vmatprep.subr.mxu0 0.0
  %5430 = vmatpush1.msra.mxu0 0.0
  %5431 = vmatprep.subr.mxu0 0.0
  %5432 = vmatpush1.msra.mxu0 0.0
  %5433 = vmatprep.subr.mxu0 0.0
  %5434 = vmatpush1.msra.mxu0 0.0
  %5435 = vmatprep.subr.mxu0 0.0
  %5436 = vmatpush1.msra.mxu0 0.0
  %5437 = vmatprep.subr.mxu0 0.0
  %5438 = vmatpush1.msra.mxu0 0.0
  %5439 = vmatprep.subr.mxu0 0.0
  %5440 = vmatpush1.msra.mxu0 0.0
  %5441 = vmatprep.subr.mxu0 0.0
  %5442 = vmatpush1.msra.mxu0 0.0
  %5443 = vmatprep.subr.mxu0 0.0
  %5444 = vmatpush1.msra.mxu0 0.0
  %5445 = vmatprep.subr.mxu0 0.0
  %5446 = vmatpush1.msra.mxu0 0.0
  %5447 = vmatprep.subr.mxu0 0.0
  %5448 = vmatpush1.msra.mxu0 0.0
  %5449 = vmatprep.subr.mxu0 0.0
  %5450 = vmatpush1.msra.mxu0 0.0
  %5451 = vmatprep.subr.mxu0 0.0
  %5452 = vmatpush1.msra.mxu0 0.0
  %5453 = vmatprep.subr.mxu0 0.0
  %5454 = vmatpush1.msra.mxu0 0.0
  %5455 = vmatprep.subr.mxu0 0.0
  %5456 = vmatpush1.msra.mxu0 %v5425
  %5457 = vmatprep.subr.mxu0 0.0
  %5458 = vmatpush1.msra.mxu0 %v3948
  %5459 = vmatprep.subr.mxu0 0.0
  %5460 = vmatpush2.msra.mxu0 0.0
  %5461 = vmatprep.subr.mxu0 0.0
  %5462 = vmatpush2.msra.mxu0 0.0
  %5463 = vmatprep.subr.mxu0 0.0
  %5464 = vmatpush2.msra.mxu0 0.0
  %5465 = vmatprep.subr.mxu0 0.0
  %5466 = vmatpush2.msra.mxu0 0.0
  %5467 = vmatprep.subr.mxu0 0.0
  %5468 = vmatpush2.msra.mxu0 0.0
  %5469 = vmatprep.subr.mxu0 0.0
  %5470 = vmatpush2.msra.mxu0 0.0
  %5471 = vmatprep.subr.mxu0 0.0
  %5472 = vmatpush2.msra.mxu0 0.0
  %5473 = vmatprep.subr.mxu0 0.0
  %5474 = vmatpush2.msra.mxu0 0.0
  %5475 = vmatprep.subr.mxu0 0.0
  %5476 = vmatpush2.msra.mxu0 0.0
  %5477 = vmatprep.subr.mxu0 0.0
  %5478 = vmatpush2.msra.mxu0 0.0
  %5479 = vmatprep.subr.mxu0 0.0
  %5480 = vmatpush2.msra.mxu0 0.0
  %5481 = vmatprep.subr.mxu0 0.0
  %5482 = vmatpush2.msra.mxu0 0.0
  %5483 = vmatprep.subr.mxu0 0.0
  %5484 = vmatpush2.msra.mxu0 0.0
  %5485 = vmatprep.subr.mxu0 0.0
  %5486 = vmatpush2.msra.mxu0 0.0
  %5487 = vmatprep.subr.mxu0 0.0
  %5488 = vmatpush2.msra.mxu0 0.0
  %5489 = vmatprep.subr.mxu0 0.0
  %5490 = vmatpush2.msra.mxu0 0.0
  %5491 = vmatprep.mubr.f32.mxu0 0.0
  %5492 = vmatmul.mubr.f32.gmra.mxu0 %v5419
  %v5493 = vpop.f32.mrf.mxu0
  %v5494 = vadd.f32 0.0, %v5493
  %v5495 = vpop.f32.mrf.mxu0
  %5496 = vmatprep.mubr.f32.mxu0 0.0
  %5497 = vmatmul.mubr.f32.gmra.mxu0 %v5422
  %v5498 = vpop.f32.mrf.mxu0
  %v5499 = vadd.f32 0.0, %v5498
  %v5500 = vpop.f32.mrf.mxu0
  %5501 = vdwg.mxu0
  %v5502 = vmul.f32 %v4906, %v4906
  %v5503 = vmul.f32 %v4911, %v4911
  %v5504 = vmul.f32 %v4990, %v4990
  %v5505 = vmul.f32 %v4995, %v4995
  %v5506 = vmul.f32 %v5074, %v5074
  %v5507 = vmul.f32 %v5079, %v5079
  %v5508 = vmul.f32 %v5158, %v5158
  %v5509 = vmul.f32 %v5163, %v5163
  %v5510 = vmul.f32 %v5242, %v5242
  %v5511 = vmul.f32 %v5247, %v5247
  %v5512 = vmul.f32 %v5326, %v5326
  %v5513 = vmul.f32 %v5331, %v5331
  %v5514 = vmul.f32 %v5410, %v5410
  %v5515 = vmul.f32 %v5415, %v5415
  %v5516 = vmul.f32 %v5494, %v5494
  %v5517 = vmul.f32 %v5499, %v5499
  %v5518 = vsel %vm367, %v5502, 0.0
  %5519 = vadd.xlane.f32.xlu0 %v5518
  %v5520 = vpop.xlane.xlu0 %5519
  %v5521 = vsel %vm1950, %v5503, 0.0
  %5522 = vadd.xlane.f32.xlu0 %v5521
  %v5523 = vpop.xlane.xlu0 %5522
  %v5524 = vsel %vm367, %v5504, 0.0
  %5525 = vadd.xlane.f32.xlu0 %v5524
  %v5526 = vpop.xlane.xlu0 %5525
  %v5527 = vsel %vm1950, %v5505, 0.0
  %5528 = vadd.xlane.f32.xlu0 %v5527
  %v5529 = vpop.xlane.xlu0 %5528
  %v5530 = vsel %vm367, %v5506, 0.0
  %5531 = vadd.xlane.f32.xlu0 %v5530
  %v5532 = vpop.xlane.xlu0 %5531
  %v5533 = vsel %vm1950, %v5507, 0.0
  %5534 = vadd.xlane.f32.xlu0 %v5533
  %v5535 = vpop.xlane.xlu0 %5534
  %v5536 = vsel %vm367, %v5508, 0.0
  %5537 = vadd.xlane.f32.xlu0 %v5536
  %v5538 = vpop.xlane.xlu0 %5537
  %v5539 = vsel %vm1950, %v5509, 0.0
  %5540 = vadd.xlane.f32.xlu0 %v5539
  %v5541 = vpop.xlane.xlu0 %5540
  %v5542 = vsel %vm367, %v5510, 0.0
  %5543 = vadd.xlane.f32.xlu0 %v5542
  %v5544 = vpop.xlane.xlu0 %5543
  %v5545 = vsel %vm1950, %v5511, 0.0
  %5546 = vadd.xlane.f32.xlu0 %v5545
  %v5547 = vpop.xlane.xlu0 %5546
  %v5548 = vsel %vm367, %v5512, 0.0
  %5549 = vadd.xlane.f32.xlu0 %v5548
  %v5550 = vpop.xlane.xlu0 %5549
  %v5551 = vsel %vm1950, %v5513, 0.0
  %5552 = vadd.xlane.f32.xlu0 %v5551
  %v5553 = vpop.xlane.xlu0 %5552
  %v5554 = vsel %vm367, %v5514, 0.0
  %5555 = vadd.xlane.f32.xlu0 %v5554
  %v5556 = vpop.xlane.xlu0 %5555
  %v5557 = vsel %vm1950, %v5515, 0.0
  %5558 = vadd.xlane.f32.xlu0 %v5557
  %v5559 = vpop.xlane.xlu0 %5558
  %v5560 = vsel %vm367, %v5516, 0.0
  %5561 = vadd.xlane.f32.xlu0 %v5560
  %v5562 = vpop.xlane.xlu0 %5561
  %v5563 = vsel %vm1950, %v5517, 0.0
  %5564 = vadd.xlane.f32.xlu0 %v5563
  %v5565 = vpop.xlane.xlu0 %5564
  %v5566 = vmul.f32 %v1342, %v4906
  %v5567 = vmul.f32 %v1347, %v4911
  %v5568 = vmul.f32 %v1425, %v4990
  %v5569 = vmul.f32 %v1430, %v4995
  %v5570 = vmul.f32 %v1508, %v5074
  %v5571 = vmul.f32 %v1513, %v5079
  %v5572 = vmul.f32 %v1591, %v5158
  %v5573 = vmul.f32 %v1596, %v5163
  %v5574 = vmul.f32 %v1674, %v5242
  %v5575 = vmul.f32 %v1679, %v5247
  %v5576 = vmul.f32 %v1757, %v5326
  %v5577 = vmul.f32 %v1762, %v5331
  %v5578 = vmul.f32 %v1840, %v5410
  %v5579 = vmul.f32 %v1845, %v5415
  %v5580 = vmul.f32 %v1923, %v5494
  %v5581 = vmul.f32 %v1928, %v5499
  %v5582 = vsel %vm367, %v5566, 0.0
  %5583 = vadd.xlane.f32.xlu0 %v5582
  %v5584 = vpop.xlane.xlu0 %5583
  %v5585 = vsel %vm1950, %v5567, 0.0
  %5586 = vadd.xlane.f32.xlu0 %v5585
  %v5587 = vpop.xlane.xlu0 %5586
  %v5588 = vsel %vm367, %v5568, 0.0
  %5589 = vadd.xlane.f32.xlu0 %v5588
  %v5590 = vpop.xlane.xlu0 %5589
  %v5591 = vsel %vm1950, %v5569, 0.0
  %5592 = vadd.xlane.f32.xlu0 %v5591
  %v5593 = vpop.xlane.xlu0 %5592
  %v5594 = vsel %vm367, %v5570, 0.0
  %5595 = vadd.xlane.f32.xlu0 %v5594
  %v5596 = vpop.xlane.xlu0 %5595
  %v5597 = vsel %vm1950, %v5571, 0.0
  %5598 = vadd.xlane.f32.xlu0 %v5597
  %v5599 = vpop.xlane.xlu0 %5598
  %v5600 = vsel %vm367, %v5572, 0.0
  %5601 = vadd.xlane.f32.xlu0 %v5600
  %v5602 = vpop.xlane.xlu0 %5601
  %v5603 = vsel %vm1950, %v5573, 0.0
  %5604 = vadd.xlane.f32.xlu0 %v5603
  %v5605 = vpop.xlane.xlu0 %5604
  %v5606 = vsel %vm367, %v5574, 0.0
  %5607 = vadd.xlane.f32.xlu0 %v5606
  %v5608 = vpop.xlane.xlu0 %5607
  %v5609 = vsel %vm1950, %v5575, 0.0
  %5610 = vadd.xlane.f32.xlu0 %v5609
  %v5611 = vpop.xlane.xlu0 %5610
  %v5612 = vsel %vm367, %v5576, 0.0
  %5613 = vadd.xlane.f32.xlu0 %v5612
  %v5614 = vpop.xlane.xlu0 %5613
  %v5615 = vsel %vm1950, %v5577, 0.0
  %5616 = vadd.xlane.f32.xlu0 %v5615
  %v5617 = vpop.xlane.xlu0 %5616
  %v5618 = vsel %vm367, %v5578, 0.0
  %5619 = vadd.xlane.f32.xlu0 %v5618
  %v5620 = vpop.xlane.xlu0 %5619
  %v5621 = vsel %vm1950, %v5579, 0.0
  %5622 = vadd.xlane.f32.xlu0 %v5621
  %v5623 = vpop.xlane.xlu0 %5622
  %v5624 = vsel %vm367, %v5580, 0.0
  %5625 = vadd.xlane.f32.xlu0 %v5624
  %v5626 = vpop.xlane.xlu0 %5625
  %v5627 = vsel %vm1950, %v5581, 0.0
  %5628 = vadd.xlane.f32.xlu0 %v5627
  %v5629 = vpop.xlane.xlu0 %5628
  %v5630 = vmul.f32 %v1949, %v5520
  %v5631 = vmul.f32 %v1953, %v5523
  %v5632 = vmul.f32 %v1956, %v5526
  %v5633 = vmul.f32 %v1959, %v5529
  %v5634 = vmul.f32 %v1962, %v5532
  %v5635 = vmul.f32 %v1965, %v5535
  %v5636 = vmul.f32 %v1968, %v5538
  %v5637 = vmul.f32 %v1971, %v5541
  %v5638 = vmul.f32 %v1974, %v5544
  %v5639 = vmul.f32 %v1977, %v5547
  %v5640 = vmul.f32 %v1980, %v5550
  %v5641 = vmul.f32 %v1983, %v5553
  %v5642 = vmul.f32 %v1986, %v5556
  %v5643 = vmul.f32 %v1989, %v5559
  %v5644 = vmul.f32 %v1992, %v5562
  %v5645 = vmul.f32 %v1995, %v5565
  %v5646 = vmax.f32 %v5630, 1e-16
  %v5647 = vmax.f32 %v5631, 1e-16
  %v5648 = vmax.f32 %v5632, 1e-16
  %v5649 = vmax.f32 %v5633, 1e-16
  %v5650 = vmax.f32 %v5634, 1e-16
  %v5651 = vmax.f32 %v5635, 1e-16
  %v5652 = vmax.f32 %v5636, 1e-16
  %v5653 = vmax.f32 %v5637, 1e-16
  %v5654 = vmax.f32 %v5638, 1e-16
  %v5655 = vmax.f32 %v5639, 1e-16
  %v5656 = vmax.f32 %v5640, 1e-16
  %v5657 = vmax.f32 %v5641, 1e-16
  %v5658 = vmax.f32 %v5642, 1e-16
  %v5659 = vmax.f32 %v5643, 1e-16
  %v5660 = vmax.f32 %v5644, 1e-16
  %v5661 = vmax.f32 %v5645, 1e-16
  %v5662 = vrsqrt.pop %v5646
  %v5663 = vrsqrt.pop %v5647
  %v5664 = vrsqrt.pop %v5648
  %v5665 = vrsqrt.pop %v5649
  %v5666 = vrsqrt.pop %v5650
  %v5667 = vrsqrt.pop %v5651
  %v5668 = vrsqrt.pop %v5652
  %v5669 = vrsqrt.pop %v5653
  %v5670 = vrsqrt.pop %v5654
  %v5671 = vrsqrt.pop %v5655
  %v5672 = vrsqrt.pop %v5656
  %v5673 = vrsqrt.pop %v5657
  %v5674 = vrsqrt.pop %v5658
  %v5675 = vrsqrt.pop %v5659
  %v5676 = vrsqrt.pop %v5660
  %v5677 = vrsqrt.pop %v5661
  %v5678 = vmul.f32 %v5584, %v5662
  %v5679 = vmul.f32 %v5587, %v5663
  %v5680 = vmul.f32 %v5590, %v5664
  %v5681 = vmul.f32 %v5593, %v5665
  %v5682 = vmul.f32 %v5596, %v5666
  %v5683 = vmul.f32 %v5599, %v5667
  %v5684 = vmul.f32 %v5602, %v5668
  %v5685 = vmul.f32 %v5605, %v5669
  %v5686 = vmul.f32 %v5608, %v5670
  %v5687 = vmul.f32 %v5611, %v5671
  %v5688 = vmul.f32 %v5614, %v5672
  %v5689 = vmul.f32 %v5617, %v5673
  %v5690 = vmul.f32 %v5620, %v5674
  %v5691 = vmul.f32 %v5623, %v5675
  %v5692 = vmul.f32 %v5626, %v5676
  %v5693 = vmul.f32 %v5629, %v5677
  %v5710 = vlaneseq
  %v5711 = vand.u32 %v5710, 127
  %v5712 = vlaneseq
  %v5713 = vshrl.u32 %v5712, 7
  %v5714 = vsub.s32 %v5711, %v5713
  %v5715 = vrot.slane %v5678, %v5714
  %v5716 = vadd.s32 %v5711, 4294967288
  %v5717 = vlaneseq
  %v5718 = vshrl.u32 %v5717, 7
  %v5719 = vsub.s32 %v5716, %v5718
  %v5720 = vrot.slane %v5679, %v5719
  %vm5721 = vcmask 130112
  %v5722 = vsel %vm5721, %v5720, %v5715
  %v5723 = vlaneseq
  %v5724 = vshrl.u32 %v5723, 7
  %v5725 = vsub.s32 %v5711, %v5724
  %v5726 = vrot.slane %v5680, %v5725
  %v5727 = vlaneseq
  %v5728 = vshrl.u32 %v5727, 7
  %v5729 = vsub.s32 %v5716, %v5728
  %v5730 = vrot.slane %v5681, %v5729
  %v5731 = vsel %vm5721, %v5730, %v5726
  %v5732 = vlaneseq
  %v5733 = vshrl.u32 %v5732, 7
  %v5734 = vsub.s32 %v5711, %v5733
  %v5735 = vrot.slane %v5682, %v5734
  %v5736 = vlaneseq
  %v5737 = vshrl.u32 %v5736, 7
  %v5738 = vsub.s32 %v5716, %v5737
  %v5739 = vrot.slane %v5683, %v5738
  %v5740 = vsel %vm5721, %v5739, %v5735
  %v5741 = vlaneseq
  %v5742 = vshrl.u32 %v5741, 7
  %v5743 = vsub.s32 %v5711, %v5742
  %v5744 = vrot.slane %v5684, %v5743
  %v5745 = vlaneseq
  %v5746 = vshrl.u32 %v5745, 7
  %v5747 = vsub.s32 %v5716, %v5746
  %v5748 = vrot.slane %v5685, %v5747
  %v5749 = vsel %vm5721, %v5748, %v5744
  %v5750 = vlaneseq
  %v5751 = vshrl.u32 %v5750, 7
  %v5752 = vsub.s32 %v5711, %v5751
  %v5753 = vrot.slane %v5686, %v5752
  %v5754 = vlaneseq
  %v5755 = vshrl.u32 %v5754, 7
  %v5756 = vsub.s32 %v5716, %v5755
  %v5757 = vrot.slane %v5687, %v5756
  %v5758 = vsel %vm5721, %v5757, %v5753
  %v5759 = vlaneseq
  %v5760 = vshrl.u32 %v5759, 7
  %v5761 = vsub.s32 %v5711, %v5760
  %v5762 = vrot.slane %v5688, %v5761
  %v5763 = vlaneseq
  %v5764 = vshrl.u32 %v5763, 7
  %v5765 = vsub.s32 %v5716, %v5764
  %v5766 = vrot.slane %v5689, %v5765
  %v5767 = vsel %vm5721, %v5766, %v5762
  %v5768 = vlaneseq
  %v5769 = vshrl.u32 %v5768, 7
  %v5770 = vsub.s32 %v5711, %v5769
  %v5771 = vrot.slane %v5690, %v5770
  %v5772 = vlaneseq
  %v5773 = vshrl.u32 %v5772, 7
  %v5774 = vsub.s32 %v5716, %v5773
  %v5775 = vrot.slane %v5691, %v5774
  %v5776 = vsel %vm5721, %v5775, %v5771
  %v5777 = vlaneseq
  %v5778 = vshrl.u32 %v5777, 7
  %v5779 = vsub.s32 %v5711, %v5778
  %v5780 = vrot.slane %v5692, %v5779
  %v5781 = vlaneseq
  %v5782 = vshrl.u32 %v5781, 7
  %v5783 = vsub.s32 %v5716, %v5782
  %v5784 = vrot.slane %v5693, %v5783
  %v5785 = vsel %vm5721, %v5784, %v5780
  %vm5786 = vcmask 1041409
  %v5787 = vsel %vm5786, %v5731, %v5722
  %vm5788 = vcmask 1042434
  %v5789 = vsel %vm5788, %v5740, %v5787
  %vm5790 = vcmask 1043459
  %v5791 = vsel %vm5790, %v5749, %v5789
  %vm5792 = vcmask 1044484
  %v5793 = vsel %vm5792, %v5758, %v5791
  %vm5794 = vcmask 1045509
  %v5795 = vsel %vm5794, %v5767, %v5793
  %vm5796 = vcmask 1046534
  %v5797 = vsel %vm5796, %v5776, %v5795
  %vm5798 = vcmask 1047559
  %v5799 = vsel %vm5798, %v5785, %v5797
  %5801 = vst.msk [vmem:[%s7] sm:$0xff] %vm4652, %v5799
  %s5802 = scalar_lea.vmem %s3, 128
  %v5803 = vld [vmem:[%s5802] sm:$0xff]
  %v5804 = vld [vmem:[%s5802 + $0x8] sm:$0xf]
  %v5805 = vld [vmem:[%s5802 + $0x10] sm:$0xff]
  %v5806 = vld [vmem:[%s5802 + $0x18] sm:$0xf]
  %v5807 = vld [vmem:[%s5802 + $0x20] sm:$0xff]
  %v5808 = vld [vmem:[%s5802 + $0x28] sm:$0xf]
  %v5809 = vld [vmem:[%s5802 + $0x30] sm:$0xff]
  %v5810 = vld [vmem:[%s5802 + $0x38] sm:$0xf]
  %v5811 = vld [vmem:[%s5802 + $0x40] sm:$0xff]
  %v5812 = vld [vmem:[%s5802 + $0x48] sm:$0xf]
  %v5813 = vld [vmem:[%s5802 + $0x50] sm:$0xff]
  %v5814 = vld [vmem:[%s5802 + $0x58] sm:$0xf]
  %v5815 = vld [vmem:[%s5802 + $0x60] sm:$0xff]
  %v5816 = vld [vmem:[%s5802 + $0x68] sm:$0xf]
  %v5817 = vld [vmem:[%s5802 + $0x70] sm:$0xff]
  %v5818 = vld [vmem:[%s5802 + $0x78] sm:$0xf]
  %s5819 = scalar_lea.vmem %s4, 256
  %v5820 = vld [vmem:[%s5819] sm:$0xff]
  %v5821 = vld [vmem:[%s5819 + $0x8] sm:$0xff]
  %v5822 = vld [vmem:[%s5819 + $0x10] sm:$0xff]
  %v5823 = vld [vmem:[%s5819 + $0x18] sm:$0xff]
  %v5824 = vld [vmem:[%s5819 + $0x20] sm:$0xff]
  %v5825 = vld [vmem:[%s5819 + $0x28] sm:$0xff]
  %v5826 = vld [vmem:[%s5819 + $0x30] sm:$0xff]
  %v5827 = vld [vmem:[%s5819 + $0x38] sm:$0xff]
  %v5828 = vld [vmem:[%s5819 + $0x40] sm:$0xff]
  %v5829 = vld [vmem:[%s5819 + $0x48] sm:$0xff]
  %v5830 = vld [vmem:[%s5819 + $0x50] sm:$0xff]
  %v5831 = vld [vmem:[%s5819 + $0x58] sm:$0xff]
  %v5832 = vld [vmem:[%s5819 + $0x60] sm:$0xff]
  %v5833 = vld [vmem:[%s5819 + $0x68] sm:$0xff]
  %v5834 = vld [vmem:[%s5819 + $0x70] sm:$0xff]
  %v5835 = vld [vmem:[%s5819 + $0x78] sm:$0xff]
  %v5836 = vld [vmem:[%s5819 + $0x80] sm:$0xff]
  %v5837 = vld [vmem:[%s5819 + $0x88] sm:$0xff]
  %v5838 = vld [vmem:[%s5819 + $0x90] sm:$0xff]
  %v5839 = vld [vmem:[%s5819 + $0x98] sm:$0xff]
  %v5840 = vld [vmem:[%s5819 + $0xa0] sm:$0xff]
  %v5841 = vld [vmem:[%s5819 + $0xa8] sm:$0xff]
  %v5842 = vld [vmem:[%s5819 + $0xb0] sm:$0xff]
  %v5843 = vld [vmem:[%s5819 + $0xb8] sm:$0xff]
  %v5844 = vld [vmem:[%s5819 + $0xc0] sm:$0xff]
  %v5845 = vld [vmem:[%s5819 + $0xc8] sm:$0xff]
  %v5846 = vld [vmem:[%s5819 + $0xd0] sm:$0xff]
  %v5847 = vld [vmem:[%s5819 + $0xd8] sm:$0xff]
  %v5848 = vld [vmem:[%s5819 + $0xe0] sm:$0xff]
  %v5849 = vld [vmem:[%s5819 + $0xe8] sm:$0xff]
  %v5850 = vld [vmem:[%s5819 + $0xf0] sm:$0xff]
  %v5851 = vld [vmem:[%s5819 + $0xf8] sm:$0xff]
  %v5853 = vsel %vm367, %v5803, 0
  %v5856 = vsel %vm367, %v5804, 0
  %5858 = vmatprep.subr.mxu0 0.0
  %5859 = vmatpush1.msra.mxu0 0.0
  %5860 = vmatprep.subr.mxu0 0.0
  %5861 = vmatpush1.msra.mxu0 0.0
  %5862 = vmatprep.subr.mxu0 0.0
  %5863 = vmatpush1.msra.mxu0 0.0
  %5864 = vmatprep.subr.mxu0 0.0
  %5865 = vmatpush1.msra.mxu0 0.0
  %5866 = vmatprep.subr.mxu0 0.0
  %5867 = vmatpush1.msra.mxu0 0.0
  %5868 = vmatprep.subr.mxu0 0.0
  %5869 = vmatpush1.msra.mxu0 0.0
  %5870 = vmatprep.subr.mxu0 0.0
  %5871 = vmatpush1.msra.mxu0 0.0
  %5872 = vmatprep.subr.mxu0 0.0
  %5873 = vmatpush1.msra.mxu0 0.0
  %5874 = vmatprep.subr.mxu0 0.0
  %5875 = vmatpush1.msra.mxu0 0.0
  %5876 = vmatprep.subr.mxu0 0.0
  %5877 = vmatpush1.msra.mxu0 0.0
  %5878 = vmatprep.subr.mxu0 0.0
  %5879 = vmatpush1.msra.mxu0 0.0
  %5880 = vmatprep.subr.mxu0 0.0
  %5881 = vmatpush1.msra.mxu0 0.0
  %5882 = vmatprep.subr.mxu0 0.0
  %5883 = vmatpush1.msra.mxu0 %v5823
  %5884 = vmatprep.subr.mxu0 0.0
  %5885 = vmatpush1.msra.mxu0 %v5822
  %5886 = vmatprep.subr.mxu0 0.0
  %5887 = vmatpush1.msra.mxu0 %v5821
  %5888 = vmatprep.subr.mxu0 0.0
  %5889 = vmatpush1.msra.mxu0 %v5820
  %5890 = vmatprep.subr.mxu0 0.0
  %5891 = vmatpush2.msra.mxu0 0.0
  %5892 = vmatprep.subr.mxu0 0.0
  %5893 = vmatpush2.msra.mxu0 0.0
  %5894 = vmatprep.subr.mxu0 0.0
  %5895 = vmatpush2.msra.mxu0 0.0
  %5896 = vmatprep.subr.mxu0 0.0
  %5897 = vmatpush2.msra.mxu0 0.0
  %5898 = vmatprep.subr.mxu0 0.0
  %5899 = vmatpush2.msra.mxu0 0.0
  %5900 = vmatprep.subr.mxu0 0.0
  %5901 = vmatpush2.msra.mxu0 0.0
  %5902 = vmatprep.subr.mxu0 0.0
  %5903 = vmatpush2.msra.mxu0 0.0
  %5904 = vmatprep.subr.mxu0 0.0
  %5905 = vmatpush2.msra.mxu0 0.0
  %5906 = vmatprep.subr.mxu0 0.0
  %5907 = vmatpush2.msra.mxu0 0.0
  %5908 = vmatprep.subr.mxu0 0.0
  %5909 = vmatpush2.msra.mxu0 0.0
  %5910 = vmatprep.subr.mxu0 0.0
  %5911 = vmatpush2.msra.mxu0 0.0
  %5912 = vmatprep.subr.mxu0 0.0
  %5913 = vmatpush2.msra.mxu0 0.0
  %5914 = vmatprep.subr.mxu0 0.0
  %5915 = vmatpush2.msra.mxu0 0.0
  %5916 = vmatprep.subr.mxu0 0.0
  %5917 = vmatpush2.msra.mxu0 0.0
  %5918 = vmatprep.subr.mxu0 0.0
  %5919 = vmatpush2.msra.mxu0 0.0
  %5920 = vmatprep.subr.mxu0 0.0
  %5921 = vmatpush2.msra.mxu0 0.0
  %5922 = vmatprep.mubr.f32.mxu0 0.0
  %5923 = vmatmul.mubr.f32.gmra.mxu0 %v5853
  %v5924 = vpop.f32.mrf.mxu0
  %v5925 = vadd.f32 0.0, %v5924
  %v5926 = vpop.f32.mrf.mxu0
  %5927 = vmatprep.mubr.f32.mxu0 0.0
  %5928 = vmatmul.mubr.f32.gmra.mxu0 %v5856
  %v5929 = vpop.f32.mrf.mxu0
  %v5930 = vadd.f32 0.0, %v5929
  %v5931 = vpop.f32.mrf.mxu0
  %5932 = vdwg.mxu0
  %v5934 = vsel %vm367, %v5805, 0
  %v5937 = vsel %vm367, %v5806, 0
  %5939 = vmatprep.subr.mxu0 0.0
  %5940 = vmatpush1.msra.mxu0 0.0
  %5941 = vmatprep.subr.mxu0 0.0
  %5942 = vmatpush1.msra.mxu0 0.0
  %5943 = vmatprep.subr.mxu0 0.0
  %5944 = vmatpush1.msra.mxu0 0.0
  %5945 = vmatprep.subr.mxu0 0.0
  %5946 = vmatpush1.msra.mxu0 0.0
  %5947 = vmatprep.subr.mxu0 0.0
  %5948 = vmatpush1.msra.mxu0 0.0
  %5949 = vmatprep.subr.mxu0 0.0
  %5950 = vmatpush1.msra.mxu0 0.0
  %5951 = vmatprep.subr.mxu0 0.0
  %5952 = vmatpush1.msra.mxu0 0.0
  %5953 = vmatprep.subr.mxu0 0.0
  %5954 = vmatpush1.msra.mxu0 0.0
  %5955 = vmatprep.subr.mxu0 0.0
  %5956 = vmatpush1.msra.mxu0 0.0
  %5957 = vmatprep.subr.mxu0 0.0
  %5958 = vmatpush1.msra.mxu0 0.0
  %5959 = vmatprep.subr.mxu0 0.0
  %5960 = vmatpush1.msra.mxu0 0.0
  %5961 = vmatprep.subr.mxu0 0.0
  %5962 = vmatpush1.msra.mxu0 0.0
  %5963 = vmatprep.subr.mxu0 0.0
  %5964 = vmatpush1.msra.mxu0 %v5827
  %5965 = vmatprep.subr.mxu0 0.0
  %5966 = vmatpush1.msra.mxu0 %v5826
  %5967 = vmatprep.subr.mxu0 0.0
  %5968 = vmatpush1.msra.mxu0 %v5825
  %5969 = vmatprep.subr.mxu0 0.0
  %5970 = vmatpush1.msra.mxu0 %v5824
  %5971 = vmatprep.subr.mxu0 0.0
  %5972 = vmatpush2.msra.mxu0 0.0
  %5973 = vmatprep.subr.mxu0 0.0
  %5974 = vmatpush2.msra.mxu0 0.0
  %5975 = vmatprep.subr.mxu0 0.0
  %5976 = vmatpush2.msra.mxu0 0.0
  %5977 = vmatprep.subr.mxu0 0.0
  %5978 = vmatpush2.msra.mxu0 0.0
  %5979 = vmatprep.subr.mxu0 0.0
  %5980 = vmatpush2.msra.mxu0 0.0
  %5981 = vmatprep.subr.mxu0 0.0
  %5982 = vmatpush2.msra.mxu0 0.0
  %5983 = vmatprep.subr.mxu0 0.0
  %5984 = vmatpush2.msra.mxu0 0.0
  %5985 = vmatprep.subr.mxu0 0.0
  %5986 = vmatpush2.msra.mxu0 0.0
  %5987 = vmatprep.subr.mxu0 0.0
  %5988 = vmatpush2.msra.mxu0 0.0
  %5989 = vmatprep.subr.mxu0 0.0
  %5990 = vmatpush2.msra.mxu0 0.0
  %5991 = vmatprep.subr.mxu0 0.0
  %5992 = vmatpush2.msra.mxu0 0.0
  %5993 = vmatprep.subr.mxu0 0.0
  %5994 = vmatpush2.msra.mxu0 0.0
  %5995 = vmatprep.subr.mxu0 0.0
  %5996 = vmatpush2.msra.mxu0 0.0
  %5997 = vmatprep.subr.mxu0 0.0
  %5998 = vmatpush2.msra.mxu0 0.0
  %5999 = vmatprep.subr.mxu0 0.0
  %6000 = vmatpush2.msra.mxu0 0.0
  %6001 = vmatprep.subr.mxu0 0.0
  %6002 = vmatpush2.msra.mxu0 0.0
  %6003 = vmatprep.mubr.f32.mxu0 0.0
  %6004 = vmatmul.mubr.f32.gmra.mxu0 %v5934
  %v6005 = vpop.f32.mrf.mxu0
  %v6006 = vadd.f32 0.0, %v6005
  %v6007 = vpop.f32.mrf.mxu0
  %6008 = vmatprep.mubr.f32.mxu0 0.0
  %6009 = vmatmul.mubr.f32.gmra.mxu0 %v5937
  %v6010 = vpop.f32.mrf.mxu0
  %v6011 = vadd.f32 0.0, %v6010
  %v6012 = vpop.f32.mrf.mxu0
  %6013 = vdwg.mxu0
  %v6015 = vsel %vm367, %v5807, 0
  %v6018 = vsel %vm367, %v5808, 0
  %6020 = vmatprep.subr.mxu0 0.0
  %6021 = vmatpush1.msra.mxu0 0.0
  %6022 = vmatprep.subr.mxu0 0.0
  %6023 = vmatpush1.msra.mxu0 0.0
  %6024 = vmatprep.subr.mxu0 0.0
  %6025 = vmatpush1.msra.mxu0 0.0
  %6026 = vmatprep.subr.mxu0 0.0
  %6027 = vmatpush1.msra.mxu0 0.0
  %6028 = vmatprep.subr.mxu0 0.0
  %6029 = vmatpush1.msra.mxu0 0.0
  %6030 = vmatprep.subr.mxu0 0.0
  %6031 = vmatpush1.msra.mxu0 0.0
  %6032 = vmatprep.subr.mxu0 0.0
  %6033 = vmatpush1.msra.mxu0 0.0
  %6034 = vmatprep.subr.mxu0 0.0
  %6035 = vmatpush1.msra.mxu0 0.0
  %6036 = vmatprep.subr.mxu0 0.0
  %6037 = vmatpush1.msra.mxu0 0.0
  %6038 = vmatprep.subr.mxu0 0.0
  %6039 = vmatpush1.msra.mxu0 0.0
  %6040 = vmatprep.subr.mxu0 0.0
  %6041 = vmatpush1.msra.mxu0 0.0
  %6042 = vmatprep.subr.mxu0 0.0
  %6043 = vmatpush1.msra.mxu0 0.0
  %6044 = vmatprep.subr.mxu0 0.0
  %6045 = vmatpush1.msra.mxu0 %v5831
  %6046 = vmatprep.subr.mxu0 0.0
  %6047 = vmatpush1.msra.mxu0 %v5830
  %6048 = vmatprep.subr.mxu0 0.0
  %6049 = vmatpush1.msra.mxu0 %v5829
  %6050 = vmatprep.subr.mxu0 0.0
  %6051 = vmatpush1.msra.mxu0 %v5828
  %6052 = vmatprep.subr.mxu0 0.0
  %6053 = vmatpush2.msra.mxu0 0.0
  %6054 = vmatprep.subr.mxu0 0.0
  %6055 = vmatpush2.msra.mxu0 0.0
  %6056 = vmatprep.subr.mxu0 0.0
  %6057 = vmatpush2.msra.mxu0 0.0
  %6058 = vmatprep.subr.mxu0 0.0
  %6059 = vmatpush2.msra.mxu0 0.0
  %6060 = vmatprep.subr.mxu0 0.0
  %6061 = vmatpush2.msra.mxu0 0.0
  %6062 = vmatprep.subr.mxu0 0.0
  %6063 = vmatpush2.msra.mxu0 0.0
  %6064 = vmatprep.subr.mxu0 0.0
  %6065 = vmatpush2.msra.mxu0 0.0
  %6066 = vmatprep.subr.mxu0 0.0
  %6067 = vmatpush2.msra.mxu0 0.0
  %6068 = vmatprep.subr.mxu0 0.0
  %6069 = vmatpush2.msra.mxu0 0.0
  %6070 = vmatprep.subr.mxu0 0.0
  %6071 = vmatpush2.msra.mxu0 0.0
  %6072 = vmatprep.subr.mxu0 0.0
  %6073 = vmatpush2.msra.mxu0 0.0
  %6074 = vmatprep.subr.mxu0 0.0
  %6075 = vmatpush2.msra.mxu0 0.0
  %6076 = vmatprep.subr.mxu0 0.0
  %6077 = vmatpush2.msra.mxu0 0.0
  %6078 = vmatprep.subr.mxu0 0.0
  %6079 = vmatpush2.msra.mxu0 0.0
  %6080 = vmatprep.subr.mxu0 0.0
  %6081 = vmatpush2.msra.mxu0 0.0
  %6082 = vmatprep.subr.mxu0 0.0
  %6083 = vmatpush2.msra.mxu0 0.0
  %6084 = vmatprep.mubr.f32.mxu0 0.0
  %6085 = vmatmul.mubr.f32.gmra.mxu0 %v6015
  %v6086 = vpop.f32.mrf.mxu0
  %v6087 = vadd.f32 0.0, %v6086
  %v6088 = vpop.f32.mrf.mxu0
  %6089 = vmatprep.mubr.f32.mxu0 0.0
  %6090 = vmatmul.mubr.f32.gmra.mxu0 %v6018
  %v6091 = vpop.f32.mrf.mxu0
  %v6092 = vadd.f32 0.0, %v6091
  %v6093 = vpop.f32.mrf.mxu0
  %6094 = vdwg.mxu0
  %v6096 = vsel %vm367, %v5809, 0
  %v6099 = vsel %vm367, %v5810, 0
  %6101 = vmatprep.subr.mxu0 0.0
  %6102 = vmatpush1.msra.mxu0 0.0
  %6103 = vmatprep.subr.mxu0 0.0
  %6104 = vmatpush1.msra.mxu0 0.0
  %6105 = vmatprep.subr.mxu0 0.0
  %6106 = vmatpush1.msra.mxu0 0.0
  %6107 = vmatprep.subr.mxu0 0.0
  %6108 = vmatpush1.msra.mxu0 0.0
  %6109 = vmatprep.subr.mxu0 0.0
  %6110 = vmatpush1.msra.mxu0 0.0
  %6111 = vmatprep.subr.mxu0 0.0
  %6112 = vmatpush1.msra.mxu0 0.0
  %6113 = vmatprep.subr.mxu0 0.0
  %6114 = vmatpush1.msra.mxu0 0.0
  %6115 = vmatprep.subr.mxu0 0.0
  %6116 = vmatpush1.msra.mxu0 0.0
  %6117 = vmatprep.subr.mxu0 0.0
  %6118 = vmatpush1.msra.mxu0 0.0
  %6119 = vmatprep.subr.mxu0 0.0
  %6120 = vmatpush1.msra.mxu0 0.0
  %6121 = vmatprep.subr.mxu0 0.0
  %6122 = vmatpush1.msra.mxu0 0.0
  %6123 = vmatprep.subr.mxu0 0.0
  %6124 = vmatpush1.msra.mxu0 0.0
  %6125 = vmatprep.subr.mxu0 0.0
  %6126 = vmatpush1.msra.mxu0 %v5835
  %6127 = vmatprep.subr.mxu0 0.0
  %6128 = vmatpush1.msra.mxu0 %v5834
  %6129 = vmatprep.subr.mxu0 0.0
  %6130 = vmatpush1.msra.mxu0 %v5833
  %6131 = vmatprep.subr.mxu0 0.0
  %6132 = vmatpush1.msra.mxu0 %v5832
  %6133 = vmatprep.subr.mxu0 0.0
  %6134 = vmatpush2.msra.mxu0 0.0
  %6135 = vmatprep.subr.mxu0 0.0
  %6136 = vmatpush2.msra.mxu0 0.0
  %6137 = vmatprep.subr.mxu0 0.0
  %6138 = vmatpush2.msra.mxu0 0.0
  %6139 = vmatprep.subr.mxu0 0.0
  %6140 = vmatpush2.msra.mxu0 0.0
  %6141 = vmatprep.subr.mxu0 0.0
  %6142 = vmatpush2.msra.mxu0 0.0
  %6143 = vmatprep.subr.mxu0 0.0
  %6144 = vmatpush2.msra.mxu0 0.0
  %6145 = vmatprep.subr.mxu0 0.0
  %6146 = vmatpush2.msra.mxu0 0.0
  %6147 = vmatprep.subr.mxu0 0.0
  %6148 = vmatpush2.msra.mxu0 0.0
  %6149 = vmatprep.subr.mxu0 0.0
  %6150 = vmatpush2.msra.mxu0 0.0
  %6151 = vmatprep.subr.mxu0 0.0
  %6152 = vmatpush2.msra.mxu0 0.0
  %6153 = vmatprep.subr.mxu0 0.0
  %6154 = vmatpush2.msra.mxu0 0.0
  %6155 = vmatprep.subr.mxu0 0.0
  %6156 = vmatpush2.msra.mxu0 0.0
  %6157 = vmatprep.subr.mxu0 0.0
  %6158 = vmatpush2.msra.mxu0 0.0
  %6159 = vmatprep.subr.mxu0 0.0
  %6160 = vmatpush2.msra.mxu0 0.0
  %6161 = vmatprep.subr.mxu0 0.0
  %6162 = vmatpush2.msra.mxu0 0.0
  %6163 = vmatprep.subr.mxu0 0.0
  %6164 = vmatpush2.msra.mxu0 0.0
  %6165 = vmatprep.mubr.f32.mxu0 0.0
  %6166 = vmatmul.mubr.f32.gmra.mxu0 %v6096
  %v6167 = vpop.f32.mrf.mxu0
  %v6168 = vadd.f32 0.0, %v6167
  %v6169 = vpop.f32.mrf.mxu0
  %6170 = vmatprep.mubr.f32.mxu0 0.0
  %6171 = vmatmul.mubr.f32.gmra.mxu0 %v6099
  %v6172 = vpop.f32.mrf.mxu0
  %v6173 = vadd.f32 0.0, %v6172
  %v6174 = vpop.f32.mrf.mxu0
  %6175 = vdwg.mxu0
  %v6177 = vsel %vm367, %v5811, 0
  %v6180 = vsel %vm367, %v5812, 0
  %6182 = vmatprep.subr.mxu0 0.0
  %6183 = vmatpush1.msra.mxu0 0.0
  %6184 = vmatprep.subr.mxu0 0.0
  %6185 = vmatpush1.msra.mxu0 0.0
  %6186 = vmatprep.subr.mxu0 0.0
  %6187 = vmatpush1.msra.mxu0 0.0
  %6188 = vmatprep.subr.mxu0 0.0
  %6189 = vmatpush1.msra.mxu0 0.0
  %6190 = vmatprep.subr.mxu0 0.0
  %6191 = vmatpush1.msra.mxu0 0.0
  %6192 = vmatprep.subr.mxu0 0.0
  %6193 = vmatpush1.msra.mxu0 0.0
  %6194 = vmatprep.subr.mxu0 0.0
  %6195 = vmatpush1.msra.mxu0 0.0
  %6196 = vmatprep.subr.mxu0 0.0
  %6197 = vmatpush1.msra.mxu0 0.0
  %6198 = vmatprep.subr.mxu0 0.0
  %6199 = vmatpush1.msra.mxu0 0.0
  %6200 = vmatprep.subr.mxu0 0.0
  %6201 = vmatpush1.msra.mxu0 0.0
  %6202 = vmatprep.subr.mxu0 0.0
  %6203 = vmatpush1.msra.mxu0 0.0
  %6204 = vmatprep.subr.mxu0 0.0
  %6205 = vmatpush1.msra.mxu0 0.0
  %6206 = vmatprep.subr.mxu0 0.0
  %6207 = vmatpush1.msra.mxu0 %v5839
  %6208 = vmatprep.subr.mxu0 0.0
  %6209 = vmatpush1.msra.mxu0 %v5838
  %6210 = vmatprep.subr.mxu0 0.0
  %6211 = vmatpush1.msra.mxu0 %v5837
  %6212 = vmatprep.subr.mxu0 0.0
  %6213 = vmatpush1.msra.mxu0 %v5836
  %6214 = vmatprep.subr.mxu0 0.0
  %6215 = vmatpush2.msra.mxu0 0.0
  %6216 = vmatprep.subr.mxu0 0.0
  %6217 = vmatpush2.msra.mxu0 0.0
  %6218 = vmatprep.subr.mxu0 0.0
  %6219 = vmatpush2.msra.mxu0 0.0
  %6220 = vmatprep.subr.mxu0 0.0
  %6221 = vmatpush2.msra.mxu0 0.0
  %6222 = vmatprep.subr.mxu0 0.0
  %6223 = vmatpush2.msra.mxu0 0.0
  %6224 = vmatprep.subr.mxu0 0.0
  %6225 = vmatpush2.msra.mxu0 0.0
  %6226 = vmatprep.subr.mxu0 0.0
  %6227 = vmatpush2.msra.mxu0 0.0
  %6228 = vmatprep.subr.mxu0 0.0
  %6229 = vmatpush2.msra.mxu0 0.0
  %6230 = vmatprep.subr.mxu0 0.0
  %6231 = vmatpush2.msra.mxu0 0.0
  %6232 = vmatprep.subr.mxu0 0.0
  %6233 = vmatpush2.msra.mxu0 0.0
  %6234 = vmatprep.subr.mxu0 0.0
  %6235 = vmatpush2.msra.mxu0 0.0
  %6236 = vmatprep.subr.mxu0 0.0
  %6237 = vmatpush2.msra.mxu0 0.0
  %6238 = vmatprep.subr.mxu0 0.0
  %6239 = vmatpush2.msra.mxu0 0.0
  %6240 = vmatprep.subr.mxu0 0.0
  %6241 = vmatpush2.msra.mxu0 0.0
  %6242 = vmatprep.subr.mxu0 0.0
  %6243 = vmatpush2.msra.mxu0 0.0
  %6244 = vmatprep.subr.mxu0 0.0
  %6245 = vmatpush2.msra.mxu0 0.0
  %6246 = vmatprep.mubr.f32.mxu0 0.0
  %6247 = vmatmul.mubr.f32.gmra.mxu0 %v6177
  %v6248 = vpop.f32.mrf.mxu0
  %v6249 = vadd.f32 0.0, %v6248
  %v6250 = vpop.f32.mrf.mxu0
  %6251 = vmatprep.mubr.f32.mxu0 0.0
  %6252 = vmatmul.mubr.f32.gmra.mxu0 %v6180
  %v6253 = vpop.f32.mrf.mxu0
  %v6254 = vadd.f32 0.0, %v6253
  %v6255 = vpop.f32.mrf.mxu0
  %6256 = vdwg.mxu0
  %v6258 = vsel %vm367, %v5813, 0
  %v6261 = vsel %vm367, %v5814, 0
  %6263 = vmatprep.subr.mxu0 0.0
  %6264 = vmatpush1.msra.mxu0 0.0
  %6265 = vmatprep.subr.mxu0 0.0
  %6266 = vmatpush1.msra.mxu0 0.0
  %6267 = vmatprep.subr.mxu0 0.0
  %6268 = vmatpush1.msra.mxu0 0.0
  %6269 = vmatprep.subr.mxu0 0.0
  %6270 = vmatpush1.msra.mxu0 0.0
  %6271 = vmatprep.subr.mxu0 0.0
  %6272 = vmatpush1.msra.mxu0 0.0
  %6273 = vmatprep.subr.mxu0 0.0
  %6274 = vmatpush1.msra.mxu0 0.0
  %6275 = vmatprep.subr.mxu0 0.0
  %6276 = vmatpush1.msra.mxu0 0.0
  %6277 = vmatprep.subr.mxu0 0.0
  %6278 = vmatpush1.msra.mxu0 0.0
  %6279 = vmatprep.subr.mxu0 0.0
  %6280 = vmatpush1.msra.mxu0 0.0
  %6281 = vmatprep.subr.mxu0 0.0
  %6282 = vmatpush1.msra.mxu0 0.0
  %6283 = vmatprep.subr.mxu0 0.0
  %6284 = vmatpush1.msra.mxu0 0.0
  %6285 = vmatprep.subr.mxu0 0.0
  %6286 = vmatpush1.msra.mxu0 0.0
  %6287 = vmatprep.subr.mxu0 0.0
  %6288 = vmatpush1.msra.mxu0 %v5843
  %6289 = vmatprep.subr.mxu0 0.0
  %6290 = vmatpush1.msra.mxu0 %v5842
  %6291 = vmatprep.subr.mxu0 0.0
  %6292 = vmatpush1.msra.mxu0 %v5841
  %6293 = vmatprep.subr.mxu0 0.0
  %6294 = vmatpush1.msra.mxu0 %v5840
  %6295 = vmatprep.subr.mxu0 0.0
  %6296 = vmatpush2.msra.mxu0 0.0
  %6297 = vmatprep.subr.mxu0 0.0
  %6298 = vmatpush2.msra.mxu0 0.0
  %6299 = vmatprep.subr.mxu0 0.0
  %6300 = vmatpush2.msra.mxu0 0.0
  %6301 = vmatprep.subr.mxu0 0.0
  %6302 = vmatpush2.msra.mxu0 0.0
  %6303 = vmatprep.subr.mxu0 0.0
  %6304 = vmatpush2.msra.mxu0 0.0
  %6305 = vmatprep.subr.mxu0 0.0
  %6306 = vmatpush2.msra.mxu0 0.0
  %6307 = vmatprep.subr.mxu0 0.0
  %6308 = vmatpush2.msra.mxu0 0.0
  %6309 = vmatprep.subr.mxu0 0.0
  %6310 = vmatpush2.msra.mxu0 0.0
  %6311 = vmatprep.subr.mxu0 0.0
  %6312 = vmatpush2.msra.mxu0 0.0
  %6313 = vmatprep.subr.mxu0 0.0
  %6314 = vmatpush2.msra.mxu0 0.0
  %6315 = vmatprep.subr.mxu0 0.0
  %6316 = vmatpush2.msra.mxu0 0.0
  %6317 = vmatprep.subr.mxu0 0.0
  %6318 = vmatpush2.msra.mxu0 0.0
  %6319 = vmatprep.subr.mxu0 0.0
  %6320 = vmatpush2.msra.mxu0 0.0
  %6321 = vmatprep.subr.mxu0 0.0
  %6322 = vmatpush2.msra.mxu0 0.0
  %6323 = vmatprep.subr.mxu0 0.0
  %6324 = vmatpush2.msra.mxu0 0.0
  %6325 = vmatprep.subr.mxu0 0.0
  %6326 = vmatpush2.msra.mxu0 0.0
  %6327 = vmatprep.mubr.f32.mxu0 0.0
  %6328 = vmatmul.mubr.f32.gmra.mxu0 %v6258
  %v6329 = vpop.f32.mrf.mxu0
  %v6330 = vadd.f32 0.0, %v6329
  %v6331 = vpop.f32.mrf.mxu0
  %6332 = vmatprep.mubr.f32.mxu0 0.0
  %6333 = vmatmul.mubr.f32.gmra.mxu0 %v6261
  %v6334 = vpop.f32.mrf.mxu0
  %v6335 = vadd.f32 0.0, %v6334
  %v6336 = vpop.f32.mrf.mxu0
  %6337 = vdwg.mxu0
  %v6339 = vsel %vm367, %v5815, 0
  %v6342 = vsel %vm367, %v5816, 0
  %6344 = vmatprep.subr.mxu0 0.0
  %6345 = vmatpush1.msra.mxu0 0.0
  %6346 = vmatprep.subr.mxu0 0.0
  %6347 = vmatpush1.msra.mxu0 0.0
  %6348 = vmatprep.subr.mxu0 0.0
  %6349 = vmatpush1.msra.mxu0 0.0
  %6350 = vmatprep.subr.mxu0 0.0
  %6351 = vmatpush1.msra.mxu0 0.0
  %6352 = vmatprep.subr.mxu0 0.0
  %6353 = vmatpush1.msra.mxu0 0.0
  %6354 = vmatprep.subr.mxu0 0.0
  %6355 = vmatpush1.msra.mxu0 0.0
  %6356 = vmatprep.subr.mxu0 0.0
  %6357 = vmatpush1.msra.mxu0 0.0
  %6358 = vmatprep.subr.mxu0 0.0
  %6359 = vmatpush1.msra.mxu0 0.0
  %6360 = vmatprep.subr.mxu0 0.0
  %6361 = vmatpush1.msra.mxu0 0.0
  %6362 = vmatprep.subr.mxu0 0.0
  %6363 = vmatpush1.msra.mxu0 0.0
  %6364 = vmatprep.subr.mxu0 0.0
  %6365 = vmatpush1.msra.mxu0 0.0
  %6366 = vmatprep.subr.mxu0 0.0
  %6367 = vmatpush1.msra.mxu0 0.0
  %6368 = vmatprep.subr.mxu0 0.0
  %6369 = vmatpush1.msra.mxu0 %v5847
  %6370 = vmatprep.subr.mxu0 0.0
  %6371 = vmatpush1.msra.mxu0 %v5846
  %6372 = vmatprep.subr.mxu0 0.0
  %6373 = vmatpush1.msra.mxu0 %v5845
  %6374 = vmatprep.subr.mxu0 0.0
  %6375 = vmatpush1.msra.mxu0 %v5844
  %6376 = vmatprep.subr.mxu0 0.0
  %6377 = vmatpush2.msra.mxu0 0.0
  %6378 = vmatprep.subr.mxu0 0.0
  %6379 = vmatpush2.msra.mxu0 0.0
  %6380 = vmatprep.subr.mxu0 0.0
  %6381 = vmatpush2.msra.mxu0 0.0
  %6382 = vmatprep.subr.mxu0 0.0
  %6383 = vmatpush2.msra.mxu0 0.0
  %6384 = vmatprep.subr.mxu0 0.0
  %6385 = vmatpush2.msra.mxu0 0.0
  %6386 = vmatprep.subr.mxu0 0.0
  %6387 = vmatpush2.msra.mxu0 0.0
  %6388 = vmatprep.subr.mxu0 0.0
  %6389 = vmatpush2.msra.mxu0 0.0
  %6390 = vmatprep.subr.mxu0 0.0
  %6391 = vmatpush2.msra.mxu0 0.0
  %6392 = vmatprep.subr.mxu0 0.0
  %6393 = vmatpush2.msra.mxu0 0.0
  %6394 = vmatprep.subr.mxu0 0.0
  %6395 = vmatpush2.msra.mxu0 0.0
  %6396 = vmatprep.subr.mxu0 0.0
  %6397 = vmatpush2.msra.mxu0 0.0
  %6398 = vmatprep.subr.mxu0 0.0
  %6399 = vmatpush2.msra.mxu0 0.0
  %6400 = vmatprep.subr.mxu0 0.0
  %6401 = vmatpush2.msra.mxu0 0.0
  %6402 = vmatprep.subr.mxu0 0.0
  %6403 = vmatpush2.msra.mxu0 0.0
  %6404 = vmatprep.subr.mxu0 0.0
  %6405 = vmatpush2.msra.mxu0 0.0
  %6406 = vmatprep.subr.mxu0 0.0
  %6407 = vmatpush2.msra.mxu0 0.0
  %6408 = vmatprep.mubr.f32.mxu0 0.0
  %6409 = vmatmul.mubr.f32.gmra.mxu0 %v6339
  %v6410 = vpop.f32.mrf.mxu0
  %v6411 = vadd.f32 0.0, %v6410
  %v6412 = vpop.f32.mrf.mxu0
  %6413 = vmatprep.mubr.f32.mxu0 0.0
  %6414 = vmatmul.mubr.f32.gmra.mxu0 %v6342
  %v6415 = vpop.f32.mrf.mxu0
  %v6416 = vadd.f32 0.0, %v6415
  %v6417 = vpop.f32.mrf.mxu0
  %6418 = vdwg.mxu0
  %v6420 = vsel %vm367, %v5817, 0
  %v6423 = vsel %vm367, %v5818, 0
  %6425 = vmatprep.subr.mxu0 0.0
  %6426 = vmatpush1.msra.mxu0 0.0
  %6427 = vmatprep.subr.mxu0 0.0
  %6428 = vmatpush1.msra.mxu0 0.0
  %6429 = vmatprep.subr.mxu0 0.0
  %6430 = vmatpush1.msra.mxu0 0.0
  %6431 = vmatprep.subr.mxu0 0.0
  %6432 = vmatpush1.msra.mxu0 0.0
  %6433 = vmatprep.subr.mxu0 0.0
  %6434 = vmatpush1.msra.mxu0 0.0
  %6435 = vmatprep.subr.mxu0 0.0
  %6436 = vmatpush1.msra.mxu0 0.0
  %6437 = vmatprep.subr.mxu0 0.0
  %6438 = vmatpush1.msra.mxu0 0.0
  %6439 = vmatprep.subr.mxu0 0.0
  %6440 = vmatpush1.msra.mxu0 0.0
  %6441 = vmatprep.subr.mxu0 0.0
  %6442 = vmatpush1.msra.mxu0 0.0
  %6443 = vmatprep.subr.mxu0 0.0
  %6444 = vmatpush1.msra.mxu0 0.0
  %6445 = vmatprep.subr.mxu0 0.0
  %6446 = vmatpush1.msra.mxu0 0.0
  %6447 = vmatprep.subr.mxu0 0.0
  %6448 = vmatpush1.msra.mxu0 0.0
  %6449 = vmatprep.subr.mxu0 0.0
  %6450 = vmatpush1.msra.mxu0 %v5851
  %6451 = vmatprep.subr.mxu0 0.0
  %6452 = vmatpush1.msra.mxu0 %v5850
  %6453 = vmatprep.subr.mxu0 0.0
  %6454 = vmatpush1.msra.mxu0 %v5849
  %6455 = vmatprep.subr.mxu0 0.0
  %6456 = vmatpush1.msra.mxu0 %v5848
  %6457 = vmatprep.subr.mxu0 0.0
  %6458 = vmatpush2.msra.mxu0 0.0
  %6459 = vmatprep.subr.mxu0 0.0
  %6460 = vmatpush2.msra.mxu0 0.0
  %6461 = vmatprep.subr.mxu0 0.0
  %6462 = vmatpush2.msra.mxu0 0.0
  %6463 = vmatprep.subr.mxu0 0.0
  %6464 = vmatpush2.msra.mxu0 0.0
  %6465 = vmatprep.subr.mxu0 0.0
  %6466 = vmatpush2.msra.mxu0 0.0
  %6467 = vmatprep.subr.mxu0 0.0
  %6468 = vmatpush2.msra.mxu0 0.0
  %6469 = vmatprep.subr.mxu0 0.0
  %6470 = vmatpush2.msra.mxu0 0.0
  %6471 = vmatprep.subr.mxu0 0.0
  %6472 = vmatpush2.msra.mxu0 0.0
  %6473 = vmatprep.subr.mxu0 0.0
  %6474 = vmatpush2.msra.mxu0 0.0
  %6475 = vmatprep.subr.mxu0 0.0
  %6476 = vmatpush2.msra.mxu0 0.0
  %6477 = vmatprep.subr.mxu0 0.0
  %6478 = vmatpush2.msra.mxu0 0.0
  %6479 = vmatprep.subr.mxu0 0.0
  %6480 = vmatpush2.msra.mxu0 0.0
  %6481 = vmatprep.subr.mxu0 0.0
  %6482 = vmatpush2.msra.mxu0 0.0
  %6483 = vmatprep.subr.mxu0 0.0
  %6484 = vmatpush2.msra.mxu0 0.0
  %6485 = vmatprep.subr.mxu0 0.0
  %6486 = vmatpush2.msra.mxu0 0.0
  %6487 = vmatprep.subr.mxu0 0.0
  %6488 = vmatpush2.msra.mxu0 0.0
  %6489 = vmatprep.mubr.f32.mxu0 0.0
  %6490 = vmatmul.mubr.f32.gmra.mxu0 %v6420
  %v6491 = vpop.f32.mrf.mxu0
  %v6492 = vadd.f32 0.0, %v6491
  %v6493 = vpop.f32.mrf.mxu0
  %6494 = vmatprep.mubr.f32.mxu0 0.0
  %6495 = vmatmul.mubr.f32.gmra.mxu0 %v6423
  %v6496 = vpop.f32.mrf.mxu0
  %v6497 = vadd.f32 0.0, %v6496
  %v6498 = vpop.f32.mrf.mxu0
  %6499 = vdwg.mxu0
  %s6500 = scalar_lea.vmem %s5, 256
  %v6501 = vld [vmem:[%s6500] sm:$0xff]
  %v6502 = vld [vmem:[%s6500 + $0x8] sm:$0xff]
  %v6503 = vld [vmem:[%s6500 + $0x10] sm:$0xff]
  %v6504 = vld [vmem:[%s6500 + $0x18] sm:$0xff]
  %v6505 = vld [vmem:[%s6500 + $0x20] sm:$0xff]
  %v6506 = vld [vmem:[%s6500 + $0x28] sm:$0xff]
  %v6507 = vld [vmem:[%s6500 + $0x30] sm:$0xff]
  %v6508 = vld [vmem:[%s6500 + $0x38] sm:$0xff]
  %v6509 = vld [vmem:[%s6500 + $0x40] sm:$0xff]
  %v6510 = vld [vmem:[%s6500 + $0x48] sm:$0xff]
  %v6511 = vld [vmem:[%s6500 + $0x50] sm:$0xff]
  %v6512 = vld [vmem:[%s6500 + $0x58] sm:$0xff]
  %v6513 = vld [vmem:[%s6500 + $0x60] sm:$0xff]
  %v6514 = vld [vmem:[%s6500 + $0x68] sm:$0xff]
  %v6515 = vld [vmem:[%s6500 + $0x70] sm:$0xff]
  %v6516 = vld [vmem:[%s6500 + $0x78] sm:$0xff]
  %v6517 = vld [vmem:[%s6500 + $0x80] sm:$0xff]
  %v6518 = vld [vmem:[%s6500 + $0x88] sm:$0xff]
  %v6519 = vld [vmem:[%s6500 + $0x90] sm:$0xff]
  %v6520 = vld [vmem:[%s6500 + $0x98] sm:$0xff]
  %v6521 = vld [vmem:[%s6500 + $0xa0] sm:$0xff]
  %v6522 = vld [vmem:[%s6500 + $0xa8] sm:$0xff]
  %v6523 = vld [vmem:[%s6500 + $0xb0] sm:$0xff]
  %v6524 = vld [vmem:[%s6500 + $0xb8] sm:$0xff]
  %v6525 = vld [vmem:[%s6500 + $0xc0] sm:$0xff]
  %v6526 = vld [vmem:[%s6500 + $0xc8] sm:$0xff]
  %v6527 = vld [vmem:[%s6500 + $0xd0] sm:$0xff]
  %v6528 = vld [vmem:[%s6500 + $0xd8] sm:$0xff]
  %v6529 = vld [vmem:[%s6500 + $0xe0] sm:$0xff]
  %v6530 = vld [vmem:[%s6500 + $0xe8] sm:$0xff]
  %v6531 = vld [vmem:[%s6500 + $0xf0] sm:$0xff]
  %v6532 = vld [vmem:[%s6500 + $0xf8] sm:$0xff]
  %6533 = vmatprep.subr.mxu0 0.0
  %6534 = vmatpush1.msra.mxu0 0.0
  %6535 = vmatprep.subr.mxu0 0.0
  %6536 = vmatpush1.msra.mxu0 0.0
  %6537 = vmatprep.subr.mxu0 0.0
  %6538 = vmatpush1.msra.mxu0 0.0
  %6539 = vmatprep.subr.mxu0 0.0
  %6540 = vmatpush1.msra.mxu0 0.0
  %6541 = vmatprep.subr.mxu0 0.0
  %6542 = vmatpush1.msra.mxu0 0.0
  %6543 = vmatprep.subr.mxu0 0.0
  %6544 = vmatpush1.msra.mxu0 0.0
  %6545 = vmatprep.subr.mxu0 0.0
  %6546 = vmatpush1.msra.mxu0 0.0
  %6547 = vmatprep.subr.mxu0 0.0
  %6548 = vmatpush1.msra.mxu0 0.0
  %6549 = vmatprep.subr.mxu0 0.0
  %6550 = vmatpush1.msra.mxu0 0.0
  %6551 = vmatprep.subr.mxu0 0.0
  %6552 = vmatpush1.msra.mxu0 0.0
  %6553 = vmatprep.subr.mxu0 0.0
  %6554 = vmatpush1.msra.mxu0 0.0
  %6555 = vmatprep.subr.mxu0 0.0
  %6556 = vmatpush1.msra.mxu0 0.0
  %6557 = vmatprep.subr.mxu0 0.0
  %6558 = vmatpush1.msra.mxu0 %v6504
  %6559 = vmatprep.subr.mxu0 0.0
  %6560 = vmatpush1.msra.mxu0 %v6503
  %6561 = vmatprep.subr.mxu0 0.0
  %6562 = vmatpush1.msra.mxu0 %v6502
  %6563 = vmatprep.subr.mxu0 0.0
  %6564 = vmatpush1.msra.mxu0 %v6501
  %6565 = vmatprep.subr.mxu0 0.0
  %6566 = vmatpush2.msra.mxu0 0.0
  %6567 = vmatprep.subr.mxu0 0.0
  %6568 = vmatpush2.msra.mxu0 0.0
  %6569 = vmatprep.subr.mxu0 0.0
  %6570 = vmatpush2.msra.mxu0 0.0
  %6571 = vmatprep.subr.mxu0 0.0
  %6572 = vmatpush2.msra.mxu0 0.0
  %6573 = vmatprep.subr.mxu0 0.0
  %6574 = vmatpush2.msra.mxu0 0.0
  %6575 = vmatprep.subr.mxu0 0.0
  %6576 = vmatpush2.msra.mxu0 0.0
  %6577 = vmatprep.subr.mxu0 0.0
  %6578 = vmatpush2.msra.mxu0 0.0
  %6579 = vmatprep.subr.mxu0 0.0
  %6580 = vmatpush2.msra.mxu0 0.0
  %6581 = vmatprep.subr.mxu0 0.0
  %6582 = vmatpush2.msra.mxu0 0.0
  %6583 = vmatprep.subr.mxu0 0.0
  %6584 = vmatpush2.msra.mxu0 0.0
  %6585 = vmatprep.subr.mxu0 0.0
  %6586 = vmatpush2.msra.mxu0 0.0
  %6587 = vmatprep.subr.mxu0 0.0
  %6588 = vmatpush2.msra.mxu0 0.0
  %6589 = vmatprep.subr.mxu0 0.0
  %6590 = vmatpush2.msra.mxu0 0.0
  %6591 = vmatprep.subr.mxu0 0.0
  %6592 = vmatpush2.msra.mxu0 0.0
  %6593 = vmatprep.subr.mxu0 0.0
  %6594 = vmatpush2.msra.mxu0 0.0
  %6595 = vmatprep.subr.mxu0 0.0
  %6596 = vmatpush2.msra.mxu0 0.0
  %6597 = vmatprep.mubr.f32.mxu0 0.0
  %6598 = vmatmul.mubr.f32.gmra.mxu0 %v5853
  %v6599 = vpop.f32.mrf.mxu0
  %v6600 = vadd.f32 0.0, %v6599
  %v6601 = vpop.f32.mrf.mxu0
  %6602 = vmatprep.mubr.f32.mxu0 0.0
  %6603 = vmatmul.mubr.f32.gmra.mxu0 %v5856
  %v6604 = vpop.f32.mrf.mxu0
  %v6605 = vadd.f32 0.0, %v6604
  %v6606 = vpop.f32.mrf.mxu0
  %6607 = vdwg.mxu0
  %6608 = vmatprep.subr.mxu0 0.0
  %6609 = vmatpush1.msra.mxu0 0.0
  %6610 = vmatprep.subr.mxu0 0.0
  %6611 = vmatpush1.msra.mxu0 0.0
  %6612 = vmatprep.subr.mxu0 0.0
  %6613 = vmatpush1.msra.mxu0 0.0
  %6614 = vmatprep.subr.mxu0 0.0
  %6615 = vmatpush1.msra.mxu0 0.0
  %6616 = vmatprep.subr.mxu0 0.0
  %6617 = vmatpush1.msra.mxu0 0.0
  %6618 = vmatprep.subr.mxu0 0.0
  %6619 = vmatpush1.msra.mxu0 0.0
  %6620 = vmatprep.subr.mxu0 0.0
  %6621 = vmatpush1.msra.mxu0 0.0
  %6622 = vmatprep.subr.mxu0 0.0
  %6623 = vmatpush1.msra.mxu0 0.0
  %6624 = vmatprep.subr.mxu0 0.0
  %6625 = vmatpush1.msra.mxu0 0.0
  %6626 = vmatprep.subr.mxu0 0.0
  %6627 = vmatpush1.msra.mxu0 0.0
  %6628 = vmatprep.subr.mxu0 0.0
  %6629 = vmatpush1.msra.mxu0 0.0
  %6630 = vmatprep.subr.mxu0 0.0
  %6631 = vmatpush1.msra.mxu0 0.0
  %6632 = vmatprep.subr.mxu0 0.0
  %6633 = vmatpush1.msra.mxu0 %v6508
  %6634 = vmatprep.subr.mxu0 0.0
  %6635 = vmatpush1.msra.mxu0 %v6507
  %6636 = vmatprep.subr.mxu0 0.0
  %6637 = vmatpush1.msra.mxu0 %v6506
  %6638 = vmatprep.subr.mxu0 0.0
  %6639 = vmatpush1.msra.mxu0 %v6505
  %6640 = vmatprep.subr.mxu0 0.0
  %6641 = vmatpush2.msra.mxu0 0.0
  %6642 = vmatprep.subr.mxu0 0.0
  %6643 = vmatpush2.msra.mxu0 0.0
  %6644 = vmatprep.subr.mxu0 0.0
  %6645 = vmatpush2.msra.mxu0 0.0
  %6646 = vmatprep.subr.mxu0 0.0
  %6647 = vmatpush2.msra.mxu0 0.0
  %6648 = vmatprep.subr.mxu0 0.0
  %6649 = vmatpush2.msra.mxu0 0.0
  %6650 = vmatprep.subr.mxu0 0.0
  %6651 = vmatpush2.msra.mxu0 0.0
  %6652 = vmatprep.subr.mxu0 0.0
  %6653 = vmatpush2.msra.mxu0 0.0
  %6654 = vmatprep.subr.mxu0 0.0
  %6655 = vmatpush2.msra.mxu0 0.0
  %6656 = vmatprep.subr.mxu0 0.0
  %6657 = vmatpush2.msra.mxu0 0.0
  %6658 = vmatprep.subr.mxu0 0.0
  %6659 = vmatpush2.msra.mxu0 0.0
  %6660 = vmatprep.subr.mxu0 0.0
  %6661 = vmatpush2.msra.mxu0 0.0
  %6662 = vmatprep.subr.mxu0 0.0
  %6663 = vmatpush2.msra.mxu0 0.0
  %6664 = vmatprep.subr.mxu0 0.0
  %6665 = vmatpush2.msra.mxu0 0.0
  %6666 = vmatprep.subr.mxu0 0.0
  %6667 = vmatpush2.msra.mxu0 0.0
  %6668 = vmatprep.subr.mxu0 0.0
  %6669 = vmatpush2.msra.mxu0 0.0
  %6670 = vmatprep.subr.mxu0 0.0
  %6671 = vmatpush2.msra.mxu0 0.0
  %6672 = vmatprep.mubr.f32.mxu0 0.0
  %6673 = vmatmul.mubr.f32.gmra.mxu0 %v5934
  %v6674 = vpop.f32.mrf.mxu0
  %v6675 = vadd.f32 0.0, %v6674
  %v6676 = vpop.f32.mrf.mxu0
  %6677 = vmatprep.mubr.f32.mxu0 0.0
  %6678 = vmatmul.mubr.f32.gmra.mxu0 %v5937
  %v6679 = vpop.f32.mrf.mxu0
  %v6680 = vadd.f32 0.0, %v6679
  %v6681 = vpop.f32.mrf.mxu0
  %6682 = vdwg.mxu0
  %6683 = vmatprep.subr.mxu0 0.0
  %6684 = vmatpush1.msra.mxu0 0.0
  %6685 = vmatprep.subr.mxu0 0.0
  %6686 = vmatpush1.msra.mxu0 0.0
  %6687 = vmatprep.subr.mxu0 0.0
  %6688 = vmatpush1.msra.mxu0 0.0
  %6689 = vmatprep.subr.mxu0 0.0
  %6690 = vmatpush1.msra.mxu0 0.0
  %6691 = vmatprep.subr.mxu0 0.0
  %6692 = vmatpush1.msra.mxu0 0.0
  %6693 = vmatprep.subr.mxu0 0.0
  %6694 = vmatpush1.msra.mxu0 0.0
  %6695 = vmatprep.subr.mxu0 0.0
  %6696 = vmatpush1.msra.mxu0 0.0
  %6697 = vmatprep.subr.mxu0 0.0
  %6698 = vmatpush1.msra.mxu0 0.0
  %6699 = vmatprep.subr.mxu0 0.0
  %6700 = vmatpush1.msra.mxu0 0.0
  %6701 = vmatprep.subr.mxu0 0.0
  %6702 = vmatpush1.msra.mxu0 0.0
  %6703 = vmatprep.subr.mxu0 0.0
  %6704 = vmatpush1.msra.mxu0 0.0
  %6705 = vmatprep.subr.mxu0 0.0
  %6706 = vmatpush1.msra.mxu0 0.0
  %6707 = vmatprep.subr.mxu0 0.0
  %6708 = vmatpush1.msra.mxu0 %v6512
  %6709 = vmatprep.subr.mxu0 0.0
  %6710 = vmatpush1.msra.mxu0 %v6511
  %6711 = vmatprep.subr.mxu0 0.0
  %6712 = vmatpush1.msra.mxu0 %v6510
  %6713 = vmatprep.subr.mxu0 0.0
  %6714 = vmatpush1.msra.mxu0 %v6509
  %6715 = vmatprep.subr.mxu0 0.0
  %6716 = vmatpush2.msra.mxu0 0.0
  %6717 = vmatprep.subr.mxu0 0.0
  %6718 = vmatpush2.msra.mxu0 0.0
  %6719 = vmatprep.subr.mxu0 0.0
  %6720 = vmatpush2.msra.mxu0 0.0
  %6721 = vmatprep.subr.mxu0 0.0
  %6722 = vmatpush2.msra.mxu0 0.0
  %6723 = vmatprep.subr.mxu0 0.0
  %6724 = vmatpush2.msra.mxu0 0.0
  %6725 = vmatprep.subr.mxu0 0.0
  %6726 = vmatpush2.msra.mxu0 0.0
  %6727 = vmatprep.subr.mxu0 0.0
  %6728 = vmatpush2.msra.mxu0 0.0
  %6729 = vmatprep.subr.mxu0 0.0
  %6730 = vmatpush2.msra.mxu0 0.0
  %6731 = vmatprep.subr.mxu0 0.0
  %6732 = vmatpush2.msra.mxu0 0.0
  %6733 = vmatprep.subr.mxu0 0.0
  %6734 = vmatpush2.msra.mxu0 0.0
  %6735 = vmatprep.subr.mxu0 0.0
  %6736 = vmatpush2.msra.mxu0 0.0
  %6737 = vmatprep.subr.mxu0 0.0
  %6738 = vmatpush2.msra.mxu0 0.0
  %6739 = vmatprep.subr.mxu0 0.0
  %6740 = vmatpush2.msra.mxu0 0.0
  %6741 = vmatprep.subr.mxu0 0.0
  %6742 = vmatpush2.msra.mxu0 0.0
  %6743 = vmatprep.subr.mxu0 0.0
  %6744 = vmatpush2.msra.mxu0 0.0
  %6745 = vmatprep.subr.mxu0 0.0
  %6746 = vmatpush2.msra.mxu0 0.0
  %6747 = vmatprep.mubr.f32.mxu0 0.0
  %6748 = vmatmul.mubr.f32.gmra.mxu0 %v6015
  %v6749 = vpop.f32.mrf.mxu0
  %v6750 = vadd.f32 0.0, %v6749
  %v6751 = vpop.f32.mrf.mxu0
  %6752 = vmatprep.mubr.f32.mxu0 0.0
  %6753 = vmatmul.mubr.f32.gmra.mxu0 %v6018
  %v6754 = vpop.f32.mrf.mxu0
  %v6755 = vadd.f32 0.0, %v6754
  %v6756 = vpop.f32.mrf.mxu0
  %6757 = vdwg.mxu0
  %6758 = vmatprep.subr.mxu0 0.0
  %6759 = vmatpush1.msra.mxu0 0.0
  %6760 = vmatprep.subr.mxu0 0.0
  %6761 = vmatpush1.msra.mxu0 0.0
  %6762 = vmatprep.subr.mxu0 0.0
  %6763 = vmatpush1.msra.mxu0 0.0
  %6764 = vmatprep.subr.mxu0 0.0
  %6765 = vmatpush1.msra.mxu0 0.0
  %6766 = vmatprep.subr.mxu0 0.0
  %6767 = vmatpush1.msra.mxu0 0.0
  %6768 = vmatprep.subr.mxu0 0.0
  %6769 = vmatpush1.msra.mxu0 0.0
  %6770 = vmatprep.subr.mxu0 0.0
  %6771 = vmatpush1.msra.mxu0 0.0
  %6772 = vmatprep.subr.mxu0 0.0
  %6773 = vmatpush1.msra.mxu0 0.0
  %6774 = vmatprep.subr.mxu0 0.0
  %6775 = vmatpush1.msra.mxu0 0.0
  %6776 = vmatprep.subr.mxu0 0.0
  %6777 = vmatpush1.msra.mxu0 0.0
  %6778 = vmatprep.subr.mxu0 0.0
  %6779 = vmatpush1.msra.mxu0 0.0
  %6780 = vmatprep.subr.mxu0 0.0
  %6781 = vmatpush1.msra.mxu0 0.0
  %6782 = vmatprep.subr.mxu0 0.0
  %6783 = vmatpush1.msra.mxu0 %v6516
  %6784 = vmatprep.subr.mxu0 0.0
  %6785 = vmatpush1.msra.mxu0 %v6515
  %6786 = vmatprep.subr.mxu0 0.0
  %6787 = vmatpush1.msra.mxu0 %v6514
  %6788 = vmatprep.subr.mxu0 0.0
  %6789 = vmatpush1.msra.mxu0 %v6513
  %6790 = vmatprep.subr.mxu0 0.0
  %6791 = vmatpush2.msra.mxu0 0.0
  %6792 = vmatprep.subr.mxu0 0.0
  %6793 = vmatpush2.msra.mxu0 0.0
  %6794 = vmatprep.subr.mxu0 0.0
  %6795 = vmatpush2.msra.mxu0 0.0
  %6796 = vmatprep.subr.mxu0 0.0
  %6797 = vmatpush2.msra.mxu0 0.0
  %6798 = vmatprep.subr.mxu0 0.0
  %6799 = vmatpush2.msra.mxu0 0.0
  %6800 = vmatprep.subr.mxu0 0.0
  %6801 = vmatpush2.msra.mxu0 0.0
  %6802 = vmatprep.subr.mxu0 0.0
  %6803 = vmatpush2.msra.mxu0 0.0
  %6804 = vmatprep.subr.mxu0 0.0
  %6805 = vmatpush2.msra.mxu0 0.0
  %6806 = vmatprep.subr.mxu0 0.0
  %6807 = vmatpush2.msra.mxu0 0.0
  %6808 = vmatprep.subr.mxu0 0.0
  %6809 = vmatpush2.msra.mxu0 0.0
  %6810 = vmatprep.subr.mxu0 0.0
  %6811 = vmatpush2.msra.mxu0 0.0
  %6812 = vmatprep.subr.mxu0 0.0
  %6813 = vmatpush2.msra.mxu0 0.0
  %6814 = vmatprep.subr.mxu0 0.0
  %6815 = vmatpush2.msra.mxu0 0.0
  %6816 = vmatprep.subr.mxu0 0.0
  %6817 = vmatpush2.msra.mxu0 0.0
  %6818 = vmatprep.subr.mxu0 0.0
  %6819 = vmatpush2.msra.mxu0 0.0
  %6820 = vmatprep.subr.mxu0 0.0
  %6821 = vmatpush2.msra.mxu0 0.0
  %6822 = vmatprep.mubr.f32.mxu0 0.0
  %6823 = vmatmul.mubr.f32.gmra.mxu0 %v6096
  %v6824 = vpop.f32.mrf.mxu0
  %v6825 = vadd.f32 0.0, %v6824
  %v6826 = vpop.f32.mrf.mxu0
  %6827 = vmatprep.mubr.f32.mxu0 0.0
  %6828 = vmatmul.mubr.f32.gmra.mxu0 %v6099
  %v6829 = vpop.f32.mrf.mxu0
  %v6830 = vadd.f32 0.0, %v6829
  %v6831 = vpop.f32.mrf.mxu0
  %6832 = vdwg.mxu0
  %6833 = vmatprep.subr.mxu0 0.0
  %6834 = vmatpush1.msra.mxu0 0.0
  %6835 = vmatprep.subr.mxu0 0.0
  %6836 = vmatpush1.msra.mxu0 0.0
  %6837 = vmatprep.subr.mxu0 0.0
  %6838 = vmatpush1.msra.mxu0 0.0
  %6839 = vmatprep.subr.mxu0 0.0
  %6840 = vmatpush1.msra.mxu0 0.0
  %6841 = vmatprep.subr.mxu0 0.0
  %6842 = vmatpush1.msra.mxu0 0.0
  %6843 = vmatprep.subr.mxu0 0.0
  %6844 = vmatpush1.msra.mxu0 0.0
  %6845 = vmatprep.subr.mxu0 0.0
  %6846 = vmatpush1.msra.mxu0 0.0
  %6847 = vmatprep.subr.mxu0 0.0
  %6848 = vmatpush1.msra.mxu0 0.0
  %6849 = vmatprep.subr.mxu0 0.0
  %6850 = vmatpush1.msra.mxu0 0.0
  %6851 = vmatprep.subr.mxu0 0.0
  %6852 = vmatpush1.msra.mxu0 0.0
  %6853 = vmatprep.subr.mxu0 0.0
  %6854 = vmatpush1.msra.mxu0 0.0
  %6855 = vmatprep.subr.mxu0 0.0
  %6856 = vmatpush1.msra.mxu0 0.0
  %6857 = vmatprep.subr.mxu0 0.0
  %6858 = vmatpush1.msra.mxu0 %v6520
  %6859 = vmatprep.subr.mxu0 0.0
  %6860 = vmatpush1.msra.mxu0 %v6519
  %6861 = vmatprep.subr.mxu0 0.0
  %6862 = vmatpush1.msra.mxu0 %v6518
  %6863 = vmatprep.subr.mxu0 0.0
  %6864 = vmatpush1.msra.mxu0 %v6517
  %6865 = vmatprep.subr.mxu0 0.0
  %6866 = vmatpush2.msra.mxu0 0.0
  %6867 = vmatprep.subr.mxu0 0.0
  %6868 = vmatpush2.msra.mxu0 0.0
  %6869 = vmatprep.subr.mxu0 0.0
  %6870 = vmatpush2.msra.mxu0 0.0
  %6871 = vmatprep.subr.mxu0 0.0
  %6872 = vmatpush2.msra.mxu0 0.0
  %6873 = vmatprep.subr.mxu0 0.0
  %6874 = vmatpush2.msra.mxu0 0.0
  %6875 = vmatprep.subr.mxu0 0.0
  %6876 = vmatpush2.msra.mxu0 0.0
  %6877 = vmatprep.subr.mxu0 0.0
  %6878 = vmatpush2.msra.mxu0 0.0
  %6879 = vmatprep.subr.mxu0 0.0
  %6880 = vmatpush2.msra.mxu0 0.0
  %6881 = vmatprep.subr.mxu0 0.0
  %6882 = vmatpush2.msra.mxu0 0.0
  %6883 = vmatprep.subr.mxu0 0.0
  %6884 = vmatpush2.msra.mxu0 0.0
  %6885 = vmatprep.subr.mxu0 0.0
  %6886 = vmatpush2.msra.mxu0 0.0
  %6887 = vmatprep.subr.mxu0 0.0
  %6888 = vmatpush2.msra.mxu0 0.0
  %6889 = vmatprep.subr.mxu0 0.0
  %6890 = vmatpush2.msra.mxu0 0.0
  %6891 = vmatprep.subr.mxu0 0.0
  %6892 = vmatpush2.msra.mxu0 0.0
  %6893 = vmatprep.subr.mxu0 0.0
  %6894 = vmatpush2.msra.mxu0 0.0
  %6895 = vmatprep.subr.mxu0 0.0
  %6896 = vmatpush2.msra.mxu0 0.0
  %6897 = vmatprep.mubr.f32.mxu0 0.0
  %6898 = vmatmul.mubr.f32.gmra.mxu0 %v6177
  %v6899 = vpop.f32.mrf.mxu0
  %v6900 = vadd.f32 0.0, %v6899
  %v6901 = vpop.f32.mrf.mxu0
  %6902 = vmatprep.mubr.f32.mxu0 0.0
  %6903 = vmatmul.mubr.f32.gmra.mxu0 %v6180
  %v6904 = vpop.f32.mrf.mxu0
  %v6905 = vadd.f32 0.0, %v6904
  %v6906 = vpop.f32.mrf.mxu0
  %6907 = vdwg.mxu0
  %6908 = vmatprep.subr.mxu0 0.0
  %6909 = vmatpush1.msra.mxu0 0.0
  %6910 = vmatprep.subr.mxu0 0.0
  %6911 = vmatpush1.msra.mxu0 0.0
  %6912 = vmatprep.subr.mxu0 0.0
  %6913 = vmatpush1.msra.mxu0 0.0
  %6914 = vmatprep.subr.mxu0 0.0
  %6915 = vmatpush1.msra.mxu0 0.0
  %6916 = vmatprep.subr.mxu0 0.0
  %6917 = vmatpush1.msra.mxu0 0.0
  %6918 = vmatprep.subr.mxu0 0.0
  %6919 = vmatpush1.msra.mxu0 0.0
  %6920 = vmatprep.subr.mxu0 0.0
  %6921 = vmatpush1.msra.mxu0 0.0
  %6922 = vmatprep.subr.mxu0 0.0
  %6923 = vmatpush1.msra.mxu0 0.0
  %6924 = vmatprep.subr.mxu0 0.0
  %6925 = vmatpush1.msra.mxu0 0.0
  %6926 = vmatprep.subr.mxu0 0.0
  %6927 = vmatpush1.msra.mxu0 0.0
  %6928 = vmatprep.subr.mxu0 0.0
  %6929 = vmatpush1.msra.mxu0 0.0
  %6930 = vmatprep.subr.mxu0 0.0
  %6931 = vmatpush1.msra.mxu0 0.0
  %6932 = vmatprep.subr.mxu0 0.0
  %6933 = vmatpush1.msra.mxu0 %v6524
  %6934 = vmatprep.subr.mxu0 0.0
  %6935 = vmatpush1.msra.mxu0 %v6523
  %6936 = vmatprep.subr.mxu0 0.0
  %6937 = vmatpush1.msra.mxu0 %v6522
  %6938 = vmatprep.subr.mxu0 0.0
  %6939 = vmatpush1.msra.mxu0 %v6521
  %6940 = vmatprep.subr.mxu0 0.0
  %6941 = vmatpush2.msra.mxu0 0.0
  %6942 = vmatprep.subr.mxu0 0.0
  %6943 = vmatpush2.msra.mxu0 0.0
  %6944 = vmatprep.subr.mxu0 0.0
  %6945 = vmatpush2.msra.mxu0 0.0
  %6946 = vmatprep.subr.mxu0 0.0
  %6947 = vmatpush2.msra.mxu0 0.0
  %6948 = vmatprep.subr.mxu0 0.0
  %6949 = vmatpush2.msra.mxu0 0.0
  %6950 = vmatprep.subr.mxu0 0.0
  %6951 = vmatpush2.msra.mxu0 0.0
  %6952 = vmatprep.subr.mxu0 0.0
  %6953 = vmatpush2.msra.mxu0 0.0
  %6954 = vmatprep.subr.mxu0 0.0
  %6955 = vmatpush2.msra.mxu0 0.0
  %6956 = vmatprep.subr.mxu0 0.0
  %6957 = vmatpush2.msra.mxu0 0.0
  %6958 = vmatprep.subr.mxu0 0.0
  %6959 = vmatpush2.msra.mxu0 0.0
  %6960 = vmatprep.subr.mxu0 0.0
  %6961 = vmatpush2.msra.mxu0 0.0
  %6962 = vmatprep.subr.mxu0 0.0
  %6963 = vmatpush2.msra.mxu0 0.0
  %6964 = vmatprep.subr.mxu0 0.0
  %6965 = vmatpush2.msra.mxu0 0.0
  %6966 = vmatprep.subr.mxu0 0.0
  %6967 = vmatpush2.msra.mxu0 0.0
  %6968 = vmatprep.subr.mxu0 0.0
  %6969 = vmatpush2.msra.mxu0 0.0
  %6970 = vmatprep.subr.mxu0 0.0
  %6971 = vmatpush2.msra.mxu0 0.0
  %6972 = vmatprep.mubr.f32.mxu0 0.0
  %6973 = vmatmul.mubr.f32.gmra.mxu0 %v6258
  %v6974 = vpop.f32.mrf.mxu0
  %v6975 = vadd.f32 0.0, %v6974
  %v6976 = vpop.f32.mrf.mxu0
  %6977 = vmatprep.mubr.f32.mxu0 0.0
  %6978 = vmatmul.mubr.f32.gmra.mxu0 %v6261
  %v6979 = vpop.f32.mrf.mxu0
  %v6980 = vadd.f32 0.0, %v6979
  %v6981 = vpop.f32.mrf.mxu0
  %6982 = vdwg.mxu0
  %6983 = vmatprep.subr.mxu0 0.0
  %6984 = vmatpush1.msra.mxu0 0.0
  %6985 = vmatprep.subr.mxu0 0.0
  %6986 = vmatpush1.msra.mxu0 0.0
  %6987 = vmatprep.subr.mxu0 0.0
  %6988 = vmatpush1.msra.mxu0 0.0
  %6989 = vmatprep.subr.mxu0 0.0
  %6990 = vmatpush1.msra.mxu0 0.0
  %6991 = vmatprep.subr.mxu0 0.0
  %6992 = vmatpush1.msra.mxu0 0.0
  %6993 = vmatprep.subr.mxu0 0.0
  %6994 = vmatpush1.msra.mxu0 0.0
  %6995 = vmatprep.subr.mxu0 0.0
  %6996 = vmatpush1.msra.mxu0 0.0
  %6997 = vmatprep.subr.mxu0 0.0
  %6998 = vmatpush1.msra.mxu0 0.0
  %6999 = vmatprep.subr.mxu0 0.0
  %7000 = vmatpush1.msra.mxu0 0.0
  %7001 = vmatprep.subr.mxu0 0.0
  %7002 = vmatpush1.msra.mxu0 0.0
  %7003 = vmatprep.subr.mxu0 0.0
  %7004 = vmatpush1.msra.mxu0 0.0
  %7005 = vmatprep.subr.mxu0 0.0
  %7006 = vmatpush1.msra.mxu0 0.0
  %7007 = vmatprep.subr.mxu0 0.0
  %7008 = vmatpush1.msra.mxu0 %v6528
  %7009 = vmatprep.subr.mxu0 0.0
  %7010 = vmatpush1.msra.mxu0 %v6527
  %7011 = vmatprep.subr.mxu0 0.0
  %7012 = vmatpush1.msra.mxu0 %v6526
  %7013 = vmatprep.subr.mxu0 0.0
  %7014 = vmatpush1.msra.mxu0 %v6525
  %7015 = vmatprep.subr.mxu0 0.0
  %7016 = vmatpush2.msra.mxu0 0.0
  %7017 = vmatprep.subr.mxu0 0.0
  %7018 = vmatpush2.msra.mxu0 0.0
  %7019 = vmatprep.subr.mxu0 0.0
  %7020 = vmatpush2.msra.mxu0 0.0
  %7021 = vmatprep.subr.mxu0 0.0
  %7022 = vmatpush2.msra.mxu0 0.0
  %7023 = vmatprep.subr.mxu0 0.0
  %7024 = vmatpush2.msra.mxu0 0.0
  %7025 = vmatprep.subr.mxu0 0.0
  %7026 = vmatpush2.msra.mxu0 0.0
  %7027 = vmatprep.subr.mxu0 0.0
  %7028 = vmatpush2.msra.mxu0 0.0
  %7029 = vmatprep.subr.mxu0 0.0
  %7030 = vmatpush2.msra.mxu0 0.0
  %7031 = vmatprep.subr.mxu0 0.0
  %7032 = vmatpush2.msra.mxu0 0.0
  %7033 = vmatprep.subr.mxu0 0.0
  %7034 = vmatpush2.msra.mxu0 0.0
  %7035 = vmatprep.subr.mxu0 0.0
  %7036 = vmatpush2.msra.mxu0 0.0
  %7037 = vmatprep.subr.mxu0 0.0
  %7038 = vmatpush2.msra.mxu0 0.0
  %7039 = vmatprep.subr.mxu0 0.0
  %7040 = vmatpush2.msra.mxu0 0.0
  %7041 = vmatprep.subr.mxu0 0.0
  %7042 = vmatpush2.msra.mxu0 0.0
  %7043 = vmatprep.subr.mxu0 0.0
  %7044 = vmatpush2.msra.mxu0 0.0
  %7045 = vmatprep.subr.mxu0 0.0
  %7046 = vmatpush2.msra.mxu0 0.0
  %7047 = vmatprep.mubr.f32.mxu0 0.0
  %7048 = vmatmul.mubr.f32.gmra.mxu0 %v6339
  %v7049 = vpop.f32.mrf.mxu0
  %v7050 = vadd.f32 0.0, %v7049
  %v7051 = vpop.f32.mrf.mxu0
  %7052 = vmatprep.mubr.f32.mxu0 0.0
  %7053 = vmatmul.mubr.f32.gmra.mxu0 %v6342
  %v7054 = vpop.f32.mrf.mxu0
  %v7055 = vadd.f32 0.0, %v7054
  %v7056 = vpop.f32.mrf.mxu0
  %7057 = vdwg.mxu0
  %7058 = vmatprep.subr.mxu0 0.0
  %7059 = vmatpush1.msra.mxu0 0.0
  %7060 = vmatprep.subr.mxu0 0.0
  %7061 = vmatpush1.msra.mxu0 0.0
  %7062 = vmatprep.subr.mxu0 0.0
  %7063 = vmatpush1.msra.mxu0 0.0
  %7064 = vmatprep.subr.mxu0 0.0
  %7065 = vmatpush1.msra.mxu0 0.0
  %7066 = vmatprep.subr.mxu0 0.0
  %7067 = vmatpush1.msra.mxu0 0.0
  %7068 = vmatprep.subr.mxu0 0.0
  %7069 = vmatpush1.msra.mxu0 0.0
  %7070 = vmatprep.subr.mxu0 0.0
  %7071 = vmatpush1.msra.mxu0 0.0
  %7072 = vmatprep.subr.mxu0 0.0
  %7073 = vmatpush1.msra.mxu0 0.0
  %7074 = vmatprep.subr.mxu0 0.0
  %7075 = vmatpush1.msra.mxu0 0.0
  %7076 = vmatprep.subr.mxu0 0.0
  %7077 = vmatpush1.msra.mxu0 0.0
  %7078 = vmatprep.subr.mxu0 0.0
  %7079 = vmatpush1.msra.mxu0 0.0
  %7080 = vmatprep.subr.mxu0 0.0
  %7081 = vmatpush1.msra.mxu0 0.0
  %7082 = vmatprep.subr.mxu0 0.0
  %7083 = vmatpush1.msra.mxu0 %v6532
  %7084 = vmatprep.subr.mxu0 0.0
  %7085 = vmatpush1.msra.mxu0 %v6531
  %7086 = vmatprep.subr.mxu0 0.0
  %7087 = vmatpush1.msra.mxu0 %v6530
  %7088 = vmatprep.subr.mxu0 0.0
  %7089 = vmatpush1.msra.mxu0 %v6529
  %7090 = vmatprep.subr.mxu0 0.0
  %7091 = vmatpush2.msra.mxu0 0.0
  %7092 = vmatprep.subr.mxu0 0.0
  %7093 = vmatpush2.msra.mxu0 0.0
  %7094 = vmatprep.subr.mxu0 0.0
  %7095 = vmatpush2.msra.mxu0 0.0
  %7096 = vmatprep.subr.mxu0 0.0
  %7097 = vmatpush2.msra.mxu0 0.0
  %7098 = vmatprep.subr.mxu0 0.0
  %7099 = vmatpush2.msra.mxu0 0.0
  %7100 = vmatprep.subr.mxu0 0.0
  %7101 = vmatpush2.msra.mxu0 0.0
  %7102 = vmatprep.subr.mxu0 0.0
  %7103 = vmatpush2.msra.mxu0 0.0
  %7104 = vmatprep.subr.mxu0 0.0
  %7105 = vmatpush2.msra.mxu0 0.0
  %7106 = vmatprep.subr.mxu0 0.0
  %7107 = vmatpush2.msra.mxu0 0.0
  %7108 = vmatprep.subr.mxu0 0.0
  %7109 = vmatpush2.msra.mxu0 0.0
  %7110 = vmatprep.subr.mxu0 0.0
  %7111 = vmatpush2.msra.mxu0 0.0
  %7112 = vmatprep.subr.mxu0 0.0
  %7113 = vmatpush2.msra.mxu0 0.0
  %7114 = vmatprep.subr.mxu0 0.0
  %7115 = vmatpush2.msra.mxu0 0.0
  %7116 = vmatprep.subr.mxu0 0.0
  %7117 = vmatpush2.msra.mxu0 0.0
  %7118 = vmatprep.subr.mxu0 0.0
  %7119 = vmatpush2.msra.mxu0 0.0
  %7120 = vmatprep.subr.mxu0 0.0
  %7121 = vmatpush2.msra.mxu0 0.0
  %7122 = vmatprep.mubr.f32.mxu0 0.0
  %7123 = vmatmul.mubr.f32.gmra.mxu0 %v6420
  %v7124 = vpop.f32.mrf.mxu0
  %v7125 = vadd.f32 0.0, %v7124
  %v7126 = vpop.f32.mrf.mxu0
  %7127 = vmatprep.mubr.f32.mxu0 0.0
  %7128 = vmatmul.mubr.f32.gmra.mxu0 %v6423
  %v7129 = vpop.f32.mrf.mxu0
  %v7130 = vadd.f32 0.0, %v7129
  %v7131 = vpop.f32.mrf.mxu0
  %7132 = vdwg.mxu0
  %s7133 = scalar_lea.vmem %s6, 256
  %v7134 = vld [vmem:[%s7133] sm:$0xff]
  %v7135 = vld [vmem:[%s7133 + $0x8] sm:$0xff]
  %v7136 = vld [vmem:[%s7133 + $0x10] sm:$0xff]
  %v7137 = vld [vmem:[%s7133 + $0x18] sm:$0xff]
  %v7138 = vld [vmem:[%s7133 + $0x20] sm:$0xff]
  %v7139 = vld [vmem:[%s7133 + $0x28] sm:$0xff]
  %v7140 = vld [vmem:[%s7133 + $0x30] sm:$0xff]
  %v7141 = vld [vmem:[%s7133 + $0x38] sm:$0xff]
  %v7142 = vld [vmem:[%s7133 + $0x40] sm:$0xff]
  %v7143 = vld [vmem:[%s7133 + $0x48] sm:$0xff]
  %v7144 = vld [vmem:[%s7133 + $0x50] sm:$0xff]
  %v7145 = vld [vmem:[%s7133 + $0x58] sm:$0xff]
  %v7146 = vld [vmem:[%s7133 + $0x60] sm:$0xff]
  %v7147 = vld [vmem:[%s7133 + $0x68] sm:$0xff]
  %v7148 = vld [vmem:[%s7133 + $0x70] sm:$0xff]
  %v7149 = vld [vmem:[%s7133 + $0x78] sm:$0xff]
  %v7150 = vld [vmem:[%s7133 + $0x80] sm:$0xff]
  %v7151 = vld [vmem:[%s7133 + $0x88] sm:$0xff]
  %v7152 = vld [vmem:[%s7133 + $0x90] sm:$0xff]
  %v7153 = vld [vmem:[%s7133 + $0x98] sm:$0xff]
  %v7154 = vld [vmem:[%s7133 + $0xa0] sm:$0xff]
  %v7155 = vld [vmem:[%s7133 + $0xa8] sm:$0xff]
  %v7156 = vld [vmem:[%s7133 + $0xb0] sm:$0xff]
  %v7157 = vld [vmem:[%s7133 + $0xb8] sm:$0xff]
  %v7158 = vld [vmem:[%s7133 + $0xc0] sm:$0xff]
  %v7159 = vld [vmem:[%s7133 + $0xc8] sm:$0xff]
  %v7160 = vld [vmem:[%s7133 + $0xd0] sm:$0xff]
  %v7161 = vld [vmem:[%s7133 + $0xd8] sm:$0xff]
  %v7162 = vld [vmem:[%s7133 + $0xe0] sm:$0xff]
  %v7163 = vld [vmem:[%s7133 + $0xe8] sm:$0xff]
  %v7164 = vld [vmem:[%s7133 + $0xf0] sm:$0xff]
  %v7165 = vld [vmem:[%s7133 + $0xf8] sm:$0xff]
  %7166 = vmatprep.subr.mxu0 0.0
  %7167 = vmatpush1.msra.mxu0 0.0
  %7168 = vmatprep.subr.mxu0 0.0
  %7169 = vmatpush1.msra.mxu0 0.0
  %7170 = vmatprep.subr.mxu0 0.0
  %7171 = vmatpush1.msra.mxu0 0.0
  %7172 = vmatprep.subr.mxu0 0.0
  %7173 = vmatpush1.msra.mxu0 0.0
  %7174 = vmatprep.subr.mxu0 0.0
  %7175 = vmatpush1.msra.mxu0 0.0
  %7176 = vmatprep.subr.mxu0 0.0
  %7177 = vmatpush1.msra.mxu0 0.0
  %7178 = vmatprep.subr.mxu0 0.0
  %7179 = vmatpush1.msra.mxu0 0.0
  %7180 = vmatprep.subr.mxu0 0.0
  %7181 = vmatpush1.msra.mxu0 0.0
  %7182 = vmatprep.subr.mxu0 0.0
  %7183 = vmatpush1.msra.mxu0 0.0
  %7184 = vmatprep.subr.mxu0 0.0
  %7185 = vmatpush1.msra.mxu0 0.0
  %7186 = vmatprep.subr.mxu0 0.0
  %7187 = vmatpush1.msra.mxu0 0.0
  %7188 = vmatprep.subr.mxu0 0.0
  %7189 = vmatpush1.msra.mxu0 0.0
  %7190 = vmatprep.subr.mxu0 0.0
  %7191 = vmatpush1.msra.mxu0 %v7137
  %7192 = vmatprep.subr.mxu0 0.0
  %7193 = vmatpush1.msra.mxu0 %v7136
  %7194 = vmatprep.subr.mxu0 0.0
  %7195 = vmatpush1.msra.mxu0 %v7135
  %7196 = vmatprep.subr.mxu0 0.0
  %7197 = vmatpush1.msra.mxu0 %v7134
  %7198 = vmatprep.subr.mxu0 0.0
  %7199 = vmatpush2.msra.mxu0 0.0
  %7200 = vmatprep.subr.mxu0 0.0
  %7201 = vmatpush2.msra.mxu0 0.0
  %7202 = vmatprep.subr.mxu0 0.0
  %7203 = vmatpush2.msra.mxu0 0.0
  %7204 = vmatprep.subr.mxu0 0.0
  %7205 = vmatpush2.msra.mxu0 0.0
  %7206 = vmatprep.subr.mxu0 0.0
  %7207 = vmatpush2.msra.mxu0 0.0
  %7208 = vmatprep.subr.mxu0 0.0
  %7209 = vmatpush2.msra.mxu0 0.0
  %7210 = vmatprep.subr.mxu0 0.0
  %7211 = vmatpush2.msra.mxu0 0.0
  %7212 = vmatprep.subr.mxu0 0.0
  %7213 = vmatpush2.msra.mxu0 0.0
  %7214 = vmatprep.subr.mxu0 0.0
  %7215 = vmatpush2.msra.mxu0 0.0
  %7216 = vmatprep.subr.mxu0 0.0
  %7217 = vmatpush2.msra.mxu0 0.0
  %7218 = vmatprep.subr.mxu0 0.0
  %7219 = vmatpush2.msra.mxu0 0.0
  %7220 = vmatprep.subr.mxu0 0.0
  %7221 = vmatpush2.msra.mxu0 0.0
  %7222 = vmatprep.subr.mxu0 0.0
  %7223 = vmatpush2.msra.mxu0 0.0
  %7224 = vmatprep.subr.mxu0 0.0
  %7225 = vmatpush2.msra.mxu0 0.0
  %7226 = vmatprep.subr.mxu0 0.0
  %7227 = vmatpush2.msra.mxu0 0.0
  %7228 = vmatprep.subr.mxu0 0.0
  %7229 = vmatpush2.msra.mxu0 0.0
  %7230 = vmatprep.mubr.f32.mxu0 0.0
  %7231 = vmatmul.mubr.f32.gmra.mxu0 %v5853
  %v7232 = vpop.f32.mrf.mxu0
  %v7233 = vadd.f32 0.0, %v7232
  %v7234 = vpop.f32.mrf.mxu0
  %7235 = vmatprep.mubr.f32.mxu0 0.0
  %7236 = vmatmul.mubr.f32.gmra.mxu0 %v5856
  %v7237 = vpop.f32.mrf.mxu0
  %v7238 = vadd.f32 0.0, %v7237
  %v7239 = vpop.f32.mrf.mxu0
  %7240 = vdwg.mxu0
  %7241 = vmatprep.subr.mxu0 0.0
  %7242 = vmatpush1.msra.mxu0 0.0
  %7243 = vmatprep.subr.mxu0 0.0
  %7244 = vmatpush1.msra.mxu0 0.0
  %7245 = vmatprep.subr.mxu0 0.0
  %7246 = vmatpush1.msra.mxu0 0.0
  %7247 = vmatprep.subr.mxu0 0.0
  %7248 = vmatpush1.msra.mxu0 0.0
  %7249 = vmatprep.subr.mxu0 0.0
  %7250 = vmatpush1.msra.mxu0 0.0
  %7251 = vmatprep.subr.mxu0 0.0
  %7252 = vmatpush1.msra.mxu0 0.0
  %7253 = vmatprep.subr.mxu0 0.0
  %7254 = vmatpush1.msra.mxu0 0.0
  %7255 = vmatprep.subr.mxu0 0.0
  %7256 = vmatpush1.msra.mxu0 0.0
  %7257 = vmatprep.subr.mxu0 0.0
  %7258 = vmatpush1.msra.mxu0 0.0
  %7259 = vmatprep.subr.mxu0 0.0
  %7260 = vmatpush1.msra.mxu0 0.0
  %7261 = vmatprep.subr.mxu0 0.0
  %7262 = vmatpush1.msra.mxu0 0.0
  %7263 = vmatprep.subr.mxu0 0.0
  %7264 = vmatpush1.msra.mxu0 0.0
  %7265 = vmatprep.subr.mxu0 0.0
  %7266 = vmatpush1.msra.mxu0 %v7141
  %7267 = vmatprep.subr.mxu0 0.0
  %7268 = vmatpush1.msra.mxu0 %v7140
  %7269 = vmatprep.subr.mxu0 0.0
  %7270 = vmatpush1.msra.mxu0 %v7139
  %7271 = vmatprep.subr.mxu0 0.0
  %7272 = vmatpush1.msra.mxu0 %v7138
  %7273 = vmatprep.subr.mxu0 0.0
  %7274 = vmatpush2.msra.mxu0 0.0
  %7275 = vmatprep.subr.mxu0 0.0
  %7276 = vmatpush2.msra.mxu0 0.0
  %7277 = vmatprep.subr.mxu0 0.0
  %7278 = vmatpush2.msra.mxu0 0.0
  %7279 = vmatprep.subr.mxu0 0.0
  %7280 = vmatpush2.msra.mxu0 0.0
  %7281 = vmatprep.subr.mxu0 0.0
  %7282 = vmatpush2.msra.mxu0 0.0
  %7283 = vmatprep.subr.mxu0 0.0
  %7284 = vmatpush2.msra.mxu0 0.0
  %7285 = vmatprep.subr.mxu0 0.0
  %7286 = vmatpush2.msra.mxu0 0.0
  %7287 = vmatprep.subr.mxu0 0.0
  %7288 = vmatpush2.msra.mxu0 0.0
  %7289 = vmatprep.subr.mxu0 0.0
  %7290 = vmatpush2.msra.mxu0 0.0
  %7291 = vmatprep.subr.mxu0 0.0
  %7292 = vmatpush2.msra.mxu0 0.0
  %7293 = vmatprep.subr.mxu0 0.0
  %7294 = vmatpush2.msra.mxu0 0.0
  %7295 = vmatprep.subr.mxu0 0.0
  %7296 = vmatpush2.msra.mxu0 0.0
  %7297 = vmatprep.subr.mxu0 0.0
  %7298 = vmatpush2.msra.mxu0 0.0
  %7299 = vmatprep.subr.mxu0 0.0
  %7300 = vmatpush2.msra.mxu0 0.0
  %7301 = vmatprep.subr.mxu0 0.0
  %7302 = vmatpush2.msra.mxu0 0.0
  %7303 = vmatprep.subr.mxu0 0.0
  %7304 = vmatpush2.msra.mxu0 0.0
  %7305 = vmatprep.mubr.f32.mxu0 0.0
  %7306 = vmatmul.mubr.f32.gmra.mxu0 %v5934
  %v7307 = vpop.f32.mrf.mxu0
  %v7308 = vadd.f32 0.0, %v7307
  %v7309 = vpop.f32.mrf.mxu0
  %7310 = vmatprep.mubr.f32.mxu0 0.0
  %7311 = vmatmul.mubr.f32.gmra.mxu0 %v5937
  %v7312 = vpop.f32.mrf.mxu0
  %v7313 = vadd.f32 0.0, %v7312
  %v7314 = vpop.f32.mrf.mxu0
  %7315 = vdwg.mxu0
  %7316 = vmatprep.subr.mxu0 0.0
  %7317 = vmatpush1.msra.mxu0 0.0
  %7318 = vmatprep.subr.mxu0 0.0
  %7319 = vmatpush1.msra.mxu0 0.0
  %7320 = vmatprep.subr.mxu0 0.0
  %7321 = vmatpush1.msra.mxu0 0.0
  %7322 = vmatprep.subr.mxu0 0.0
  %7323 = vmatpush1.msra.mxu0 0.0
  %7324 = vmatprep.subr.mxu0 0.0
  %7325 = vmatpush1.msra.mxu0 0.0
  %7326 = vmatprep.subr.mxu0 0.0
  %7327 = vmatpush1.msra.mxu0 0.0
  %7328 = vmatprep.subr.mxu0 0.0
  %7329 = vmatpush1.msra.mxu0 0.0
  %7330 = vmatprep.subr.mxu0 0.0
  %7331 = vmatpush1.msra.mxu0 0.0
  %7332 = vmatprep.subr.mxu0 0.0
  %7333 = vmatpush1.msra.mxu0 0.0
  %7334 = vmatprep.subr.mxu0 0.0
  %7335 = vmatpush1.msra.mxu0 0.0
  %7336 = vmatprep.subr.mxu0 0.0
  %7337 = vmatpush1.msra.mxu0 0.0
  %7338 = vmatprep.subr.mxu0 0.0
  %7339 = vmatpush1.msra.mxu0 0.0
  %7340 = vmatprep.subr.mxu0 0.0
  %7341 = vmatpush1.msra.mxu0 %v7145
  %7342 = vmatprep.subr.mxu0 0.0
  %7343 = vmatpush1.msra.mxu0 %v7144
  %7344 = vmatprep.subr.mxu0 0.0
  %7345 = vmatpush1.msra.mxu0 %v7143
  %7346 = vmatprep.subr.mxu0 0.0
  %7347 = vmatpush1.msra.mxu0 %v7142
  %7348 = vmatprep.subr.mxu0 0.0
  %7349 = vmatpush2.msra.mxu0 0.0
  %7350 = vmatprep.subr.mxu0 0.0
  %7351 = vmatpush2.msra.mxu0 0.0
  %7352 = vmatprep.subr.mxu0 0.0
  %7353 = vmatpush2.msra.mxu0 0.0
  %7354 = vmatprep.subr.mxu0 0.0
  %7355 = vmatpush2.msra.mxu0 0.0
  %7356 = vmatprep.subr.mxu0 0.0
  %7357 = vmatpush2.msra.mxu0 0.0
  %7358 = vmatprep.subr.mxu0 0.0
  %7359 = vmatpush2.msra.mxu0 0.0
  %7360 = vmatprep.subr.mxu0 0.0
  %7361 = vmatpush2.msra.mxu0 0.0
  %7362 = vmatprep.subr.mxu0 0.0
  %7363 = vmatpush2.msra.mxu0 0.0
  %7364 = vmatprep.subr.mxu0 0.0
  %7365 = vmatpush2.msra.mxu0 0.0
  %7366 = vmatprep.subr.mxu0 0.0
  %7367 = vmatpush2.msra.mxu0 0.0
  %7368 = vmatprep.subr.mxu0 0.0
  %7369 = vmatpush2.msra.mxu0 0.0
  %7370 = vmatprep.subr.mxu0 0.0
  %7371 = vmatpush2.msra.mxu0 0.0
  %7372 = vmatprep.subr.mxu0 0.0
  %7373 = vmatpush2.msra.mxu0 0.0
  %7374 = vmatprep.subr.mxu0 0.0
  %7375 = vmatpush2.msra.mxu0 0.0
  %7376 = vmatprep.subr.mxu0 0.0
  %7377 = vmatpush2.msra.mxu0 0.0
  %7378 = vmatprep.subr.mxu0 0.0
  %7379 = vmatpush2.msra.mxu0 0.0
  %7380 = vmatprep.mubr.f32.mxu0 0.0
  %7381 = vmatmul.mubr.f32.gmra.mxu0 %v6015
  %v7382 = vpop.f32.mrf.mxu0
  %v7383 = vadd.f32 0.0, %v7382
  %v7384 = vpop.f32.mrf.mxu0
  %7385 = vmatprep.mubr.f32.mxu0 0.0
  %7386 = vmatmul.mubr.f32.gmra.mxu0 %v6018
  %v7387 = vpop.f32.mrf.mxu0
  %v7388 = vadd.f32 0.0, %v7387
  %v7389 = vpop.f32.mrf.mxu0
  %7390 = vdwg.mxu0
  %7391 = vmatprep.subr.mxu0 0.0
  %7392 = vmatpush1.msra.mxu0 0.0
  %7393 = vmatprep.subr.mxu0 0.0
  %7394 = vmatpush1.msra.mxu0 0.0
  %7395 = vmatprep.subr.mxu0 0.0
  %7396 = vmatpush1.msra.mxu0 0.0
  %7397 = vmatprep.subr.mxu0 0.0
  %7398 = vmatpush1.msra.mxu0 0.0
  %7399 = vmatprep.subr.mxu0 0.0
  %7400 = vmatpush1.msra.mxu0 0.0
  %7401 = vmatprep.subr.mxu0 0.0
  %7402 = vmatpush1.msra.mxu0 0.0
  %7403 = vmatprep.subr.mxu0 0.0
  %7404 = vmatpush1.msra.mxu0 0.0
  %7405 = vmatprep.subr.mxu0 0.0
  %7406 = vmatpush1.msra.mxu0 0.0
  %7407 = vmatprep.subr.mxu0 0.0
  %7408 = vmatpush1.msra.mxu0 0.0
  %7409 = vmatprep.subr.mxu0 0.0
  %7410 = vmatpush1.msra.mxu0 0.0
  %7411 = vmatprep.subr.mxu0 0.0
  %7412 = vmatpush1.msra.mxu0 0.0
  %7413 = vmatprep.subr.mxu0 0.0
  %7414 = vmatpush1.msra.mxu0 0.0
  %7415 = vmatprep.subr.mxu0 0.0
  %7416 = vmatpush1.msra.mxu0 %v7149
  %7417 = vmatprep.subr.mxu0 0.0
  %7418 = vmatpush1.msra.mxu0 %v7148
  %7419 = vmatprep.subr.mxu0 0.0
  %7420 = vmatpush1.msra.mxu0 %v7147
  %7421 = vmatprep.subr.mxu0 0.0
  %7422 = vmatpush1.msra.mxu0 %v7146
  %7423 = vmatprep.subr.mxu0 0.0
  %7424 = vmatpush2.msra.mxu0 0.0
  %7425 = vmatprep.subr.mxu0 0.0
  %7426 = vmatpush2.msra.mxu0 0.0
  %7427 = vmatprep.subr.mxu0 0.0
  %7428 = vmatpush2.msra.mxu0 0.0
  %7429 = vmatprep.subr.mxu0 0.0
  %7430 = vmatpush2.msra.mxu0 0.0
  %7431 = vmatprep.subr.mxu0 0.0
  %7432 = vmatpush2.msra.mxu0 0.0
  %7433 = vmatprep.subr.mxu0 0.0
  %7434 = vmatpush2.msra.mxu0 0.0
  %7435 = vmatprep.subr.mxu0 0.0
  %7436 = vmatpush2.msra.mxu0 0.0
  %7437 = vmatprep.subr.mxu0 0.0
  %7438 = vmatpush2.msra.mxu0 0.0
  %7439 = vmatprep.subr.mxu0 0.0
  %7440 = vmatpush2.msra.mxu0 0.0
  %7441 = vmatprep.subr.mxu0 0.0
  %7442 = vmatpush2.msra.mxu0 0.0
  %7443 = vmatprep.subr.mxu0 0.0
  %7444 = vmatpush2.msra.mxu0 0.0
  %7445 = vmatprep.subr.mxu0 0.0
  %7446 = vmatpush2.msra.mxu0 0.0
  %7447 = vmatprep.subr.mxu0 0.0
  %7448 = vmatpush2.msra.mxu0 0.0
  %7449 = vmatprep.subr.mxu0 0.0
  %7450 = vmatpush2.msra.mxu0 0.0
  %7451 = vmatprep.subr.mxu0 0.0
  %7452 = vmatpush2.msra.mxu0 0.0
  %7453 = vmatprep.subr.mxu0 0.0
  %7454 = vmatpush2.msra.mxu0 0.0
  %7455 = vmatprep.mubr.f32.mxu0 0.0
  %7456 = vmatmul.mubr.f32.gmra.mxu0 %v6096
  %v7457 = vpop.f32.mrf.mxu0
  %v7458 = vadd.f32 0.0, %v7457
  %v7459 = vpop.f32.mrf.mxu0
  %7460 = vmatprep.mubr.f32.mxu0 0.0
  %7461 = vmatmul.mubr.f32.gmra.mxu0 %v6099
  %v7462 = vpop.f32.mrf.mxu0
  %v7463 = vadd.f32 0.0, %v7462
  %v7464 = vpop.f32.mrf.mxu0
  %7465 = vdwg.mxu0
  %7466 = vmatprep.subr.mxu0 0.0
  %7467 = vmatpush1.msra.mxu0 0.0
  %7468 = vmatprep.subr.mxu0 0.0
  %7469 = vmatpush1.msra.mxu0 0.0
  %7470 = vmatprep.subr.mxu0 0.0
  %7471 = vmatpush1.msra.mxu0 0.0
  %7472 = vmatprep.subr.mxu0 0.0
  %7473 = vmatpush1.msra.mxu0 0.0
  %7474 = vmatprep.subr.mxu0 0.0
  %7475 = vmatpush1.msra.mxu0 0.0
  %7476 = vmatprep.subr.mxu0 0.0
  %7477 = vmatpush1.msra.mxu0 0.0
  %7478 = vmatprep.subr.mxu0 0.0
  %7479 = vmatpush1.msra.mxu0 0.0
  %7480 = vmatprep.subr.mxu0 0.0
  %7481 = vmatpush1.msra.mxu0 0.0
  %7482 = vmatprep.subr.mxu0 0.0
  %7483 = vmatpush1.msra.mxu0 0.0
  %7484 = vmatprep.subr.mxu0 0.0
  %7485 = vmatpush1.msra.mxu0 0.0
  %7486 = vmatprep.subr.mxu0 0.0
  %7487 = vmatpush1.msra.mxu0 0.0
  %7488 = vmatprep.subr.mxu0 0.0
  %7489 = vmatpush1.msra.mxu0 0.0
  %7490 = vmatprep.subr.mxu0 0.0
  %7491 = vmatpush1.msra.mxu0 %v7153
  %7492 = vmatprep.subr.mxu0 0.0
  %7493 = vmatpush1.msra.mxu0 %v7152
  %7494 = vmatprep.subr.mxu0 0.0
  %7495 = vmatpush1.msra.mxu0 %v7151
  %7496 = vmatprep.subr.mxu0 0.0
  %7497 = vmatpush1.msra.mxu0 %v7150
  %7498 = vmatprep.subr.mxu0 0.0
  %7499 = vmatpush2.msra.mxu0 0.0
  %7500 = vmatprep.subr.mxu0 0.0
  %7501 = vmatpush2.msra.mxu0 0.0
  %7502 = vmatprep.subr.mxu0 0.0
  %7503 = vmatpush2.msra.mxu0 0.0
  %7504 = vmatprep.subr.mxu0 0.0
  %7505 = vmatpush2.msra.mxu0 0.0
  %7506 = vmatprep.subr.mxu0 0.0
  %7507 = vmatpush2.msra.mxu0 0.0
  %7508 = vmatprep.subr.mxu0 0.0
  %7509 = vmatpush2.msra.mxu0 0.0
  %7510 = vmatprep.subr.mxu0 0.0
  %7511 = vmatpush2.msra.mxu0 0.0
  %7512 = vmatprep.subr.mxu0 0.0
  %7513 = vmatpush2.msra.mxu0 0.0
  %7514 = vmatprep.subr.mxu0 0.0
  %7515 = vmatpush2.msra.mxu0 0.0
  %7516 = vmatprep.subr.mxu0 0.0
  %7517 = vmatpush2.msra.mxu0 0.0
  %7518 = vmatprep.subr.mxu0 0.0
  %7519 = vmatpush2.msra.mxu0 0.0
  %7520 = vmatprep.subr.mxu0 0.0
  %7521 = vmatpush2.msra.mxu0 0.0
  %7522 = vmatprep.subr.mxu0 0.0
  %7523 = vmatpush2.msra.mxu0 0.0
  %7524 = vmatprep.subr.mxu0 0.0
  %7525 = vmatpush2.msra.mxu0 0.0
  %7526 = vmatprep.subr.mxu0 0.0
  %7527 = vmatpush2.msra.mxu0 0.0
  %7528 = vmatprep.subr.mxu0 0.0
  %7529 = vmatpush2.msra.mxu0 0.0
  %7530 = vmatprep.mubr.f32.mxu0 0.0
  %7531 = vmatmul.mubr.f32.gmra.mxu0 %v6177
  %v7532 = vpop.f32.mrf.mxu0
  %v7533 = vadd.f32 0.0, %v7532
  %v7534 = vpop.f32.mrf.mxu0
  %7535 = vmatprep.mubr.f32.mxu0 0.0
  %7536 = vmatmul.mubr.f32.gmra.mxu0 %v6180
  %v7537 = vpop.f32.mrf.mxu0
  %v7538 = vadd.f32 0.0, %v7537
  %v7539 = vpop.f32.mrf.mxu0
  %7540 = vdwg.mxu0
  %7541 = vmatprep.subr.mxu0 0.0
  %7542 = vmatpush1.msra.mxu0 0.0
  %7543 = vmatprep.subr.mxu0 0.0
  %7544 = vmatpush1.msra.mxu0 0.0
  %7545 = vmatprep.subr.mxu0 0.0
  %7546 = vmatpush1.msra.mxu0 0.0
  %7547 = vmatprep.subr.mxu0 0.0
  %7548 = vmatpush1.msra.mxu0 0.0
  %7549 = vmatprep.subr.mxu0 0.0
  %7550 = vmatpush1.msra.mxu0 0.0
  %7551 = vmatprep.subr.mxu0 0.0
  %7552 = vmatpush1.msra.mxu0 0.0
  %7553 = vmatprep.subr.mxu0 0.0
  %7554 = vmatpush1.msra.mxu0 0.0
  %7555 = vmatprep.subr.mxu0 0.0
  %7556 = vmatpush1.msra.mxu0 0.0
  %7557 = vmatprep.subr.mxu0 0.0
  %7558 = vmatpush1.msra.mxu0 0.0
  %7559 = vmatprep.subr.mxu0 0.0
  %7560 = vmatpush1.msra.mxu0 0.0
  %7561 = vmatprep.subr.mxu0 0.0
  %7562 = vmatpush1.msra.mxu0 0.0
  %7563 = vmatprep.subr.mxu0 0.0
  %7564 = vmatpush1.msra.mxu0 0.0
  %7565 = vmatprep.subr.mxu0 0.0
  %7566 = vmatpush1.msra.mxu0 %v7157
  %7567 = vmatprep.subr.mxu0 0.0
  %7568 = vmatpush1.msra.mxu0 %v7156
  %7569 = vmatprep.subr.mxu0 0.0
  %7570 = vmatpush1.msra.mxu0 %v7155
  %7571 = vmatprep.subr.mxu0 0.0
  %7572 = vmatpush1.msra.mxu0 %v7154
  %7573 = vmatprep.subr.mxu0 0.0
  %7574 = vmatpush2.msra.mxu0 0.0
  %7575 = vmatprep.subr.mxu0 0.0
  %7576 = vmatpush2.msra.mxu0 0.0
  %7577 = vmatprep.subr.mxu0 0.0
  %7578 = vmatpush2.msra.mxu0 0.0
  %7579 = vmatprep.subr.mxu0 0.0
  %7580 = vmatpush2.msra.mxu0 0.0
  %7581 = vmatprep.subr.mxu0 0.0
  %7582 = vmatpush2.msra.mxu0 0.0
  %7583 = vmatprep.subr.mxu0 0.0
  %7584 = vmatpush2.msra.mxu0 0.0
  %7585 = vmatprep.subr.mxu0 0.0
  %7586 = vmatpush2.msra.mxu0 0.0
  %7587 = vmatprep.subr.mxu0 0.0
  %7588 = vmatpush2.msra.mxu0 0.0
  %7589 = vmatprep.subr.mxu0 0.0
  %7590 = vmatpush2.msra.mxu0 0.0
  %7591 = vmatprep.subr.mxu0 0.0
  %7592 = vmatpush2.msra.mxu0 0.0
  %7593 = vmatprep.subr.mxu0 0.0
  %7594 = vmatpush2.msra.mxu0 0.0
  %7595 = vmatprep.subr.mxu0 0.0
  %7596 = vmatpush2.msra.mxu0 0.0
  %7597 = vmatprep.subr.mxu0 0.0
  %7598 = vmatpush2.msra.mxu0 0.0
  %7599 = vmatprep.subr.mxu0 0.0
  %7600 = vmatpush2.msra.mxu0 0.0
  %7601 = vmatprep.subr.mxu0 0.0
  %7602 = vmatpush2.msra.mxu0 0.0
  %7603 = vmatprep.subr.mxu0 0.0
  %7604 = vmatpush2.msra.mxu0 0.0
  %7605 = vmatprep.mubr.f32.mxu0 0.0
  %7606 = vmatmul.mubr.f32.gmra.mxu0 %v6258
  %v7607 = vpop.f32.mrf.mxu0
  %v7608 = vadd.f32 0.0, %v7607
  %v7609 = vpop.f32.mrf.mxu0
  %7610 = vmatprep.mubr.f32.mxu0 0.0
  %7611 = vmatmul.mubr.f32.gmra.mxu0 %v6261
  %v7612 = vpop.f32.mrf.mxu0
  %v7613 = vadd.f32 0.0, %v7612
  %v7614 = vpop.f32.mrf.mxu0
  %7615 = vdwg.mxu0
  %7616 = vmatprep.subr.mxu0 0.0
  %7617 = vmatpush1.msra.mxu0 0.0
  %7618 = vmatprep.subr.mxu0 0.0
  %7619 = vmatpush1.msra.mxu0 0.0
  %7620 = vmatprep.subr.mxu0 0.0
  %7621 = vmatpush1.msra.mxu0 0.0
  %7622 = vmatprep.subr.mxu0 0.0
  %7623 = vmatpush1.msra.mxu0 0.0
  %7624 = vmatprep.subr.mxu0 0.0
  %7625 = vmatpush1.msra.mxu0 0.0
  %7626 = vmatprep.subr.mxu0 0.0
  %7627 = vmatpush1.msra.mxu0 0.0
  %7628 = vmatprep.subr.mxu0 0.0
  %7629 = vmatpush1.msra.mxu0 0.0
  %7630 = vmatprep.subr.mxu0 0.0
  %7631 = vmatpush1.msra.mxu0 0.0
  %7632 = vmatprep.subr.mxu0 0.0
  %7633 = vmatpush1.msra.mxu0 0.0
  %7634 = vmatprep.subr.mxu0 0.0
  %7635 = vmatpush1.msra.mxu0 0.0
  %7636 = vmatprep.subr.mxu0 0.0
  %7637 = vmatpush1.msra.mxu0 0.0
  %7638 = vmatprep.subr.mxu0 0.0
  %7639 = vmatpush1.msra.mxu0 0.0
  %7640 = vmatprep.subr.mxu0 0.0
  %7641 = vmatpush1.msra.mxu0 %v7161
  %7642 = vmatprep.subr.mxu0 0.0
  %7643 = vmatpush1.msra.mxu0 %v7160
  %7644 = vmatprep.subr.mxu0 0.0
  %7645 = vmatpush1.msra.mxu0 %v7159
  %7646 = vmatprep.subr.mxu0 0.0
  %7647 = vmatpush1.msra.mxu0 %v7158
  %7648 = vmatprep.subr.mxu0 0.0
  %7649 = vmatpush2.msra.mxu0 0.0
  %7650 = vmatprep.subr.mxu0 0.0
  %7651 = vmatpush2.msra.mxu0 0.0
  %7652 = vmatprep.subr.mxu0 0.0
  %7653 = vmatpush2.msra.mxu0 0.0
  %7654 = vmatprep.subr.mxu0 0.0
  %7655 = vmatpush2.msra.mxu0 0.0
  %7656 = vmatprep.subr.mxu0 0.0
  %7657 = vmatpush2.msra.mxu0 0.0
  %7658 = vmatprep.subr.mxu0 0.0
  %7659 = vmatpush2.msra.mxu0 0.0
  %7660 = vmatprep.subr.mxu0 0.0
  %7661 = vmatpush2.msra.mxu0 0.0
  %7662 = vmatprep.subr.mxu0 0.0
  %7663 = vmatpush2.msra.mxu0 0.0
  %7664 = vmatprep.subr.mxu0 0.0
  %7665 = vmatpush2.msra.mxu0 0.0
  %7666 = vmatprep.subr.mxu0 0.0
  %7667 = vmatpush2.msra.mxu0 0.0
  %7668 = vmatprep.subr.mxu0 0.0
  %7669 = vmatpush2.msra.mxu0 0.0
  %7670 = vmatprep.subr.mxu0 0.0
  %7671 = vmatpush2.msra.mxu0 0.0
  %7672 = vmatprep.subr.mxu0 0.0
  %7673 = vmatpush2.msra.mxu0 0.0
  %7674 = vmatprep.subr.mxu0 0.0
  %7675 = vmatpush2.msra.mxu0 0.0
  %7676 = vmatprep.subr.mxu0 0.0
  %7677 = vmatpush2.msra.mxu0 0.0
  %7678 = vmatprep.subr.mxu0 0.0
  %7679 = vmatpush2.msra.mxu0 0.0
  %7680 = vmatprep.mubr.f32.mxu0 0.0
  %7681 = vmatmul.mubr.f32.gmra.mxu0 %v6339
  %v7682 = vpop.f32.mrf.mxu0
  %v7683 = vadd.f32 0.0, %v7682
  %v7684 = vpop.f32.mrf.mxu0
  %7685 = vmatprep.mubr.f32.mxu0 0.0
  %7686 = vmatmul.mubr.f32.gmra.mxu0 %v6342
  %v7687 = vpop.f32.mrf.mxu0
  %v7688 = vadd.f32 0.0, %v7687
  %v7689 = vpop.f32.mrf.mxu0
  %7690 = vdwg.mxu0
  %7691 = vmatprep.subr.mxu0 0.0
  %7692 = vmatpush1.msra.mxu0 0.0
  %7693 = vmatprep.subr.mxu0 0.0
  %7694 = vmatpush1.msra.mxu0 0.0
  %7695 = vmatprep.subr.mxu0 0.0
  %7696 = vmatpush1.msra.mxu0 0.0
  %7697 = vmatprep.subr.mxu0 0.0
  %7698 = vmatpush1.msra.mxu0 0.0
  %7699 = vmatprep.subr.mxu0 0.0
  %7700 = vmatpush1.msra.mxu0 0.0
  %7701 = vmatprep.subr.mxu0 0.0
  %7702 = vmatpush1.msra.mxu0 0.0
  %7703 = vmatprep.subr.mxu0 0.0
  %7704 = vmatpush1.msra.mxu0 0.0
  %7705 = vmatprep.subr.mxu0 0.0
  %7706 = vmatpush1.msra.mxu0 0.0
  %7707 = vmatprep.subr.mxu0 0.0
  %7708 = vmatpush1.msra.mxu0 0.0
  %7709 = vmatprep.subr.mxu0 0.0
  %7710 = vmatpush1.msra.mxu0 0.0
  %7711 = vmatprep.subr.mxu0 0.0
  %7712 = vmatpush1.msra.mxu0 0.0
  %7713 = vmatprep.subr.mxu0 0.0
  %7714 = vmatpush1.msra.mxu0 0.0
  %7715 = vmatprep.subr.mxu0 0.0
  %7716 = vmatpush1.msra.mxu0 %v7165
  %7717 = vmatprep.subr.mxu0 0.0
  %7718 = vmatpush1.msra.mxu0 %v7164
  %7719 = vmatprep.subr.mxu0 0.0
  %7720 = vmatpush1.msra.mxu0 %v7163
  %7721 = vmatprep.subr.mxu0 0.0
  %7722 = vmatpush1.msra.mxu0 %v7162
  %7723 = vmatprep.subr.mxu0 0.0
  %7724 = vmatpush2.msra.mxu0 0.0
  %7725 = vmatprep.subr.mxu0 0.0
  %7726 = vmatpush2.msra.mxu0 0.0
  %7727 = vmatprep.subr.mxu0 0.0
  %7728 = vmatpush2.msra.mxu0 0.0
  %7729 = vmatprep.subr.mxu0 0.0
  %7730 = vmatpush2.msra.mxu0 0.0
  %7731 = vmatprep.subr.mxu0 0.0
  %7732 = vmatpush2.msra.mxu0 0.0
  %7733 = vmatprep.subr.mxu0 0.0
  %7734 = vmatpush2.msra.mxu0 0.0
  %7735 = vmatprep.subr.mxu0 0.0
  %7736 = vmatpush2.msra.mxu0 0.0
  %7737 = vmatprep.subr.mxu0 0.0
  %7738 = vmatpush2.msra.mxu0 0.0
  %7739 = vmatprep.subr.mxu0 0.0
  %7740 = vmatpush2.msra.mxu0 0.0
  %7741 = vmatprep.subr.mxu0 0.0
  %7742 = vmatpush2.msra.mxu0 0.0
  %7743 = vmatprep.subr.mxu0 0.0
  %7744 = vmatpush2.msra.mxu0 0.0
  %7745 = vmatprep.subr.mxu0 0.0
  %7746 = vmatpush2.msra.mxu0 0.0
  %7747 = vmatprep.subr.mxu0 0.0
  %7748 = vmatpush2.msra.mxu0 0.0
  %7749 = vmatprep.subr.mxu0 0.0
  %7750 = vmatpush2.msra.mxu0 0.0
  %7751 = vmatprep.subr.mxu0 0.0
  %7752 = vmatpush2.msra.mxu0 0.0
  %7753 = vmatprep.subr.mxu0 0.0
  %7754 = vmatpush2.msra.mxu0 0.0
  %7755 = vmatprep.mubr.f32.mxu0 0.0
  %7756 = vmatmul.mubr.f32.gmra.mxu0 %v6420
  %v7757 = vpop.f32.mrf.mxu0
  %v7758 = vadd.f32 0.0, %v7757
  %v7759 = vpop.f32.mrf.mxu0
  %7760 = vmatprep.mubr.f32.mxu0 0.0
  %7761 = vmatmul.mubr.f32.gmra.mxu0 %v6423
  %v7762 = vpop.f32.mrf.mxu0
  %v7763 = vadd.f32 0.0, %v7762
  %v7764 = vpop.f32.mrf.mxu0
  %7765 = vdwg.mxu0
  %v7767 = vsel %vm367, %v5925, 0
  %v7770 = vsel %vm367, %v5930, 0
  %v7773 = vsel %vm367, %v6600, 0
  %v7776 = vsel %vm367, %v6605, 0
  %7778 = vmatprep.subr.mxu0 0.0
  %7779 = vmatpush1.xpose.msra.mxu0 0.0
  %7780 = vmatprep.subr.mxu0 0.0
  %7781 = vmatpush1.xpose.msra.mxu0 0.0
  %7782 = vmatprep.subr.mxu0 0.0
  %7783 = vmatpush1.xpose.msra.mxu0 0.0
  %7784 = vmatprep.subr.mxu0 0.0
  %7785 = vmatpush1.xpose.msra.mxu0 0.0
  %7786 = vmatprep.subr.mxu0 0.0
  %7787 = vmatpush1.xpose.msra.mxu0 0.0
  %7788 = vmatprep.subr.mxu0 0.0
  %7789 = vmatpush1.xpose.msra.mxu0 0.0
  %7790 = vmatprep.subr.mxu0 0.0
  %7791 = vmatpush1.xpose.msra.mxu0 0.0
  %7792 = vmatprep.subr.mxu0 0.0
  %7793 = vmatpush1.xpose.msra.mxu0 0.0
  %7794 = vmatprep.subr.mxu0 0.0
  %7795 = vmatpush1.xpose.msra.mxu0 0.0
  %7796 = vmatprep.subr.mxu0 0.0
  %7797 = vmatpush1.xpose.msra.mxu0 0.0
  %7798 = vmatprep.subr.mxu0 0.0
  %7799 = vmatpush1.xpose.msra.mxu0 0.0
  %7800 = vmatprep.subr.mxu0 0.0
  %7801 = vmatpush1.xpose.msra.mxu0 0.0
  %7802 = vmatprep.subr.mxu0 0.0
  %7803 = vmatpush1.xpose.msra.mxu0 0.0
  %7804 = vmatprep.subr.mxu0 0.0
  %7805 = vmatpush1.xpose.msra.mxu0 0.0
  %7806 = vmatprep.subr.mxu0 0.0
  %7807 = vmatpush1.xpose.msra.mxu0 %v7776
  %7808 = vmatprep.subr.mxu0 0.0
  %7809 = vmatpush1.xpose.msra.mxu0 %v7773
  %7810 = vmatprep.subr.mxu0 0.0
  %7811 = vmatpush2.xpose.msra.mxu0 0.0
  %7812 = vmatprep.subr.mxu0 0.0
  %7813 = vmatpush2.xpose.msra.mxu0 0.0
  %7814 = vmatprep.subr.mxu0 0.0
  %7815 = vmatpush2.xpose.msra.mxu0 0.0
  %7816 = vmatprep.subr.mxu0 0.0
  %7817 = vmatpush2.xpose.msra.mxu0 0.0
  %7818 = vmatprep.subr.mxu0 0.0
  %7819 = vmatpush2.xpose.msra.mxu0 0.0
  %7820 = vmatprep.subr.mxu0 0.0
  %7821 = vmatpush2.xpose.msra.mxu0 0.0
  %7822 = vmatprep.subr.mxu0 0.0
  %7823 = vmatpush2.xpose.msra.mxu0 0.0
  %7824 = vmatprep.subr.mxu0 0.0
  %7825 = vmatpush2.xpose.msra.mxu0 0.0
  %7826 = vmatprep.subr.mxu0 0.0
  %7827 = vmatpush2.xpose.msra.mxu0 0.0
  %7828 = vmatprep.subr.mxu0 0.0
  %7829 = vmatpush2.xpose.msra.mxu0 0.0
  %7830 = vmatprep.subr.mxu0 0.0
  %7831 = vmatpush2.xpose.msra.mxu0 0.0
  %7832 = vmatprep.subr.mxu0 0.0
  %7833 = vmatpush2.xpose.msra.mxu0 0.0
  %7834 = vmatprep.subr.mxu0 0.0
  %7835 = vmatpush2.xpose.msra.mxu0 0.0
  %7836 = vmatprep.subr.mxu0 0.0
  %7837 = vmatpush2.xpose.msra.mxu0 0.0
  %7838 = vmatprep.subr.mxu0 0.0
  %7839 = vmatpush2.xpose.msra.mxu0 0.0
  %7840 = vmatprep.subr.mxu0 0.0
  %7841 = vmatpush2.xpose.msra.mxu0 0.0
  %7842 = vmatprep.mubr.f32.mxu0 0.0
  %7843 = vmatmul.mubr.f32.gmra.mxu0 %v7767
  %v7844 = vpop.f32.mrf.mxu0
  %v7845 = vadd.f32 0.0, %v7844
  %v7846 = vpop.f32.mrf.mxu0
  %7847 = vmatprep.mubr.f32.mxu0 0.0
  %7848 = vmatmul.mubr.f32.gmra.mxu0 %v7770
  %v7849 = vpop.f32.mrf.mxu0
  %v7850 = vadd.f32 0.0, %v7849
  %v7851 = vpop.f32.mrf.mxu0
  %7852 = vdwg.mxu0
  %v7854 = vsel %vm367, %v6006, 0
  %v7857 = vsel %vm367, %v6011, 0
  %v7860 = vsel %vm367, %v6675, 0
  %v7863 = vsel %vm367, %v6680, 0
  %7865 = vmatprep.subr.mxu0 0.0
  %7866 = vmatpush1.xpose.msra.mxu0 0.0
  %7867 = vmatprep.subr.mxu0 0.0
  %7868 = vmatpush1.xpose.msra.mxu0 0.0
  %7869 = vmatprep.subr.mxu0 0.0
  %7870 = vmatpush1.xpose.msra.mxu0 0.0
  %7871 = vmatprep.subr.mxu0 0.0
  %7872 = vmatpush1.xpose.msra.mxu0 0.0
  %7873 = vmatprep.subr.mxu0 0.0
  %7874 = vmatpush1.xpose.msra.mxu0 0.0
  %7875 = vmatprep.subr.mxu0 0.0
  %7876 = vmatpush1.xpose.msra.mxu0 0.0
  %7877 = vmatprep.subr.mxu0 0.0
  %7878 = vmatpush1.xpose.msra.mxu0 0.0
  %7879 = vmatprep.subr.mxu0 0.0
  %7880 = vmatpush1.xpose.msra.mxu0 0.0
  %7881 = vmatprep.subr.mxu0 0.0
  %7882 = vmatpush1.xpose.msra.mxu0 0.0
  %7883 = vmatprep.subr.mxu0 0.0
  %7884 = vmatpush1.xpose.msra.mxu0 0.0
  %7885 = vmatprep.subr.mxu0 0.0
  %7886 = vmatpush1.xpose.msra.mxu0 0.0
  %7887 = vmatprep.subr.mxu0 0.0
  %7888 = vmatpush1.xpose.msra.mxu0 0.0
  %7889 = vmatprep.subr.mxu0 0.0
  %7890 = vmatpush1.xpose.msra.mxu0 0.0
  %7891 = vmatprep.subr.mxu0 0.0
  %7892 = vmatpush1.xpose.msra.mxu0 0.0
  %7893 = vmatprep.subr.mxu0 0.0
  %7894 = vmatpush1.xpose.msra.mxu0 %v7863
  %7895 = vmatprep.subr.mxu0 0.0
  %7896 = vmatpush1.xpose.msra.mxu0 %v7860
  %7897 = vmatprep.subr.mxu0 0.0
  %7898 = vmatpush2.xpose.msra.mxu0 0.0
  %7899 = vmatprep.subr.mxu0 0.0
  %7900 = vmatpush2.xpose.msra.mxu0 0.0
  %7901 = vmatprep.subr.mxu0 0.0
  %7902 = vmatpush2.xpose.msra.mxu0 0.0
  %7903 = vmatprep.subr.mxu0 0.0
  %7904 = vmatpush2.xpose.msra.mxu0 0.0
  %7905 = vmatprep.subr.mxu0 0.0
  %7906 = vmatpush2.xpose.msra.mxu0 0.0
  %7907 = vmatprep.subr.mxu0 0.0
  %7908 = vmatpush2.xpose.msra.mxu0 0.0
  %7909 = vmatprep.subr.mxu0 0.0
  %7910 = vmatpush2.xpose.msra.mxu0 0.0
  %7911 = vmatprep.subr.mxu0 0.0
  %7912 = vmatpush2.xpose.msra.mxu0 0.0
  %7913 = vmatprep.subr.mxu0 0.0
  %7914 = vmatpush2.xpose.msra.mxu0 0.0
  %7915 = vmatprep.subr.mxu0 0.0
  %7916 = vmatpush2.xpose.msra.mxu0 0.0
  %7917 = vmatprep.subr.mxu0 0.0
  %7918 = vmatpush2.xpose.msra.mxu0 0.0
  %7919 = vmatprep.subr.mxu0 0.0
  %7920 = vmatpush2.xpose.msra.mxu0 0.0
  %7921 = vmatprep.subr.mxu0 0.0
  %7922 = vmatpush2.xpose.msra.mxu0 0.0
  %7923 = vmatprep.subr.mxu0 0.0
  %7924 = vmatpush2.xpose.msra.mxu0 0.0
  %7925 = vmatprep.subr.mxu0 0.0
  %7926 = vmatpush2.xpose.msra.mxu0 0.0
  %7927 = vmatprep.subr.mxu0 0.0
  %7928 = vmatpush2.xpose.msra.mxu0 0.0
  %7929 = vmatprep.mubr.f32.mxu0 0.0
  %7930 = vmatmul.mubr.f32.gmra.mxu0 %v7854
  %v7931 = vpop.f32.mrf.mxu0
  %v7932 = vadd.f32 0.0, %v7931
  %v7933 = vpop.f32.mrf.mxu0
  %7934 = vmatprep.mubr.f32.mxu0 0.0
  %7935 = vmatmul.mubr.f32.gmra.mxu0 %v7857
  %v7936 = vpop.f32.mrf.mxu0
  %v7937 = vadd.f32 0.0, %v7936
  %v7938 = vpop.f32.mrf.mxu0
  %7939 = vdwg.mxu0
  %v7941 = vsel %vm367, %v6087, 0
  %v7944 = vsel %vm367, %v6092, 0
  %v7947 = vsel %vm367, %v6750, 0
  %v7950 = vsel %vm367, %v6755, 0
  %7952 = vmatprep.subr.mxu0 0.0
  %7953 = vmatpush1.xpose.msra.mxu0 0.0
  %7954 = vmatprep.subr.mxu0 0.0
  %7955 = vmatpush1.xpose.msra.mxu0 0.0
  %7956 = vmatprep.subr.mxu0 0.0
  %7957 = vmatpush1.xpose.msra.mxu0 0.0
  %7958 = vmatprep.subr.mxu0 0.0
  %7959 = vmatpush1.xpose.msra.mxu0 0.0
  %7960 = vmatprep.subr.mxu0 0.0
  %7961 = vmatpush1.xpose.msra.mxu0 0.0
  %7962 = vmatprep.subr.mxu0 0.0
  %7963 = vmatpush1.xpose.msra.mxu0 0.0
  %7964 = vmatprep.subr.mxu0 0.0
  %7965 = vmatpush1.xpose.msra.mxu0 0.0
  %7966 = vmatprep.subr.mxu0 0.0
  %7967 = vmatpush1.xpose.msra.mxu0 0.0
  %7968 = vmatprep.subr.mxu0 0.0
  %7969 = vmatpush1.xpose.msra.mxu0 0.0
  %7970 = vmatprep.subr.mxu0 0.0
  %7971 = vmatpush1.xpose.msra.mxu0 0.0
  %7972 = vmatprep.subr.mxu0 0.0
  %7973 = vmatpush1.xpose.msra.mxu0 0.0
  %7974 = vmatprep.subr.mxu0 0.0
  %7975 = vmatpush1.xpose.msra.mxu0 0.0
  %7976 = vmatprep.subr.mxu0 0.0
  %7977 = vmatpush1.xpose.msra.mxu0 0.0
  %7978 = vmatprep.subr.mxu0 0.0
  %7979 = vmatpush1.xpose.msra.mxu0 0.0
  %7980 = vmatprep.subr.mxu0 0.0
  %7981 = vmatpush1.xpose.msra.mxu0 %v7950
  %7982 = vmatprep.subr.mxu0 0.0
  %7983 = vmatpush1.xpose.msra.mxu0 %v7947
  %7984 = vmatprep.subr.mxu0 0.0
  %7985 = vmatpush2.xpose.msra.mxu0 0.0
  %7986 = vmatprep.subr.mxu0 0.0
  %7987 = vmatpush2.xpose.msra.mxu0 0.0
  %7988 = vmatprep.subr.mxu0 0.0
  %7989 = vmatpush2.xpose.msra.mxu0 0.0
  %7990 = vmatprep.subr.mxu0 0.0
  %7991 = vmatpush2.xpose.msra.mxu0 0.0
  %7992 = vmatprep.subr.mxu0 0.0
  %7993 = vmatpush2.xpose.msra.mxu0 0.0
  %7994 = vmatprep.subr.mxu0 0.0
  %7995 = vmatpush2.xpose.msra.mxu0 0.0
  %7996 = vmatprep.subr.mxu0 0.0
  %7997 = vmatpush2.xpose.msra.mxu0 0.0
  %7998 = vmatprep.subr.mxu0 0.0
  %7999 = vmatpush2.xpose.msra.mxu0 0.0
  %8000 = vmatprep.subr.mxu0 0.0
  %8001 = vmatpush2.xpose.msra.mxu0 0.0
  %8002 = vmatprep.subr.mxu0 0.0
  %8003 = vmatpush2.xpose.msra.mxu0 0.0
  %8004 = vmatprep.subr.mxu0 0.0
  %8005 = vmatpush2.xpose.msra.mxu0 0.0
  %8006 = vmatprep.subr.mxu0 0.0
  %8007 = vmatpush2.xpose.msra.mxu0 0.0
  %8008 = vmatprep.subr.mxu0 0.0
  %8009 = vmatpush2.xpose.msra.mxu0 0.0
  %8010 = vmatprep.subr.mxu0 0.0
  %8011 = vmatpush2.xpose.msra.mxu0 0.0
  %8012 = vmatprep.subr.mxu0 0.0
  %8013 = vmatpush2.xpose.msra.mxu0 0.0
  %8014 = vmatprep.subr.mxu0 0.0
  %8015 = vmatpush2.xpose.msra.mxu0 0.0
  %8016 = vmatprep.mubr.f32.mxu0 0.0
  %8017 = vmatmul.mubr.f32.gmra.mxu0 %v7941
  %v8018 = vpop.f32.mrf.mxu0
  %v8019 = vadd.f32 0.0, %v8018
  %v8020 = vpop.f32.mrf.mxu0
  %8021 = vmatprep.mubr.f32.mxu0 0.0
  %8022 = vmatmul.mubr.f32.gmra.mxu0 %v7944
  %v8023 = vpop.f32.mrf.mxu0
  %v8024 = vadd.f32 0.0, %v8023
  %v8025 = vpop.f32.mrf.mxu0
  %8026 = vdwg.mxu0
  %v8028 = vsel %vm367, %v6168, 0
  %v8031 = vsel %vm367, %v6173, 0
  %v8034 = vsel %vm367, %v6825, 0
  %v8037 = vsel %vm367, %v6830, 0
  %8039 = vmatprep.subr.mxu0 0.0
  %8040 = vmatpush1.xpose.msra.mxu0 0.0
  %8041 = vmatprep.subr.mxu0 0.0
  %8042 = vmatpush1.xpose.msra.mxu0 0.0
  %8043 = vmatprep.subr.mxu0 0.0
  %8044 = vmatpush1.xpose.msra.mxu0 0.0
  %8045 = vmatprep.subr.mxu0 0.0
  %8046 = vmatpush1.xpose.msra.mxu0 0.0
  %8047 = vmatprep.subr.mxu0 0.0
  %8048 = vmatpush1.xpose.msra.mxu0 0.0
  %8049 = vmatprep.subr.mxu0 0.0
  %8050 = vmatpush1.xpose.msra.mxu0 0.0
  %8051 = vmatprep.subr.mxu0 0.0
  %8052 = vmatpush1.xpose.msra.mxu0 0.0
  %8053 = vmatprep.subr.mxu0 0.0
  %8054 = vmatpush1.xpose.msra.mxu0 0.0
  %8055 = vmatprep.subr.mxu0 0.0
  %8056 = vmatpush1.xpose.msra.mxu0 0.0
  %8057 = vmatprep.subr.mxu0 0.0
  %8058 = vmatpush1.xpose.msra.mxu0 0.0
  %8059 = vmatprep.subr.mxu0 0.0
  %8060 = vmatpush1.xpose.msra.mxu0 0.0
  %8061 = vmatprep.subr.mxu0 0.0
  %8062 = vmatpush1.xpose.msra.mxu0 0.0
  %8063 = vmatprep.subr.mxu0 0.0
  %8064 = vmatpush1.xpose.msra.mxu0 0.0
  %8065 = vmatprep.subr.mxu0 0.0
  %8066 = vmatpush1.xpose.msra.mxu0 0.0
  %8067 = vmatprep.subr.mxu0 0.0
  %8068 = vmatpush1.xpose.msra.mxu0 %v8037
  %8069 = vmatprep.subr.mxu0 0.0
  %8070 = vmatpush1.xpose.msra.mxu0 %v8034
  %8071 = vmatprep.subr.mxu0 0.0
  %8072 = vmatpush2.xpose.msra.mxu0 0.0
  %8073 = vmatprep.subr.mxu0 0.0
  %8074 = vmatpush2.xpose.msra.mxu0 0.0
  %8075 = vmatprep.subr.mxu0 0.0
  %8076 = vmatpush2.xpose.msra.mxu0 0.0
  %8077 = vmatprep.subr.mxu0 0.0
  %8078 = vmatpush2.xpose.msra.mxu0 0.0
  %8079 = vmatprep.subr.mxu0 0.0
  %8080 = vmatpush2.xpose.msra.mxu0 0.0
  %8081 = vmatprep.subr.mxu0 0.0
  %8082 = vmatpush2.xpose.msra.mxu0 0.0
  %8083 = vmatprep.subr.mxu0 0.0
  %8084 = vmatpush2.xpose.msra.mxu0 0.0
  %8085 = vmatprep.subr.mxu0 0.0
  %8086 = vmatpush2.xpose.msra.mxu0 0.0
  %8087 = vmatprep.subr.mxu0 0.0
  %8088 = vmatpush2.xpose.msra.mxu0 0.0
  %8089 = vmatprep.subr.mxu0 0.0
  %8090 = vmatpush2.xpose.msra.mxu0 0.0
  %8091 = vmatprep.subr.mxu0 0.0
  %8092 = vmatpush2.xpose.msra.mxu0 0.0
  %8093 = vmatprep.subr.mxu0 0.0
  %8094 = vmatpush2.xpose.msra.mxu0 0.0
  %8095 = vmatprep.subr.mxu0 0.0
  %8096 = vmatpush2.xpose.msra.mxu0 0.0
  %8097 = vmatprep.subr.mxu0 0.0
  %8098 = vmatpush2.xpose.msra.mxu0 0.0
  %8099 = vmatprep.subr.mxu0 0.0
  %8100 = vmatpush2.xpose.msra.mxu0 0.0
  %8101 = vmatprep.subr.mxu0 0.0
  %8102 = vmatpush2.xpose.msra.mxu0 0.0
  %8103 = vmatprep.mubr.f32.mxu0 0.0
  %8104 = vmatmul.mubr.f32.gmra.mxu0 %v8028
  %v8105 = vpop.f32.mrf.mxu0
  %v8106 = vadd.f32 0.0, %v8105
  %v8107 = vpop.f32.mrf.mxu0
  %8108 = vmatprep.mubr.f32.mxu0 0.0
  %8109 = vmatmul.mubr.f32.gmra.mxu0 %v8031
  %v8110 = vpop.f32.mrf.mxu0
  %v8111 = vadd.f32 0.0, %v8110
  %v8112 = vpop.f32.mrf.mxu0
  %8113 = vdwg.mxu0
  %v8115 = vsel %vm367, %v6249, 0
  %v8118 = vsel %vm367, %v6254, 0
  %v8121 = vsel %vm367, %v6900, 0
  %v8124 = vsel %vm367, %v6905, 0
  %8126 = vmatprep.subr.mxu0 0.0
  %8127 = vmatpush1.xpose.msra.mxu0 0.0
  %8128 = vmatprep.subr.mxu0 0.0
  %8129 = vmatpush1.xpose.msra.mxu0 0.0
  %8130 = vmatprep.subr.mxu0 0.0
  %8131 = vmatpush1.xpose.msra.mxu0 0.0
  %8132 = vmatprep.subr.mxu0 0.0
  %8133 = vmatpush1.xpose.msra.mxu0 0.0
  %8134 = vmatprep.subr.mxu0 0.0
  %8135 = vmatpush1.xpose.msra.mxu0 0.0
  %8136 = vmatprep.subr.mxu0 0.0
  %8137 = vmatpush1.xpose.msra.mxu0 0.0
  %8138 = vmatprep.subr.mxu0 0.0
  %8139 = vmatpush1.xpose.msra.mxu0 0.0
  %8140 = vmatprep.subr.mxu0 0.0
  %8141 = vmatpush1.xpose.msra.mxu0 0.0
  %8142 = vmatprep.subr.mxu0 0.0
  %8143 = vmatpush1.xpose.msra.mxu0 0.0
  %8144 = vmatprep.subr.mxu0 0.0
  %8145 = vmatpush1.xpose.msra.mxu0 0.0
  %8146 = vmatprep.subr.mxu0 0.0
  %8147 = vmatpush1.xpose.msra.mxu0 0.0
  %8148 = vmatprep.subr.mxu0 0.0
  %8149 = vmatpush1.xpose.msra.mxu0 0.0
  %8150 = vmatprep.subr.mxu0 0.0
  %8151 = vmatpush1.xpose.msra.mxu0 0.0
  %8152 = vmatprep.subr.mxu0 0.0
  %8153 = vmatpush1.xpose.msra.mxu0 0.0
  %8154 = vmatprep.subr.mxu0 0.0
  %8155 = vmatpush1.xpose.msra.mxu0 %v8124
  %8156 = vmatprep.subr.mxu0 0.0
  %8157 = vmatpush1.xpose.msra.mxu0 %v8121
  %8158 = vmatprep.subr.mxu0 0.0
  %8159 = vmatpush2.xpose.msra.mxu0 0.0
  %8160 = vmatprep.subr.mxu0 0.0
  %8161 = vmatpush2.xpose.msra.mxu0 0.0
  %8162 = vmatprep.subr.mxu0 0.0
  %8163 = vmatpush2.xpose.msra.mxu0 0.0
  %8164 = vmatprep.subr.mxu0 0.0
  %8165 = vmatpush2.xpose.msra.mxu0 0.0
  %8166 = vmatprep.subr.mxu0 0.0
  %8167 = vmatpush2.xpose.msra.mxu0 0.0
  %8168 = vmatprep.subr.mxu0 0.0
  %8169 = vmatpush2.xpose.msra.mxu0 0.0
  %8170 = vmatprep.subr.mxu0 0.0
  %8171 = vmatpush2.xpose.msra.mxu0 0.0
  %8172 = vmatprep.subr.mxu0 0.0
  %8173 = vmatpush2.xpose.msra.mxu0 0.0
  %8174 = vmatprep.subr.mxu0 0.0
  %8175 = vmatpush2.xpose.msra.mxu0 0.0
  %8176 = vmatprep.subr.mxu0 0.0
  %8177 = vmatpush2.xpose.msra.mxu0 0.0
  %8178 = vmatprep.subr.mxu0 0.0
  %8179 = vmatpush2.xpose.msra.mxu0 0.0
  %8180 = vmatprep.subr.mxu0 0.0
  %8181 = vmatpush2.xpose.msra.mxu0 0.0
  %8182 = vmatprep.subr.mxu0 0.0
  %8183 = vmatpush2.xpose.msra.mxu0 0.0
  %8184 = vmatprep.subr.mxu0 0.0
  %8185 = vmatpush2.xpose.msra.mxu0 0.0
  %8186 = vmatprep.subr.mxu0 0.0
  %8187 = vmatpush2.xpose.msra.mxu0 0.0
  %8188 = vmatprep.subr.mxu0 0.0
  %8189 = vmatpush2.xpose.msra.mxu0 0.0
  %8190 = vmatprep.mubr.f32.mxu0 0.0
  %8191 = vmatmul.mubr.f32.gmra.mxu0 %v8115
  %v8192 = vpop.f32.mrf.mxu0
  %v8193 = vadd.f32 0.0, %v8192
  %v8194 = vpop.f32.mrf.mxu0
  %8195 = vmatprep.mubr.f32.mxu0 0.0
  %8196 = vmatmul.mubr.f32.gmra.mxu0 %v8118
  %v8197 = vpop.f32.mrf.mxu0
  %v8198 = vadd.f32 0.0, %v8197
  %v8199 = vpop.f32.mrf.mxu0
  %8200 = vdwg.mxu0
  %v8202 = vsel %vm367, %v6330, 0
  %v8205 = vsel %vm367, %v6335, 0
  %v8208 = vsel %vm367, %v6975, 0
  %v8211 = vsel %vm367, %v6980, 0
  %8213 = vmatprep.subr.mxu0 0.0
  %8214 = vmatpush1.xpose.msra.mxu0 0.0
  %8215 = vmatprep.subr.mxu0 0.0
  %8216 = vmatpush1.xpose.msra.mxu0 0.0
  %8217 = vmatprep.subr.mxu0 0.0
  %8218 = vmatpush1.xpose.msra.mxu0 0.0
  %8219 = vmatprep.subr.mxu0 0.0
  %8220 = vmatpush1.xpose.msra.mxu0 0.0
  %8221 = vmatprep.subr.mxu0 0.0
  %8222 = vmatpush1.xpose.msra.mxu0 0.0
  %8223 = vmatprep.subr.mxu0 0.0
  %8224 = vmatpush1.xpose.msra.mxu0 0.0
  %8225 = vmatprep.subr.mxu0 0.0
  %8226 = vmatpush1.xpose.msra.mxu0 0.0
  %8227 = vmatprep.subr.mxu0 0.0
  %8228 = vmatpush1.xpose.msra.mxu0 0.0
  %8229 = vmatprep.subr.mxu0 0.0
  %8230 = vmatpush1.xpose.msra.mxu0 0.0
  %8231 = vmatprep.subr.mxu0 0.0
  %8232 = vmatpush1.xpose.msra.mxu0 0.0
  %8233 = vmatprep.subr.mxu0 0.0
  %8234 = vmatpush1.xpose.msra.mxu0 0.0
  %8235 = vmatprep.subr.mxu0 0.0
  %8236 = vmatpush1.xpose.msra.mxu0 0.0
  %8237 = vmatprep.subr.mxu0 0.0
  %8238 = vmatpush1.xpose.msra.mxu0 0.0
  %8239 = vmatprep.subr.mxu0 0.0
  %8240 = vmatpush1.xpose.msra.mxu0 0.0
  %8241 = vmatprep.subr.mxu0 0.0
  %8242 = vmatpush1.xpose.msra.mxu0 %v8211
  %8243 = vmatprep.subr.mxu0 0.0
  %8244 = vmatpush1.xpose.msra.mxu0 %v8208
  %8245 = vmatprep.subr.mxu0 0.0
  %8246 = vmatpush2.xpose.msra.mxu0 0.0
  %8247 = vmatprep.subr.mxu0 0.0
  %8248 = vmatpush2.xpose.msra.mxu0 0.0
  %8249 = vmatprep.subr.mxu0 0.0
  %8250 = vmatpush2.xpose.msra.mxu0 0.0
  %8251 = vmatprep.subr.mxu0 0.0
  %8252 = vmatpush2.xpose.msra.mxu0 0.0
  %8253 = vmatprep.subr.mxu0 0.0
  %8254 = vmatpush2.xpose.msra.mxu0 0.0
  %8255 = vmatprep.subr.mxu0 0.0
  %8256 = vmatpush2.xpose.msra.mxu0 0.0
  %8257 = vmatprep.subr.mxu0 0.0
  %8258 = vmatpush2.xpose.msra.mxu0 0.0
  %8259 = vmatprep.subr.mxu0 0.0
  %8260 = vmatpush2.xpose.msra.mxu0 0.0
  %8261 = vmatprep.subr.mxu0 0.0
  %8262 = vmatpush2.xpose.msra.mxu0 0.0
  %8263 = vmatprep.subr.mxu0 0.0
  %8264 = vmatpush2.xpose.msra.mxu0 0.0
  %8265 = vmatprep.subr.mxu0 0.0
  %8266 = vmatpush2.xpose.msra.mxu0 0.0
  %8267 = vmatprep.subr.mxu0 0.0
  %8268 = vmatpush2.xpose.msra.mxu0 0.0
  %8269 = vmatprep.subr.mxu0 0.0
  %8270 = vmatpush2.xpose.msra.mxu0 0.0
  %8271 = vmatprep.subr.mxu0 0.0
  %8272 = vmatpush2.xpose.msra.mxu0 0.0
  %8273 = vmatprep.subr.mxu0 0.0
  %8274 = vmatpush2.xpose.msra.mxu0 0.0
  %8275 = vmatprep.subr.mxu0 0.0
  %8276 = vmatpush2.xpose.msra.mxu0 0.0
  %8277 = vmatprep.mubr.f32.mxu0 0.0
  %8278 = vmatmul.mubr.f32.gmra.mxu0 %v8202
  %v8279 = vpop.f32.mrf.mxu0
  %v8280 = vadd.f32 0.0, %v8279
  %v8281 = vpop.f32.mrf.mxu0
  %8282 = vmatprep.mubr.f32.mxu0 0.0
  %8283 = vmatmul.mubr.f32.gmra.mxu0 %v8205
  %v8284 = vpop.f32.mrf.mxu0
  %v8285 = vadd.f32 0.0, %v8284
  %v8286 = vpop.f32.mrf.mxu0
  %8287 = vdwg.mxu0
  %v8289 = vsel %vm367, %v6411, 0
  %v8292 = vsel %vm367, %v6416, 0
  %v8295 = vsel %vm367, %v7050, 0
  %v8298 = vsel %vm367, %v7055, 0
  %8300 = vmatprep.subr.mxu0 0.0
  %8301 = vmatpush1.xpose.msra.mxu0 0.0
  %8302 = vmatprep.subr.mxu0 0.0
  %8303 = vmatpush1.xpose.msra.mxu0 0.0
  %8304 = vmatprep.subr.mxu0 0.0
  %8305 = vmatpush1.xpose.msra.mxu0 0.0
  %8306 = vmatprep.subr.mxu0 0.0
  %8307 = vmatpush1.xpose.msra.mxu0 0.0
  %8308 = vmatprep.subr.mxu0 0.0
  %8309 = vmatpush1.xpose.msra.mxu0 0.0
  %8310 = vmatprep.subr.mxu0 0.0
  %8311 = vmatpush1.xpose.msra.mxu0 0.0
  %8312 = vmatprep.subr.mxu0 0.0
  %8313 = vmatpush1.xpose.msra.mxu0 0.0
  %8314 = vmatprep.subr.mxu0 0.0
  %8315 = vmatpush1.xpose.msra.mxu0 0.0
  %8316 = vmatprep.subr.mxu0 0.0
  %8317 = vmatpush1.xpose.msra.mxu0 0.0
  %8318 = vmatprep.subr.mxu0 0.0
  %8319 = vmatpush1.xpose.msra.mxu0 0.0
  %8320 = vmatprep.subr.mxu0 0.0
  %8321 = vmatpush1.xpose.msra.mxu0 0.0
  %8322 = vmatprep.subr.mxu0 0.0
  %8323 = vmatpush1.xpose.msra.mxu0 0.0
  %8324 = vmatprep.subr.mxu0 0.0
  %8325 = vmatpush1.xpose.msra.mxu0 0.0
  %8326 = vmatprep.subr.mxu0 0.0
  %8327 = vmatpush1.xpose.msra.mxu0 0.0
  %8328 = vmatprep.subr.mxu0 0.0
  %8329 = vmatpush1.xpose.msra.mxu0 %v8298
  %8330 = vmatprep.subr.mxu0 0.0
  %8331 = vmatpush1.xpose.msra.mxu0 %v8295
  %8332 = vmatprep.subr.mxu0 0.0
  %8333 = vmatpush2.xpose.msra.mxu0 0.0
  %8334 = vmatprep.subr.mxu0 0.0
  %8335 = vmatpush2.xpose.msra.mxu0 0.0
  %8336 = vmatprep.subr.mxu0 0.0
  %8337 = vmatpush2.xpose.msra.mxu0 0.0
  %8338 = vmatprep.subr.mxu0 0.0
  %8339 = vmatpush2.xpose.msra.mxu0 0.0
  %8340 = vmatprep.subr.mxu0 0.0
  %8341 = vmatpush2.xpose.msra.mxu0 0.0
  %8342 = vmatprep.subr.mxu0 0.0
  %8343 = vmatpush2.xpose.msra.mxu0 0.0
  %8344 = vmatprep.subr.mxu0 0.0
  %8345 = vmatpush2.xpose.msra.mxu0 0.0
  %8346 = vmatprep.subr.mxu0 0.0
  %8347 = vmatpush2.xpose.msra.mxu0 0.0
  %8348 = vmatprep.subr.mxu0 0.0
  %8349 = vmatpush2.xpose.msra.mxu0 0.0
  %8350 = vmatprep.subr.mxu0 0.0
  %8351 = vmatpush2.xpose.msra.mxu0 0.0
  %8352 = vmatprep.subr.mxu0 0.0
  %8353 = vmatpush2.xpose.msra.mxu0 0.0
  %8354 = vmatprep.subr.mxu0 0.0
  %8355 = vmatpush2.xpose.msra.mxu0 0.0
  %8356 = vmatprep.subr.mxu0 0.0
  %8357 = vmatpush2.xpose.msra.mxu0 0.0
  %8358 = vmatprep.subr.mxu0 0.0
  %8359 = vmatpush2.xpose.msra.mxu0 0.0
  %8360 = vmatprep.subr.mxu0 0.0
  %8361 = vmatpush2.xpose.msra.mxu0 0.0
  %8362 = vmatprep.subr.mxu0 0.0
  %8363 = vmatpush2.xpose.msra.mxu0 0.0
  %8364 = vmatprep.mubr.f32.mxu0 0.0
  %8365 = vmatmul.mubr.f32.gmra.mxu0 %v8289
  %v8366 = vpop.f32.mrf.mxu0
  %v8367 = vadd.f32 0.0, %v8366
  %v8368 = vpop.f32.mrf.mxu0
  %8369 = vmatprep.mubr.f32.mxu0 0.0
  %8370 = vmatmul.mubr.f32.gmra.mxu0 %v8292
  %v8371 = vpop.f32.mrf.mxu0
  %v8372 = vadd.f32 0.0, %v8371
  %v8373 = vpop.f32.mrf.mxu0
  %8374 = vdwg.mxu0
  %v8376 = vsel %vm367, %v6492, 0
  %v8379 = vsel %vm367, %v6497, 0
  %v8382 = vsel %vm367, %v7125, 0
  %v8385 = vsel %vm367, %v7130, 0
  %8387 = vmatprep.subr.mxu0 0.0
  %8388 = vmatpush1.xpose.msra.mxu0 0.0
  %8389 = vmatprep.subr.mxu0 0.0
  %8390 = vmatpush1.xpose.msra.mxu0 0.0
  %8391 = vmatprep.subr.mxu0 0.0
  %8392 = vmatpush1.xpose.msra.mxu0 0.0
  %8393 = vmatprep.subr.mxu0 0.0
  %8394 = vmatpush1.xpose.msra.mxu0 0.0
  %8395 = vmatprep.subr.mxu0 0.0
  %8396 = vmatpush1.xpose.msra.mxu0 0.0
  %8397 = vmatprep.subr.mxu0 0.0
  %8398 = vmatpush1.xpose.msra.mxu0 0.0
  %8399 = vmatprep.subr.mxu0 0.0
  %8400 = vmatpush1.xpose.msra.mxu0 0.0
  %8401 = vmatprep.subr.mxu0 0.0
  %8402 = vmatpush1.xpose.msra.mxu0 0.0
  %8403 = vmatprep.subr.mxu0 0.0
  %8404 = vmatpush1.xpose.msra.mxu0 0.0
  %8405 = vmatprep.subr.mxu0 0.0
  %8406 = vmatpush1.xpose.msra.mxu0 0.0
  %8407 = vmatprep.subr.mxu0 0.0
  %8408 = vmatpush1.xpose.msra.mxu0 0.0
  %8409 = vmatprep.subr.mxu0 0.0
  %8410 = vmatpush1.xpose.msra.mxu0 0.0
  %8411 = vmatprep.subr.mxu0 0.0
  %8412 = vmatpush1.xpose.msra.mxu0 0.0
  %8413 = vmatprep.subr.mxu0 0.0
  %8414 = vmatpush1.xpose.msra.mxu0 0.0
  %8415 = vmatprep.subr.mxu0 0.0
  %8416 = vmatpush1.xpose.msra.mxu0 %v8385
  %8417 = vmatprep.subr.mxu0 0.0
  %8418 = vmatpush1.xpose.msra.mxu0 %v8382
  %8419 = vmatprep.subr.mxu0 0.0
  %8420 = vmatpush2.xpose.msra.mxu0 0.0
  %8421 = vmatprep.subr.mxu0 0.0
  %8422 = vmatpush2.xpose.msra.mxu0 0.0
  %8423 = vmatprep.subr.mxu0 0.0
  %8424 = vmatpush2.xpose.msra.mxu0 0.0
  %8425 = vmatprep.subr.mxu0 0.0
  %8426 = vmatpush2.xpose.msra.mxu0 0.0
  %8427 = vmatprep.subr.mxu0 0.0
  %8428 = vmatpush2.xpose.msra.mxu0 0.0
  %8429 = vmatprep.subr.mxu0 0.0
  %8430 = vmatpush2.xpose.msra.mxu0 0.0
  %8431 = vmatprep.subr.mxu0 0.0
  %8432 = vmatpush2.xpose.msra.mxu0 0.0
  %8433 = vmatprep.subr.mxu0 0.0
  %8434 = vmatpush2.xpose.msra.mxu0 0.0
  %8435 = vmatprep.subr.mxu0 0.0
  %8436 = vmatpush2.xpose.msra.mxu0 0.0
  %8437 = vmatprep.subr.mxu0 0.0
  %8438 = vmatpush2.xpose.msra.mxu0 0.0
  %8439 = vmatprep.subr.mxu0 0.0
  %8440 = vmatpush2.xpose.msra.mxu0 0.0
  %8441 = vmatprep.subr.mxu0 0.0
  %8442 = vmatpush2.xpose.msra.mxu0 0.0
  %8443 = vmatprep.subr.mxu0 0.0
  %8444 = vmatpush2.xpose.msra.mxu0 0.0
  %8445 = vmatprep.subr.mxu0 0.0
  %8446 = vmatpush2.xpose.msra.mxu0 0.0
  %8447 = vmatprep.subr.mxu0 0.0
  %8448 = vmatpush2.xpose.msra.mxu0 0.0
  %8449 = vmatprep.subr.mxu0 0.0
  %8450 = vmatpush2.xpose.msra.mxu0 0.0
  %8451 = vmatprep.mubr.f32.mxu0 0.0
  %8452 = vmatmul.mubr.f32.gmra.mxu0 %v8376
  %v8453 = vpop.f32.mrf.mxu0
  %v8454 = vadd.f32 0.0, %v8453
  %v8455 = vpop.f32.mrf.mxu0
  %8456 = vmatprep.mubr.f32.mxu0 0.0
  %8457 = vmatmul.mubr.f32.gmra.mxu0 %v8379
  %v8458 = vpop.f32.mrf.mxu0
  %v8459 = vadd.f32 0.0, %v8458
  %v8460 = vpop.f32.mrf.mxu0
  %8461 = vdwg.mxu0
  %v8462 = vsel %vm4652, %v7845, -inf
  %8463 = vmax.xlane.f32.xlu0 %v8462
  %v8464 = vpop.xlane.xlu0 %8463
  %v8465 = vsel %vm4656, %v7850, -inf
  %8466 = vmax.xlane.f32.xlu0 %v8465
  %v8467 = vpop.xlane.xlu0 %8466
  %v8468 = vsel %vm4652, %v7932, -inf
  %8469 = vmax.xlane.f32.xlu0 %v8468
  %v8470 = vpop.xlane.xlu0 %8469
  %v8471 = vsel %vm4656, %v7937, -inf
  %8472 = vmax.xlane.f32.xlu0 %v8471
  %v8473 = vpop.xlane.xlu0 %8472
  %v8474 = vsel %vm4652, %v8019, -inf
  %8475 = vmax.xlane.f32.xlu0 %v8474
  %v8476 = vpop.xlane.xlu0 %8475
  %v8477 = vsel %vm4656, %v8024, -inf
  %8478 = vmax.xlane.f32.xlu0 %v8477
  %v8479 = vpop.xlane.xlu0 %8478
  %v8480 = vsel %vm4652, %v8106, -inf
  %8481 = vmax.xlane.f32.xlu0 %v8480
  %v8482 = vpop.xlane.xlu0 %8481
  %v8483 = vsel %vm4656, %v8111, -inf
  %8484 = vmax.xlane.f32.xlu0 %v8483
  %v8485 = vpop.xlane.xlu0 %8484
  %v8486 = vsel %vm4652, %v8193, -inf
  %8487 = vmax.xlane.f32.xlu0 %v8486
  %v8488 = vpop.xlane.xlu0 %8487
  %v8489 = vsel %vm4656, %v8198, -inf
  %8490 = vmax.xlane.f32.xlu0 %v8489
  %v8491 = vpop.xlane.xlu0 %8490
  %v8492 = vsel %vm4652, %v8280, -inf
  %8493 = vmax.xlane.f32.xlu0 %v8492
  %v8494 = vpop.xlane.xlu0 %8493
  %v8495 = vsel %vm4656, %v8285, -inf
  %8496 = vmax.xlane.f32.xlu0 %v8495
  %v8497 = vpop.xlane.xlu0 %8496
  %v8498 = vsel %vm4652, %v8367, -inf
  %8499 = vmax.xlane.f32.xlu0 %v8498
  %v8500 = vpop.xlane.xlu0 %8499
  %v8501 = vsel %vm4656, %v8372, -inf
  %8502 = vmax.xlane.f32.xlu0 %v8501
  %v8503 = vpop.xlane.xlu0 %8502
  %v8504 = vsel %vm4652, %v8454, -inf
  %8505 = vmax.xlane.f32.xlu0 %v8504
  %v8506 = vpop.xlane.xlu0 %8505
  %v8507 = vsel %vm4656, %v8459, -inf
  %8508 = vmax.xlane.f32.xlu0 %v8507
  %v8509 = vpop.xlane.xlu0 %8508
  %v8510 = vsub.f32 %v7845, %v8464
  %v8511 = vsub.f32 %v7850, %v8467
  %v8512 = vsub.f32 %v7932, %v8470
  %v8513 = vsub.f32 %v7937, %v8473
  %v8514 = vsub.f32 %v8019, %v8476
  %v8515 = vsub.f32 %v8024, %v8479
  %v8516 = vsub.f32 %v8106, %v8482
  %v8517 = vsub.f32 %v8111, %v8485
  %v8518 = vsub.f32 %v8193, %v8488
  %v8519 = vsub.f32 %v8198, %v8491
  %v8520 = vsub.f32 %v8280, %v8494
  %v8521 = vsub.f32 %v8285, %v8497
  %v8522 = vsub.f32 %v8367, %v8500
  %v8523 = vsub.f32 %v8372, %v8503
  %v8524 = vsub.f32 %v8454, %v8506
  %v8525 = vsub.f32 %v8459, %v8509
  %v8526 = vmul.f32 %v8510, 1.442695
  %v8527 = vpow.pop %v8526
  %v8528 = vmul.f32 %v8511, 1.442695
  %v8529 = vpow.pop %v8528
  %v8530 = vmul.f32 %v8512, 1.442695
  %v8531 = vpow.pop %v8530
  %v8532 = vmul.f32 %v8513, 1.442695
  %v8533 = vpow.pop %v8532
  %v8534 = vmul.f32 %v8514, 1.442695
  %v8535 = vpow.pop %v8534
  %v8536 = vmul.f32 %v8515, 1.442695
  %v8537 = vpow.pop %v8536
  %v8538 = vmul.f32 %v8516, 1.442695
  %v8539 = vpow.pop %v8538
  %v8540 = vmul.f32 %v8517, 1.442695
  %v8541 = vpow.pop %v8540
  %v8542 = vmul.f32 %v8518, 1.442695
  %v8543 = vpow.pop %v8542
  %v8544 = vmul.f32 %v8519, 1.442695
  %v8545 = vpow.pop %v8544
  %v8546 = vmul.f32 %v8520, 1.442695
  %v8547 = vpow.pop %v8546
  %v8548 = vmul.f32 %v8521, 1.442695
  %v8549 = vpow.pop %v8548
  %v8550 = vmul.f32 %v8522, 1.442695
  %v8551 = vpow.pop %v8550
  %v8552 = vmul.f32 %v8523, 1.442695
  %v8553 = vpow.pop %v8552
  %v8554 = vmul.f32 %v8524, 1.442695
  %v8555 = vpow.pop %v8554
  %v8556 = vmul.f32 %v8525, 1.442695
  %v8557 = vpow.pop %v8556
  %v8558 = vsel %vm4652, %v8527, 0.0
  %8559 = vadd.xlane.f32.xlu0 %v8558
  %v8560 = vpop.xlane.xlu0 %8559
  %v8561 = vsel %vm4656, %v8529, 0.0
  %8562 = vadd.xlane.f32.xlu0 %v8561
  %v8563 = vpop.xlane.xlu0 %8562
  %v8564 = vsel %vm4652, %v8531, 0.0
  %8565 = vadd.xlane.f32.xlu0 %v8564
  %v8566 = vpop.xlane.xlu0 %8565
  %v8567 = vsel %vm4656, %v8533, 0.0
  %8568 = vadd.xlane.f32.xlu0 %v8567
  %v8569 = vpop.xlane.xlu0 %8568
  %v8570 = vsel %vm4652, %v8535, 0.0
  %8571 = vadd.xlane.f32.xlu0 %v8570
  %v8572 = vpop.xlane.xlu0 %8571
  %v8573 = vsel %vm4656, %v8537, 0.0
  %8574 = vadd.xlane.f32.xlu0 %v8573
  %v8575 = vpop.xlane.xlu0 %8574
  %v8576 = vsel %vm4652, %v8539, 0.0
  %8577 = vadd.xlane.f32.xlu0 %v8576
  %v8578 = vpop.xlane.xlu0 %8577
  %v8579 = vsel %vm4656, %v8541, 0.0
  %8580 = vadd.xlane.f32.xlu0 %v8579
  %v8581 = vpop.xlane.xlu0 %8580
  %v8582 = vsel %vm4652, %v8543, 0.0
  %8583 = vadd.xlane.f32.xlu0 %v8582
  %v8584 = vpop.xlane.xlu0 %8583
  %v8585 = vsel %vm4656, %v8545, 0.0
  %8586 = vadd.xlane.f32.xlu0 %v8585
  %v8587 = vpop.xlane.xlu0 %8586
  %v8588 = vsel %vm4652, %v8547, 0.0
  %8589 = vadd.xlane.f32.xlu0 %v8588
  %v8590 = vpop.xlane.xlu0 %8589
  %v8591 = vsel %vm4656, %v8549, 0.0
  %8592 = vadd.xlane.f32.xlu0 %v8591
  %v8593 = vpop.xlane.xlu0 %8592
  %v8594 = vsel %vm4652, %v8551, 0.0
  %8595 = vadd.xlane.f32.xlu0 %v8594
  %v8596 = vpop.xlane.xlu0 %8595
  %v8597 = vsel %vm4656, %v8553, 0.0
  %8598 = vadd.xlane.f32.xlu0 %v8597
  %v8599 = vpop.xlane.xlu0 %8598
  %v8600 = vsel %vm4652, %v8555, 0.0
  %8601 = vadd.xlane.f32.xlu0 %v8600
  %v8602 = vpop.xlane.xlu0 %8601
  %v8603 = vsel %vm4656, %v8557, 0.0
  %8604 = vadd.xlane.f32.xlu0 %v8603
  %v8605 = vpop.xlane.xlu0 %8604
  %v8606 = vrcp.pop %v8560
  %v8607 = vrcp.pop %v8563
  %v8608 = vrcp.pop %v8566
  %v8609 = vrcp.pop %v8569
  %v8610 = vrcp.pop %v8572
  %v8611 = vrcp.pop %v8575
  %v8612 = vrcp.pop %v8578
  %v8613 = vrcp.pop %v8581
  %v8614 = vrcp.pop %v8584
  %v8615 = vrcp.pop %v8587
  %v8616 = vrcp.pop %v8590
  %v8617 = vrcp.pop %v8593
  %v8618 = vrcp.pop %v8596
  %v8619 = vrcp.pop %v8599
  %v8620 = vrcp.pop %v8602
  %v8621 = vrcp.pop %v8605
  %v8622 = vmul.f32 %v8527, %v8606
  %v8623 = vmul.f32 %v8529, %v8607
  %v8624 = vmul.f32 %v8531, %v8608
  %v8625 = vmul.f32 %v8533, %v8609
  %v8626 = vmul.f32 %v8535, %v8610
  %v8627 = vmul.f32 %v8537, %v8611
  %v8628 = vmul.f32 %v8539, %v8612
  %v8629 = vmul.f32 %v8541, %v8613
  %v8630 = vmul.f32 %v8543, %v8614
  %v8631 = vmul.f32 %v8545, %v8615
  %v8632 = vmul.f32 %v8547, %v8616
  %v8633 = vmul.f32 %v8549, %v8617
  %v8634 = vmul.f32 %v8551, %v8618
  %v8635 = vmul.f32 %v8553, %v8619
  %v8636 = vmul.f32 %v8555, %v8620
  %v8637 = vmul.f32 %v8557, %v8621
  %v8639 = vsel %vm4652, %v8622, 0
  %v8642 = vsel %vm4652, %v8623, 0
  %v8645 = vsel %vm1272, %v7238, 0
  %8647 = vmatprep.subr.mxu0 0.0
  %8648 = vmatpush1.msra.mxu0 0.0
  %8649 = vmatprep.subr.mxu0 0.0
  %8650 = vmatpush1.msra.mxu0 0.0
  %8651 = vmatprep.subr.mxu0 0.0
  %8652 = vmatpush1.msra.mxu0 0.0
  %8653 = vmatprep.subr.mxu0 0.0
  %8654 = vmatpush1.msra.mxu0 0.0
  %8655 = vmatprep.subr.mxu0 0.0
  %8656 = vmatpush1.msra.mxu0 0.0
  %8657 = vmatprep.subr.mxu0 0.0
  %8658 = vmatpush1.msra.mxu0 0.0
  %8659 = vmatprep.subr.mxu0 0.0
  %8660 = vmatpush1.msra.mxu0 0.0
  %8661 = vmatprep.subr.mxu0 0.0
  %8662 = vmatpush1.msra.mxu0 0.0
  %8663 = vmatprep.subr.mxu0 0.0
  %8664 = vmatpush1.msra.mxu0 0.0
  %8665 = vmatprep.subr.mxu0 0.0
  %8666 = vmatpush1.msra.mxu0 0.0
  %8667 = vmatprep.subr.mxu0 0.0
  %8668 = vmatpush1.msra.mxu0 0.0
  %8669 = vmatprep.subr.mxu0 0.0
  %8670 = vmatpush1.msra.mxu0 0.0
  %8671 = vmatprep.subr.mxu0 0.0
  %8672 = vmatpush1.msra.mxu0 0.0
  %8673 = vmatprep.subr.mxu0 0.0
  %8674 = vmatpush1.msra.mxu0 0.0
  %8675 = vmatprep.subr.mxu0 0.0
  %8676 = vmatpush1.msra.mxu0 %v8645
  %8677 = vmatprep.subr.mxu0 0.0
  %8678 = vmatpush1.msra.mxu0 %v7233
  %8679 = vmatprep.subr.mxu0 0.0
  %8680 = vmatpush2.msra.mxu0 0.0
  %8681 = vmatprep.subr.mxu0 0.0
  %8682 = vmatpush2.msra.mxu0 0.0
  %8683 = vmatprep.subr.mxu0 0.0
  %8684 = vmatpush2.msra.mxu0 0.0
  %8685 = vmatprep.subr.mxu0 0.0
  %8686 = vmatpush2.msra.mxu0 0.0
  %8687 = vmatprep.subr.mxu0 0.0
  %8688 = vmatpush2.msra.mxu0 0.0
  %8689 = vmatprep.subr.mxu0 0.0
  %8690 = vmatpush2.msra.mxu0 0.0
  %8691 = vmatprep.subr.mxu0 0.0
  %8692 = vmatpush2.msra.mxu0 0.0
  %8693 = vmatprep.subr.mxu0 0.0
  %8694 = vmatpush2.msra.mxu0 0.0
  %8695 = vmatprep.subr.mxu0 0.0
  %8696 = vmatpush2.msra.mxu0 0.0
  %8697 = vmatprep.subr.mxu0 0.0
  %8698 = vmatpush2.msra.mxu0 0.0
  %8699 = vmatprep.subr.mxu0 0.0
  %8700 = vmatpush2.msra.mxu0 0.0
  %8701 = vmatprep.subr.mxu0 0.0
  %8702 = vmatpush2.msra.mxu0 0.0
  %8703 = vmatprep.subr.mxu0 0.0
  %8704 = vmatpush2.msra.mxu0 0.0
  %8705 = vmatprep.subr.mxu0 0.0
  %8706 = vmatpush2.msra.mxu0 0.0
  %8707 = vmatprep.subr.mxu0 0.0
  %8708 = vmatpush2.msra.mxu0 0.0
  %8709 = vmatprep.subr.mxu0 0.0
  %8710 = vmatpush2.msra.mxu0 0.0
  %8711 = vmatprep.mubr.f32.mxu0 0.0
  %8712 = vmatmul.mubr.f32.gmra.mxu0 %v8639
  %v8713 = vpop.f32.mrf.mxu0
  %v8714 = vadd.f32 0.0, %v8713
  %v8715 = vpop.f32.mrf.mxu0
  %8716 = vmatprep.mubr.f32.mxu0 0.0
  %8717 = vmatmul.mubr.f32.gmra.mxu0 %v8642
  %v8718 = vpop.f32.mrf.mxu0
  %v8719 = vadd.f32 0.0, %v8718
  %v8720 = vpop.f32.mrf.mxu0
  %8721 = vdwg.mxu0
  %v8723 = vsel %vm4652, %v8624, 0
  %v8726 = vsel %vm4652, %v8625, 0
  %v8729 = vsel %vm1272, %v7313, 0
  %8731 = vmatprep.subr.mxu0 0.0
  %8732 = vmatpush1.msra.mxu0 0.0
  %8733 = vmatprep.subr.mxu0 0.0
  %8734 = vmatpush1.msra.mxu0 0.0
  %8735 = vmatprep.subr.mxu0 0.0
  %8736 = vmatpush1.msra.mxu0 0.0
  %8737 = vmatprep.subr.mxu0 0.0
  %8738 = vmatpush1.msra.mxu0 0.0
  %8739 = vmatprep.subr.mxu0 0.0
  %8740 = vmatpush1.msra.mxu0 0.0
  %8741 = vmatprep.subr.mxu0 0.0
  %8742 = vmatpush1.msra.mxu0 0.0
  %8743 = vmatprep.subr.mxu0 0.0
  %8744 = vmatpush1.msra.mxu0 0.0
  %8745 = vmatprep.subr.mxu0 0.0
  %8746 = vmatpush1.msra.mxu0 0.0
  %8747 = vmatprep.subr.mxu0 0.0
  %8748 = vmatpush1.msra.mxu0 0.0
  %8749 = vmatprep.subr.mxu0 0.0
  %8750 = vmatpush1.msra.mxu0 0.0
  %8751 = vmatprep.subr.mxu0 0.0
  %8752 = vmatpush1.msra.mxu0 0.0
  %8753 = vmatprep.subr.mxu0 0.0
  %8754 = vmatpush1.msra.mxu0 0.0
  %8755 = vmatprep.subr.mxu0 0.0
  %8756 = vmatpush1.msra.mxu0 0.0
  %8757 = vmatprep.subr.mxu0 0.0
  %8758 = vmatpush1.msra.mxu0 0.0
  %8759 = vmatprep.subr.mxu0 0.0
  %8760 = vmatpush1.msra.mxu0 %v8729
  %8761 = vmatprep.subr.mxu0 0.0
  %8762 = vmatpush1.msra.mxu0 %v7308
  %8763 = vmatprep.subr.mxu0 0.0
  %8764 = vmatpush2.msra.mxu0 0.0
  %8765 = vmatprep.subr.mxu0 0.0
  %8766 = vmatpush2.msra.mxu0 0.0
  %8767 = vmatprep.subr.mxu0 0.0
  %8768 = vmatpush2.msra.mxu0 0.0
  %8769 = vmatprep.subr.mxu0 0.0
  %8770 = vmatpush2.msra.mxu0 0.0
  %8771 = vmatprep.subr.mxu0 0.0
  %8772 = vmatpush2.msra.mxu0 0.0
  %8773 = vmatprep.subr.mxu0 0.0
  %8774 = vmatpush2.msra.mxu0 0.0
  %8775 = vmatprep.subr.mxu0 0.0
  %8776 = vmatpush2.msra.mxu0 0.0
  %8777 = vmatprep.subr.mxu0 0.0
  %8778 = vmatpush2.msra.mxu0 0.0
  %8779 = vmatprep.subr.mxu0 0.0
  %8780 = vmatpush2.msra.mxu0 0.0
  %8781 = vmatprep.subr.mxu0 0.0
  %8782 = vmatpush2.msra.mxu0 0.0
  %8783 = vmatprep.subr.mxu0 0.0
  %8784 = vmatpush2.msra.mxu0 0.0
  %8785 = vmatprep.subr.mxu0 0.0
  %8786 = vmatpush2.msra.mxu0 0.0
  %8787 = vmatprep.subr.mxu0 0.0
  %8788 = vmatpush2.msra.mxu0 0.0
  %8789 = vmatprep.subr.mxu0 0.0
  %8790 = vmatpush2.msra.mxu0 0.0
  %8791 = vmatprep.subr.mxu0 0.0
  %8792 = vmatpush2.msra.mxu0 0.0
  %8793 = vmatprep.subr.mxu0 0.0
  %8794 = vmatpush2.msra.mxu0 0.0
  %8795 = vmatprep.mubr.f32.mxu0 0.0
  %8796 = vmatmul.mubr.f32.gmra.mxu0 %v8723
  %v8797 = vpop.f32.mrf.mxu0
  %v8798 = vadd.f32 0.0, %v8797
  %v8799 = vpop.f32.mrf.mxu0
  %8800 = vmatprep.mubr.f32.mxu0 0.0
  %8801 = vmatmul.mubr.f32.gmra.mxu0 %v8726
  %v8802 = vpop.f32.mrf.mxu0
  %v8803 = vadd.f32 0.0, %v8802
  %v8804 = vpop.f32.mrf.mxu0
  %8805 = vdwg.mxu0
  %v8807 = vsel %vm4652, %v8626, 0
  %v8810 = vsel %vm4652, %v8627, 0
  %v8813 = vsel %vm1272, %v7388, 0
  %8815 = vmatprep.subr.mxu0 0.0
  %8816 = vmatpush1.msra.mxu0 0.0
  %8817 = vmatprep.subr.mxu0 0.0
  %8818 = vmatpush1.msra.mxu0 0.0
  %8819 = vmatprep.subr.mxu0 0.0
  %8820 = vmatpush1.msra.mxu0 0.0
  %8821 = vmatprep.subr.mxu0 0.0
  %8822 = vmatpush1.msra.mxu0 0.0
  %8823 = vmatprep.subr.mxu0 0.0
  %8824 = vmatpush1.msra.mxu0 0.0
  %8825 = vmatprep.subr.mxu0 0.0
  %8826 = vmatpush1.msra.mxu0 0.0
  %8827 = vmatprep.subr.mxu0 0.0
  %8828 = vmatpush1.msra.mxu0 0.0
  %8829 = vmatprep.subr.mxu0 0.0
  %8830 = vmatpush1.msra.mxu0 0.0
  %8831 = vmatprep.subr.mxu0 0.0
  %8832 = vmatpush1.msra.mxu0 0.0
  %8833 = vmatprep.subr.mxu0 0.0
  %8834 = vmatpush1.msra.mxu0 0.0
  %8835 = vmatprep.subr.mxu0 0.0
  %8836 = vmatpush1.msra.mxu0 0.0
  %8837 = vmatprep.subr.mxu0 0.0
  %8838 = vmatpush1.msra.mxu0 0.0
  %8839 = vmatprep.subr.mxu0 0.0
  %8840 = vmatpush1.msra.mxu0 0.0
  %8841 = vmatprep.subr.mxu0 0.0
  %8842 = vmatpush1.msra.mxu0 0.0
  %8843 = vmatprep.subr.mxu0 0.0
  %8844 = vmatpush1.msra.mxu0 %v8813
  %8845 = vmatprep.subr.mxu0 0.0
  %8846 = vmatpush1.msra.mxu0 %v7383
  %8847 = vmatprep.subr.mxu0 0.0
  %8848 = vmatpush2.msra.mxu0 0.0
  %8849 = vmatprep.subr.mxu0 0.0
  %8850 = vmatpush2.msra.mxu0 0.0
  %8851 = vmatprep.subr.mxu0 0.0
  %8852 = vmatpush2.msra.mxu0 0.0
  %8853 = vmatprep.subr.mxu0 0.0
  %8854 = vmatpush2.msra.mxu0 0.0
  %8855 = vmatprep.subr.mxu0 0.0
  %8856 = vmatpush2.msra.mxu0 0.0
  %8857 = vmatprep.subr.mxu0 0.0
  %8858 = vmatpush2.msra.mxu0 0.0
  %8859 = vmatprep.subr.mxu0 0.0
  %8860 = vmatpush2.msra.mxu0 0.0
  %8861 = vmatprep.subr.mxu0 0.0
  %8862 = vmatpush2.msra.mxu0 0.0
  %8863 = vmatprep.subr.mxu0 0.0
  %8864 = vmatpush2.msra.mxu0 0.0
  %8865 = vmatprep.subr.mxu0 0.0
  %8866 = vmatpush2.msra.mxu0 0.0
  %8867 = vmatprep.subr.mxu0 0.0
  %8868 = vmatpush2.msra.mxu0 0.0
  %8869 = vmatprep.subr.mxu0 0.0
  %8870 = vmatpush2.msra.mxu0 0.0
  %8871 = vmatprep.subr.mxu0 0.0
  %8872 = vmatpush2.msra.mxu0 0.0
  %8873 = vmatprep.subr.mxu0 0.0
  %8874 = vmatpush2.msra.mxu0 0.0
  %8875 = vmatprep.subr.mxu0 0.0
  %8876 = vmatpush2.msra.mxu0 0.0
  %8877 = vmatprep.subr.mxu0 0.0
  %8878 = vmatpush2.msra.mxu0 0.0
  %8879 = vmatprep.mubr.f32.mxu0 0.0
  %8880 = vmatmul.mubr.f32.gmra.mxu0 %v8807
  %v8881 = vpop.f32.mrf.mxu0
  %v8882 = vadd.f32 0.0, %v8881
  %v8883 = vpop.f32.mrf.mxu0
  %8884 = vmatprep.mubr.f32.mxu0 0.0
  %8885 = vmatmul.mubr.f32.gmra.mxu0 %v8810
  %v8886 = vpop.f32.mrf.mxu0
  %v8887 = vadd.f32 0.0, %v8886
  %v8888 = vpop.f32.mrf.mxu0
  %8889 = vdwg.mxu0
  %v8891 = vsel %vm4652, %v8628, 0
  %v8894 = vsel %vm4652, %v8629, 0
  %v8897 = vsel %vm1272, %v7463, 0
  %8899 = vmatprep.subr.mxu0 0.0
  %8900 = vmatpush1.msra.mxu0 0.0
  %8901 = vmatprep.subr.mxu0 0.0
  %8902 = vmatpush1.msra.mxu0 0.0
  %8903 = vmatprep.subr.mxu0 0.0
  %8904 = vmatpush1.msra.mxu0 0.0
  %8905 = vmatprep.subr.mxu0 0.0
  %8906 = vmatpush1.msra.mxu0 0.0
  %8907 = vmatprep.subr.mxu0 0.0
  %8908 = vmatpush1.msra.mxu0 0.0
  %8909 = vmatprep.subr.mxu0 0.0
  %8910 = vmatpush1.msra.mxu0 0.0
  %8911 = vmatprep.subr.mxu0 0.0
  %8912 = vmatpush1.msra.mxu0 0.0
  %8913 = vmatprep.subr.mxu0 0.0
  %8914 = vmatpush1.msra.mxu0 0.0
  %8915 = vmatprep.subr.mxu0 0.0
  %8916 = vmatpush1.msra.mxu0 0.0
  %8917 = vmatprep.subr.mxu0 0.0
  %8918 = vmatpush1.msra.mxu0 0.0
  %8919 = vmatprep.subr.mxu0 0.0
  %8920 = vmatpush1.msra.mxu0 0.0
  %8921 = vmatprep.subr.mxu0 0.0
  %8922 = vmatpush1.msra.mxu0 0.0
  %8923 = vmatprep.subr.mxu0 0.0
  %8924 = vmatpush1.msra.mxu0 0.0
  %8925 = vmatprep.subr.mxu0 0.0
  %8926 = vmatpush1.msra.mxu0 0.0
  %8927 = vmatprep.subr.mxu0 0.0
  %8928 = vmatpush1.msra.mxu0 %v8897
  %8929 = vmatprep.subr.mxu0 0.0
  %8930 = vmatpush1.msra.mxu0 %v7458
  %8931 = vmatprep.subr.mxu0 0.0
  %8932 = vmatpush2.msra.mxu0 0.0
  %8933 = vmatprep.subr.mxu0 0.0
  %8934 = vmatpush2.msra.mxu0 0.0
  %8935 = vmatprep.subr.mxu0 0.0
  %8936 = vmatpush2.msra.mxu0 0.0
  %8937 = vmatprep.subr.mxu0 0.0
  %8938 = vmatpush2.msra.mxu0 0.0
  %8939 = vmatprep.subr.mxu0 0.0
  %8940 = vmatpush2.msra.mxu0 0.0
  %8941 = vmatprep.subr.mxu0 0.0
  %8942 = vmatpush2.msra.mxu0 0.0
  %8943 = vmatprep.subr.mxu0 0.0
  %8944 = vmatpush2.msra.mxu0 0.0
  %8945 = vmatprep.subr.mxu0 0.0
  %8946 = vmatpush2.msra.mxu0 0.0
  %8947 = vmatprep.subr.mxu0 0.0
  %8948 = vmatpush2.msra.mxu0 0.0
  %8949 = vmatprep.subr.mxu0 0.0
  %8950 = vmatpush2.msra.mxu0 0.0
  %8951 = vmatprep.subr.mxu0 0.0
  %8952 = vmatpush2.msra.mxu0 0.0
  %8953 = vmatprep.subr.mxu0 0.0
  %8954 = vmatpush2.msra.mxu0 0.0
  %8955 = vmatprep.subr.mxu0 0.0
  %8956 = vmatpush2.msra.mxu0 0.0
  %8957 = vmatprep.subr.mxu0 0.0
  %8958 = vmatpush2.msra.mxu0 0.0
  %8959 = vmatprep.subr.mxu0 0.0
  %8960 = vmatpush2.msra.mxu0 0.0
  %8961 = vmatprep.subr.mxu0 0.0
  %8962 = vmatpush2.msra.mxu0 0.0
  %8963 = vmatprep.mubr.f32.mxu0 0.0
  %8964 = vmatmul.mubr.f32.gmra.mxu0 %v8891
  %v8965 = vpop.f32.mrf.mxu0
  %v8966 = vadd.f32 0.0, %v8965
  %v8967 = vpop.f32.mrf.mxu0
  %8968 = vmatprep.mubr.f32.mxu0 0.0
  %8969 = vmatmul.mubr.f32.gmra.mxu0 %v8894
  %v8970 = vpop.f32.mrf.mxu0
  %v8971 = vadd.f32 0.0, %v8970
  %v8972 = vpop.f32.mrf.mxu0
  %8973 = vdwg.mxu0
  %v8975 = vsel %vm4652, %v8630, 0
  %v8978 = vsel %vm4652, %v8631, 0
  %v8981 = vsel %vm1272, %v7538, 0
  %8983 = vmatprep.subr.mxu0 0.0
  %8984 = vmatpush1.msra.mxu0 0.0
  %8985 = vmatprep.subr.mxu0 0.0
  %8986 = vmatpush1.msra.mxu0 0.0
  %8987 = vmatprep.subr.mxu0 0.0
  %8988 = vmatpush1.msra.mxu0 0.0
  %8989 = vmatprep.subr.mxu0 0.0
  %8990 = vmatpush1.msra.mxu0 0.0
  %8991 = vmatprep.subr.mxu0 0.0
  %8992 = vmatpush1.msra.mxu0 0.0
  %8993 = vmatprep.subr.mxu0 0.0
  %8994 = vmatpush1.msra.mxu0 0.0
  %8995 = vmatprep.subr.mxu0 0.0
  %8996 = vmatpush1.msra.mxu0 0.0
  %8997 = vmatprep.subr.mxu0 0.0
  %8998 = vmatpush1.msra.mxu0 0.0
  %8999 = vmatprep.subr.mxu0 0.0
  %9000 = vmatpush1.msra.mxu0 0.0
  %9001 = vmatprep.subr.mxu0 0.0
  %9002 = vmatpush1.msra.mxu0 0.0
  %9003 = vmatprep.subr.mxu0 0.0
  %9004 = vmatpush1.msra.mxu0 0.0
  %9005 = vmatprep.subr.mxu0 0.0
  %9006 = vmatpush1.msra.mxu0 0.0
  %9007 = vmatprep.subr.mxu0 0.0
  %9008 = vmatpush1.msra.mxu0 0.0
  %9009 = vmatprep.subr.mxu0 0.0
  %9010 = vmatpush1.msra.mxu0 0.0
  %9011 = vmatprep.subr.mxu0 0.0
  %9012 = vmatpush1.msra.mxu0 %v8981
  %9013 = vmatprep.subr.mxu0 0.0
  %9014 = vmatpush1.msra.mxu0 %v7533
  %9015 = vmatprep.subr.mxu0 0.0
  %9016 = vmatpush2.msra.mxu0 0.0
  %9017 = vmatprep.subr.mxu0 0.0
  %9018 = vmatpush2.msra.mxu0 0.0
  %9019 = vmatprep.subr.mxu0 0.0
  %9020 = vmatpush2.msra.mxu0 0.0
  %9021 = vmatprep.subr.mxu0 0.0
  %9022 = vmatpush2.msra.mxu0 0.0
  %9023 = vmatprep.subr.mxu0 0.0
  %9024 = vmatpush2.msra.mxu0 0.0
  %9025 = vmatprep.subr.mxu0 0.0
  %9026 = vmatpush2.msra.mxu0 0.0
  %9027 = vmatprep.subr.mxu0 0.0
  %9028 = vmatpush2.msra.mxu0 0.0
  %9029 = vmatprep.subr.mxu0 0.0
  %9030 = vmatpush2.msra.mxu0 0.0
  %9031 = vmatprep.subr.mxu0 0.0
  %9032 = vmatpush2.msra.mxu0 0.0
  %9033 = vmatprep.subr.mxu0 0.0
  %9034 = vmatpush2.msra.mxu0 0.0
  %9035 = vmatprep.subr.mxu0 0.0
  %9036 = vmatpush2.msra.mxu0 0.0
  %9037 = vmatprep.subr.mxu0 0.0
  %9038 = vmatpush2.msra.mxu0 0.0
  %9039 = vmatprep.subr.mxu0 0.0
  %9040 = vmatpush2.msra.mxu0 0.0
  %9041 = vmatprep.subr.mxu0 0.0
  %9042 = vmatpush2.msra.mxu0 0.0
  %9043 = vmatprep.subr.mxu0 0.0
  %9044 = vmatpush2.msra.mxu0 0.0
  %9045 = vmatprep.subr.mxu0 0.0
  %9046 = vmatpush2.msra.mxu0 0.0
  %9047 = vmatprep.mubr.f32.mxu0 0.0
  %9048 = vmatmul.mubr.f32.gmra.mxu0 %v8975
  %v9049 = vpop.f32.mrf.mxu0
  %v9050 = vadd.f32 0.0, %v9049
  %v9051 = vpop.f32.mrf.mxu0
  %9052 = vmatprep.mubr.f32.mxu0 0.0
  %9053 = vmatmul.mubr.f32.gmra.mxu0 %v8978
  %v9054 = vpop.f32.mrf.mxu0
  %v9055 = vadd.f32 0.0, %v9054
  %v9056 = vpop.f32.mrf.mxu0
  %9057 = vdwg.mxu0
  %v9059 = vsel %vm4652, %v8632, 0
  %v9062 = vsel %vm4652, %v8633, 0
  %v9065 = vsel %vm1272, %v7613, 0
  %9067 = vmatprep.subr.mxu0 0.0
  %9068 = vmatpush1.msra.mxu0 0.0
  %9069 = vmatprep.subr.mxu0 0.0
  %9070 = vmatpush1.msra.mxu0 0.0
  %9071 = vmatprep.subr.mxu0 0.0
  %9072 = vmatpush1.msra.mxu0 0.0
  %9073 = vmatprep.subr.mxu0 0.0
  %9074 = vmatpush1.msra.mxu0 0.0
  %9075 = vmatprep.subr.mxu0 0.0
  %9076 = vmatpush1.msra.mxu0 0.0
  %9077 = vmatprep.subr.mxu0 0.0
  %9078 = vmatpush1.msra.mxu0 0.0
  %9079 = vmatprep.subr.mxu0 0.0
  %9080 = vmatpush1.msra.mxu0 0.0
  %9081 = vmatprep.subr.mxu0 0.0
  %9082 = vmatpush1.msra.mxu0 0.0
  %9083 = vmatprep.subr.mxu0 0.0
  %9084 = vmatpush1.msra.mxu0 0.0
  %9085 = vmatprep.subr.mxu0 0.0
  %9086 = vmatpush1.msra.mxu0 0.0
  %9087 = vmatprep.subr.mxu0 0.0
  %9088 = vmatpush1.msra.mxu0 0.0
  %9089 = vmatprep.subr.mxu0 0.0
  %9090 = vmatpush1.msra.mxu0 0.0
  %9091 = vmatprep.subr.mxu0 0.0
  %9092 = vmatpush1.msra.mxu0 0.0
  %9093 = vmatprep.subr.mxu0 0.0
  %9094 = vmatpush1.msra.mxu0 0.0
  %9095 = vmatprep.subr.mxu0 0.0
  %9096 = vmatpush1.msra.mxu0 %v9065
  %9097 = vmatprep.subr.mxu0 0.0
  %9098 = vmatpush1.msra.mxu0 %v7608
  %9099 = vmatprep.subr.mxu0 0.0
  %9100 = vmatpush2.msra.mxu0 0.0
  %9101 = vmatprep.subr.mxu0 0.0
  %9102 = vmatpush2.msra.mxu0 0.0
  %9103 = vmatprep.subr.mxu0 0.0
  %9104 = vmatpush2.msra.mxu0 0.0
  %9105 = vmatprep.subr.mxu0 0.0
  %9106 = vmatpush2.msra.mxu0 0.0
  %9107 = vmatprep.subr.mxu0 0.0
  %9108 = vmatpush2.msra.mxu0 0.0
  %9109 = vmatprep.subr.mxu0 0.0
  %9110 = vmatpush2.msra.mxu0 0.0
  %9111 = vmatprep.subr.mxu0 0.0
  %9112 = vmatpush2.msra.mxu0 0.0
  %9113 = vmatprep.subr.mxu0 0.0
  %9114 = vmatpush2.msra.mxu0 0.0
  %9115 = vmatprep.subr.mxu0 0.0
  %9116 = vmatpush2.msra.mxu0 0.0
  %9117 = vmatprep.subr.mxu0 0.0
  %9118 = vmatpush2.msra.mxu0 0.0
  %9119 = vmatprep.subr.mxu0 0.0
  %9120 = vmatpush2.msra.mxu0 0.0
  %9121 = vmatprep.subr.mxu0 0.0
  %9122 = vmatpush2.msra.mxu0 0.0
  %9123 = vmatprep.subr.mxu0 0.0
  %9124 = vmatpush2.msra.mxu0 0.0
  %9125 = vmatprep.subr.mxu0 0.0
  %9126 = vmatpush2.msra.mxu0 0.0
  %9127 = vmatprep.subr.mxu0 0.0
  %9128 = vmatpush2.msra.mxu0 0.0
  %9129 = vmatprep.subr.mxu0 0.0
  %9130 = vmatpush2.msra.mxu0 0.0
  %9131 = vmatprep.mubr.f32.mxu0 0.0
  %9132 = vmatmul.mubr.f32.gmra.mxu0 %v9059
  %v9133 = vpop.f32.mrf.mxu0
  %v9134 = vadd.f32 0.0, %v9133
  %v9135 = vpop.f32.mrf.mxu0
  %9136 = vmatprep.mubr.f32.mxu0 0.0
  %9137 = vmatmul.mubr.f32.gmra.mxu0 %v9062
  %v9138 = vpop.f32.mrf.mxu0
  %v9139 = vadd.f32 0.0, %v9138
  %v9140 = vpop.f32.mrf.mxu0
  %9141 = vdwg.mxu0
  %v9143 = vsel %vm4652, %v8634, 0
  %v9146 = vsel %vm4652, %v8635, 0
  %v9149 = vsel %vm1272, %v7688, 0
  %9151 = vmatprep.subr.mxu0 0.0
  %9152 = vmatpush1.msra.mxu0 0.0
  %9153 = vmatprep.subr.mxu0 0.0
  %9154 = vmatpush1.msra.mxu0 0.0
  %9155 = vmatprep.subr.mxu0 0.0
  %9156 = vmatpush1.msra.mxu0 0.0
  %9157 = vmatprep.subr.mxu0 0.0
  %9158 = vmatpush1.msra.mxu0 0.0
  %9159 = vmatprep.subr.mxu0 0.0
  %9160 = vmatpush1.msra.mxu0 0.0
  %9161 = vmatprep.subr.mxu0 0.0
  %9162 = vmatpush1.msra.mxu0 0.0
  %9163 = vmatprep.subr.mxu0 0.0
  %9164 = vmatpush1.msra.mxu0 0.0
  %9165 = vmatprep.subr.mxu0 0.0
  %9166 = vmatpush1.msra.mxu0 0.0
  %9167 = vmatprep.subr.mxu0 0.0
  %9168 = vmatpush1.msra.mxu0 0.0
  %9169 = vmatprep.subr.mxu0 0.0
  %9170 = vmatpush1.msra.mxu0 0.0
  %9171 = vmatprep.subr.mxu0 0.0
  %9172 = vmatpush1.msra.mxu0 0.0
  %9173 = vmatprep.subr.mxu0 0.0
  %9174 = vmatpush1.msra.mxu0 0.0
  %9175 = vmatprep.subr.mxu0 0.0
  %9176 = vmatpush1.msra.mxu0 0.0
  %9177 = vmatprep.subr.mxu0 0.0
  %9178 = vmatpush1.msra.mxu0 0.0
  %9179 = vmatprep.subr.mxu0 0.0
  %9180 = vmatpush1.msra.mxu0 %v9149
  %9181 = vmatprep.subr.mxu0 0.0
  %9182 = vmatpush1.msra.mxu0 %v7683
  %9183 = vmatprep.subr.mxu0 0.0
  %9184 = vmatpush2.msra.mxu0 0.0
  %9185 = vmatprep.subr.mxu0 0.0
  %9186 = vmatpush2.msra.mxu0 0.0
  %9187 = vmatprep.subr.mxu0 0.0
  %9188 = vmatpush2.msra.mxu0 0.0
  %9189 = vmatprep.subr.mxu0 0.0
  %9190 = vmatpush2.msra.mxu0 0.0
  %9191 = vmatprep.subr.mxu0 0.0
  %9192 = vmatpush2.msra.mxu0 0.0
  %9193 = vmatprep.subr.mxu0 0.0
  %9194 = vmatpush2.msra.mxu0 0.0
  %9195 = vmatprep.subr.mxu0 0.0
  %9196 = vmatpush2.msra.mxu0 0.0
  %9197 = vmatprep.subr.mxu0 0.0
  %9198 = vmatpush2.msra.mxu0 0.0
  %9199 = vmatprep.subr.mxu0 0.0
  %9200 = vmatpush2.msra.mxu0 0.0
  %9201 = vmatprep.subr.mxu0 0.0
  %9202 = vmatpush2.msra.mxu0 0.0
  %9203 = vmatprep.subr.mxu0 0.0
  %9204 = vmatpush2.msra.mxu0 0.0
  %9205 = vmatprep.subr.mxu0 0.0
  %9206 = vmatpush2.msra.mxu0 0.0
  %9207 = vmatprep.subr.mxu0 0.0
  %9208 = vmatpush2.msra.mxu0 0.0
  %9209 = vmatprep.subr.mxu0 0.0
  %9210 = vmatpush2.msra.mxu0 0.0
  %9211 = vmatprep.subr.mxu0 0.0
  %9212 = vmatpush2.msra.mxu0 0.0
  %9213 = vmatprep.subr.mxu0 0.0
  %9214 = vmatpush2.msra.mxu0 0.0
  %9215 = vmatprep.mubr.f32.mxu0 0.0
  %9216 = vmatmul.mubr.f32.gmra.mxu0 %v9143
  %v9217 = vpop.f32.mrf.mxu0
  %v9218 = vadd.f32 0.0, %v9217
  %v9219 = vpop.f32.mrf.mxu0
  %9220 = vmatprep.mubr.f32.mxu0 0.0
  %9221 = vmatmul.mubr.f32.gmra.mxu0 %v9146
  %v9222 = vpop.f32.mrf.mxu0
  %v9223 = vadd.f32 0.0, %v9222
  %v9224 = vpop.f32.mrf.mxu0
  %9225 = vdwg.mxu0
  %v9227 = vsel %vm4652, %v8636, 0
  %v9230 = vsel %vm4652, %v8637, 0
  %v9233 = vsel %vm1272, %v7763, 0
  %9235 = vmatprep.subr.mxu0 0.0
  %9236 = vmatpush1.msra.mxu0 0.0
  %9237 = vmatprep.subr.mxu0 0.0
  %9238 = vmatpush1.msra.mxu0 0.0
  %9239 = vmatprep.subr.mxu0 0.0
  %9240 = vmatpush1.msra.mxu0 0.0
  %9241 = vmatprep.subr.mxu0 0.0
  %9242 = vmatpush1.msra.mxu0 0.0
  %9243 = vmatprep.subr.mxu0 0.0
  %9244 = vmatpush1.msra.mxu0 0.0
  %9245 = vmatprep.subr.mxu0 0.0
  %9246 = vmatpush1.msra.mxu0 0.0
  %9247 = vmatprep.subr.mxu0 0.0
  %9248 = vmatpush1.msra.mxu0 0.0
  %9249 = vmatprep.subr.mxu0 0.0
  %9250 = vmatpush1.msra.mxu0 0.0
  %9251 = vmatprep.subr.mxu0 0.0
  %9252 = vmatpush1.msra.mxu0 0.0
  %9253 = vmatprep.subr.mxu0 0.0
  %9254 = vmatpush1.msra.mxu0 0.0
  %9255 = vmatprep.subr.mxu0 0.0
  %9256 = vmatpush1.msra.mxu0 0.0
  %9257 = vmatprep.subr.mxu0 0.0
  %9258 = vmatpush1.msra.mxu0 0.0
  %9259 = vmatprep.subr.mxu0 0.0
  %9260 = vmatpush1.msra.mxu0 0.0
  %9261 = vmatprep.subr.mxu0 0.0
  %9262 = vmatpush1.msra.mxu0 0.0
  %9263 = vmatprep.subr.mxu0 0.0
  %9264 = vmatpush1.msra.mxu0 %v9233
  %9265 = vmatprep.subr.mxu0 0.0
  %9266 = vmatpush1.msra.mxu0 %v7758
  %9267 = vmatprep.subr.mxu0 0.0
  %9268 = vmatpush2.msra.mxu0 0.0
  %9269 = vmatprep.subr.mxu0 0.0
  %9270 = vmatpush2.msra.mxu0 0.0
  %9271 = vmatprep.subr.mxu0 0.0
  %9272 = vmatpush2.msra.mxu0 0.0
  %9273 = vmatprep.subr.mxu0 0.0
  %9274 = vmatpush2.msra.mxu0 0.0
  %9275 = vmatprep.subr.mxu0 0.0
  %9276 = vmatpush2.msra.mxu0 0.0
  %9277 = vmatprep.subr.mxu0 0.0
  %9278 = vmatpush2.msra.mxu0 0.0
  %9279 = vmatprep.subr.mxu0 0.0
  %9280 = vmatpush2.msra.mxu0 0.0
  %9281 = vmatprep.subr.mxu0 0.0
  %9282 = vmatpush2.msra.mxu0 0.0
  %9283 = vmatprep.subr.mxu0 0.0
  %9284 = vmatpush2.msra.mxu0 0.0
  %9285 = vmatprep.subr.mxu0 0.0
  %9286 = vmatpush2.msra.mxu0 0.0
  %9287 = vmatprep.subr.mxu0 0.0
  %9288 = vmatpush2.msra.mxu0 0.0
  %9289 = vmatprep.subr.mxu0 0.0
  %9290 = vmatpush2.msra.mxu0 0.0
  %9291 = vmatprep.subr.mxu0 0.0
  %9292 = vmatpush2.msra.mxu0 0.0
  %9293 = vmatprep.subr.mxu0 0.0
  %9294 = vmatpush2.msra.mxu0 0.0
  %9295 = vmatprep.subr.mxu0 0.0
  %9296 = vmatpush2.msra.mxu0 0.0
  %9297 = vmatprep.subr.mxu0 0.0
  %9298 = vmatpush2.msra.mxu0 0.0
  %9299 = vmatprep.mubr.f32.mxu0 0.0
  %9300 = vmatmul.mubr.f32.gmra.mxu0 %v9227
  %v9301 = vpop.f32.mrf.mxu0
  %v9302 = vadd.f32 0.0, %v9301
  %v9303 = vpop.f32.mrf.mxu0
  %9304 = vmatprep.mubr.f32.mxu0 0.0
  %9305 = vmatmul.mubr.f32.gmra.mxu0 %v9230
  %v9306 = vpop.f32.mrf.mxu0
  %v9307 = vadd.f32 0.0, %v9306
  %v9308 = vpop.f32.mrf.mxu0
  %9309 = vdwg.mxu0
  %v9310 = vmul.f32 %v8714, %v8714
  %v9311 = vmul.f32 %v8719, %v8719
  %v9312 = vmul.f32 %v8798, %v8798
  %v9313 = vmul.f32 %v8803, %v8803
  %v9314 = vmul.f32 %v8882, %v8882
  %v9315 = vmul.f32 %v8887, %v8887
  %v9316 = vmul.f32 %v8966, %v8966
  %v9317 = vmul.f32 %v8971, %v8971
  %v9318 = vmul.f32 %v9050, %v9050
  %v9319 = vmul.f32 %v9055, %v9055
  %v9320 = vmul.f32 %v9134, %v9134
  %v9321 = vmul.f32 %v9139, %v9139
  %v9322 = vmul.f32 %v9218, %v9218
  %v9323 = vmul.f32 %v9223, %v9223
  %v9324 = vmul.f32 %v9302, %v9302
  %v9325 = vmul.f32 %v9307, %v9307
  %v9326 = vsel %vm367, %v9310, 0.0
  %9327 = vadd.xlane.f32.xlu0 %v9326
  %v9328 = vpop.xlane.xlu0 %9327
  %v9329 = vsel %vm1950, %v9311, 0.0
  %9330 = vadd.xlane.f32.xlu0 %v9329
  %v9331 = vpop.xlane.xlu0 %9330
  %v9332 = vsel %vm367, %v9312, 0.0
  %9333 = vadd.xlane.f32.xlu0 %v9332
  %v9334 = vpop.xlane.xlu0 %9333
  %v9335 = vsel %vm1950, %v9313, 0.0
  %9336 = vadd.xlane.f32.xlu0 %v9335
  %v9337 = vpop.xlane.xlu0 %9336
  %v9338 = vsel %vm367, %v9314, 0.0
  %9339 = vadd.xlane.f32.xlu0 %v9338
  %v9340 = vpop.xlane.xlu0 %9339
  %v9341 = vsel %vm1950, %v9315, 0.0
  %9342 = vadd.xlane.f32.xlu0 %v9341
  %v9343 = vpop.xlane.xlu0 %9342
  %v9344 = vsel %vm367, %v9316, 0.0
  %9345 = vadd.xlane.f32.xlu0 %v9344
  %v9346 = vpop.xlane.xlu0 %9345
  %v9347 = vsel %vm1950, %v9317, 0.0
  %9348 = vadd.xlane.f32.xlu0 %v9347
  %v9349 = vpop.xlane.xlu0 %9348
  %v9350 = vsel %vm367, %v9318, 0.0
  %9351 = vadd.xlane.f32.xlu0 %v9350
  %v9352 = vpop.xlane.xlu0 %9351
  %v9353 = vsel %vm1950, %v9319, 0.0
  %9354 = vadd.xlane.f32.xlu0 %v9353
  %v9355 = vpop.xlane.xlu0 %9354
  %v9356 = vsel %vm367, %v9320, 0.0
  %9357 = vadd.xlane.f32.xlu0 %v9356
  %v9358 = vpop.xlane.xlu0 %9357
  %v9359 = vsel %vm1950, %v9321, 0.0
  %9360 = vadd.xlane.f32.xlu0 %v9359
  %v9361 = vpop.xlane.xlu0 %9360
  %v9362 = vsel %vm367, %v9322, 0.0
  %9363 = vadd.xlane.f32.xlu0 %v9362
  %v9364 = vpop.xlane.xlu0 %9363
  %v9365 = vsel %vm1950, %v9323, 0.0
  %9366 = vadd.xlane.f32.xlu0 %v9365
  %v9367 = vpop.xlane.xlu0 %9366
  %v9368 = vsel %vm367, %v9324, 0.0
  %9369 = vadd.xlane.f32.xlu0 %v9368
  %v9370 = vpop.xlane.xlu0 %9369
  %v9371 = vsel %vm1950, %v9325, 0.0
  %9372 = vadd.xlane.f32.xlu0 %v9371
  %v9373 = vpop.xlane.xlu0 %9372
  %v9374 = vmul.f32 %v1342, %v8714
  %v9375 = vmul.f32 %v1347, %v8719
  %v9376 = vmul.f32 %v1425, %v8798
  %v9377 = vmul.f32 %v1430, %v8803
  %v9378 = vmul.f32 %v1508, %v8882
  %v9379 = vmul.f32 %v1513, %v8887
  %v9380 = vmul.f32 %v1591, %v8966
  %v9381 = vmul.f32 %v1596, %v8971
  %v9382 = vmul.f32 %v1674, %v9050
  %v9383 = vmul.f32 %v1679, %v9055
  %v9384 = vmul.f32 %v1757, %v9134
  %v9385 = vmul.f32 %v1762, %v9139
  %v9386 = vmul.f32 %v1840, %v9218
  %v9387 = vmul.f32 %v1845, %v9223
  %v9388 = vmul.f32 %v1923, %v9302
  %v9389 = vmul.f32 %v1928, %v9307
  %v9390 = vsel %vm367, %v9374, 0.0
  %9391 = vadd.xlane.f32.xlu0 %v9390
  %v9392 = vpop.xlane.xlu0 %9391
  %v9393 = vsel %vm1950, %v9375, 0.0
  %9394 = vadd.xlane.f32.xlu0 %v9393
  %v9395 = vpop.xlane.xlu0 %9394
  %v9396 = vsel %vm367, %v9376, 0.0
  %9397 = vadd.xlane.f32.xlu0 %v9396
  %v9398 = vpop.xlane.xlu0 %9397
  %v9399 = vsel %vm1950, %v9377, 0.0
  %9400 = vadd.xlane.f32.xlu0 %v9399
  %v9401 = vpop.xlane.xlu0 %9400
  %v9402 = vsel %vm367, %v9378, 0.0
  %9403 = vadd.xlane.f32.xlu0 %v9402
  %v9404 = vpop.xlane.xlu0 %9403
  %v9405 = vsel %vm1950, %v9379, 0.0
  %9406 = vadd.xlane.f32.xlu0 %v9405
  %v9407 = vpop.xlane.xlu0 %9406
  %v9408 = vsel %vm367, %v9380, 0.0
  %9409 = vadd.xlane.f32.xlu0 %v9408
  %v9410 = vpop.xlane.xlu0 %9409
  %v9411 = vsel %vm1950, %v9381, 0.0
  %9412 = vadd.xlane.f32.xlu0 %v9411
  %v9413 = vpop.xlane.xlu0 %9412
  %v9414 = vsel %vm367, %v9382, 0.0
  %9415 = vadd.xlane.f32.xlu0 %v9414
  %v9416 = vpop.xlane.xlu0 %9415
  %v9417 = vsel %vm1950, %v9383, 0.0
  %9418 = vadd.xlane.f32.xlu0 %v9417
  %v9419 = vpop.xlane.xlu0 %9418
  %v9420 = vsel %vm367, %v9384, 0.0
  %9421 = vadd.xlane.f32.xlu0 %v9420
  %v9422 = vpop.xlane.xlu0 %9421
  %v9423 = vsel %vm1950, %v9385, 0.0
  %9424 = vadd.xlane.f32.xlu0 %v9423
  %v9425 = vpop.xlane.xlu0 %9424
  %v9426 = vsel %vm367, %v9386, 0.0
  %9427 = vadd.xlane.f32.xlu0 %v9426
  %v9428 = vpop.xlane.xlu0 %9427
  %v9429 = vsel %vm1950, %v9387, 0.0
  %9430 = vadd.xlane.f32.xlu0 %v9429
  %v9431 = vpop.xlane.xlu0 %9430
  %v9432 = vsel %vm367, %v9388, 0.0
  %9433 = vadd.xlane.f32.xlu0 %v9432
  %v9434 = vpop.xlane.xlu0 %9433
  %v9435 = vsel %vm1950, %v9389, 0.0
  %9436 = vadd.xlane.f32.xlu0 %v9435
  %v9437 = vpop.xlane.xlu0 %9436
  %v9438 = vmul.f32 %v1949, %v9328
  %v9439 = vmul.f32 %v1953, %v9331
  %v9440 = vmul.f32 %v1956, %v9334
  %v9441 = vmul.f32 %v1959, %v9337
  %v9442 = vmul.f32 %v1962, %v9340
  %v9443 = vmul.f32 %v1965, %v9343
  %v9444 = vmul.f32 %v1968, %v9346
  %v9445 = vmul.f32 %v1971, %v9349
  %v9446 = vmul.f32 %v1974, %v9352
  %v9447 = vmul.f32 %v1977, %v9355
  %v9448 = vmul.f32 %v1980, %v9358
  %v9449 = vmul.f32 %v1983, %v9361
  %v9450 = vmul.f32 %v1986, %v9364
  %v9451 = vmul.f32 %v1989, %v9367
  %v9452 = vmul.f32 %v1992, %v9370
  %v9453 = vmul.f32 %v1995, %v9373
  %v9454 = vmax.f32 %v9438, 1e-16
  %v9455 = vmax.f32 %v9439, 1e-16
  %v9456 = vmax.f32 %v9440, 1e-16
  %v9457 = vmax.f32 %v9441, 1e-16
  %v9458 = vmax.f32 %v9442, 1e-16
  %v9459 = vmax.f32 %v9443, 1e-16
  %v9460 = vmax.f32 %v9444, 1e-16
  %v9461 = vmax.f32 %v9445, 1e-16
  %v9462 = vmax.f32 %v9446, 1e-16
  %v9463 = vmax.f32 %v9447, 1e-16
  %v9464 = vmax.f32 %v9448, 1e-16
  %v9465 = vmax.f32 %v9449, 1e-16
  %v9466 = vmax.f32 %v9450, 1e-16
  %v9467 = vmax.f32 %v9451, 1e-16
  %v9468 = vmax.f32 %v9452, 1e-16
  %v9469 = vmax.f32 %v9453, 1e-16
  %v9470 = vrsqrt.pop %v9454
  %v9471 = vrsqrt.pop %v9455
  %v9472 = vrsqrt.pop %v9456
  %v9473 = vrsqrt.pop %v9457
  %v9474 = vrsqrt.pop %v9458
  %v9475 = vrsqrt.pop %v9459
  %v9476 = vrsqrt.pop %v9460
  %v9477 = vrsqrt.pop %v9461
  %v9478 = vrsqrt.pop %v9462
  %v9479 = vrsqrt.pop %v9463
  %v9480 = vrsqrt.pop %v9464
  %v9481 = vrsqrt.pop %v9465
  %v9482 = vrsqrt.pop %v9466
  %v9483 = vrsqrt.pop %v9467
  %v9484 = vrsqrt.pop %v9468
  %v9485 = vrsqrt.pop %v9469
  %v9486 = vmul.f32 %v9392, %v9470
  %v9487 = vmul.f32 %v9395, %v9471
  %v9488 = vmul.f32 %v9398, %v9472
  %v9489 = vmul.f32 %v9401, %v9473
  %v9490 = vmul.f32 %v9404, %v9474
  %v9491 = vmul.f32 %v9407, %v9475
  %v9492 = vmul.f32 %v9410, %v9476
  %v9493 = vmul.f32 %v9413, %v9477
  %v9494 = vmul.f32 %v9416, %v9478
  %v9495 = vmul.f32 %v9419, %v9479
  %v9496 = vmul.f32 %v9422, %v9480
  %v9497 = vmul.f32 %v9425, %v9481
  %v9498 = vmul.f32 %v9428, %v9482
  %v9499 = vmul.f32 %v9431, %v9483
  %v9500 = vmul.f32 %v9434, %v9484
  %v9501 = vmul.f32 %v9437, %v9485
  %v9518 = vlaneseq
  %v9519 = vshrl.u32 %v9518, 7
  %v9520 = vsub.s32 %v5711, %v9519
  %v9521 = vrot.slane %v9486, %v9520
  %v9522 = vlaneseq
  %v9523 = vshrl.u32 %v9522, 7
  %v9524 = vsub.s32 %v5716, %v9523
  %v9525 = vrot.slane %v9487, %v9524
  %v9526 = vsel %vm5721, %v9525, %v9521
  %v9527 = vlaneseq
  %v9528 = vshrl.u32 %v9527, 7
  %v9529 = vsub.s32 %v5711, %v9528
  %v9530 = vrot.slane %v9488, %v9529
  %v9531 = vlaneseq
  %v9532 = vshrl.u32 %v9531, 7
  %v9533 = vsub.s32 %v5716, %v9532
  %v9534 = vrot.slane %v9489, %v9533
  %v9535 = vsel %vm5721, %v9534, %v9530
  %v9536 = vlaneseq
  %v9537 = vshrl.u32 %v9536, 7
  %v9538 = vsub.s32 %v5711, %v9537
  %v9539 = vrot.slane %v9490, %v9538
  %v9540 = vlaneseq
  %v9541 = vshrl.u32 %v9540, 7
  %v9542 = vsub.s32 %v5716, %v9541
  %v9543 = vrot.slane %v9491, %v9542
  %v9544 = vsel %vm5721, %v9543, %v9539
  %v9545 = vlaneseq
  %v9546 = vshrl.u32 %v9545, 7
  %v9547 = vsub.s32 %v5711, %v9546
  %v9548 = vrot.slane %v9492, %v9547
  %v9549 = vlaneseq
  %v9550 = vshrl.u32 %v9549, 7
  %v9551 = vsub.s32 %v5716, %v9550
  %v9552 = vrot.slane %v9493, %v9551
  %v9553 = vsel %vm5721, %v9552, %v9548
  %v9554 = vlaneseq
  %v9555 = vshrl.u32 %v9554, 7
  %v9556 = vsub.s32 %v5711, %v9555
  %v9557 = vrot.slane %v9494, %v9556
  %v9558 = vlaneseq
  %v9559 = vshrl.u32 %v9558, 7
  %v9560 = vsub.s32 %v5716, %v9559
  %v9561 = vrot.slane %v9495, %v9560
  %v9562 = vsel %vm5721, %v9561, %v9557
  %v9563 = vlaneseq
  %v9564 = vshrl.u32 %v9563, 7
  %v9565 = vsub.s32 %v5711, %v9564
  %v9566 = vrot.slane %v9496, %v9565
  %v9567 = vlaneseq
  %v9568 = vshrl.u32 %v9567, 7
  %v9569 = vsub.s32 %v5716, %v9568
  %v9570 = vrot.slane %v9497, %v9569
  %v9571 = vsel %vm5721, %v9570, %v9566
  %v9572 = vlaneseq
  %v9573 = vshrl.u32 %v9572, 7
  %v9574 = vsub.s32 %v5711, %v9573
  %v9575 = vrot.slane %v9498, %v9574
  %v9576 = vlaneseq
  %v9577 = vshrl.u32 %v9576, 7
  %v9578 = vsub.s32 %v5716, %v9577
  %v9579 = vrot.slane %v9499, %v9578
  %v9580 = vsel %vm5721, %v9579, %v9575
  %v9581 = vlaneseq
  %v9582 = vshrl.u32 %v9581, 7
  %v9583 = vsub.s32 %v5711, %v9582
  %v9584 = vrot.slane %v9500, %v9583
  %v9585 = vlaneseq
  %v9586 = vshrl.u32 %v9585, 7
  %v9587 = vsub.s32 %v5716, %v9586
  %v9588 = vrot.slane %v9501, %v9587
  %v9589 = vsel %vm5721, %v9588, %v9584
  %v9590 = vsel %vm5786, %v9535, %v9526
  %v9591 = vsel %vm5788, %v9544, %v9590
  %v9592 = vsel %vm5790, %v9553, %v9591
  %v9593 = vsel %vm5792, %v9562, %v9592
  %v9594 = vsel %vm5794, %v9571, %v9593
  %v9595 = vsel %vm5796, %v9580, %v9594
  %v9596 = vsel %vm5798, %v9589, %v9595
  %s9598 = scalar_lea.vmem %s7, 8
  %9599 = vst.msk [vmem:[%s9598] sm:$0xff] %vm4652, %v9596
  %s9600 = scalar_lea.vmem %s3, 256
  %v9601 = vld [vmem:[%s9600] sm:$0xff]
  %v9602 = vld [vmem:[%s9600 + $0x8] sm:$0xf]
  %v9603 = vld [vmem:[%s9600 + $0x10] sm:$0xff]
  %v9604 = vld [vmem:[%s9600 + $0x18] sm:$0xf]
  %v9605 = vld [vmem:[%s9600 + $0x20] sm:$0xff]
  %v9606 = vld [vmem:[%s9600 + $0x28] sm:$0xf]
  %v9607 = vld [vmem:[%s9600 + $0x30] sm:$0xff]
  %v9608 = vld [vmem:[%s9600 + $0x38] sm:$0xf]
  %v9609 = vld [vmem:[%s9600 + $0x40] sm:$0xff]
  %v9610 = vld [vmem:[%s9600 + $0x48] sm:$0xf]
  %v9611 = vld [vmem:[%s9600 + $0x50] sm:$0xff]
  %v9612 = vld [vmem:[%s9600 + $0x58] sm:$0xf]
  %v9613 = vld [vmem:[%s9600 + $0x60] sm:$0xff]
  %v9614 = vld [vmem:[%s9600 + $0x68] sm:$0xf]
  %v9615 = vld [vmem:[%s9600 + $0x70] sm:$0xff]
  %v9616 = vld [vmem:[%s9600 + $0x78] sm:$0xf]
  %s9617 = scalar_lea.vmem %s4, 512
  %v9618 = vld [vmem:[%s9617] sm:$0xff]
  %v9619 = vld [vmem:[%s9617 + $0x8] sm:$0xff]
  %v9620 = vld [vmem:[%s9617 + $0x10] sm:$0xff]
  %v9621 = vld [vmem:[%s9617 + $0x18] sm:$0xff]
  %v9622 = vld [vmem:[%s9617 + $0x20] sm:$0xff]
  %v9623 = vld [vmem:[%s9617 + $0x28] sm:$0xff]
  %v9624 = vld [vmem:[%s9617 + $0x30] sm:$0xff]
  %v9625 = vld [vmem:[%s9617 + $0x38] sm:$0xff]
  %v9626 = vld [vmem:[%s9617 + $0x40] sm:$0xff]
  %v9627 = vld [vmem:[%s9617 + $0x48] sm:$0xff]
  %v9628 = vld [vmem:[%s9617 + $0x50] sm:$0xff]
  %v9629 = vld [vmem:[%s9617 + $0x58] sm:$0xff]
  %v9630 = vld [vmem:[%s9617 + $0x60] sm:$0xff]
  %v9631 = vld [vmem:[%s9617 + $0x68] sm:$0xff]
  %v9632 = vld [vmem:[%s9617 + $0x70] sm:$0xff]
  %v9633 = vld [vmem:[%s9617 + $0x78] sm:$0xff]
  %v9634 = vld [vmem:[%s9617 + $0x80] sm:$0xff]
  %v9635 = vld [vmem:[%s9617 + $0x88] sm:$0xff]
  %v9636 = vld [vmem:[%s9617 + $0x90] sm:$0xff]
  %v9637 = vld [vmem:[%s9617 + $0x98] sm:$0xff]
  %v9638 = vld [vmem:[%s9617 + $0xa0] sm:$0xff]
  %v9639 = vld [vmem:[%s9617 + $0xa8] sm:$0xff]
  %v9640 = vld [vmem:[%s9617 + $0xb0] sm:$0xff]
  %v9641 = vld [vmem:[%s9617 + $0xb8] sm:$0xff]
  %v9642 = vld [vmem:[%s9617 + $0xc0] sm:$0xff]
  %v9643 = vld [vmem:[%s9617 + $0xc8] sm:$0xff]
  %v9644 = vld [vmem:[%s9617 + $0xd0] sm:$0xff]
  %v9645 = vld [vmem:[%s9617 + $0xd8] sm:$0xff]
  %v9646 = vld [vmem:[%s9617 + $0xe0] sm:$0xff]
  %v9647 = vld [vmem:[%s9617 + $0xe8] sm:$0xff]
  %v9648 = vld [vmem:[%s9617 + $0xf0] sm:$0xff]
  %v9649 = vld [vmem:[%s9617 + $0xf8] sm:$0xff]
  %v9651 = vsel %vm367, %v9601, 0
  %v9654 = vsel %vm367, %v9602, 0
  %9656 = vmatprep.subr.mxu0 0.0
  %9657 = vmatpush1.msra.mxu0 0.0
  %9658 = vmatprep.subr.mxu0 0.0
  %9659 = vmatpush1.msra.mxu0 0.0
  %9660 = vmatprep.subr.mxu0 0.0
  %9661 = vmatpush1.msra.mxu0 0.0
  %9662 = vmatprep.subr.mxu0 0.0
  %9663 = vmatpush1.msra.mxu0 0.0
  %9664 = vmatprep.subr.mxu0 0.0
  %9665 = vmatpush1.msra.mxu0 0.0
  %9666 = vmatprep.subr.mxu0 0.0
  %9667 = vmatpush1.msra.mxu0 0.0
  %9668 = vmatprep.subr.mxu0 0.0
  %9669 = vmatpush1.msra.mxu0 0.0
  %9670 = vmatprep.subr.mxu0 0.0
  %9671 = vmatpush1.msra.mxu0 0.0
  %9672 = vmatprep.subr.mxu0 0.0
  %9673 = vmatpush1.msra.mxu0 0.0
  %9674 = vmatprep.subr.mxu0 0.0
  %9675 = vmatpush1.msra.mxu0 0.0
  %9676 = vmatprep.subr.mxu0 0.0
  %9677 = vmatpush1.msra.mxu0 0.0
  %9678 = vmatprep.subr.mxu0 0.0
  %9679 = vmatpush1.msra.mxu0 0.0
  %9680 = vmatprep.subr.mxu0 0.0
  %9681 = vmatpush1.msra.mxu0 %v9621
  %9682 = vmatprep.subr.mxu0 0.0
  %9683 = vmatpush1.msra.mxu0 %v9620
  %9684 = vmatprep.subr.mxu0 0.0
  %9685 = vmatpush1.msra.mxu0 %v9619
  %9686 = vmatprep.subr.mxu0 0.0
  %9687 = vmatpush1.msra.mxu0 %v9618
  %9688 = vmatprep.subr.mxu0 0.0
  %9689 = vmatpush2.msra.mxu0 0.0
  %9690 = vmatprep.subr.mxu0 0.0
  %9691 = vmatpush2.msra.mxu0 0.0
  %9692 = vmatprep.subr.mxu0 0.0
  %9693 = vmatpush2.msra.mxu0 0.0
  %9694 = vmatprep.subr.mxu0 0.0
  %9695 = vmatpush2.msra.mxu0 0.0
  %9696 = vmatprep.subr.mxu0 0.0
  %9697 = vmatpush2.msra.mxu0 0.0
  %9698 = vmatprep.subr.mxu0 0.0
  %9699 = vmatpush2.msra.mxu0 0.0
  %9700 = vmatprep.subr.mxu0 0.0
  %9701 = vmatpush2.msra.mxu0 0.0
  %9702 = vmatprep.subr.mxu0 0.0
  %9703 = vmatpush2.msra.mxu0 0.0
  %9704 = vmatprep.subr.mxu0 0.0
  %9705 = vmatpush2.msra.mxu0 0.0
  %9706 = vmatprep.subr.mxu0 0.0
  %9707 = vmatpush2.msra.mxu0 0.0
  %9708 = vmatprep.subr.mxu0 0.0
  %9709 = vmatpush2.msra.mxu0 0.0
  %9710 = vmatprep.subr.mxu0 0.0
  %9711 = vmatpush2.msra.mxu0 0.0
  %9712 = vmatprep.subr.mxu0 0.0
  %9713 = vmatpush2.msra.mxu0 0.0
  %9714 = vmatprep.subr.mxu0 0.0
  %9715 = vmatpush2.msra.mxu0 0.0
  %9716 = vmatprep.subr.mxu0 0.0
  %9717 = vmatpush2.msra.mxu0 0.0
  %9718 = vmatprep.subr.mxu0 0.0
  %9719 = vmatpush2.msra.mxu0 0.0
  %9720 = vmatprep.mubr.f32.mxu0 0.0
  %9721 = vmatmul.mubr.f32.gmra.mxu0 %v9651
  %v9722 = vpop.f32.mrf.mxu0
  %v9723 = vadd.f32 0.0, %v9722
  %v9724 = vpop.f32.mrf.mxu0
  %9725 = vmatprep.mubr.f32.mxu0 0.0
  %9726 = vmatmul.mubr.f32.gmra.mxu0 %v9654
  %v9727 = vpop.f32.mrf.mxu0
  %v9728 = vadd.f32 0.0, %v9727
  %v9729 = vpop.f32.mrf.mxu0
  %9730 = vdwg.mxu0
  %v9732 = vsel %vm367, %v9603, 0
  %v9735 = vsel %vm367, %v9604, 0
  %9737 = vmatprep.subr.mxu0 0.0
  %9738 = vmatpush1.msra.mxu0 0.0
  %9739 = vmatprep.subr.mxu0 0.0
  %9740 = vmatpush1.msra.mxu0 0.0
  %9741 = vmatprep.subr.mxu0 0.0
  %9742 = vmatpush1.msra.mxu0 0.0
  %9743 = vmatprep.subr.mxu0 0.0
  %9744 = vmatpush1.msra.mxu0 0.0
  %9745 = vmatprep.subr.mxu0 0.0
  %9746 = vmatpush1.msra.mxu0 0.0
  %9747 = vmatprep.subr.mxu0 0.0
  %9748 = vmatpush1.msra.mxu0 0.0
  %9749 = vmatprep.subr.mxu0 0.0
  %9750 = vmatpush1.msra.mxu0 0.0
  %9751 = vmatprep.subr.mxu0 0.0
  %9752 = vmatpush1.msra.mxu0 0.0
  %9753 = vmatprep.subr.mxu0 0.0
  %9754 = vmatpush1.msra.mxu0 0.0
  %9755 = vmatprep.subr.mxu0 0.0
  %9756 = vmatpush1.msra.mxu0 0.0
  %9757 = vmatprep.subr.mxu0 0.0
  %9758 = vmatpush1.msra.mxu0 0.0
  %9759 = vmatprep.subr.mxu0 0.0
  %9760 = vmatpush1.msra.mxu0 0.0
  %9761 = vmatprep.subr.mxu0 0.0
  %9762 = vmatpush1.msra.mxu0 %v9625
  %9763 = vmatprep.subr.mxu0 0.0
  %9764 = vmatpush1.msra.mxu0 %v9624
  %9765 = vmatprep.subr.mxu0 0.0
  %9766 = vmatpush1.msra.mxu0 %v9623
  %9767 = vmatprep.subr.mxu0 0.0
  %9768 = vmatpush1.msra.mxu0 %v9622
  %9769 = vmatprep.subr.mxu0 0.0
  %9770 = vmatpush2.msra.mxu0 0.0
  %9771 = vmatprep.subr.mxu0 0.0
  %9772 = vmatpush2.msra.mxu0 0.0
  %9773 = vmatprep.subr.mxu0 0.0
  %9774 = vmatpush2.msra.mxu0 0.0
  %9775 = vmatprep.subr.mxu0 0.0
  %9776 = vmatpush2.msra.mxu0 0.0
  %9777 = vmatprep.subr.mxu0 0.0
  %9778 = vmatpush2.msra.mxu0 0.0
  %9779 = vmatprep.subr.mxu0 0.0
  %9780 = vmatpush2.msra.mxu0 0.0
  %9781 = vmatprep.subr.mxu0 0.0
  %9782 = vmatpush2.msra.mxu0 0.0
  %9783 = vmatprep.subr.mxu0 0.0
  %9784 = vmatpush2.msra.mxu0 0.0
  %9785 = vmatprep.subr.mxu0 0.0
  %9786 = vmatpush2.msra.mxu0 0.0
  %9787 = vmatprep.subr.mxu0 0.0
  %9788 = vmatpush2.msra.mxu0 0.0
  %9789 = vmatprep.subr.mxu0 0.0
  %9790 = vmatpush2.msra.mxu0 0.0
  %9791 = vmatprep.subr.mxu0 0.0
  %9792 = vmatpush2.msra.mxu0 0.0
  %9793 = vmatprep.subr.mxu0 0.0
  %9794 = vmatpush2.msra.mxu0 0.0
  %9795 = vmatprep.subr.mxu0 0.0
  %9796 = vmatpush2.msra.mxu0 0.0
  %9797 = vmatprep.subr.mxu0 0.0
  %9798 = vmatpush2.msra.mxu0 0.0
  %9799 = vmatprep.subr.mxu0 0.0
  %9800 = vmatpush2.msra.mxu0 0.0
  %9801 = vmatprep.mubr.f32.mxu0 0.0
  %9802 = vmatmul.mubr.f32.gmra.mxu0 %v9732
  %v9803 = vpop.f32.mrf.mxu0
  %v9804 = vadd.f32 0.0, %v9803
  %v9805 = vpop.f32.mrf.mxu0
  %9806 = vmatprep.mubr.f32.mxu0 0.0
  %9807 = vmatmul.mubr.f32.gmra.mxu0 %v9735
  %v9808 = vpop.f32.mrf.mxu0
  %v9809 = vadd.f32 0.0, %v9808
  %v9810 = vpop.f32.mrf.mxu0
  %9811 = vdwg.mxu0
  %v9813 = vsel %vm367, %v9605, 0
  %v9816 = vsel %vm367, %v9606, 0
  %9818 = vmatprep.subr.mxu0 0.0
  %9819 = vmatpush1.msra.mxu0 0.0
  %9820 = vmatprep.subr.mxu0 0.0
  %9821 = vmatpush1.msra.mxu0 0.0
  %9822 = vmatprep.subr.mxu0 0.0
  %9823 = vmatpush1.msra.mxu0 0.0
  %9824 = vmatprep.subr.mxu0 0.0
  %9825 = vmatpush1.msra.mxu0 0.0
  %9826 = vmatprep.subr.mxu0 0.0
  %9827 = vmatpush1.msra.mxu0 0.0
  %9828 = vmatprep.subr.mxu0 0.0
  %9829 = vmatpush1.msra.mxu0 0.0
  %9830 = vmatprep.subr.mxu0 0.0
  %9831 = vmatpush1.msra.mxu0 0.0
  %9832 = vmatprep.subr.mxu0 0.0
  %9833 = vmatpush1.msra.mxu0 0.0
  %9834 = vmatprep.subr.mxu0 0.0
  %9835 = vmatpush1.msra.mxu0 0.0
  %9836 = vmatprep.subr.mxu0 0.0
  %9837 = vmatpush1.msra.mxu0 0.0
  %9838 = vmatprep.subr.mxu0 0.0
  %9839 = vmatpush1.msra.mxu0 0.0
  %9840 = vmatprep.subr.mxu0 0.0
  %9841 = vmatpush1.msra.mxu0 0.0
  %9842 = vmatprep.subr.mxu0 0.0
  %9843 = vmatpush1.msra.mxu0 %v9629
  %9844 = vmatprep.subr.mxu0 0.0
  %9845 = vmatpush1.msra.mxu0 %v9628
  %9846 = vmatprep.subr.mxu0 0.0
  %9847 = vmatpush1.msra.mxu0 %v9627
  %9848 = vmatprep.subr.mxu0 0.0
  %9849 = vmatpush1.msra.mxu0 %v9626
  %9850 = vmatprep.subr.mxu0 0.0
  %9851 = vmatpush2.msra.mxu0 0.0
  %9852 = vmatprep.subr.mxu0 0.0
  %9853 = vmatpush2.msra.mxu0 0.0
  %9854 = vmatprep.subr.mxu0 0.0
  %9855 = vmatpush2.msra.mxu0 0.0
  %9856 = vmatprep.subr.mxu0 0.0
  %9857 = vmatpush2.msra.mxu0 0.0
  %9858 = vmatprep.subr.mxu0 0.0
  %9859 = vmatpush2.msra.mxu0 0.0
  %9860 = vmatprep.subr.mxu0 0.0
  %9861 = vmatpush2.msra.mxu0 0.0
  %9862 = vmatprep.subr.mxu0 0.0
  %9863 = vmatpush2.msra.mxu0 0.0
  %9864 = vmatprep.subr.mxu0 0.0
  %9865 = vmatpush2.msra.mxu0 0.0
  %9866 = vmatprep.subr.mxu0 0.0
  %9867 = vmatpush2.msra.mxu0 0.0
  %9868 = vmatprep.subr.mxu0 0.0
  %9869 = vmatpush2.msra.mxu0 0.0
  %9870 = vmatprep.subr.mxu0 0.0
  %9871 = vmatpush2.msra.mxu0 0.0
  %9872 = vmatprep.subr.mxu0 0.0
  %9873 = vmatpush2.msra.mxu0 0.0
  %9874 = vmatprep.subr.mxu0 0.0
  %9875 = vmatpush2.msra.mxu0 0.0
  %9876 = vmatprep.subr.mxu0 0.0
  %9877 = vmatpush2.msra.mxu0 0.0
  %9878 = vmatprep.subr.mxu0 0.0
  %9879 = vmatpush2.msra.mxu0 0.0
  %9880 = vmatprep.subr.mxu0 0.0
  %9881 = vmatpush2.msra.mxu0 0.0
  %9882 = vmatprep.mubr.f32.mxu0 0.0
  %9883 = vmatmul.mubr.f32.gmra.mxu0 %v9813
  %v9884 = vpop.f32.mrf.mxu0
  %v9885 = vadd.f32 0.0, %v9884
  %v9886 = vpop.f32.mrf.mxu0
  %9887 = vmatprep.mubr.f32.mxu0 0.0
  %9888 = vmatmul.mubr.f32.gmra.mxu0 %v9816
  %v9889 = vpop.f32.mrf.mxu0
  %v9890 = vadd.f32 0.0, %v9889
  %v9891 = vpop.f32.mrf.mxu0
  %9892 = vdwg.mxu0
  %v9894 = vsel %vm367, %v9607, 0
  %v9897 = vsel %vm367, %v9608, 0
  %9899 = vmatprep.subr.mxu0 0.0
  %9900 = vmatpush1.msra.mxu0 0.0
  %9901 = vmatprep.subr.mxu0 0.0
  %9902 = vmatpush1.msra.mxu0 0.0
  %9903 = vmatprep.subr.mxu0 0.0
  %9904 = vmatpush1.msra.mxu0 0.0
  %9905 = vmatprep.subr.mxu0 0.0
  %9906 = vmatpush1.msra.mxu0 0.0
  %9907 = vmatprep.subr.mxu0 0.0
  %9908 = vmatpush1.msra.mxu0 0.0
  %9909 = vmatprep.subr.mxu0 0.0
  %9910 = vmatpush1.msra.mxu0 0.0
  %9911 = vmatprep.subr.mxu0 0.0
  %9912 = vmatpush1.msra.mxu0 0.0
  %9913 = vmatprep.subr.mxu0 0.0
  %9914 = vmatpush1.msra.mxu0 0.0
  %9915 = vmatprep.subr.mxu0 0.0
  %9916 = vmatpush1.msra.mxu0 0.0
  %9917 = vmatprep.subr.mxu0 0.0
  %9918 = vmatpush1.msra.mxu0 0.0
  %9919 = vmatprep.subr.mxu0 0.0
  %9920 = vmatpush1.msra.mxu0 0.0
  %9921 = vmatprep.subr.mxu0 0.0
  %9922 = vmatpush1.msra.mxu0 0.0
  %9923 = vmatprep.subr.mxu0 0.0
  %9924 = vmatpush1.msra.mxu0 %v9633
  %9925 = vmatprep.subr.mxu0 0.0
  %9926 = vmatpush1.msra.mxu0 %v9632
  %9927 = vmatprep.subr.mxu0 0.0
  %9928 = vmatpush1.msra.mxu0 %v9631
  %9929 = vmatprep.subr.mxu0 0.0
  %9930 = vmatpush1.msra.mxu0 %v9630
  %9931 = vmatprep.subr.mxu0 0.0
  %9932 = vmatpush2.msra.mxu0 0.0
  %9933 = vmatprep.subr.mxu0 0.0
  %9934 = vmatpush2.msra.mxu0 0.0
  %9935 = vmatprep.subr.mxu0 0.0
  %9936 = vmatpush2.msra.mxu0 0.0
  %9937 = vmatprep.subr.mxu0 0.0
  %9938 = vmatpush2.msra.mxu0 0.0
  %9939 = vmatprep.subr.mxu0 0.0
  %9940 = vmatpush2.msra.mxu0 0.0
  %9941 = vmatprep.subr.mxu0 0.0
  %9942 = vmatpush2.msra.mxu0 0.0
  %9943 = vmatprep.subr.mxu0 0.0
  %9944 = vmatpush2.msra.mxu0 0.0
  %9945 = vmatprep.subr.mxu0 0.0
  %9946 = vmatpush2.msra.mxu0 0.0
  %9947 = vmatprep.subr.mxu0 0.0
  %9948 = vmatpush2.msra.mxu0 0.0
  %9949 = vmatprep.subr.mxu0 0.0
  %9950 = vmatpush2.msra.mxu0 0.0
  %9951 = vmatprep.subr.mxu0 0.0
  %9952 = vmatpush2.msra.mxu0 0.0
  %9953 = vmatprep.subr.mxu0 0.0
  %9954 = vmatpush2.msra.mxu0 0.0
  %9955 = vmatprep.subr.mxu0 0.0
  %9956 = vmatpush2.msra.mxu0 0.0
  %9957 = vmatprep.subr.mxu0 0.0
  %9958 = vmatpush2.msra.mxu0 0.0
  %9959 = vmatprep.subr.mxu0 0.0
  %9960 = vmatpush2.msra.mxu0 0.0
  %9961 = vmatprep.subr.mxu0 0.0
  %9962 = vmatpush2.msra.mxu0 0.0
  %9963 = vmatprep.mubr.f32.mxu0 0.0
  %9964 = vmatmul.mubr.f32.gmra.mxu0 %v9894
  %v9965 = vpop.f32.mrf.mxu0
  %v9966 = vadd.f32 0.0, %v9965
  %v9967 = vpop.f32.mrf.mxu0
  %9968 = vmatprep.mubr.f32.mxu0 0.0
  %9969 = vmatmul.mubr.f32.gmra.mxu0 %v9897
  %v9970 = vpop.f32.mrf.mxu0
  %v9971 = vadd.f32 0.0, %v9970
  %v9972 = vpop.f32.mrf.mxu0
  %9973 = vdwg.mxu0
  %v9975 = vsel %vm367, %v9609, 0
  %v9978 = vsel %vm367, %v9610, 0
  %9980 = vmatprep.subr.mxu0 0.0
  %9981 = vmatpush1.msra.mxu0 0.0
  %9982 = vmatprep.subr.mxu0 0.0
  %9983 = vmatpush1.msra.mxu0 0.0
  %9984 = vmatprep.subr.mxu0 0.0
  %9985 = vmatpush1.msra.mxu0 0.0
  %9986 = vmatprep.subr.mxu0 0.0
  %9987 = vmatpush1.msra.mxu0 0.0
  %9988 = vmatprep.subr.mxu0 0.0
  %9989 = vmatpush1.msra.mxu0 0.0
  %9990 = vmatprep.subr.mxu0 0.0
  %9991 = vmatpush1.msra.mxu0 0.0
  %9992 = vmatprep.subr.mxu0 0.0
  %9993 = vmatpush1.msra.mxu0 0.0
  %9994 = vmatprep.subr.mxu0 0.0
  %9995 = vmatpush1.msra.mxu0 0.0
  %9996 = vmatprep.subr.mxu0 0.0
  %9997 = vmatpush1.msra.mxu0 0.0
  %9998 = vmatprep.subr.mxu0 0.0
  %9999 = vmatpush1.msra.mxu0 0.0
  %10000 = vmatprep.subr.mxu0 0.0
  %10001 = vmatpush1.msra.mxu0 0.0
  %10002 = vmatprep.subr.mxu0 0.0
  %10003 = vmatpush1.msra.mxu0 0.0
  %10004 = vmatprep.subr.mxu0 0.0
  %10005 = vmatpush1.msra.mxu0 %v9637
  %10006 = vmatprep.subr.mxu0 0.0
  %10007 = vmatpush1.msra.mxu0 %v9636
  %10008 = vmatprep.subr.mxu0 0.0
  %10009 = vmatpush1.msra.mxu0 %v9635
  %10010 = vmatprep.subr.mxu0 0.0
  %10011 = vmatpush1.msra.mxu0 %v9634
  %10012 = vmatprep.subr.mxu0 0.0
  %10013 = vmatpush2.msra.mxu0 0.0
  %10014 = vmatprep.subr.mxu0 0.0
  %10015 = vmatpush2.msra.mxu0 0.0
  %10016 = vmatprep.subr.mxu0 0.0
  %10017 = vmatpush2.msra.mxu0 0.0
  %10018 = vmatprep.subr.mxu0 0.0
  %10019 = vmatpush2.msra.mxu0 0.0
  %10020 = vmatprep.subr.mxu0 0.0
  %10021 = vmatpush2.msra.mxu0 0.0
  %10022 = vmatprep.subr.mxu0 0.0
  %10023 = vmatpush2.msra.mxu0 0.0
  %10024 = vmatprep.subr.mxu0 0.0
  %10025 = vmatpush2.msra.mxu0 0.0
  %10026 = vmatprep.subr.mxu0 0.0
  %10027 = vmatpush2.msra.mxu0 0.0
  %10028 = vmatprep.subr.mxu0 0.0
  %10029 = vmatpush2.msra.mxu0 0.0
  %10030 = vmatprep.subr.mxu0 0.0
  %10031 = vmatpush2.msra.mxu0 0.0
  %10032 = vmatprep.subr.mxu0 0.0
  %10033 = vmatpush2.msra.mxu0 0.0
  %10034 = vmatprep.subr.mxu0 0.0
  %10035 = vmatpush2.msra.mxu0 0.0
  %10036 = vmatprep.subr.mxu0 0.0
  %10037 = vmatpush2.msra.mxu0 0.0
  %10038 = vmatprep.subr.mxu0 0.0
  %10039 = vmatpush2.msra.mxu0 0.0
  %10040 = vmatprep.subr.mxu0 0.0
  %10041 = vmatpush2.msra.mxu0 0.0
  %10042 = vmatprep.subr.mxu0 0.0
  %10043 = vmatpush2.msra.mxu0 0.0
  %10044 = vmatprep.mubr.f32.mxu0 0.0
  %10045 = vmatmul.mubr.f32.gmra.mxu0 %v9975
  %v10046 = vpop.f32.mrf.mxu0
  %v10047 = vadd.f32 0.0, %v10046
  %v10048 = vpop.f32.mrf.mxu0
  %10049 = vmatprep.mubr.f32.mxu0 0.0
  %10050 = vmatmul.mubr.f32.gmra.mxu0 %v9978
  %v10051 = vpop.f32.mrf.mxu0
  %v10052 = vadd.f32 0.0, %v10051
  %v10053 = vpop.f32.mrf.mxu0
  %10054 = vdwg.mxu0
  %v10056 = vsel %vm367, %v9611, 0
  %v10059 = vsel %vm367, %v9612, 0
  %10061 = vmatprep.subr.mxu0 0.0
  %10062 = vmatpush1.msra.mxu0 0.0
  %10063 = vmatprep.subr.mxu0 0.0
  %10064 = vmatpush1.msra.mxu0 0.0
  %10065 = vmatprep.subr.mxu0 0.0
  %10066 = vmatpush1.msra.mxu0 0.0
  %10067 = vmatprep.subr.mxu0 0.0
  %10068 = vmatpush1.msra.mxu0 0.0
  %10069 = vmatprep.subr.mxu0 0.0
  %10070 = vmatpush1.msra.mxu0 0.0
  %10071 = vmatprep.subr.mxu0 0.0
  %10072 = vmatpush1.msra.mxu0 0.0
  %10073 = vmatprep.subr.mxu0 0.0
  %10074 = vmatpush1.msra.mxu0 0.0
  %10075 = vmatprep.subr.mxu0 0.0
  %10076 = vmatpush1.msra.mxu0 0.0
  %10077 = vmatprep.subr.mxu0 0.0
  %10078 = vmatpush1.msra.mxu0 0.0
  %10079 = vmatprep.subr.mxu0 0.0
  %10080 = vmatpush1.msra.mxu0 0.0
  %10081 = vmatprep.subr.mxu0 0.0
  %10082 = vmatpush1.msra.mxu0 0.0
  %10083 = vmatprep.subr.mxu0 0.0
  %10084 = vmatpush1.msra.mxu0 0.0
  %10085 = vmatprep.subr.mxu0 0.0
  %10086 = vmatpush1.msra.mxu0 %v9641
  %10087 = vmatprep.subr.mxu0 0.0
  %10088 = vmatpush1.msra.mxu0 %v9640
  %10089 = vmatprep.subr.mxu0 0.0
  %10090 = vmatpush1.msra.mxu0 %v9639
  %10091 = vmatprep.subr.mxu0 0.0
  %10092 = vmatpush1.msra.mxu0 %v9638
  %10093 = vmatprep.subr.mxu0 0.0
  %10094 = vmatpush2.msra.mxu0 0.0
  %10095 = vmatprep.subr.mxu0 0.0
  %10096 = vmatpush2.msra.mxu0 0.0
  %10097 = vmatprep.subr.mxu0 0.0
  %10098 = vmatpush2.msra.mxu0 0.0
  %10099 = vmatprep.subr.mxu0 0.0
  %10100 = vmatpush2.msra.mxu0 0.0
  %10101 = vmatprep.subr.mxu0 0.0
  %10102 = vmatpush2.msra.mxu0 0.0
  %10103 = vmatprep.subr.mxu0 0.0
  %10104 = vmatpush2.msra.mxu0 0.0
  %10105 = vmatprep.subr.mxu0 0.0
  %10106 = vmatpush2.msra.mxu0 0.0
  %10107 = vmatprep.subr.mxu0 0.0
  %10108 = vmatpush2.msra.mxu0 0.0
  %10109 = vmatprep.subr.mxu0 0.0
  %10110 = vmatpush2.msra.mxu0 0.0
  %10111 = vmatprep.subr.mxu0 0.0
  %10112 = vmatpush2.msra.mxu0 0.0
  %10113 = vmatprep.subr.mxu0 0.0
  %10114 = vmatpush2.msra.mxu0 0.0
  %10115 = vmatprep.subr.mxu0 0.0
  %10116 = vmatpush2.msra.mxu0 0.0
  %10117 = vmatprep.subr.mxu0 0.0
  %10118 = vmatpush2.msra.mxu0 0.0
  %10119 = vmatprep.subr.mxu0 0.0
  %10120 = vmatpush2.msra.mxu0 0.0
  %10121 = vmatprep.subr.mxu0 0.0
  %10122 = vmatpush2.msra.mxu0 0.0
  %10123 = vmatprep.subr.mxu0 0.0
  %10124 = vmatpush2.msra.mxu0 0.0
  %10125 = vmatprep.mubr.f32.mxu0 0.0
  %10126 = vmatmul.mubr.f32.gmra.mxu0 %v10056
  %v10127 = vpop.f32.mrf.mxu0
  %v10128 = vadd.f32 0.0, %v10127
  %v10129 = vpop.f32.mrf.mxu0
  %10130 = vmatprep.mubr.f32.mxu0 0.0
  %10131 = vmatmul.mubr.f32.gmra.mxu0 %v10059
  %v10132 = vpop.f32.mrf.mxu0
  %v10133 = vadd.f32 0.0, %v10132
  %v10134 = vpop.f32.mrf.mxu0
  %10135 = vdwg.mxu0
  %v10137 = vsel %vm367, %v9613, 0
  %v10140 = vsel %vm367, %v9614, 0
  %10142 = vmatprep.subr.mxu0 0.0
  %10143 = vmatpush1.msra.mxu0 0.0
  %10144 = vmatprep.subr.mxu0 0.0
  %10145 = vmatpush1.msra.mxu0 0.0
  %10146 = vmatprep.subr.mxu0 0.0
  %10147 = vmatpush1.msra.mxu0 0.0
  %10148 = vmatprep.subr.mxu0 0.0
  %10149 = vmatpush1.msra.mxu0 0.0
  %10150 = vmatprep.subr.mxu0 0.0
  %10151 = vmatpush1.msra.mxu0 0.0
  %10152 = vmatprep.subr.mxu0 0.0
  %10153 = vmatpush1.msra.mxu0 0.0
  %10154 = vmatprep.subr.mxu0 0.0
  %10155 = vmatpush1.msra.mxu0 0.0
  %10156 = vmatprep.subr.mxu0 0.0
  %10157 = vmatpush1.msra.mxu0 0.0
  %10158 = vmatprep.subr.mxu0 0.0
  %10159 = vmatpush1.msra.mxu0 0.0
  %10160 = vmatprep.subr.mxu0 0.0
  %10161 = vmatpush1.msra.mxu0 0.0
  %10162 = vmatprep.subr.mxu0 0.0
  %10163 = vmatpush1.msra.mxu0 0.0
  %10164 = vmatprep.subr.mxu0 0.0
  %10165 = vmatpush1.msra.mxu0 0.0
  %10166 = vmatprep.subr.mxu0 0.0
  %10167 = vmatpush1.msra.mxu0 %v9645
  %10168 = vmatprep.subr.mxu0 0.0
  %10169 = vmatpush1.msra.mxu0 %v9644
  %10170 = vmatprep.subr.mxu0 0.0
  %10171 = vmatpush1.msra.mxu0 %v9643
  %10172 = vmatprep.subr.mxu0 0.0
  %10173 = vmatpush1.msra.mxu0 %v9642
  %10174 = vmatprep.subr.mxu0 0.0
  %10175 = vmatpush2.msra.mxu0 0.0
  %10176 = vmatprep.subr.mxu0 0.0
  %10177 = vmatpush2.msra.mxu0 0.0
  %10178 = vmatprep.subr.mxu0 0.0
  %10179 = vmatpush2.msra.mxu0 0.0
  %10180 = vmatprep.subr.mxu0 0.0
  %10181 = vmatpush2.msra.mxu0 0.0
  %10182 = vmatprep.subr.mxu0 0.0
  %10183 = vmatpush2.msra.mxu0 0.0
  %10184 = vmatprep.subr.mxu0 0.0
  %10185 = vmatpush2.msra.mxu0 0.0
  %10186 = vmatprep.subr.mxu0 0.0
  %10187 = vmatpush2.msra.mxu0 0.0
  %10188 = vmatprep.subr.mxu0 0.0
  %10189 = vmatpush2.msra.mxu0 0.0
  %10190 = vmatprep.subr.mxu0 0.0
  %10191 = vmatpush2.msra.mxu0 0.0
  %10192 = vmatprep.subr.mxu0 0.0
  %10193 = vmatpush2.msra.mxu0 0.0
  %10194 = vmatprep.subr.mxu0 0.0
  %10195 = vmatpush2.msra.mxu0 0.0
  %10196 = vmatprep.subr.mxu0 0.0
  %10197 = vmatpush2.msra.mxu0 0.0
  %10198 = vmatprep.subr.mxu0 0.0
  %10199 = vmatpush2.msra.mxu0 0.0
  %10200 = vmatprep.subr.mxu0 0.0
  %10201 = vmatpush2.msra.mxu0 0.0
  %10202 = vmatprep.subr.mxu0 0.0
  %10203 = vmatpush2.msra.mxu0 0.0
  %10204 = vmatprep.subr.mxu0 0.0
  %10205 = vmatpush2.msra.mxu0 0.0
  %10206 = vmatprep.mubr.f32.mxu0 0.0
  %10207 = vmatmul.mubr.f32.gmra.mxu0 %v10137
  %v10208 = vpop.f32.mrf.mxu0
  %v10209 = vadd.f32 0.0, %v10208
  %v10210 = vpop.f32.mrf.mxu0
  %10211 = vmatprep.mubr.f32.mxu0 0.0
  %10212 = vmatmul.mubr.f32.gmra.mxu0 %v10140
  %v10213 = vpop.f32.mrf.mxu0
  %v10214 = vadd.f32 0.0, %v10213
  %v10215 = vpop.f32.mrf.mxu0
  %10216 = vdwg.mxu0
  %v10218 = vsel %vm367, %v9615, 0
  %v10221 = vsel %vm367, %v9616, 0
  %10223 = vmatprep.subr.mxu0 0.0
  %10224 = vmatpush1.msra.mxu0 0.0
  %10225 = vmatprep.subr.mxu0 0.0
  %10226 = vmatpush1.msra.mxu0 0.0
  %10227 = vmatprep.subr.mxu0 0.0
  %10228 = vmatpush1.msra.mxu0 0.0
  %10229 = vmatprep.subr.mxu0 0.0
  %10230 = vmatpush1.msra.mxu0 0.0
  %10231 = vmatprep.subr.mxu0 0.0
  %10232 = vmatpush1.msra.mxu0 0.0
  %10233 = vmatprep.subr.mxu0 0.0
  %10234 = vmatpush1.msra.mxu0 0.0
  %10235 = vmatprep.subr.mxu0 0.0
  %10236 = vmatpush1.msra.mxu0 0.0
  %10237 = vmatprep.subr.mxu0 0.0
  %10238 = vmatpush1.msra.mxu0 0.0
  %10239 = vmatprep.subr.mxu0 0.0
  %10240 = vmatpush1.msra.mxu0 0.0
  %10241 = vmatprep.subr.mxu0 0.0
  %10242 = vmatpush1.msra.mxu0 0.0
  %10243 = vmatprep.subr.mxu0 0.0
  %10244 = vmatpush1.msra.mxu0 0.0
  %10245 = vmatprep.subr.mxu0 0.0
  %10246 = vmatpush1.msra.mxu0 0.0
  %10247 = vmatprep.subr.mxu0 0.0
  %10248 = vmatpush1.msra.mxu0 %v9649
  %10249 = vmatprep.subr.mxu0 0.0
  %10250 = vmatpush1.msra.mxu0 %v9648
  %10251 = vmatprep.subr.mxu0 0.0
  %10252 = vmatpush1.msra.mxu0 %v9647
  %10253 = vmatprep.subr.mxu0 0.0
  %10254 = vmatpush1.msra.mxu0 %v9646
  %10255 = vmatprep.subr.mxu0 0.0
  %10256 = vmatpush2.msra.mxu0 0.0
  %10257 = vmatprep.subr.mxu0 0.0
  %10258 = vmatpush2.msra.mxu0 0.0
  %10259 = vmatprep.subr.mxu0 0.0
  %10260 = vmatpush2.msra.mxu0 0.0
  %10261 = vmatprep.subr.mxu0 0.0
  %10262 = vmatpush2.msra.mxu0 0.0
  %10263 = vmatprep.subr.mxu0 0.0
  %10264 = vmatpush2.msra.mxu0 0.0
  %10265 = vmatprep.subr.mxu0 0.0
  %10266 = vmatpush2.msra.mxu0 0.0
  %10267 = vmatprep.subr.mxu0 0.0
  %10268 = vmatpush2.msra.mxu0 0.0
  %10269 = vmatprep.subr.mxu0 0.0
  %10270 = vmatpush2.msra.mxu0 0.0
  %10271 = vmatprep.subr.mxu0 0.0
  %10272 = vmatpush2.msra.mxu0 0.0
  %10273 = vmatprep.subr.mxu0 0.0
  %10274 = vmatpush2.msra.mxu0 0.0
  %10275 = vmatprep.subr.mxu0 0.0
  %10276 = vmatpush2.msra.mxu0 0.0
  %10277 = vmatprep.subr.mxu0 0.0
  %10278 = vmatpush2.msra.mxu0 0.0
  %10279 = vmatprep.subr.mxu0 0.0
  %10280 = vmatpush2.msra.mxu0 0.0
  %10281 = vmatprep.subr.mxu0 0.0
  %10282 = vmatpush2.msra.mxu0 0.0
  %10283 = vmatprep.subr.mxu0 0.0
  %10284 = vmatpush2.msra.mxu0 0.0
  %10285 = vmatprep.subr.mxu0 0.0
  %10286 = vmatpush2.msra.mxu0 0.0
  %10287 = vmatprep.mubr.f32.mxu0 0.0
  %10288 = vmatmul.mubr.f32.gmra.mxu0 %v10218
  %v10289 = vpop.f32.mrf.mxu0
  %v10290 = vadd.f32 0.0, %v10289
  %v10291 = vpop.f32.mrf.mxu0
  %10292 = vmatprep.mubr.f32.mxu0 0.0
  %10293 = vmatmul.mubr.f32.gmra.mxu0 %v10221
  %v10294 = vpop.f32.mrf.mxu0
  %v10295 = vadd.f32 0.0, %v10294
  %v10296 = vpop.f32.mrf.mxu0
  %10297 = vdwg.mxu0
  %s10298 = scalar_lea.vmem %s5, 512
  %v10299 = vld [vmem:[%s10298] sm:$0xff]
  %v10300 = vld [vmem:[%s10298 + $0x8] sm:$0xff]
  %v10301 = vld [vmem:[%s10298 + $0x10] sm:$0xff]
  %v10302 = vld [vmem:[%s10298 + $0x18] sm:$0xff]
  %v10303 = vld [vmem:[%s10298 + $0x20] sm:$0xff]
  %v10304 = vld [vmem:[%s10298 + $0x28] sm:$0xff]
  %v10305 = vld [vmem:[%s10298 + $0x30] sm:$0xff]
  %v10306 = vld [vmem:[%s10298 + $0x38] sm:$0xff]
  %v10307 = vld [vmem:[%s10298 + $0x40] sm:$0xff]
  %v10308 = vld [vmem:[%s10298 + $0x48] sm:$0xff]
  %v10309 = vld [vmem:[%s10298 + $0x50] sm:$0xff]
  %v10310 = vld [vmem:[%s10298 + $0x58] sm:$0xff]
  %v10311 = vld [vmem:[%s10298 + $0x60] sm:$0xff]
  %v10312 = vld [vmem:[%s10298 + $0x68] sm:$0xff]
  %v10313 = vld [vmem:[%s10298 + $0x70] sm:$0xff]
  %v10314 = vld [vmem:[%s10298 + $0x78] sm:$0xff]
  %v10315 = vld [vmem:[%s10298 + $0x80] sm:$0xff]
  %v10316 = vld [vmem:[%s10298 + $0x88] sm:$0xff]
  %v10317 = vld [vmem:[%s10298 + $0x90] sm:$0xff]
  %v10318 = vld [vmem:[%s10298 + $0x98] sm:$0xff]
  %v10319 = vld [vmem:[%s10298 + $0xa0] sm:$0xff]
  %v10320 = vld [vmem:[%s10298 + $0xa8] sm:$0xff]
  %v10321 = vld [vmem:[%s10298 + $0xb0] sm:$0xff]
  %v10322 = vld [vmem:[%s10298 + $0xb8] sm:$0xff]
  %v10323 = vld [vmem:[%s10298 + $0xc0] sm:$0xff]
  %v10324 = vld [vmem:[%s10298 + $0xc8] sm:$0xff]
  %v10325 = vld [vmem:[%s10298 + $0xd0] sm:$0xff]
  %v10326 = vld [vmem:[%s10298 + $0xd8] sm:$0xff]
  %v10327 = vld [vmem:[%s10298 + $0xe0] sm:$0xff]
  %v10328 = vld [vmem:[%s10298 + $0xe8] sm:$0xff]
  %v10329 = vld [vmem:[%s10298 + $0xf0] sm:$0xff]
  %v10330 = vld [vmem:[%s10298 + $0xf8] sm:$0xff]
  %10331 = vmatprep.subr.mxu0 0.0
  %10332 = vmatpush1.msra.mxu0 0.0
  %10333 = vmatprep.subr.mxu0 0.0
  %10334 = vmatpush1.msra.mxu0 0.0
  %10335 = vmatprep.subr.mxu0 0.0
  %10336 = vmatpush1.msra.mxu0 0.0
  %10337 = vmatprep.subr.mxu0 0.0
  %10338 = vmatpush1.msra.mxu0 0.0
  %10339 = vmatprep.subr.mxu0 0.0
  %10340 = vmatpush1.msra.mxu0 0.0
  %10341 = vmatprep.subr.mxu0 0.0
  %10342 = vmatpush1.msra.mxu0 0.0
  %10343 = vmatprep.subr.mxu0 0.0
  %10344 = vmatpush1.msra.mxu0 0.0
  %10345 = vmatprep.subr.mxu0 0.0
  %10346 = vmatpush1.msra.mxu0 0.0
  %10347 = vmatprep.subr.mxu0 0.0
  %10348 = vmatpush1.msra.mxu0 0.0
  %10349 = vmatprep.subr.mxu0 0.0
  %10350 = vmatpush1.msra.mxu0 0.0
  %10351 = vmatprep.subr.mxu0 0.0
  %10352 = vmatpush1.msra.mxu0 0.0
  %10353 = vmatprep.subr.mxu0 0.0
  %10354 = vmatpush1.msra.mxu0 0.0
  %10355 = vmatprep.subr.mxu0 0.0
  %10356 = vmatpush1.msra.mxu0 %v10302
  %10357 = vmatprep.subr.mxu0 0.0
  %10358 = vmatpush1.msra.mxu0 %v10301
  %10359 = vmatprep.subr.mxu0 0.0
  %10360 = vmatpush1.msra.mxu0 %v10300
  %10361 = vmatprep.subr.mxu0 0.0
  %10362 = vmatpush1.msra.mxu0 %v10299
  %10363 = vmatprep.subr.mxu0 0.0
  %10364 = vmatpush2.msra.mxu0 0.0
  %10365 = vmatprep.subr.mxu0 0.0
  %10366 = vmatpush2.msra.mxu0 0.0
  %10367 = vmatprep.subr.mxu0 0.0
  %10368 = vmatpush2.msra.mxu0 0.0
  %10369 = vmatprep.subr.mxu0 0.0
  %10370 = vmatpush2.msra.mxu0 0.0
  %10371 = vmatprep.subr.mxu0 0.0
  %10372 = vmatpush2.msra.mxu0 0.0
  %10373 = vmatprep.subr.mxu0 0.0
  %10374 = vmatpush2.msra.mxu0 0.0
  %10375 = vmatprep.subr.mxu0 0.0
  %10376 = vmatpush2.msra.mxu0 0.0
  %10377 = vmatprep.subr.mxu0 0.0
  %10378 = vmatpush2.msra.mxu0 0.0
  %10379 = vmatprep.subr.mxu0 0.0
  %10380 = vmatpush2.msra.mxu0 0.0
  %10381 = vmatprep.subr.mxu0 0.0
  %10382 = vmatpush2.msra.mxu0 0.0
  %10383 = vmatprep.subr.mxu0 0.0
  %10384 = vmatpush2.msra.mxu0 0.0
  %10385 = vmatprep.subr.mxu0 0.0
  %10386 = vmatpush2.msra.mxu0 0.0
  %10387 = vmatprep.subr.mxu0 0.0
  %10388 = vmatpush2.msra.mxu0 0.0
  %10389 = vmatprep.subr.mxu0 0.0
  %10390 = vmatpush2.msra.mxu0 0.0
  %10391 = vmatprep.subr.mxu0 0.0
  %10392 = vmatpush2.msra.mxu0 0.0
  %10393 = vmatprep.subr.mxu0 0.0
  %10394 = vmatpush2.msra.mxu0 0.0
  %10395 = vmatprep.mubr.f32.mxu0 0.0
  %10396 = vmatmul.mubr.f32.gmra.mxu0 %v9651
  %v10397 = vpop.f32.mrf.mxu0
  %v10398 = vadd.f32 0.0, %v10397
  %v10399 = vpop.f32.mrf.mxu0
  %10400 = vmatprep.mubr.f32.mxu0 0.0
  %10401 = vmatmul.mubr.f32.gmra.mxu0 %v9654
  %v10402 = vpop.f32.mrf.mxu0
  %v10403 = vadd.f32 0.0, %v10402
  %v10404 = vpop.f32.mrf.mxu0
  %10405 = vdwg.mxu0
  %10406 = vmatprep.subr.mxu0 0.0
  %10407 = vmatpush1.msra.mxu0 0.0
  %10408 = vmatprep.subr.mxu0 0.0
  %10409 = vmatpush1.msra.mxu0 0.0
  %10410 = vmatprep.subr.mxu0 0.0
  %10411 = vmatpush1.msra.mxu0 0.0
  %10412 = vmatprep.subr.mxu0 0.0
  %10413 = vmatpush1.msra.mxu0 0.0
  %10414 = vmatprep.subr.mxu0 0.0
  %10415 = vmatpush1.msra.mxu0 0.0
  %10416 = vmatprep.subr.mxu0 0.0
  %10417 = vmatpush1.msra.mxu0 0.0
  %10418 = vmatprep.subr.mxu0 0.0
  %10419 = vmatpush1.msra.mxu0 0.0
  %10420 = vmatprep.subr.mxu0 0.0
  %10421 = vmatpush1.msra.mxu0 0.0
  %10422 = vmatprep.subr.mxu0 0.0
  %10423 = vmatpush1.msra.mxu0 0.0
  %10424 = vmatprep.subr.mxu0 0.0
  %10425 = vmatpush1.msra.mxu0 0.0
  %10426 = vmatprep.subr.mxu0 0.0
  %10427 = vmatpush1.msra.mxu0 0.0
  %10428 = vmatprep.subr.mxu0 0.0
  %10429 = vmatpush1.msra.mxu0 0.0
  %10430 = vmatprep.subr.mxu0 0.0
  %10431 = vmatpush1.msra.mxu0 %v10306
  %10432 = vmatprep.subr.mxu0 0.0
  %10433 = vmatpush1.msra.mxu0 %v10305
  %10434 = vmatprep.subr.mxu0 0.0
  %10435 = vmatpush1.msra.mxu0 %v10304
  %10436 = vmatprep.subr.mxu0 0.0
  %10437 = vmatpush1.msra.mxu0 %v10303
  %10438 = vmatprep.subr.mxu0 0.0
  %10439 = vmatpush2.msra.mxu0 0.0
  %10440 = vmatprep.subr.mxu0 0.0
  %10441 = vmatpush2.msra.mxu0 0.0
  %10442 = vmatprep.subr.mxu0 0.0
  %10443 = vmatpush2.msra.mxu0 0.0
  %10444 = vmatprep.subr.mxu0 0.0
  %10445 = vmatpush2.msra.mxu0 0.0
  %10446 = vmatprep.subr.mxu0 0.0
  %10447 = vmatpush2.msra.mxu0 0.0
  %10448 = vmatprep.subr.mxu0 0.0
  %10449 = vmatpush2.msra.mxu0 0.0
  %10450 = vmatprep.subr.mxu0 0.0
  %10451 = vmatpush2.msra.mxu0 0.0
  %10452 = vmatprep.subr.mxu0 0.0
  %10453 = vmatpush2.msra.mxu0 0.0
  %10454 = vmatprep.subr.mxu0 0.0
  %10455 = vmatpush2.msra.mxu0 0.0
  %10456 = vmatprep.subr.mxu0 0.0
  %10457 = vmatpush2.msra.mxu0 0.0
  %10458 = vmatprep.subr.mxu0 0.0
  %10459 = vmatpush2.msra.mxu0 0.0
  %10460 = vmatprep.subr.mxu0 0.0
  %10461 = vmatpush2.msra.mxu0 0.0
  %10462 = vmatprep.subr.mxu0 0.0
  %10463 = vmatpush2.msra.mxu0 0.0
  %10464 = vmatprep.subr.mxu0 0.0
  %10465 = vmatpush2.msra.mxu0 0.0
  %10466 = vmatprep.subr.mxu0 0.0
  %10467 = vmatpush2.msra.mxu0 0.0
  %10468 = vmatprep.subr.mxu0 0.0
  %10469 = vmatpush2.msra.mxu0 0.0
  %10470 = vmatprep.mubr.f32.mxu0 0.0
  %10471 = vmatmul.mubr.f32.gmra.mxu0 %v9732
  %v10472 = vpop.f32.mrf.mxu0
  %v10473 = vadd.f32 0.0, %v10472
  %v10474 = vpop.f32.mrf.mxu0
  %10475 = vmatprep.mubr.f32.mxu0 0.0
  %10476 = vmatmul.mubr.f32.gmra.mxu0 %v9735
  %v10477 = vpop.f32.mrf.mxu0
  %v10478 = vadd.f32 0.0, %v10477
  %v10479 = vpop.f32.mrf.mxu0
  %10480 = vdwg.mxu0
  %10481 = vmatprep.subr.mxu0 0.0
  %10482 = vmatpush1.msra.mxu0 0.0
  %10483 = vmatprep.subr.mxu0 0.0
  %10484 = vmatpush1.msra.mxu0 0.0
  %10485 = vmatprep.subr.mxu0 0.0
  %10486 = vmatpush1.msra.mxu0 0.0
  %10487 = vmatprep.subr.mxu0 0.0
  %10488 = vmatpush1.msra.mxu0 0.0
  %10489 = vmatprep.subr.mxu0 0.0
  %10490 = vmatpush1.msra.mxu0 0.0
  %10491 = vmatprep.subr.mxu0 0.0
  %10492 = vmatpush1.msra.mxu0 0.0
  %10493 = vmatprep.subr.mxu0 0.0
  %10494 = vmatpush1.msra.mxu0 0.0
  %10495 = vmatprep.subr.mxu0 0.0
  %10496 = vmatpush1.msra.mxu0 0.0
  %10497 = vmatprep.subr.mxu0 0.0
  %10498 = vmatpush1.msra.mxu0 0.0
  %10499 = vmatprep.subr.mxu0 0.0
  %10500 = vmatpush1.msra.mxu0 0.0
  %10501 = vmatprep.subr.mxu0 0.0
  %10502 = vmatpush1.msra.mxu0 0.0
  %10503 = vmatprep.subr.mxu0 0.0
  %10504 = vmatpush1.msra.mxu0 0.0
  %10505 = vmatprep.subr.mxu0 0.0
  %10506 = vmatpush1.msra.mxu0 %v10310
  %10507 = vmatprep.subr.mxu0 0.0
  %10508 = vmatpush1.msra.mxu0 %v10309
  %10509 = vmatprep.subr.mxu0 0.0
  %10510 = vmatpush1.msra.mxu0 %v10308
  %10511 = vmatprep.subr.mxu0 0.0
  %10512 = vmatpush1.msra.mxu0 %v10307
  %10513 = vmatprep.subr.mxu0 0.0
  %10514 = vmatpush2.msra.mxu0 0.0
  %10515 = vmatprep.subr.mxu0 0.0
  %10516 = vmatpush2.msra.mxu0 0.0
  %10517 = vmatprep.subr.mxu0 0.0
  %10518 = vmatpush2.msra.mxu0 0.0
  %10519 = vmatprep.subr.mxu0 0.0
  %10520 = vmatpush2.msra.mxu0 0.0
  %10521 = vmatprep.subr.mxu0 0.0
  %10522 = vmatpush2.msra.mxu0 0.0
  %10523 = vmatprep.subr.mxu0 0.0
  %10524 = vmatpush2.msra.mxu0 0.0
  %10525 = vmatprep.subr.mxu0 0.0
  %10526 = vmatpush2.msra.mxu0 0.0
  %10527 = vmatprep.subr.mxu0 0.0
  %10528 = vmatpush2.msra.mxu0 0.0
  %10529 = vmatprep.subr.mxu0 0.0
  %10530 = vmatpush2.msra.mxu0 0.0
  %10531 = vmatprep.subr.mxu0 0.0
  %10532 = vmatpush2.msra.mxu0 0.0
  %10533 = vmatprep.subr.mxu0 0.0
  %10534 = vmatpush2.msra.mxu0 0.0
  %10535 = vmatprep.subr.mxu0 0.0
  %10536 = vmatpush2.msra.mxu0 0.0
  %10537 = vmatprep.subr.mxu0 0.0
  %10538 = vmatpush2.msra.mxu0 0.0
  %10539 = vmatprep.subr.mxu0 0.0
  %10540 = vmatpush2.msra.mxu0 0.0
  %10541 = vmatprep.subr.mxu0 0.0
  %10542 = vmatpush2.msra.mxu0 0.0
  %10543 = vmatprep.subr.mxu0 0.0
  %10544 = vmatpush2.msra.mxu0 0.0
  %10545 = vmatprep.mubr.f32.mxu0 0.0
  %10546 = vmatmul.mubr.f32.gmra.mxu0 %v9813
  %v10547 = vpop.f32.mrf.mxu0
  %v10548 = vadd.f32 0.0, %v10547
  %v10549 = vpop.f32.mrf.mxu0
  %10550 = vmatprep.mubr.f32.mxu0 0.0
  %10551 = vmatmul.mubr.f32.gmra.mxu0 %v9816
  %v10552 = vpop.f32.mrf.mxu0
  %v10553 = vadd.f32 0.0, %v10552
  %v10554 = vpop.f32.mrf.mxu0
  %10555 = vdwg.mxu0
  %10556 = vmatprep.subr.mxu0 0.0
  %10557 = vmatpush1.msra.mxu0 0.0
  %10558 = vmatprep.subr.mxu0 0.0
  %10559 = vmatpush1.msra.mxu0 0.0
  %10560 = vmatprep.subr.mxu0 0.0
  %10561 = vmatpush1.msra.mxu0 0.0
  %10562 = vmatprep.subr.mxu0 0.0
  %10563 = vmatpush1.msra.mxu0 0.0
  %10564 = vmatprep.subr.mxu0 0.0
  %10565 = vmatpush1.msra.mxu0 0.0
  %10566 = vmatprep.subr.mxu0 0.0
  %10567 = vmatpush1.msra.mxu0 0.0
  %10568 = vmatprep.subr.mxu0 0.0
  %10569 = vmatpush1.msra.mxu0 0.0
  %10570 = vmatprep.subr.mxu0 0.0
  %10571 = vmatpush1.msra.mxu0 0.0
  %10572 = vmatprep.subr.mxu0 0.0
  %10573 = vmatpush1.msra.mxu0 0.0
  %10574 = vmatprep.subr.mxu0 0.0
  %10575 = vmatpush1.msra.mxu0 0.0
  %10576 = vmatprep.subr.mxu0 0.0
  %10577 = vmatpush1.msra.mxu0 0.0
  %10578 = vmatprep.subr.mxu0 0.0
  %10579 = vmatpush1.msra.mxu0 0.0
  %10580 = vmatprep.subr.mxu0 0.0
  %10581 = vmatpush1.msra.mxu0 %v10314
  %10582 = vmatprep.subr.mxu0 0.0
  %10583 = vmatpush1.msra.mxu0 %v10313
  %10584 = vmatprep.subr.mxu0 0.0
  %10585 = vmatpush1.msra.mxu0 %v10312
  %10586 = vmatprep.subr.mxu0 0.0
  %10587 = vmatpush1.msra.mxu0 %v10311
  %10588 = vmatprep.subr.mxu0 0.0
  %10589 = vmatpush2.msra.mxu0 0.0
  %10590 = vmatprep.subr.mxu0 0.0
  %10591 = vmatpush2.msra.mxu0 0.0
  %10592 = vmatprep.subr.mxu0 0.0
  %10593 = vmatpush2.msra.mxu0 0.0
  %10594 = vmatprep.subr.mxu0 0.0
  %10595 = vmatpush2.msra.mxu0 0.0
  %10596 = vmatprep.subr.mxu0 0.0
  %10597 = vmatpush2.msra.mxu0 0.0
  %10598 = vmatprep.subr.mxu0 0.0
  %10599 = vmatpush2.msra.mxu0 0.0
  %10600 = vmatprep.subr.mxu0 0.0
  %10601 = vmatpush2.msra.mxu0 0.0
  %10602 = vmatprep.subr.mxu0 0.0
  %10603 = vmatpush2.msra.mxu0 0.0
  %10604 = vmatprep.subr.mxu0 0.0
  %10605 = vmatpush2.msra.mxu0 0.0
  %10606 = vmatprep.subr.mxu0 0.0
  %10607 = vmatpush2.msra.mxu0 0.0
  %10608 = vmatprep.subr.mxu0 0.0
  %10609 = vmatpush2.msra.mxu0 0.0
  %10610 = vmatprep.subr.mxu0 0.0
  %10611 = vmatpush2.msra.mxu0 0.0
  %10612 = vmatprep.subr.mxu0 0.0
  %10613 = vmatpush2.msra.mxu0 0.0
  %10614 = vmatprep.subr.mxu0 0.0
  %10615 = vmatpush2.msra.mxu0 0.0
  %10616 = vmatprep.subr.mxu0 0.0
  %10617 = vmatpush2.msra.mxu0 0.0
  %10618 = vmatprep.subr.mxu0 0.0
  %10619 = vmatpush2.msra.mxu0 0.0
  %10620 = vmatprep.mubr.f32.mxu0 0.0
  %10621 = vmatmul.mubr.f32.gmra.mxu0 %v9894
  %v10622 = vpop.f32.mrf.mxu0
  %v10623 = vadd.f32 0.0, %v10622
  %v10624 = vpop.f32.mrf.mxu0
  %10625 = vmatprep.mubr.f32.mxu0 0.0
  %10626 = vmatmul.mubr.f32.gmra.mxu0 %v9897
  %v10627 = vpop.f32.mrf.mxu0
  %v10628 = vadd.f32 0.0, %v10627
  %v10629 = vpop.f32.mrf.mxu0
  %10630 = vdwg.mxu0
  %10631 = vmatprep.subr.mxu0 0.0
  %10632 = vmatpush1.msra.mxu0 0.0
  %10633 = vmatprep.subr.mxu0 0.0
  %10634 = vmatpush1.msra.mxu0 0.0
  %10635 = vmatprep.subr.mxu0 0.0
  %10636 = vmatpush1.msra.mxu0 0.0
  %10637 = vmatprep.subr.mxu0 0.0
  %10638 = vmatpush1.msra.mxu0 0.0
  %10639 = vmatprep.subr.mxu0 0.0
  %10640 = vmatpush1.msra.mxu0 0.0
  %10641 = vmatprep.subr.mxu0 0.0
  %10642 = vmatpush1.msra.mxu0 0.0
  %10643 = vmatprep.subr.mxu0 0.0
  %10644 = vmatpush1.msra.mxu0 0.0
  %10645 = vmatprep.subr.mxu0 0.0
  %10646 = vmatpush1.msra.mxu0 0.0
  %10647 = vmatprep.subr.mxu0 0.0
  %10648 = vmatpush1.msra.mxu0 0.0
  %10649 = vmatprep.subr.mxu0 0.0
  %10650 = vmatpush1.msra.mxu0 0.0
  %10651 = vmatprep.subr.mxu0 0.0
  %10652 = vmatpush1.msra.mxu0 0.0
  %10653 = vmatprep.subr.mxu0 0.0
  %10654 = vmatpush1.msra.mxu0 0.0
  %10655 = vmatprep.subr.mxu0 0.0
  %10656 = vmatpush1.msra.mxu0 %v10318
  %10657 = vmatprep.subr.mxu0 0.0
  %10658 = vmatpush1.msra.mxu0 %v10317
  %10659 = vmatprep.subr.mxu0 0.0
  %10660 = vmatpush1.msra.mxu0 %v10316
  %10661 = vmatprep.subr.mxu0 0.0
  %10662 = vmatpush1.msra.mxu0 %v10315
  %10663 = vmatprep.subr.mxu0 0.0
  %10664 = vmatpush2.msra.mxu0 0.0
  %10665 = vmatprep.subr.mxu0 0.0
  %10666 = vmatpush2.msra.mxu0 0.0
  %10667 = vmatprep.subr.mxu0 0.0
  %10668 = vmatpush2.msra.mxu0 0.0
  %10669 = vmatprep.subr.mxu0 0.0
  %10670 = vmatpush2.msra.mxu0 0.0
  %10671 = vmatprep.subr.mxu0 0.0
  %10672 = vmatpush2.msra.mxu0 0.0
  %10673 = vmatprep.subr.mxu0 0.0
  %10674 = vmatpush2.msra.mxu0 0.0
  %10675 = vmatprep.subr.mxu0 0.0
  %10676 = vmatpush2.msra.mxu0 0.0
  %10677 = vmatprep.subr.mxu0 0.0
  %10678 = vmatpush2.msra.mxu0 0.0
  %10679 = vmatprep.subr.mxu0 0.0
  %10680 = vmatpush2.msra.mxu0 0.0
  %10681 = vmatprep.subr.mxu0 0.0
  %10682 = vmatpush2.msra.mxu0 0.0
  %10683 = vmatprep.subr.mxu0 0.0
  %10684 = vmatpush2.msra.mxu0 0.0
  %10685 = vmatprep.subr.mxu0 0.0
  %10686 = vmatpush2.msra.mxu0 0.0
  %10687 = vmatprep.subr.mxu0 0.0
  %10688 = vmatpush2.msra.mxu0 0.0
  %10689 = vmatprep.subr.mxu0 0.0
  %10690 = vmatpush2.msra.mxu0 0.0
  %10691 = vmatprep.subr.mxu0 0.0
  %10692 = vmatpush2.msra.mxu0 0.0
  %10693 = vmatprep.subr.mxu0 0.0
  %10694 = vmatpush2.msra.mxu0 0.0
  %10695 = vmatprep.mubr.f32.mxu0 0.0
  %10696 = vmatmul.mubr.f32.gmra.mxu0 %v9975
  %v10697 = vpop.f32.mrf.mxu0
  %v10698 = vadd.f32 0.0, %v10697
  %v10699 = vpop.f32.mrf.mxu0
  %10700 = vmatprep.mubr.f32.mxu0 0.0
  %10701 = vmatmul.mubr.f32.gmra.mxu0 %v9978
  %v10702 = vpop.f32.mrf.mxu0
  %v10703 = vadd.f32 0.0, %v10702
  %v10704 = vpop.f32.mrf.mxu0
  %10705 = vdwg.mxu0
  %10706 = vmatprep.subr.mxu0 0.0
  %10707 = vmatpush1.msra.mxu0 0.0
  %10708 = vmatprep.subr.mxu0 0.0
  %10709 = vmatpush1.msra.mxu0 0.0
  %10710 = vmatprep.subr.mxu0 0.0
  %10711 = vmatpush1.msra.mxu0 0.0
  %10712 = vmatprep.subr.mxu0 0.0
  %10713 = vmatpush1.msra.mxu0 0.0
  %10714 = vmatprep.subr.mxu0 0.0
  %10715 = vmatpush1.msra.mxu0 0.0
  %10716 = vmatprep.subr.mxu0 0.0
  %10717 = vmatpush1.msra.mxu0 0.0
  %10718 = vmatprep.subr.mxu0 0.0
  %10719 = vmatpush1.msra.mxu0 0.0
  %10720 = vmatprep.subr.mxu0 0.0
  %10721 = vmatpush1.msra.mxu0 0.0
  %10722 = vmatprep.subr.mxu0 0.0
  %10723 = vmatpush1.msra.mxu0 0.0
  %10724 = vmatprep.subr.mxu0 0.0
  %10725 = vmatpush1.msra.mxu0 0.0
  %10726 = vmatprep.subr.mxu0 0.0
  %10727 = vmatpush1.msra.mxu0 0.0
  %10728 = vmatprep.subr.mxu0 0.0
  %10729 = vmatpush1.msra.mxu0 0.0
  %10730 = vmatprep.subr.mxu0 0.0
  %10731 = vmatpush1.msra.mxu0 %v10322
  %10732 = vmatprep.subr.mxu0 0.0
  %10733 = vmatpush1.msra.mxu0 %v10321
  %10734 = vmatprep.subr.mxu0 0.0
  %10735 = vmatpush1.msra.mxu0 %v10320
  %10736 = vmatprep.subr.mxu0 0.0
  %10737 = vmatpush1.msra.mxu0 %v10319
  %10738 = vmatprep.subr.mxu0 0.0
  %10739 = vmatpush2.msra.mxu0 0.0
  %10740 = vmatprep.subr.mxu0 0.0
  %10741 = vmatpush2.msra.mxu0 0.0
  %10742 = vmatprep.subr.mxu0 0.0
  %10743 = vmatpush2.msra.mxu0 0.0
  %10744 = vmatprep.subr.mxu0 0.0
  %10745 = vmatpush2.msra.mxu0 0.0
  %10746 = vmatprep.subr.mxu0 0.0
  %10747 = vmatpush2.msra.mxu0 0.0
  %10748 = vmatprep.subr.mxu0 0.0
  %10749 = vmatpush2.msra.mxu0 0.0
  %10750 = vmatprep.subr.mxu0 0.0
  %10751 = vmatpush2.msra.mxu0 0.0
  %10752 = vmatprep.subr.mxu0 0.0
  %10753 = vmatpush2.msra.mxu0 0.0
  %10754 = vmatprep.subr.mxu0 0.0
  %10755 = vmatpush2.msra.mxu0 0.0
  %10756 = vmatprep.subr.mxu0 0.0
  %10757 = vmatpush2.msra.mxu0 0.0
  %10758 = vmatprep.subr.mxu0 0.0
  %10759 = vmatpush2.msra.mxu0 0.0
  %10760 = vmatprep.subr.mxu0 0.0
  %10761 = vmatpush2.msra.mxu0 0.0
  %10762 = vmatprep.subr.mxu0 0.0
  %10763 = vmatpush2.msra.mxu0 0.0
  %10764 = vmatprep.subr.mxu0 0.0
  %10765 = vmatpush2.msra.mxu0 0.0
  %10766 = vmatprep.subr.mxu0 0.0
  %10767 = vmatpush2.msra.mxu0 0.0
  %10768 = vmatprep.subr.mxu0 0.0
  %10769 = vmatpush2.msra.mxu0 0.0
  %10770 = vmatprep.mubr.f32.mxu0 0.0
  %10771 = vmatmul.mubr.f32.gmra.mxu0 %v10056
  %v10772 = vpop.f32.mrf.mxu0
  %v10773 = vadd.f32 0.0, %v10772
  %v10774 = vpop.f32.mrf.mxu0
  %10775 = vmatprep.mubr.f32.mxu0 0.0
  %10776 = vmatmul.mubr.f32.gmra.mxu0 %v10059
  %v10777 = vpop.f32.mrf.mxu0
  %v10778 = vadd.f32 0.0, %v10777
  %v10779 = vpop.f32.mrf.mxu0
  %10780 = vdwg.mxu0
  %10781 = vmatprep.subr.mxu0 0.0
  %10782 = vmatpush1.msra.mxu0 0.0
  %10783 = vmatprep.subr.mxu0 0.0
  %10784 = vmatpush1.msra.mxu0 0.0
  %10785 = vmatprep.subr.mxu0 0.0
  %10786 = vmatpush1.msra.mxu0 0.0
  %10787 = vmatprep.subr.mxu0 0.0
  %10788 = vmatpush1.msra.mxu0 0.0
  %10789 = vmatprep.subr.mxu0 0.0
  %10790 = vmatpush1.msra.mxu0 0.0
  %10791 = vmatprep.subr.mxu0 0.0
  %10792 = vmatpush1.msra.mxu0 0.0
  %10793 = vmatprep.subr.mxu0 0.0
  %10794 = vmatpush1.msra.mxu0 0.0
  %10795 = vmatprep.subr.mxu0 0.0
  %10796 = vmatpush1.msra.mxu0 0.0
  %10797 = vmatprep.subr.mxu0 0.0
  %10798 = vmatpush1.msra.mxu0 0.0
  %10799 = vmatprep.subr.mxu0 0.0
  %10800 = vmatpush1.msra.mxu0 0.0
  %10801 = vmatprep.subr.mxu0 0.0
  %10802 = vmatpush1.msra.mxu0 0.0
  %10803 = vmatprep.subr.mxu0 0.0
  %10804 = vmatpush1.msra.mxu0 0.0
  %10805 = vmatprep.subr.mxu0 0.0
  %10806 = vmatpush1.msra.mxu0 %v10326
  %10807 = vmatprep.subr.mxu0 0.0
  %10808 = vmatpush1.msra.mxu0 %v10325
  %10809 = vmatprep.subr.mxu0 0.0
  %10810 = vmatpush1.msra.mxu0 %v10324
  %10811 = vmatprep.subr.mxu0 0.0
  %10812 = vmatpush1.msra.mxu0 %v10323
  %10813 = vmatprep.subr.mxu0 0.0
  %10814 = vmatpush2.msra.mxu0 0.0
  %10815 = vmatprep.subr.mxu0 0.0
  %10816 = vmatpush2.msra.mxu0 0.0
  %10817 = vmatprep.subr.mxu0 0.0
  %10818 = vmatpush2.msra.mxu0 0.0
  %10819 = vmatprep.subr.mxu0 0.0
  %10820 = vmatpush2.msra.mxu0 0.0
  %10821 = vmatprep.subr.mxu0 0.0
  %10822 = vmatpush2.msra.mxu0 0.0
  %10823 = vmatprep.subr.mxu0 0.0
  %10824 = vmatpush2.msra.mxu0 0.0
  %10825 = vmatprep.subr.mxu0 0.0
  %10826 = vmatpush2.msra.mxu0 0.0
  %10827 = vmatprep.subr.mxu0 0.0
  %10828 = vmatpush2.msra.mxu0 0.0
  %10829 = vmatprep.subr.mxu0 0.0
  %10830 = vmatpush2.msra.mxu0 0.0
  %10831 = vmatprep.subr.mxu0 0.0
  %10832 = vmatpush2.msra.mxu0 0.0
  %10833 = vmatprep.subr.mxu0 0.0
  %10834 = vmatpush2.msra.mxu0 0.0
  %10835 = vmatprep.subr.mxu0 0.0
  %10836 = vmatpush2.msra.mxu0 0.0
  %10837 = vmatprep.subr.mxu0 0.0
  %10838 = vmatpush2.msra.mxu0 0.0
  %10839 = vmatprep.subr.mxu0 0.0
  %10840 = vmatpush2.msra.mxu0 0.0
  %10841 = vmatprep.subr.mxu0 0.0
  %10842 = vmatpush2.msra.mxu0 0.0
  %10843 = vmatprep.subr.mxu0 0.0
  %10844 = vmatpush2.msra.mxu0 0.0
  %10845 = vmatprep.mubr.f32.mxu0 0.0
  %10846 = vmatmul.mubr.f32.gmra.mxu0 %v10137
  %v10847 = vpop.f32.mrf.mxu0
  %v10848 = vadd.f32 0.0, %v10847
  %v10849 = vpop.f32.mrf.mxu0
  %10850 = vmatprep.mubr.f32.mxu0 0.0
  %10851 = vmatmul.mubr.f32.gmra.mxu0 %v10140
  %v10852 = vpop.f32.mrf.mxu0
  %v10853 = vadd.f32 0.0, %v10852
  %v10854 = vpop.f32.mrf.mxu0
  %10855 = vdwg.mxu0
  %10856 = vmatprep.subr.mxu0 0.0
  %10857 = vmatpush1.msra.mxu0 0.0
  %10858 = vmatprep.subr.mxu0 0.0
  %10859 = vmatpush1.msra.mxu0 0.0
  %10860 = vmatprep.subr.mxu0 0.0
  %10861 = vmatpush1.msra.mxu0 0.0
  %10862 = vmatprep.subr.mxu0 0.0
  %10863 = vmatpush1.msra.mxu0 0.0
  %10864 = vmatprep.subr.mxu0 0.0
  %10865 = vmatpush1.msra.mxu0 0.0
  %10866 = vmatprep.subr.mxu0 0.0
  %10867 = vmatpush1.msra.mxu0 0.0
  %10868 = vmatprep.subr.mxu0 0.0
  %10869 = vmatpush1.msra.mxu0 0.0
  %10870 = vmatprep.subr.mxu0 0.0
  %10871 = vmatpush1.msra.mxu0 0.0
  %10872 = vmatprep.subr.mxu0 0.0
  %10873 = vmatpush1.msra.mxu0 0.0
  %10874 = vmatprep.subr.mxu0 0.0
  %10875 = vmatpush1.msra.mxu0 0.0
  %10876 = vmatprep.subr.mxu0 0.0
  %10877 = vmatpush1.msra.mxu0 0.0
  %10878 = vmatprep.subr.mxu0 0.0
  %10879 = vmatpush1.msra.mxu0 0.0
  %10880 = vmatprep.subr.mxu0 0.0
  %10881 = vmatpush1.msra.mxu0 %v10330
  %10882 = vmatprep.subr.mxu0 0.0
  %10883 = vmatpush1.msra.mxu0 %v10329
  %10884 = vmatprep.subr.mxu0 0.0
  %10885 = vmatpush1.msra.mxu0 %v10328
  %10886 = vmatprep.subr.mxu0 0.0
  %10887 = vmatpush1.msra.mxu0 %v10327
  %10888 = vmatprep.subr.mxu0 0.0
  %10889 = vmatpush2.msra.mxu0 0.0
  %10890 = vmatprep.subr.mxu0 0.0
  %10891 = vmatpush2.msra.mxu0 0.0
  %10892 = vmatprep.subr.mxu0 0.0
  %10893 = vmatpush2.msra.mxu0 0.0
  %10894 = vmatprep.subr.mxu0 0.0
  %10895 = vmatpush2.msra.mxu0 0.0
  %10896 = vmatprep.subr.mxu0 0.0
  %10897 = vmatpush2.msra.mxu0 0.0
  %10898 = vmatprep.subr.mxu0 0.0
  %10899 = vmatpush2.msra.mxu0 0.0
  %10900 = vmatprep.subr.mxu0 0.0
  %10901 = vmatpush2.msra.mxu0 0.0
  %10902 = vmatprep.subr.mxu0 0.0
  %10903 = vmatpush2.msra.mxu0 0.0
  %10904 = vmatprep.subr.mxu0 0.0
  %10905 = vmatpush2.msra.mxu0 0.0
  %10906 = vmatprep.subr.mxu0 0.0
  %10907 = vmatpush2.msra.mxu0 0.0
  %10908 = vmatprep.subr.mxu0 0.0
  %10909 = vmatpush2.msra.mxu0 0.0
  %10910 = vmatprep.subr.mxu0 0.0
  %10911 = vmatpush2.msra.mxu0 0.0
  %10912 = vmatprep.subr.mxu0 0.0
  %10913 = vmatpush2.msra.mxu0 0.0
  %10914 = vmatprep.subr.mxu0 0.0
  %10915 = vmatpush2.msra.mxu0 0.0
  %10916 = vmatprep.subr.mxu0 0.0
  %10917 = vmatpush2.msra.mxu0 0.0
  %10918 = vmatprep.subr.mxu0 0.0
  %10919 = vmatpush2.msra.mxu0 0.0
  %10920 = vmatprep.mubr.f32.mxu0 0.0
  %10921 = vmatmul.mubr.f32.gmra.mxu0 %v10218
  %v10922 = vpop.f32.mrf.mxu0
  %v10923 = vadd.f32 0.0, %v10922
  %v10924 = vpop.f32.mrf.mxu0
  %10925 = vmatprep.mubr.f32.mxu0 0.0
  %10926 = vmatmul.mubr.f32.gmra.mxu0 %v10221
  %v10927 = vpop.f32.mrf.mxu0
  %v10928 = vadd.f32 0.0, %v10927
  %v10929 = vpop.f32.mrf.mxu0
  %10930 = vdwg.mxu0
  %s10931 = scalar_lea.vmem %s6, 512
  %v10932 = vld [vmem:[%s10931] sm:$0xff]
  %v10933 = vld [vmem:[%s10931 + $0x8] sm:$0xff]
  %v10934 = vld [vmem:[%s10931 + $0x10] sm:$0xff]
  %v10935 = vld [vmem:[%s10931 + $0x18] sm:$0xff]
  %v10936 = vld [vmem:[%s10931 + $0x20] sm:$0xff]
  %v10937 = vld [vmem:[%s10931 + $0x28] sm:$0xff]
  %v10938 = vld [vmem:[%s10931 + $0x30] sm:$0xff]
  %v10939 = vld [vmem:[%s10931 + $0x38] sm:$0xff]
  %v10940 = vld [vmem:[%s10931 + $0x40] sm:$0xff]
  %v10941 = vld [vmem:[%s10931 + $0x48] sm:$0xff]
  %v10942 = vld [vmem:[%s10931 + $0x50] sm:$0xff]
  %v10943 = vld [vmem:[%s10931 + $0x58] sm:$0xff]
  %v10944 = vld [vmem:[%s10931 + $0x60] sm:$0xff]
  %v10945 = vld [vmem:[%s10931 + $0x68] sm:$0xff]
  %v10946 = vld [vmem:[%s10931 + $0x70] sm:$0xff]
  %v10947 = vld [vmem:[%s10931 + $0x78] sm:$0xff]
  %v10948 = vld [vmem:[%s10931 + $0x80] sm:$0xff]
  %v10949 = vld [vmem:[%s10931 + $0x88] sm:$0xff]
  %v10950 = vld [vmem:[%s10931 + $0x90] sm:$0xff]
  %v10951 = vld [vmem:[%s10931 + $0x98] sm:$0xff]
  %v10952 = vld [vmem:[%s10931 + $0xa0] sm:$0xff]
  %v10953 = vld [vmem:[%s10931 + $0xa8] sm:$0xff]
  %v10954 = vld [vmem:[%s10931 + $0xb0] sm:$0xff]
  %v10955 = vld [vmem:[%s10931 + $0xb8] sm:$0xff]
  %v10956 = vld [vmem:[%s10931 + $0xc0] sm:$0xff]
  %v10957 = vld [vmem:[%s10931 + $0xc8] sm:$0xff]
  %v10958 = vld [vmem:[%s10931 + $0xd0] sm:$0xff]
  %v10959 = vld [vmem:[%s10931 + $0xd8] sm:$0xff]
  %v10960 = vld [vmem:[%s10931 + $0xe0] sm:$0xff]
  %v10961 = vld [vmem:[%s10931 + $0xe8] sm:$0xff]
  %v10962 = vld [vmem:[%s10931 + $0xf0] sm:$0xff]
  %v10963 = vld [vmem:[%s10931 + $0xf8] sm:$0xff]
  %10964 = vmatprep.subr.mxu0 0.0
  %10965 = vmatpush1.msra.mxu0 0.0
  %10966 = vmatprep.subr.mxu0 0.0
  %10967 = vmatpush1.msra.mxu0 0.0
  %10968 = vmatprep.subr.mxu0 0.0
  %10969 = vmatpush1.msra.mxu0 0.0
  %10970 = vmatprep.subr.mxu0 0.0
  %10971 = vmatpush1.msra.mxu0 0.0
  %10972 = vmatprep.subr.mxu0 0.0
  %10973 = vmatpush1.msra.mxu0 0.0
  %10974 = vmatprep.subr.mxu0 0.0
  %10975 = vmatpush1.msra.mxu0 0.0
  %10976 = vmatprep.subr.mxu0 0.0
  %10977 = vmatpush1.msra.mxu0 0.0
  %10978 = vmatprep.subr.mxu0 0.0
  %10979 = vmatpush1.msra.mxu0 0.0
  %10980 = vmatprep.subr.mxu0 0.0
  %10981 = vmatpush1.msra.mxu0 0.0
  %10982 = vmatprep.subr.mxu0 0.0
  %10983 = vmatpush1.msra.mxu0 0.0
  %10984 = vmatprep.subr.mxu0 0.0
  %10985 = vmatpush1.msra.mxu0 0.0
  %10986 = vmatprep.subr.mxu0 0.0
  %10987 = vmatpush1.msra.mxu0 0.0
  %10988 = vmatprep.subr.mxu0 0.0
  %10989 = vmatpush1.msra.mxu0 %v10935
  %10990 = vmatprep.subr.mxu0 0.0
  %10991 = vmatpush1.msra.mxu0 %v10934
  %10992 = vmatprep.subr.mxu0 0.0
  %10993 = vmatpush1.msra.mxu0 %v10933
  %10994 = vmatprep.subr.mxu0 0.0
  %10995 = vmatpush1.msra.mxu0 %v10932
  %10996 = vmatprep.subr.mxu0 0.0
  %10997 = vmatpush2.msra.mxu0 0.0
  %10998 = vmatprep.subr.mxu0 0.0
  %10999 = vmatpush2.msra.mxu0 0.0
  %11000 = vmatprep.subr.mxu0 0.0
  %11001 = vmatpush2.msra.mxu0 0.0
  %11002 = vmatprep.subr.mxu0 0.0
  %11003 = vmatpush2.msra.mxu0 0.0
  %11004 = vmatprep.subr.mxu0 0.0
  %11005 = vmatpush2.msra.mxu0 0.0
  %11006 = vmatprep.subr.mxu0 0.0
  %11007 = vmatpush2.msra.mxu0 0.0
  %11008 = vmatprep.subr.mxu0 0.0
  %11009 = vmatpush2.msra.mxu0 0.0
  %11010 = vmatprep.subr.mxu0 0.0
  %11011 = vmatpush2.msra.mxu0 0.0
  %11012 = vmatprep.subr.mxu0 0.0
  %11013 = vmatpush2.msra.mxu0 0.0
  %11014 = vmatprep.subr.mxu0 0.0
  %11015 = vmatpush2.msra.mxu0 0.0
  %11016 = vmatprep.subr.mxu0 0.0
  %11017 = vmatpush2.msra.mxu0 0.0
  %11018 = vmatprep.subr.mxu0 0.0
  %11019 = vmatpush2.msra.mxu0 0.0
  %11020 = vmatprep.subr.mxu0 0.0
  %11021 = vmatpush2.msra.mxu0 0.0
  %11022 = vmatprep.subr.mxu0 0.0
  %11023 = vmatpush2.msra.mxu0 0.0
  %11024 = vmatprep.subr.mxu0 0.0
  %11025 = vmatpush2.msra.mxu0 0.0
  %11026 = vmatprep.subr.mxu0 0.0
  %11027 = vmatpush2.msra.mxu0 0.0
  %11028 = vmatprep.mubr.f32.mxu0 0.0
  %11029 = vmatmul.mubr.f32.gmra.mxu0 %v9651
  %v11030 = vpop.f32.mrf.mxu0
  %v11031 = vadd.f32 0.0, %v11030
  %v11032 = vpop.f32.mrf.mxu0
  %11033 = vmatprep.mubr.f32.mxu0 0.0
  %11034 = vmatmul.mubr.f32.gmra.mxu0 %v9654
  %v11035 = vpop.f32.mrf.mxu0
  %v11036 = vadd.f32 0.0, %v11035
  %v11037 = vpop.f32.mrf.mxu0
  %11038 = vdwg.mxu0
  %11039 = vmatprep.subr.mxu0 0.0
  %11040 = vmatpush1.msra.mxu0 0.0
  %11041 = vmatprep.subr.mxu0 0.0
  %11042 = vmatpush1.msra.mxu0 0.0
  %11043 = vmatprep.subr.mxu0 0.0
  %11044 = vmatpush1.msra.mxu0 0.0
  %11045 = vmatprep.subr.mxu0 0.0
  %11046 = vmatpush1.msra.mxu0 0.0
  %11047 = vmatprep.subr.mxu0 0.0
  %11048 = vmatpush1.msra.mxu0 0.0
  %11049 = vmatprep.subr.mxu0 0.0
  %11050 = vmatpush1.msra.mxu0 0.0
  %11051 = vmatprep.subr.mxu0 0.0
  %11052 = vmatpush1.msra.mxu0 0.0
  %11053 = vmatprep.subr.mxu0 0.0
  %11054 = vmatpush1.msra.mxu0 0.0
  %11055 = vmatprep.subr.mxu0 0.0
  %11056 = vmatpush1.msra.mxu0 0.0
  %11057 = vmatprep.subr.mxu0 0.0
  %11058 = vmatpush1.msra.mxu0 0.0
  %11059 = vmatprep.subr.mxu0 0.0
  %11060 = vmatpush1.msra.mxu0 0.0
  %11061 = vmatprep.subr.mxu0 0.0
  %11062 = vmatpush1.msra.mxu0 0.0
  %11063 = vmatprep.subr.mxu0 0.0
  %11064 = vmatpush1.msra.mxu0 %v10939
  %11065 = vmatprep.subr.mxu0 0.0
  %11066 = vmatpush1.msra.mxu0 %v10938
  %11067 = vmatprep.subr.mxu0 0.0
  %11068 = vmatpush1.msra.mxu0 %v10937
  %11069 = vmatprep.subr.mxu0 0.0
  %11070 = vmatpush1.msra.mxu0 %v10936
  %11071 = vmatprep.subr.mxu0 0.0
  %11072 = vmatpush2.msra.mxu0 0.0
  %11073 = vmatprep.subr.mxu0 0.0
  %11074 = vmatpush2.msra.mxu0 0.0
  %11075 = vmatprep.subr.mxu0 0.0
  %11076 = vmatpush2.msra.mxu0 0.0
  %11077 = vmatprep.subr.mxu0 0.0
  %11078 = vmatpush2.msra.mxu0 0.0
  %11079 = vmatprep.subr.mxu0 0.0
  %11080 = vmatpush2.msra.mxu0 0.0
  %11081 = vmatprep.subr.mxu0 0.0
  %11082 = vmatpush2.msra.mxu0 0.0
  %11083 = vmatprep.subr.mxu0 0.0
  %11084 = vmatpush2.msra.mxu0 0.0
  %11085 = vmatprep.subr.mxu0 0.0
  %11086 = vmatpush2.msra.mxu0 0.0
  %11087 = vmatprep.subr.mxu0 0.0
  %11088 = vmatpush2.msra.mxu0 0.0
  %11089 = vmatprep.subr.mxu0 0.0
  %11090 = vmatpush2.msra.mxu0 0.0
  %11091 = vmatprep.subr.mxu0 0.0
  %11092 = vmatpush2.msra.mxu0 0.0
  %11093 = vmatprep.subr.mxu0 0.0
  %11094 = vmatpush2.msra.mxu0 0.0
  %11095 = vmatprep.subr.mxu0 0.0
  %11096 = vmatpush2.msra.mxu0 0.0
  %11097 = vmatprep.subr.mxu0 0.0
  %11098 = vmatpush2.msra.mxu0 0.0
  %11099 = vmatprep.subr.mxu0 0.0
  %11100 = vmatpush2.msra.mxu0 0.0
  %11101 = vmatprep.subr.mxu0 0.0
  %11102 = vmatpush2.msra.mxu0 0.0
  %11103 = vmatprep.mubr.f32.mxu0 0.0
  %11104 = vmatmul.mubr.f32.gmra.mxu0 %v9732
  %v11105 = vpop.f32.mrf.mxu0
  %v11106 = vadd.f32 0.0, %v11105
  %v11107 = vpop.f32.mrf.mxu0
  %11108 = vmatprep.mubr.f32.mxu0 0.0
  %11109 = vmatmul.mubr.f32.gmra.mxu0 %v9735
  %v11110 = vpop.f32.mrf.mxu0
  %v11111 = vadd.f32 0.0, %v11110
  %v11112 = vpop.f32.mrf.mxu0
  %11113 = vdwg.mxu0
  %11114 = vmatprep.subr.mxu0 0.0
  %11115 = vmatpush1.msra.mxu0 0.0
  %11116 = vmatprep.subr.mxu0 0.0
  %11117 = vmatpush1.msra.mxu0 0.0
  %11118 = vmatprep.subr.mxu0 0.0
  %11119 = vmatpush1.msra.mxu0 0.0
  %11120 = vmatprep.subr.mxu0 0.0
  %11121 = vmatpush1.msra.mxu0 0.0
  %11122 = vmatprep.subr.mxu0 0.0
  %11123 = vmatpush1.msra.mxu0 0.0
  %11124 = vmatprep.subr.mxu0 0.0
  %11125 = vmatpush1.msra.mxu0 0.0
  %11126 = vmatprep.subr.mxu0 0.0
  %11127 = vmatpush1.msra.mxu0 0.0
  %11128 = vmatprep.subr.mxu0 0.0
  %11129 = vmatpush1.msra.mxu0 0.0
  %11130 = vmatprep.subr.mxu0 0.0
  %11131 = vmatpush1.msra.mxu0 0.0
  %11132 = vmatprep.subr.mxu0 0.0
  %11133 = vmatpush1.msra.mxu0 0.0
  %11134 = vmatprep.subr.mxu0 0.0
  %11135 = vmatpush1.msra.mxu0 0.0
  %11136 = vmatprep.subr.mxu0 0.0
  %11137 = vmatpush1.msra.mxu0 0.0
  %11138 = vmatprep.subr.mxu0 0.0
  %11139 = vmatpush1.msra.mxu0 %v10943
  %11140 = vmatprep.subr.mxu0 0.0
  %11141 = vmatpush1.msra.mxu0 %v10942
  %11142 = vmatprep.subr.mxu0 0.0
  %11143 = vmatpush1.msra.mxu0 %v10941
  %11144 = vmatprep.subr.mxu0 0.0
  %11145 = vmatpush1.msra.mxu0 %v10940
  %11146 = vmatprep.subr.mxu0 0.0
  %11147 = vmatpush2.msra.mxu0 0.0
  %11148 = vmatprep.subr.mxu0 0.0
  %11149 = vmatpush2.msra.mxu0 0.0
  %11150 = vmatprep.subr.mxu0 0.0
  %11151 = vmatpush2.msra.mxu0 0.0
  %11152 = vmatprep.subr.mxu0 0.0
  %11153 = vmatpush2.msra.mxu0 0.0
  %11154 = vmatprep.subr.mxu0 0.0
  %11155 = vmatpush2.msra.mxu0 0.0
  %11156 = vmatprep.subr.mxu0 0.0
  %11157 = vmatpush2.msra.mxu0 0.0
  %11158 = vmatprep.subr.mxu0 0.0
  %11159 = vmatpush2.msra.mxu0 0.0
  %11160 = vmatprep.subr.mxu0 0.0
  %11161 = vmatpush2.msra.mxu0 0.0
  %11162 = vmatprep.subr.mxu0 0.0
  %11163 = vmatpush2.msra.mxu0 0.0
  %11164 = vmatprep.subr.mxu0 0.0
  %11165 = vmatpush2.msra.mxu0 0.0
  %11166 = vmatprep.subr.mxu0 0.0
  %11167 = vmatpush2.msra.mxu0 0.0
  %11168 = vmatprep.subr.mxu0 0.0
  %11169 = vmatpush2.msra.mxu0 0.0
  %11170 = vmatprep.subr.mxu0 0.0
  %11171 = vmatpush2.msra.mxu0 0.0
  %11172 = vmatprep.subr.mxu0 0.0
  %11173 = vmatpush2.msra.mxu0 0.0
  %11174 = vmatprep.subr.mxu0 0.0
  %11175 = vmatpush2.msra.mxu0 0.0
  %11176 = vmatprep.subr.mxu0 0.0
  %11177 = vmatpush2.msra.mxu0 0.0
  %11178 = vmatprep.mubr.f32.mxu0 0.0
  %11179 = vmatmul.mubr.f32.gmra.mxu0 %v9813
  %v11180 = vpop.f32.mrf.mxu0
  %v11181 = vadd.f32 0.0, %v11180
  %v11182 = vpop.f32.mrf.mxu0
  %11183 = vmatprep.mubr.f32.mxu0 0.0
  %11184 = vmatmul.mubr.f32.gmra.mxu0 %v9816
  %v11185 = vpop.f32.mrf.mxu0
  %v11186 = vadd.f32 0.0, %v11185
  %v11187 = vpop.f32.mrf.mxu0
  %11188 = vdwg.mxu0
  %11189 = vmatprep.subr.mxu0 0.0
  %11190 = vmatpush1.msra.mxu0 0.0
  %11191 = vmatprep.subr.mxu0 0.0
  %11192 = vmatpush1.msra.mxu0 0.0
  %11193 = vmatprep.subr.mxu0 0.0
  %11194 = vmatpush1.msra.mxu0 0.0
  %11195 = vmatprep.subr.mxu0 0.0
  %11196 = vmatpush1.msra.mxu0 0.0
  %11197 = vmatprep.subr.mxu0 0.0
  %11198 = vmatpush1.msra.mxu0 0.0
  %11199 = vmatprep.subr.mxu0 0.0
  %11200 = vmatpush1.msra.mxu0 0.0
  %11201 = vmatprep.subr.mxu0 0.0
  %11202 = vmatpush1.msra.mxu0 0.0
  %11203 = vmatprep.subr.mxu0 0.0
  %11204 = vmatpush1.msra.mxu0 0.0
  %11205 = vmatprep.subr.mxu0 0.0
  %11206 = vmatpush1.msra.mxu0 0.0
  %11207 = vmatprep.subr.mxu0 0.0
  %11208 = vmatpush1.msra.mxu0 0.0
  %11209 = vmatprep.subr.mxu0 0.0
  %11210 = vmatpush1.msra.mxu0 0.0
  %11211 = vmatprep.subr.mxu0 0.0
  %11212 = vmatpush1.msra.mxu0 0.0
  %11213 = vmatprep.subr.mxu0 0.0
  %11214 = vmatpush1.msra.mxu0 %v10947
  %11215 = vmatprep.subr.mxu0 0.0
  %11216 = vmatpush1.msra.mxu0 %v10946
  %11217 = vmatprep.subr.mxu0 0.0
  %11218 = vmatpush1.msra.mxu0 %v10945
  %11219 = vmatprep.subr.mxu0 0.0
  %11220 = vmatpush1.msra.mxu0 %v10944
  %11221 = vmatprep.subr.mxu0 0.0
  %11222 = vmatpush2.msra.mxu0 0.0
  %11223 = vmatprep.subr.mxu0 0.0
  %11224 = vmatpush2.msra.mxu0 0.0
  %11225 = vmatprep.subr.mxu0 0.0
  %11226 = vmatpush2.msra.mxu0 0.0
  %11227 = vmatprep.subr.mxu0 0.0
  %11228 = vmatpush2.msra.mxu0 0.0
  %11229 = vmatprep.subr.mxu0 0.0
  %11230 = vmatpush2.msra.mxu0 0.0
  %11231 = vmatprep.subr.mxu0 0.0
  %11232 = vmatpush2.msra.mxu0 0.0
  %11233 = vmatprep.subr.mxu0 0.0
  %11234 = vmatpush2.msra.mxu0 0.0
  %11235 = vmatprep.subr.mxu0 0.0
  %11236 = vmatpush2.msra.mxu0 0.0
  %11237 = vmatprep.subr.mxu0 0.0
  %11238 = vmatpush2.msra.mxu0 0.0
  %11239 = vmatprep.subr.mxu0 0.0
  %11240 = vmatpush2.msra.mxu0 0.0
  %11241 = vmatprep.subr.mxu0 0.0
  %11242 = vmatpush2.msra.mxu0 0.0
  %11243 = vmatprep.subr.mxu0 0.0
  %11244 = vmatpush2.msra.mxu0 0.0
  %11245 = vmatprep.subr.mxu0 0.0
  %11246 = vmatpush2.msra.mxu0 0.0
  %11247 = vmatprep.subr.mxu0 0.0
  %11248 = vmatpush2.msra.mxu0 0.0
  %11249 = vmatprep.subr.mxu0 0.0
  %11250 = vmatpush2.msra.mxu0 0.0
  %11251 = vmatprep.subr.mxu0 0.0
  %11252 = vmatpush2.msra.mxu0 0.0
  %11253 = vmatprep.mubr.f32.mxu0 0.0
  %11254 = vmatmul.mubr.f32.gmra.mxu0 %v9894
  %v11255 = vpop.f32.mrf.mxu0
  %v11256 = vadd.f32 0.0, %v11255
  %v11257 = vpop.f32.mrf.mxu0
  %11258 = vmatprep.mubr.f32.mxu0 0.0
  %11259 = vmatmul.mubr.f32.gmra.mxu0 %v9897
  %v11260 = vpop.f32.mrf.mxu0
  %v11261 = vadd.f32 0.0, %v11260
  %v11262 = vpop.f32.mrf.mxu0
  %11263 = vdwg.mxu0
  %11264 = vmatprep.subr.mxu0 0.0
  %11265 = vmatpush1.msra.mxu0 0.0
  %11266 = vmatprep.subr.mxu0 0.0
  %11267 = vmatpush1.msra.mxu0 0.0
  %11268 = vmatprep.subr.mxu0 0.0
  %11269 = vmatpush1.msra.mxu0 0.0
  %11270 = vmatprep.subr.mxu0 0.0
  %11271 = vmatpush1.msra.mxu0 0.0
  %11272 = vmatprep.subr.mxu0 0.0
  %11273 = vmatpush1.msra.mxu0 0.0
  %11274 = vmatprep.subr.mxu0 0.0
  %11275 = vmatpush1.msra.mxu0 0.0
  %11276 = vmatprep.subr.mxu0 0.0
  %11277 = vmatpush1.msra.mxu0 0.0
  %11278 = vmatprep.subr.mxu0 0.0
  %11279 = vmatpush1.msra.mxu0 0.0
  %11280 = vmatprep.subr.mxu0 0.0
  %11281 = vmatpush1.msra.mxu0 0.0
  %11282 = vmatprep.subr.mxu0 0.0
  %11283 = vmatpush1.msra.mxu0 0.0
  %11284 = vmatprep.subr.mxu0 0.0
  %11285 = vmatpush1.msra.mxu0 0.0
  %11286 = vmatprep.subr.mxu0 0.0
  %11287 = vmatpush1.msra.mxu0 0.0
  %11288 = vmatprep.subr.mxu0 0.0
  %11289 = vmatpush1.msra.mxu0 %v10951
  %11290 = vmatprep.subr.mxu0 0.0
  %11291 = vmatpush1.msra.mxu0 %v10950
  %11292 = vmatprep.subr.mxu0 0.0
  %11293 = vmatpush1.msra.mxu0 %v10949
  %11294 = vmatprep.subr.mxu0 0.0
  %11295 = vmatpush1.msra.mxu0 %v10948
  %11296 = vmatprep.subr.mxu0 0.0
  %11297 = vmatpush2.msra.mxu0 0.0
  %11298 = vmatprep.subr.mxu0 0.0
  %11299 = vmatpush2.msra.mxu0 0.0
  %11300 = vmatprep.subr.mxu0 0.0
  %11301 = vmatpush2.msra.mxu0 0.0
  %11302 = vmatprep.subr.mxu0 0.0
  %11303 = vmatpush2.msra.mxu0 0.0
  %11304 = vmatprep.subr.mxu0 0.0
  %11305 = vmatpush2.msra.mxu0 0.0
  %11306 = vmatprep.subr.mxu0 0.0
  %11307 = vmatpush2.msra.mxu0 0.0
  %11308 = vmatprep.subr.mxu0 0.0
  %11309 = vmatpush2.msra.mxu0 0.0
  %11310 = vmatprep.subr.mxu0 0.0
  %11311 = vmatpush2.msra.mxu0 0.0
  %11312 = vmatprep.subr.mxu0 0.0
  %11313 = vmatpush2.msra.mxu0 0.0
  %11314 = vmatprep.subr.mxu0 0.0
  %11315 = vmatpush2.msra.mxu0 0.0
  %11316 = vmatprep.subr.mxu0 0.0
  %11317 = vmatpush2.msra.mxu0 0.0
  %11318 = vmatprep.subr.mxu0 0.0
  %11319 = vmatpush2.msra.mxu0 0.0
  %11320 = vmatprep.subr.mxu0 0.0
  %11321 = vmatpush2.msra.mxu0 0.0
  %11322 = vmatprep.subr.mxu0 0.0
  %11323 = vmatpush2.msra.mxu0 0.0
  %11324 = vmatprep.subr.mxu0 0.0
  %11325 = vmatpush2.msra.mxu0 0.0
  %11326 = vmatprep.subr.mxu0 0.0
  %11327 = vmatpush2.msra.mxu0 0.0
  %11328 = vmatprep.mubr.f32.mxu0 0.0
  %11329 = vmatmul.mubr.f32.gmra.mxu0 %v9975
  %v11330 = vpop.f32.mrf.mxu0
  %v11331 = vadd.f32 0.0, %v11330
  %v11332 = vpop.f32.mrf.mxu0
  %11333 = vmatprep.mubr.f32.mxu0 0.0
  %11334 = vmatmul.mubr.f32.gmra.mxu0 %v9978
  %v11335 = vpop.f32.mrf.mxu0
  %v11336 = vadd.f32 0.0, %v11335
  %v11337 = vpop.f32.mrf.mxu0
  %11338 = vdwg.mxu0
  %11339 = vmatprep.subr.mxu0 0.0
  %11340 = vmatpush1.msra.mxu0 0.0
  %11341 = vmatprep.subr.mxu0 0.0
  %11342 = vmatpush1.msra.mxu0 0.0
  %11343 = vmatprep.subr.mxu0 0.0
  %11344 = vmatpush1.msra.mxu0 0.0
  %11345 = vmatprep.subr.mxu0 0.0
  %11346 = vmatpush1.msra.mxu0 0.0
  %11347 = vmatprep.subr.mxu0 0.0
  %11348 = vmatpush1.msra.mxu0 0.0
  %11349 = vmatprep.subr.mxu0 0.0
  %11350 = vmatpush1.msra.mxu0 0.0
  %11351 = vmatprep.subr.mxu0 0.0
  %11352 = vmatpush1.msra.mxu0 0.0
  %11353 = vmatprep.subr.mxu0 0.0
  %11354 = vmatpush1.msra.mxu0 0.0
  %11355 = vmatprep.subr.mxu0 0.0
  %11356 = vmatpush1.msra.mxu0 0.0
  %11357 = vmatprep.subr.mxu0 0.0
  %11358 = vmatpush1.msra.mxu0 0.0
  %11359 = vmatprep.subr.mxu0 0.0
  %11360 = vmatpush1.msra.mxu0 0.0
  %11361 = vmatprep.subr.mxu0 0.0
  %11362 = vmatpush1.msra.mxu0 0.0
  %11363 = vmatprep.subr.mxu0 0.0
  %11364 = vmatpush1.msra.mxu0 %v10955
  %11365 = vmatprep.subr.mxu0 0.0
  %11366 = vmatpush1.msra.mxu0 %v10954
  %11367 = vmatprep.subr.mxu0 0.0
  %11368 = vmatpush1.msra.mxu0 %v10953
  %11369 = vmatprep.subr.mxu0 0.0
  %11370 = vmatpush1.msra.mxu0 %v10952
  %11371 = vmatprep.subr.mxu0 0.0
  %11372 = vmatpush2.msra.mxu0 0.0
  %11373 = vmatprep.subr.mxu0 0.0
  %11374 = vmatpush2.msra.mxu0 0.0
  %11375 = vmatprep.subr.mxu0 0.0
  %11376 = vmatpush2.msra.mxu0 0.0
  %11377 = vmatprep.subr.mxu0 0.0
  %11378 = vmatpush2.msra.mxu0 0.0
  %11379 = vmatprep.subr.mxu0 0.0
  %11380 = vmatpush2.msra.mxu0 0.0
  %11381 = vmatprep.subr.mxu0 0.0
  %11382 = vmatpush2.msra.mxu0 0.0
  %11383 = vmatprep.subr.mxu0 0.0
  %11384 = vmatpush2.msra.mxu0 0.0
  %11385 = vmatprep.subr.mxu0 0.0
  %11386 = vmatpush2.msra.mxu0 0.0
  %11387 = vmatprep.subr.mxu0 0.0
  %11388 = vmatpush2.msra.mxu0 0.0
  %11389 = vmatprep.subr.mxu0 0.0
  %11390 = vmatpush2.msra.mxu0 0.0
  %11391 = vmatprep.subr.mxu0 0.0
  %11392 = vmatpush2.msra.mxu0 0.0
  %11393 = vmatprep.subr.mxu0 0.0
  %11394 = vmatpush2.msra.mxu0 0.0
  %11395 = vmatprep.subr.mxu0 0.0
  %11396 = vmatpush2.msra.mxu0 0.0
  %11397 = vmatprep.subr.mxu0 0.0
  %11398 = vmatpush2.msra.mxu0 0.0
  %11399 = vmatprep.subr.mxu0 0.0
  %11400 = vmatpush2.msra.mxu0 0.0
  %11401 = vmatprep.subr.mxu0 0.0
  %11402 = vmatpush2.msra.mxu0 0.0
  %11403 = vmatprep.mubr.f32.mxu0 0.0
  %11404 = vmatmul.mubr.f32.gmra.mxu0 %v10056
  %v11405 = vpop.f32.mrf.mxu0
  %v11406 = vadd.f32 0.0, %v11405
  %v11407 = vpop.f32.mrf.mxu0
  %11408 = vmatprep.mubr.f32.mxu0 0.0
  %11409 = vmatmul.mubr.f32.gmra.mxu0 %v10059
  %v11410 = vpop.f32.mrf.mxu0
  %v11411 = vadd.f32 0.0, %v11410
  %v11412 = vpop.f32.mrf.mxu0
  %11413 = vdwg.mxu0
  %11414 = vmatprep.subr.mxu0 0.0
  %11415 = vmatpush1.msra.mxu0 0.0
  %11416 = vmatprep.subr.mxu0 0.0
  %11417 = vmatpush1.msra.mxu0 0.0
  %11418 = vmatprep.subr.mxu0 0.0
  %11419 = vmatpush1.msra.mxu0 0.0
  %11420 = vmatprep.subr.mxu0 0.0
  %11421 = vmatpush1.msra.mxu0 0.0
  %11422 = vmatprep.subr.mxu0 0.0
  %11423 = vmatpush1.msra.mxu0 0.0
  %11424 = vmatprep.subr.mxu0 0.0
  %11425 = vmatpush1.msra.mxu0 0.0
  %11426 = vmatprep.subr.mxu0 0.0
  %11427 = vmatpush1.msra.mxu0 0.0
  %11428 = vmatprep.subr.mxu0 0.0
  %11429 = vmatpush1.msra.mxu0 0.0
  %11430 = vmatprep.subr.mxu0 0.0
  %11431 = vmatpush1.msra.mxu0 0.0
  %11432 = vmatprep.subr.mxu0 0.0
  %11433 = vmatpush1.msra.mxu0 0.0
  %11434 = vmatprep.subr.mxu0 0.0
  %11435 = vmatpush1.msra.mxu0 0.0
  %11436 = vmatprep.subr.mxu0 0.0
  %11437 = vmatpush1.msra.mxu0 0.0
  %11438 = vmatprep.subr.mxu0 0.0
  %11439 = vmatpush1.msra.mxu0 %v10959
  %11440 = vmatprep.subr.mxu0 0.0
  %11441 = vmatpush1.msra.mxu0 %v10958
  %11442 = vmatprep.subr.mxu0 0.0
  %11443 = vmatpush1.msra.mxu0 %v10957
  %11444 = vmatprep.subr.mxu0 0.0
  %11445 = vmatpush1.msra.mxu0 %v10956
  %11446 = vmatprep.subr.mxu0 0.0
  %11447 = vmatpush2.msra.mxu0 0.0
  %11448 = vmatprep.subr.mxu0 0.0
  %11449 = vmatpush2.msra.mxu0 0.0
  %11450 = vmatprep.subr.mxu0 0.0
  %11451 = vmatpush2.msra.mxu0 0.0
  %11452 = vmatprep.subr.mxu0 0.0
  %11453 = vmatpush2.msra.mxu0 0.0
  %11454 = vmatprep.subr.mxu0 0.0
  %11455 = vmatpush2.msra.mxu0 0.0
  %11456 = vmatprep.subr.mxu0 0.0
  %11457 = vmatpush2.msra.mxu0 0.0
  %11458 = vmatprep.subr.mxu0 0.0
  %11459 = vmatpush2.msra.mxu0 0.0
  %11460 = vmatprep.subr.mxu0 0.0
  %11461 = vmatpush2.msra.mxu0 0.0
  %11462 = vmatprep.subr.mxu0 0.0
  %11463 = vmatpush2.msra.mxu0 0.0
  %11464 = vmatprep.subr.mxu0 0.0
  %11465 = vmatpush2.msra.mxu0 0.0
  %11466 = vmatprep.subr.mxu0 0.0
  %11467 = vmatpush2.msra.mxu0 0.0
  %11468 = vmatprep.subr.mxu0 0.0
  %11469 = vmatpush2.msra.mxu0 0.0
  %11470 = vmatprep.subr.mxu0 0.0
  %11471 = vmatpush2.msra.mxu0 0.0
  %11472 = vmatprep.subr.mxu0 0.0
  %11473 = vmatpush2.msra.mxu0 0.0
  %11474 = vmatprep.subr.mxu0 0.0
  %11475 = vmatpush2.msra.mxu0 0.0
  %11476 = vmatprep.subr.mxu0 0.0
  %11477 = vmatpush2.msra.mxu0 0.0
  %11478 = vmatprep.mubr.f32.mxu0 0.0
  %11479 = vmatmul.mubr.f32.gmra.mxu0 %v10137
  %v11480 = vpop.f32.mrf.mxu0
  %v11481 = vadd.f32 0.0, %v11480
  %v11482 = vpop.f32.mrf.mxu0
  %11483 = vmatprep.mubr.f32.mxu0 0.0
  %11484 = vmatmul.mubr.f32.gmra.mxu0 %v10140
  %v11485 = vpop.f32.mrf.mxu0
  %v11486 = vadd.f32 0.0, %v11485
  %v11487 = vpop.f32.mrf.mxu0
  %11488 = vdwg.mxu0
  %11489 = vmatprep.subr.mxu0 0.0
  %11490 = vmatpush1.msra.mxu0 0.0
  %11491 = vmatprep.subr.mxu0 0.0
  %11492 = vmatpush1.msra.mxu0 0.0
  %11493 = vmatprep.subr.mxu0 0.0
  %11494 = vmatpush1.msra.mxu0 0.0
  %11495 = vmatprep.subr.mxu0 0.0
  %11496 = vmatpush1.msra.mxu0 0.0
  %11497 = vmatprep.subr.mxu0 0.0
  %11498 = vmatpush1.msra.mxu0 0.0
  %11499 = vmatprep.subr.mxu0 0.0
  %11500 = vmatpush1.msra.mxu0 0.0
  %11501 = vmatprep.subr.mxu0 0.0
  %11502 = vmatpush1.msra.mxu0 0.0
  %11503 = vmatprep.subr.mxu0 0.0
  %11504 = vmatpush1.msra.mxu0 0.0
  %11505 = vmatprep.subr.mxu0 0.0
  %11506 = vmatpush1.msra.mxu0 0.0
  %11507 = vmatprep.subr.mxu0 0.0
  %11508 = vmatpush1.msra.mxu0 0.0
  %11509 = vmatprep.subr.mxu0 0.0
  %11510 = vmatpush1.msra.mxu0 0.0
  %11511 = vmatprep.subr.mxu0 0.0
  %11512 = vmatpush1.msra.mxu0 0.0
  %11513 = vmatprep.subr.mxu0 0.0
  %11514 = vmatpush1.msra.mxu0 %v10963
  %11515 = vmatprep.subr.mxu0 0.0
  %11516 = vmatpush1.msra.mxu0 %v10962
  %11517 = vmatprep.subr.mxu0 0.0
  %11518 = vmatpush1.msra.mxu0 %v10961
  %11519 = vmatprep.subr.mxu0 0.0
  %11520 = vmatpush1.msra.mxu0 %v10960
  %11521 = vmatprep.subr.mxu0 0.0
  %11522 = vmatpush2.msra.mxu0 0.0
  %11523 = vmatprep.subr.mxu0 0.0
  %11524 = vmatpush2.msra.mxu0 0.0
  %11525 = vmatprep.subr.mxu0 0.0
  %11526 = vmatpush2.msra.mxu0 0.0
  %11527 = vmatprep.subr.mxu0 0.0
  %11528 = vmatpush2.msra.mxu0 0.0
  %11529 = vmatprep.subr.mxu0 0.0
  %11530 = vmatpush2.msra.mxu0 0.0
  %11531 = vmatprep.subr.mxu0 0.0
  %11532 = vmatpush2.msra.mxu0 0.0
  %11533 = vmatprep.subr.mxu0 0.0
  %11534 = vmatpush2.msra.mxu0 0.0
  %11535 = vmatprep.subr.mxu0 0.0
  %11536 = vmatpush2.msra.mxu0 0.0
  %11537 = vmatprep.subr.mxu0 0.0
  %11538 = vmatpush2.msra.mxu0 0.0
  %11539 = vmatprep.subr.mxu0 0.0
  %11540 = vmatpush2.msra.mxu0 0.0
  %11541 = vmatprep.subr.mxu0 0.0
  %11542 = vmatpush2.msra.mxu0 0.0
  %11543 = vmatprep.subr.mxu0 0.0
  %11544 = vmatpush2.msra.mxu0 0.0
  %11545 = vmatprep.subr.mxu0 0.0
  %11546 = vmatpush2.msra.mxu0 0.0
  %11547 = vmatprep.subr.mxu0 0.0
  %11548 = vmatpush2.msra.mxu0 0.0
  %11549 = vmatprep.subr.mxu0 0.0
  %11550 = vmatpush2.msra.mxu0 0.0
  %11551 = vmatprep.subr.mxu0 0.0
  %11552 = vmatpush2.msra.mxu0 0.0
  %11553 = vmatprep.mubr.f32.mxu0 0.0
  %11554 = vmatmul.mubr.f32.gmra.mxu0 %v10218
  %v11555 = vpop.f32.mrf.mxu0
  %v11556 = vadd.f32 0.0, %v11555
  %v11557 = vpop.f32.mrf.mxu0
  %11558 = vmatprep.mubr.f32.mxu0 0.0
  %11559 = vmatmul.mubr.f32.gmra.mxu0 %v10221
  %v11560 = vpop.f32.mrf.mxu0
  %v11561 = vadd.f32 0.0, %v11560
  %v11562 = vpop.f32.mrf.mxu0
  %11563 = vdwg.mxu0
  %v11565 = vsel %vm367, %v9723, 0
  %v11568 = vsel %vm367, %v9728, 0
  %v11571 = vsel %vm367, %v10398, 0
  %v11574 = vsel %vm367, %v10403, 0
  %11576 = vmatprep.subr.mxu0 0.0
  %11577 = vmatpush1.xpose.msra.mxu0 0.0
  %11578 = vmatprep.subr.mxu0 0.0
  %11579 = vmatpush1.xpose.msra.mxu0 0.0
  %11580 = vmatprep.subr.mxu0 0.0
  %11581 = vmatpush1.xpose.msra.mxu0 0.0
  %11582 = vmatprep.subr.mxu0 0.0
  %11583 = vmatpush1.xpose.msra.mxu0 0.0
  %11584 = vmatprep.subr.mxu0 0.0
  %11585 = vmatpush1.xpose.msra.mxu0 0.0
  %11586 = vmatprep.subr.mxu0 0.0
  %11587 = vmatpush1.xpose.msra.mxu0 0.0
  %11588 = vmatprep.subr.mxu0 0.0
  %11589 = vmatpush1.xpose.msra.mxu0 0.0
  %11590 = vmatprep.subr.mxu0 0.0
  %11591 = vmatpush1.xpose.msra.mxu0 0.0
  %11592 = vmatprep.subr.mxu0 0.0
  %11593 = vmatpush1.xpose.msra.mxu0 0.0
  %11594 = vmatprep.subr.mxu0 0.0
  %11595 = vmatpush1.xpose.msra.mxu0 0.0
  %11596 = vmatprep.subr.mxu0 0.0
  %11597 = vmatpush1.xpose.msra.mxu0 0.0
  %11598 = vmatprep.subr.mxu0 0.0
  %11599 = vmatpush1.xpose.msra.mxu0 0.0
  %11600 = vmatprep.subr.mxu0 0.0
  %11601 = vmatpush1.xpose.msra.mxu0 0.0
  %11602 = vmatprep.subr.mxu0 0.0
  %11603 = vmatpush1.xpose.msra.mxu0 0.0
  %11604 = vmatprep.subr.mxu0 0.0
  %11605 = vmatpush1.xpose.msra.mxu0 %v11574
  %11606 = vmatprep.subr.mxu0 0.0
  %11607 = vmatpush1.xpose.msra.mxu0 %v11571
  %11608 = vmatprep.subr.mxu0 0.0
  %11609 = vmatpush2.xpose.msra.mxu0 0.0
  %11610 = vmatprep.subr.mxu0 0.0
  %11611 = vmatpush2.xpose.msra.mxu0 0.0
  %11612 = vmatprep.subr.mxu0 0.0
  %11613 = vmatpush2.xpose.msra.mxu0 0.0
  %11614 = vmatprep.subr.mxu0 0.0
  %11615 = vmatpush2.xpose.msra.mxu0 0.0
  %11616 = vmatprep.subr.mxu0 0.0
  %11617 = vmatpush2.xpose.msra.mxu0 0.0
  %11618 = vmatprep.subr.mxu0 0.0
  %11619 = vmatpush2.xpose.msra.mxu0 0.0
  %11620 = vmatprep.subr.mxu0 0.0
  %11621 = vmatpush2.xpose.msra.mxu0 0.0
  %11622 = vmatprep.subr.mxu0 0.0
  %11623 = vmatpush2.xpose.msra.mxu0 0.0
  %11624 = vmatprep.subr.mxu0 0.0
  %11625 = vmatpush2.xpose.msra.mxu0 0.0
  %11626 = vmatprep.subr.mxu0 0.0
  %11627 = vmatpush2.xpose.msra.mxu0 0.0
  %11628 = vmatprep.subr.mxu0 0.0
  %11629 = vmatpush2.xpose.msra.mxu0 0.0
  %11630 = vmatprep.subr.mxu0 0.0
  %11631 = vmatpush2.xpose.msra.mxu0 0.0
  %11632 = vmatprep.subr.mxu0 0.0
  %11633 = vmatpush2.xpose.msra.mxu0 0.0
  %11634 = vmatprep.subr.mxu0 0.0
  %11635 = vmatpush2.xpose.msra.mxu0 0.0
  %11636 = vmatprep.subr.mxu0 0.0
  %11637 = vmatpush2.xpose.msra.mxu0 0.0
  %11638 = vmatprep.subr.mxu0 0.0
  %11639 = vmatpush2.xpose.msra.mxu0 0.0
  %11640 = vmatprep.mubr.f32.mxu0 0.0
  %11641 = vmatmul.mubr.f32.gmra.mxu0 %v11565
  %v11642 = vpop.f32.mrf.mxu0
  %v11643 = vadd.f32 0.0, %v11642
  %v11644 = vpop.f32.mrf.mxu0
  %11645 = vmatprep.mubr.f32.mxu0 0.0
  %11646 = vmatmul.mubr.f32.gmra.mxu0 %v11568
  %v11647 = vpop.f32.mrf.mxu0
  %v11648 = vadd.f32 0.0, %v11647
  %v11649 = vpop.f32.mrf.mxu0
  %11650 = vdwg.mxu0
  %v11652 = vsel %vm367, %v9804, 0
  %v11655 = vsel %vm367, %v9809, 0
  %v11658 = vsel %vm367, %v10473, 0
  %v11661 = vsel %vm367, %v10478, 0
  %11663 = vmatprep.subr.mxu0 0.0
  %11664 = vmatpush1.xpose.msra.mxu0 0.0
  %11665 = vmatprep.subr.mxu0 0.0
  %11666 = vmatpush1.xpose.msra.mxu0 0.0
  %11667 = vmatprep.subr.mxu0 0.0
  %11668 = vmatpush1.xpose.msra.mxu0 0.0
  %11669 = vmatprep.subr.mxu0 0.0
  %11670 = vmatpush1.xpose.msra.mxu0 0.0
  %11671 = vmatprep.subr.mxu0 0.0
  %11672 = vmatpush1.xpose.msra.mxu0 0.0
  %11673 = vmatprep.subr.mxu0 0.0
  %11674 = vmatpush1.xpose.msra.mxu0 0.0
  %11675 = vmatprep.subr.mxu0 0.0
  %11676 = vmatpush1.xpose.msra.mxu0 0.0
  %11677 = vmatprep.subr.mxu0 0.0
  %11678 = vmatpush1.xpose.msra.mxu0 0.0
  %11679 = vmatprep.subr.mxu0 0.0
  %11680 = vmatpush1.xpose.msra.mxu0 0.0
  %11681 = vmatprep.subr.mxu0 0.0
  %11682 = vmatpush1.xpose.msra.mxu0 0.0
  %11683 = vmatprep.subr.mxu0 0.0
  %11684 = vmatpush1.xpose.msra.mxu0 0.0
  %11685 = vmatprep.subr.mxu0 0.0
  %11686 = vmatpush1.xpose.msra.mxu0 0.0
  %11687 = vmatprep.subr.mxu0 0.0
  %11688 = vmatpush1.xpose.msra.mxu0 0.0
  %11689 = vmatprep.subr.mxu0 0.0
  %11690 = vmatpush1.xpose.msra.mxu0 0.0
  %11691 = vmatprep.subr.mxu0 0.0
  %11692 = vmatpush1.xpose.msra.mxu0 %v11661
  %11693 = vmatprep.subr.mxu0 0.0
  %11694 = vmatpush1.xpose.msra.mxu0 %v11658
  %11695 = vmatprep.subr.mxu0 0.0
  %11696 = vmatpush2.xpose.msra.mxu0 0.0
  %11697 = vmatprep.subr.mxu0 0.0
  %11698 = vmatpush2.xpose.msra.mxu0 0.0
  %11699 = vmatprep.subr.mxu0 0.0
  %11700 = vmatpush2.xpose.msra.mxu0 0.0
  %11701 = vmatprep.subr.mxu0 0.0
  %11702 = vmatpush2.xpose.msra.mxu0 0.0
  %11703 = vmatprep.subr.mxu0 0.0
  %11704 = vmatpush2.xpose.msra.mxu0 0.0
  %11705 = vmatprep.subr.mxu0 0.0
  %11706 = vmatpush2.xpose.msra.mxu0 0.0
  %11707 = vmatprep.subr.mxu0 0.0
  %11708 = vmatpush2.xpose.msra.mxu0 0.0
  %11709 = vmatprep.subr.mxu0 0.0
  %11710 = vmatpush2.xpose.msra.mxu0 0.0
  %11711 = vmatprep.subr.mxu0 0.0
  %11712 = vmatpush2.xpose.msra.mxu0 0.0
  %11713 = vmatprep.subr.mxu0 0.0
  %11714 = vmatpush2.xpose.msra.mxu0 0.0
  %11715 = vmatprep.subr.mxu0 0.0
  %11716 = vmatpush2.xpose.msra.mxu0 0.0
  %11717 = vmatprep.subr.mxu0 0.0
  %11718 = vmatpush2.xpose.msra.mxu0 0.0
  %11719 = vmatprep.subr.mxu0 0.0
  %11720 = vmatpush2.xpose.msra.mxu0 0.0
  %11721 = vmatprep.subr.mxu0 0.0
  %11722 = vmatpush2.xpose.msra.mxu0 0.0
  %11723 = vmatprep.subr.mxu0 0.0
  %11724 = vmatpush2.xpose.msra.mxu0 0.0
  %11725 = vmatprep.subr.mxu0 0.0
  %11726 = vmatpush2.xpose.msra.mxu0 0.0
  %11727 = vmatprep.mubr.f32.mxu0 0.0
  %11728 = vmatmul.mubr.f32.gmra.mxu0 %v11652
  %v11729 = vpop.f32.mrf.mxu0
  %v11730 = vadd.f32 0.0, %v11729
  %v11731 = vpop.f32.mrf.mxu0
  %11732 = vmatprep.mubr.f32.mxu0 0.0
  %11733 = vmatmul.mubr.f32.gmra.mxu0 %v11655
  %v11734 = vpop.f32.mrf.mxu0
  %v11735 = vadd.f32 0.0, %v11734
  %v11736 = vpop.f32.mrf.mxu0
  %11737 = vdwg.mxu0
  %v11739 = vsel %vm367, %v9885, 0
  %v11742 = vsel %vm367, %v9890, 0
  %v11745 = vsel %vm367, %v10548, 0
  %v11748 = vsel %vm367, %v10553, 0
  %11750 = vmatprep.subr.mxu0 0.0
  %11751 = vmatpush1.xpose.msra.mxu0 0.0
  %11752 = vmatprep.subr.mxu0 0.0
  %11753 = vmatpush1.xpose.msra.mxu0 0.0
  %11754 = vmatprep.subr.mxu0 0.0
  %11755 = vmatpush1.xpose.msra.mxu0 0.0
  %11756 = vmatprep.subr.mxu0 0.0
  %11757 = vmatpush1.xpose.msra.mxu0 0.0
  %11758 = vmatprep.subr.mxu0 0.0
  %11759 = vmatpush1.xpose.msra.mxu0 0.0
  %11760 = vmatprep.subr.mxu0 0.0
  %11761 = vmatpush1.xpose.msra.mxu0 0.0
  %11762 = vmatprep.subr.mxu0 0.0
  %11763 = vmatpush1.xpose.msra.mxu0 0.0
  %11764 = vmatprep.subr.mxu0 0.0
  %11765 = vmatpush1.xpose.msra.mxu0 0.0
  %11766 = vmatprep.subr.mxu0 0.0
  %11767 = vmatpush1.xpose.msra.mxu0 0.0
  %11768 = vmatprep.subr.mxu0 0.0
  %11769 = vmatpush1.xpose.msra.mxu0 0.0
  %11770 = vmatprep.subr.mxu0 0.0
  %11771 = vmatpush1.xpose.msra.mxu0 0.0
  %11772 = vmatprep.subr.mxu0 0.0
  %11773 = vmatpush1.xpose.msra.mxu0 0.0
  %11774 = vmatprep.subr.mxu0 0.0
  %11775 = vmatpush1.xpose.msra.mxu0 0.0
  %11776 = vmatprep.subr.mxu0 0.0
  %11777 = vmatpush1.xpose.msra.mxu0 0.0
  %11778 = vmatprep.subr.mxu0 0.0
  %11779 = vmatpush1.xpose.msra.mxu0 %v11748
  %11780 = vmatprep.subr.mxu0 0.0
  %11781 = vmatpush1.xpose.msra.mxu0 %v11745
  %11782 = vmatprep.subr.mxu0 0.0
  %11783 = vmatpush2.xpose.msra.mxu0 0.0
  %11784 = vmatprep.subr.mxu0 0.0
  %11785 = vmatpush2.xpose.msra.mxu0 0.0
  %11786 = vmatprep.subr.mxu0 0.0
  %11787 = vmatpush2.xpose.msra.mxu0 0.0
  %11788 = vmatprep.subr.mxu0 0.0
  %11789 = vmatpush2.xpose.msra.mxu0 0.0
  %11790 = vmatprep.subr.mxu0 0.0
  %11791 = vmatpush2.xpose.msra.mxu0 0.0
  %11792 = vmatprep.subr.mxu0 0.0
  %11793 = vmatpush2.xpose.msra.mxu0 0.0
  %11794 = vmatprep.subr.mxu0 0.0
  %11795 = vmatpush2.xpose.msra.mxu0 0.0
  %11796 = vmatprep.subr.mxu0 0.0
  %11797 = vmatpush2.xpose.msra.mxu0 0.0
  %11798 = vmatprep.subr.mxu0 0.0
  %11799 = vmatpush2.xpose.msra.mxu0 0.0
  %11800 = vmatprep.subr.mxu0 0.0
  %11801 = vmatpush2.xpose.msra.mxu0 0.0
  %11802 = vmatprep.subr.mxu0 0.0
  %11803 = vmatpush2.xpose.msra.mxu0 0.0
  %11804 = vmatprep.subr.mxu0 0.0
  %11805 = vmatpush2.xpose.msra.mxu0 0.0
  %11806 = vmatprep.subr.mxu0 0.0
  %11807 = vmatpush2.xpose.msra.mxu0 0.0
  %11808 = vmatprep.subr.mxu0 0.0
  %11809 = vmatpush2.xpose.msra.mxu0 0.0
  %11810 = vmatprep.subr.mxu0 0.0
  %11811 = vmatpush2.xpose.msra.mxu0 0.0
  %11812 = vmatprep.subr.mxu0 0.0
  %11813 = vmatpush2.xpose.msra.mxu0 0.0
  %11814 = vmatprep.mubr.f32.mxu0 0.0
  %11815 = vmatmul.mubr.f32.gmra.mxu0 %v11739
  %v11816 = vpop.f32.mrf.mxu0
  %v11817 = vadd.f32 0.0, %v11816
  %v11818 = vpop.f32.mrf.mxu0
  %11819 = vmatprep.mubr.f32.mxu0 0.0
  %11820 = vmatmul.mubr.f32.gmra.mxu0 %v11742
  %v11821 = vpop.f32.mrf.mxu0
  %v11822 = vadd.f32 0.0, %v11821
  %v11823 = vpop.f32.mrf.mxu0
  %11824 = vdwg.mxu0
  %v11826 = vsel %vm367, %v9966, 0
  %v11829 = vsel %vm367, %v9971, 0
  %v11832 = vsel %vm367, %v10623, 0
  %v11835 = vsel %vm367, %v10628, 0
  %11837 = vmatprep.subr.mxu0 0.0
  %11838 = vmatpush1.xpose.msra.mxu0 0.0
  %11839 = vmatprep.subr.mxu0 0.0
  %11840 = vmatpush1.xpose.msra.mxu0 0.0
  %11841 = vmatprep.subr.mxu0 0.0
  %11842 = vmatpush1.xpose.msra.mxu0 0.0
  %11843 = vmatprep.subr.mxu0 0.0
  %11844 = vmatpush1.xpose.msra.mxu0 0.0
  %11845 = vmatprep.subr.mxu0 0.0
  %11846 = vmatpush1.xpose.msra.mxu0 0.0
  %11847 = vmatprep.subr.mxu0 0.0
  %11848 = vmatpush1.xpose.msra.mxu0 0.0
  %11849 = vmatprep.subr.mxu0 0.0
  %11850 = vmatpush1.xpose.msra.mxu0 0.0
  %11851 = vmatprep.subr.mxu0 0.0
  %11852 = vmatpush1.xpose.msra.mxu0 0.0
  %11853 = vmatprep.subr.mxu0 0.0
  %11854 = vmatpush1.xpose.msra.mxu0 0.0
  %11855 = vmatprep.subr.mxu0 0.0
  %11856 = vmatpush1.xpose.msra.mxu0 0.0
  %11857 = vmatprep.subr.mxu0 0.0
  %11858 = vmatpush1.xpose.msra.mxu0 0.0
  %11859 = vmatprep.subr.mxu0 0.0
  %11860 = vmatpush1.xpose.msra.mxu0 0.0
  %11861 = vmatprep.subr.mxu0 0.0
  %11862 = vmatpush1.xpose.msra.mxu0 0.0
  %11863 = vmatprep.subr.mxu0 0.0
  %11864 = vmatpush1.xpose.msra.mxu0 0.0
  %11865 = vmatprep.subr.mxu0 0.0
  %11866 = vmatpush1.xpose.msra.mxu0 %v11835
  %11867 = vmatprep.subr.mxu0 0.0
  %11868 = vmatpush1.xpose.msra.mxu0 %v11832
  %11869 = vmatprep.subr.mxu0 0.0
  %11870 = vmatpush2.xpose.msra.mxu0 0.0
  %11871 = vmatprep.subr.mxu0 0.0
  %11872 = vmatpush2.xpose.msra.mxu0 0.0
  %11873 = vmatprep.subr.mxu0 0.0
  %11874 = vmatpush2.xpose.msra.mxu0 0.0
  %11875 = vmatprep.subr.mxu0 0.0
  %11876 = vmatpush2.xpose.msra.mxu0 0.0
  %11877 = vmatprep.subr.mxu0 0.0
  %11878 = vmatpush2.xpose.msra.mxu0 0.0
  %11879 = vmatprep.subr.mxu0 0.0
  %11880 = vmatpush2.xpose.msra.mxu0 0.0
  %11881 = vmatprep.subr.mxu0 0.0
  %11882 = vmatpush2.xpose.msra.mxu0 0.0
  %11883 = vmatprep.subr.mxu0 0.0
  %11884 = vmatpush2.xpose.msra.mxu0 0.0
  %11885 = vmatprep.subr.mxu0 0.0
  %11886 = vmatpush2.xpose.msra.mxu0 0.0
  %11887 = vmatprep.subr.mxu0 0.0
  %11888 = vmatpush2.xpose.msra.mxu0 0.0
  %11889 = vmatprep.subr.mxu0 0.0
  %11890 = vmatpush2.xpose.msra.mxu0 0.0
  %11891 = vmatprep.subr.mxu0 0.0
  %11892 = vmatpush2.xpose.msra.mxu0 0.0
  %11893 = vmatprep.subr.mxu0 0.0
  %11894 = vmatpush2.xpose.msra.mxu0 0.0
  %11895 = vmatprep.subr.mxu0 0.0
  %11896 = vmatpush2.xpose.msra.mxu0 0.0
  %11897 = vmatprep.subr.mxu0 0.0
  %11898 = vmatpush2.xpose.msra.mxu0 0.0
  %11899 = vmatprep.subr.mxu0 0.0
  %11900 = vmatpush2.xpose.msra.mxu0 0.0
  %11901 = vmatprep.mubr.f32.mxu0 0.0
  %11902 = vmatmul.mubr.f32.gmra.mxu0 %v11826
  %v11903 = vpop.f32.mrf.mxu0
  %v11904 = vadd.f32 0.0, %v11903
  %v11905 = vpop.f32.mrf.mxu0
  %11906 = vmatprep.mubr.f32.mxu0 0.0
  %11907 = vmatmul.mubr.f32.gmra.mxu0 %v11829
  %v11908 = vpop.f32.mrf.mxu0
  %v11909 = vadd.f32 0.0, %v11908
  %v11910 = vpop.f32.mrf.mxu0
  %11911 = vdwg.mxu0
  %v11913 = vsel %vm367, %v10047, 0
  %v11916 = vsel %vm367, %v10052, 0
  %v11919 = vsel %vm367, %v10698, 0
  %v11922 = vsel %vm367, %v10703, 0
  %11924 = vmatprep.subr.mxu0 0.0
  %11925 = vmatpush1.xpose.msra.mxu0 0.0
  %11926 = vmatprep.subr.mxu0 0.0
  %11927 = vmatpush1.xpose.msra.mxu0 0.0
  %11928 = vmatprep.subr.mxu0 0.0
  %11929 = vmatpush1.xpose.msra.mxu0 0.0
  %11930 = vmatprep.subr.mxu0 0.0
  %11931 = vmatpush1.xpose.msra.mxu0 0.0
  %11932 = vmatprep.subr.mxu0 0.0
  %11933 = vmatpush1.xpose.msra.mxu0 0.0
  %11934 = vmatprep.subr.mxu0 0.0
  %11935 = vmatpush1.xpose.msra.mxu0 0.0
  %11936 = vmatprep.subr.mxu0 0.0
  %11937 = vmatpush1.xpose.msra.mxu0 0.0
  %11938 = vmatprep.subr.mxu0 0.0
  %11939 = vmatpush1.xpose.msra.mxu0 0.0
  %11940 = vmatprep.subr.mxu0 0.0
  %11941 = vmatpush1.xpose.msra.mxu0 0.0
  %11942 = vmatprep.subr.mxu0 0.0
  %11943 = vmatpush1.xpose.msra.mxu0 0.0
  %11944 = vmatprep.subr.mxu0 0.0
  %11945 = vmatpush1.xpose.msra.mxu0 0.0
  %11946 = vmatprep.subr.mxu0 0.0
  %11947 = vmatpush1.xpose.msra.mxu0 0.0
  %11948 = vmatprep.subr.mxu0 0.0
  %11949 = vmatpush1.xpose.msra.mxu0 0.0
  %11950 = vmatprep.subr.mxu0 0.0
  %11951 = vmatpush1.xpose.msra.mxu0 0.0
  %11952 = vmatprep.subr.mxu0 0.0
  %11953 = vmatpush1.xpose.msra.mxu0 %v11922
  %11954 = vmatprep.subr.mxu0 0.0
  %11955 = vmatpush1.xpose.msra.mxu0 %v11919
  %11956 = vmatprep.subr.mxu0 0.0
  %11957 = vmatpush2.xpose.msra.mxu0 0.0
  %11958 = vmatprep.subr.mxu0 0.0
  %11959 = vmatpush2.xpose.msra.mxu0 0.0
  %11960 = vmatprep.subr.mxu0 0.0
  %11961 = vmatpush2.xpose.msra.mxu0 0.0
  %11962 = vmatprep.subr.mxu0 0.0
  %11963 = vmatpush2.xpose.msra.mxu0 0.0
  %11964 = vmatprep.subr.mxu0 0.0
  %11965 = vmatpush2.xpose.msra.mxu0 0.0
  %11966 = vmatprep.subr.mxu0 0.0
  %11967 = vmatpush2.xpose.msra.mxu0 0.0
  %11968 = vmatprep.subr.mxu0 0.0
  %11969 = vmatpush2.xpose.msra.mxu0 0.0
  %11970 = vmatprep.subr.mxu0 0.0
  %11971 = vmatpush2.xpose.msra.mxu0 0.0
  %11972 = vmatprep.subr.mxu0 0.0
  %11973 = vmatpush2.xpose.msra.mxu0 0.0
  %11974 = vmatprep.subr.mxu0 0.0
  %11975 = vmatpush2.xpose.msra.mxu0 0.0
  %11976 = vmatprep.subr.mxu0 0.0
  %11977 = vmatpush2.xpose.msra.mxu0 0.0
  %11978 = vmatprep.subr.mxu0 0.0
  %11979 = vmatpush2.xpose.msra.mxu0 0.0
  %11980 = vmatprep.subr.mxu0 0.0
  %11981 = vmatpush2.xpose.msra.mxu0 0.0
  %11982 = vmatprep.subr.mxu0 0.0
  %11983 = vmatpush2.xpose.msra.mxu0 0.0
  %11984 = vmatprep.subr.mxu0 0.0
  %11985 = vmatpush2.xpose.msra.mxu0 0.0
  %11986 = vmatprep.subr.mxu0 0.0
  %11987 = vmatpush2.xpose.msra.mxu0 0.0
  %11988 = vmatprep.mubr.f32.mxu0 0.0
  %11989 = vmatmul.mubr.f32.gmra.mxu0 %v11913
  %v11990 = vpop.f32.mrf.mxu0
  %v11991 = vadd.f32 0.0, %v11990
  %v11992 = vpop.f32.mrf.mxu0
  %11993 = vmatprep.mubr.f32.mxu0 0.0
  %11994 = vmatmul.mubr.f32.gmra.mxu0 %v11916
  %v11995 = vpop.f32.mrf.mxu0
  %v11996 = vadd.f32 0.0, %v11995
  %v11997 = vpop.f32.mrf.mxu0
  %11998 = vdwg.mxu0
  %v12000 = vsel %vm367, %v10128, 0
  %v12003 = vsel %vm367, %v10133, 0
  %v12006 = vsel %vm367, %v10773, 0
  %v12009 = vsel %vm367, %v10778, 0
  %12011 = vmatprep.subr.mxu0 0.0
  %12012 = vmatpush1.xpose.msra.mxu0 0.0
  %12013 = vmatprep.subr.mxu0 0.0
  %12014 = vmatpush1.xpose.msra.mxu0 0.0
  %12015 = vmatprep.subr.mxu0 0.0
  %12016 = vmatpush1.xpose.msra.mxu0 0.0
  %12017 = vmatprep.subr.mxu0 0.0
  %12018 = vmatpush1.xpose.msra.mxu0 0.0
  %12019 = vmatprep.subr.mxu0 0.0
  %12020 = vmatpush1.xpose.msra.mxu0 0.0
  %12021 = vmatprep.subr.mxu0 0.0
  %12022 = vmatpush1.xpose.msra.mxu0 0.0
  %12023 = vmatprep.subr.mxu0 0.0
  %12024 = vmatpush1.xpose.msra.mxu0 0.0
  %12025 = vmatprep.subr.mxu0 0.0
  %12026 = vmatpush1.xpose.msra.mxu0 0.0
  %12027 = vmatprep.subr.mxu0 0.0
  %12028 = vmatpush1.xpose.msra.mxu0 0.0
  %12029 = vmatprep.subr.mxu0 0.0
  %12030 = vmatpush1.xpose.msra.mxu0 0.0
  %12031 = vmatprep.subr.mxu0 0.0
  %12032 = vmatpush1.xpose.msra.mxu0 0.0
  %12033 = vmatprep.subr.mxu0 0.0
  %12034 = vmatpush1.xpose.msra.mxu0 0.0
  %12035 = vmatprep.subr.mxu0 0.0
  %12036 = vmatpush1.xpose.msra.mxu0 0.0
  %12037 = vmatprep.subr.mxu0 0.0
  %12038 = vmatpush1.xpose.msra.mxu0 0.0
  %12039 = vmatprep.subr.mxu0 0.0
  %12040 = vmatpush1.xpose.msra.mxu0 %v12009
  %12041 = vmatprep.subr.mxu0 0.0
  %12042 = vmatpush1.xpose.msra.mxu0 %v12006
  %12043 = vmatprep.subr.mxu0 0.0
  %12044 = vmatpush2.xpose.msra.mxu0 0.0
  %12045 = vmatprep.subr.mxu0 0.0
  %12046 = vmatpush2.xpose.msra.mxu0 0.0
  %12047 = vmatprep.subr.mxu0 0.0
  %12048 = vmatpush2.xpose.msra.mxu0 0.0
  %12049 = vmatprep.subr.mxu0 0.0
  %12050 = vmatpush2.xpose.msra.mxu0 0.0
  %12051 = vmatprep.subr.mxu0 0.0
  %12052 = vmatpush2.xpose.msra.mxu0 0.0
  %12053 = vmatprep.subr.mxu0 0.0
  %12054 = vmatpush2.xpose.msra.mxu0 0.0
  %12055 = vmatprep.subr.mxu0 0.0
  %12056 = vmatpush2.xpose.msra.mxu0 0.0
  %12057 = vmatprep.subr.mxu0 0.0
  %12058 = vmatpush2.xpose.msra.mxu0 0.0
  %12059 = vmatprep.subr.mxu0 0.0
  %12060 = vmatpush2.xpose.msra.mxu0 0.0
  %12061 = vmatprep.subr.mxu0 0.0
  %12062 = vmatpush2.xpose.msra.mxu0 0.0
  %12063 = vmatprep.subr.mxu0 0.0
  %12064 = vmatpush2.xpose.msra.mxu0 0.0
  %12065 = vmatprep.subr.mxu0 0.0
  %12066 = vmatpush2.xpose.msra.mxu0 0.0
  %12067 = vmatprep.subr.mxu0 0.0
  %12068 = vmatpush2.xpose.msra.mxu0 0.0
  %12069 = vmatprep.subr.mxu0 0.0
  %12070 = vmatpush2.xpose.msra.mxu0 0.0
  %12071 = vmatprep.subr.mxu0 0.0
  %12072 = vmatpush2.xpose.msra.mxu0 0.0
  %12073 = vmatprep.subr.mxu0 0.0
  %12074 = vmatpush2.xpose.msra.mxu0 0.0
  %12075 = vmatprep.mubr.f32.mxu0 0.0
  %12076 = vmatmul.mubr.f32.gmra.mxu0 %v12000
  %v12077 = vpop.f32.mrf.mxu0
  %v12078 = vadd.f32 0.0, %v12077
  %v12079 = vpop.f32.mrf.mxu0
  %12080 = vmatprep.mubr.f32.mxu0 0.0
  %12081 = vmatmul.mubr.f32.gmra.mxu0 %v12003
  %v12082 = vpop.f32.mrf.mxu0
  %v12083 = vadd.f32 0.0, %v12082
  %v12084 = vpop.f32.mrf.mxu0
  %12085 = vdwg.mxu0
  %v12087 = vsel %vm367, %v10209, 0
  %v12090 = vsel %vm367, %v10214, 0
  %v12093 = vsel %vm367, %v10848, 0
  %v12096 = vsel %vm367, %v10853, 0
  %12098 = vmatprep.subr.mxu0 0.0
  %12099 = vmatpush1.xpose.msra.mxu0 0.0
  %12100 = vmatprep.subr.mxu0 0.0
  %12101 = vmatpush1.xpose.msra.mxu0 0.0
  %12102 = vmatprep.subr.mxu0 0.0
  %12103 = vmatpush1.xpose.msra.mxu0 0.0
  %12104 = vmatprep.subr.mxu0 0.0
  %12105 = vmatpush1.xpose.msra.mxu0 0.0
  %12106 = vmatprep.subr.mxu0 0.0
  %12107 = vmatpush1.xpose.msra.mxu0 0.0
  %12108 = vmatprep.subr.mxu0 0.0
  %12109 = vmatpush1.xpose.msra.mxu0 0.0
  %12110 = vmatprep.subr.mxu0 0.0
  %12111 = vmatpush1.xpose.msra.mxu0 0.0
  %12112 = vmatprep.subr.mxu0 0.0
  %12113 = vmatpush1.xpose.msra.mxu0 0.0
  %12114 = vmatprep.subr.mxu0 0.0
  %12115 = vmatpush1.xpose.msra.mxu0 0.0
  %12116 = vmatprep.subr.mxu0 0.0
  %12117 = vmatpush1.xpose.msra.mxu0 0.0
  %12118 = vmatprep.subr.mxu0 0.0
  %12119 = vmatpush1.xpose.msra.mxu0 0.0
  %12120 = vmatprep.subr.mxu0 0.0
  %12121 = vmatpush1.xpose.msra.mxu0 0.0
  %12122 = vmatprep.subr.mxu0 0.0
  %12123 = vmatpush1.xpose.msra.mxu0 0.0
  %12124 = vmatprep.subr.mxu0 0.0
  %12125 = vmatpush1.xpose.msra.mxu0 0.0
  %12126 = vmatprep.subr.mxu0 0.0
  %12127 = vmatpush1.xpose.msra.mxu0 %v12096
  %12128 = vmatprep.subr.mxu0 0.0
  %12129 = vmatpush1.xpose.msra.mxu0 %v12093
  %12130 = vmatprep.subr.mxu0 0.0
  %12131 = vmatpush2.xpose.msra.mxu0 0.0
  %12132 = vmatprep.subr.mxu0 0.0
  %12133 = vmatpush2.xpose.msra.mxu0 0.0
  %12134 = vmatprep.subr.mxu0 0.0
  %12135 = vmatpush2.xpose.msra.mxu0 0.0
  %12136 = vmatprep.subr.mxu0 0.0
  %12137 = vmatpush2.xpose.msra.mxu0 0.0
  %12138 = vmatprep.subr.mxu0 0.0
  %12139 = vmatpush2.xpose.msra.mxu0 0.0
  %12140 = vmatprep.subr.mxu0 0.0
  %12141 = vmatpush2.xpose.msra.mxu0 0.0
  %12142 = vmatprep.subr.mxu0 0.0
  %12143 = vmatpush2.xpose.msra.mxu0 0.0
  %12144 = vmatprep.subr.mxu0 0.0
  %12145 = vmatpush2.xpose.msra.mxu0 0.0
  %12146 = vmatprep.subr.mxu0 0.0
  %12147 = vmatpush2.xpose.msra.mxu0 0.0
  %12148 = vmatprep.subr.mxu0 0.0
  %12149 = vmatpush2.xpose.msra.mxu0 0.0
  %12150 = vmatprep.subr.mxu0 0.0
  %12151 = vmatpush2.xpose.msra.mxu0 0.0
  %12152 = vmatprep.subr.mxu0 0.0
  %12153 = vmatpush2.xpose.msra.mxu0 0.0
  %12154 = vmatprep.subr.mxu0 0.0
  %12155 = vmatpush2.xpose.msra.mxu0 0.0
  %12156 = vmatprep.subr.mxu0 0.0
  %12157 = vmatpush2.xpose.msra.mxu0 0.0
  %12158 = vmatprep.subr.mxu0 0.0
  %12159 = vmatpush2.xpose.msra.mxu0 0.0
  %12160 = vmatprep.subr.mxu0 0.0
  %12161 = vmatpush2.xpose.msra.mxu0 0.0
  %12162 = vmatprep.mubr.f32.mxu0 0.0
  %12163 = vmatmul.mubr.f32.gmra.mxu0 %v12087
  %v12164 = vpop.f32.mrf.mxu0
  %v12165 = vadd.f32 0.0, %v12164
  %v12166 = vpop.f32.mrf.mxu0
  %12167 = vmatprep.mubr.f32.mxu0 0.0
  %12168 = vmatmul.mubr.f32.gmra.mxu0 %v12090
  %v12169 = vpop.f32.mrf.mxu0
  %v12170 = vadd.f32 0.0, %v12169
  %v12171 = vpop.f32.mrf.mxu0
  %12172 = vdwg.mxu0
  %v12174 = vsel %vm367, %v10290, 0
  %v12177 = vsel %vm367, %v10295, 0
  %v12180 = vsel %vm367, %v10923, 0
  %v12183 = vsel %vm367, %v10928, 0
  %12185 = vmatprep.subr.mxu0 0.0
  %12186 = vmatpush1.xpose.msra.mxu0 0.0
  %12187 = vmatprep.subr.mxu0 0.0
  %12188 = vmatpush1.xpose.msra.mxu0 0.0
  %12189 = vmatprep.subr.mxu0 0.0
  %12190 = vmatpush1.xpose.msra.mxu0 0.0
  %12191 = vmatprep.subr.mxu0 0.0
  %12192 = vmatpush1.xpose.msra.mxu0 0.0
  %12193 = vmatprep.subr.mxu0 0.0
  %12194 = vmatpush1.xpose.msra.mxu0 0.0
  %12195 = vmatprep.subr.mxu0 0.0
  %12196 = vmatpush1.xpose.msra.mxu0 0.0
  %12197 = vmatprep.subr.mxu0 0.0
  %12198 = vmatpush1.xpose.msra.mxu0 0.0
  %12199 = vmatprep.subr.mxu0 0.0
  %12200 = vmatpush1.xpose.msra.mxu0 0.0
  %12201 = vmatprep.subr.mxu0 0.0
  %12202 = vmatpush1.xpose.msra.mxu0 0.0
  %12203 = vmatprep.subr.mxu0 0.0
  %12204 = vmatpush1.xpose.msra.mxu0 0.0
  %12205 = vmatprep.subr.mxu0 0.0
  %12206 = vmatpush1.xpose.msra.mxu0 0.0
  %12207 = vmatprep.subr.mxu0 0.0
  %12208 = vmatpush1.xpose.msra.mxu0 0.0
  %12209 = vmatprep.subr.mxu0 0.0
  %12210 = vmatpush1.xpose.msra.mxu0 0.0
  %12211 = vmatprep.subr.mxu0 0.0
  %12212 = vmatpush1.xpose.msra.mxu0 0.0
  %12213 = vmatprep.subr.mxu0 0.0
  %12214 = vmatpush1.xpose.msra.mxu0 %v12183
  %12215 = vmatprep.subr.mxu0 0.0
  %12216 = vmatpush1.xpose.msra.mxu0 %v12180
  %12217 = vmatprep.subr.mxu0 0.0
  %12218 = vmatpush2.xpose.msra.mxu0 0.0
  %12219 = vmatprep.subr.mxu0 0.0
  %12220 = vmatpush2.xpose.msra.mxu0 0.0
  %12221 = vmatprep.subr.mxu0 0.0
  %12222 = vmatpush2.xpose.msra.mxu0 0.0
  %12223 = vmatprep.subr.mxu0 0.0
  %12224 = vmatpush2.xpose.msra.mxu0 0.0
  %12225 = vmatprep.subr.mxu0 0.0
  %12226 = vmatpush2.xpose.msra.mxu0 0.0
  %12227 = vmatprep.subr.mxu0 0.0
  %12228 = vmatpush2.xpose.msra.mxu0 0.0
  %12229 = vmatprep.subr.mxu0 0.0
  %12230 = vmatpush2.xpose.msra.mxu0 0.0
  %12231 = vmatprep.subr.mxu0 0.0
  %12232 = vmatpush2.xpose.msra.mxu0 0.0
  %12233 = vmatprep.subr.mxu0 0.0
  %12234 = vmatpush2.xpose.msra.mxu0 0.0
  %12235 = vmatprep.subr.mxu0 0.0
  %12236 = vmatpush2.xpose.msra.mxu0 0.0
  %12237 = vmatprep.subr.mxu0 0.0
  %12238 = vmatpush2.xpose.msra.mxu0 0.0
  %12239 = vmatprep.subr.mxu0 0.0
  %12240 = vmatpush2.xpose.msra.mxu0 0.0
  %12241 = vmatprep.subr.mxu0 0.0
  %12242 = vmatpush2.xpose.msra.mxu0 0.0
  %12243 = vmatprep.subr.mxu0 0.0
  %12244 = vmatpush2.xpose.msra.mxu0 0.0
  %12245 = vmatprep.subr.mxu0 0.0
  %12246 = vmatpush2.xpose.msra.mxu0 0.0
  %12247 = vmatprep.subr.mxu0 0.0
  %12248 = vmatpush2.xpose.msra.mxu0 0.0
  %12249 = vmatprep.mubr.f32.mxu0 0.0
  %12250 = vmatmul.mubr.f32.gmra.mxu0 %v12174
  %v12251 = vpop.f32.mrf.mxu0
  %v12252 = vadd.f32 0.0, %v12251
  %v12253 = vpop.f32.mrf.mxu0
  %12254 = vmatprep.mubr.f32.mxu0 0.0
  %12255 = vmatmul.mubr.f32.gmra.mxu0 %v12177
  %v12256 = vpop.f32.mrf.mxu0
  %v12257 = vadd.f32 0.0, %v12256
  %v12258 = vpop.f32.mrf.mxu0
  %12259 = vdwg.mxu0
  %v12260 = vsel %vm4652, %v11643, -inf
  %12261 = vmax.xlane.f32.xlu0 %v12260
  %v12262 = vpop.xlane.xlu0 %12261
  %v12263 = vsel %vm4656, %v11648, -inf
  %12264 = vmax.xlane.f32.xlu0 %v12263
  %v12265 = vpop.xlane.xlu0 %12264
  %v12266 = vsel %vm4652, %v11730, -inf
  %12267 = vmax.xlane.f32.xlu0 %v12266
  %v12268 = vpop.xlane.xlu0 %12267
  %v12269 = vsel %vm4656, %v11735, -inf
  %12270 = vmax.xlane.f32.xlu0 %v12269
  %v12271 = vpop.xlane.xlu0 %12270
  %v12272 = vsel %vm4652, %v11817, -inf
  %12273 = vmax.xlane.f32.xlu0 %v12272
  %v12274 = vpop.xlane.xlu0 %12273
  %v12275 = vsel %vm4656, %v11822, -inf
  %12276 = vmax.xlane.f32.xlu0 %v12275
  %v12277 = vpop.xlane.xlu0 %12276
  %v12278 = vsel %vm4652, %v11904, -inf
  %12279 = vmax.xlane.f32.xlu0 %v12278
  %v12280 = vpop.xlane.xlu0 %12279
  %v12281 = vsel %vm4656, %v11909, -inf
  %12282 = vmax.xlane.f32.xlu0 %v12281
  %v12283 = vpop.xlane.xlu0 %12282
  %v12284 = vsel %vm4652, %v11991, -inf
  %12285 = vmax.xlane.f32.xlu0 %v12284
  %v12286 = vpop.xlane.xlu0 %12285
  %v12287 = vsel %vm4656, %v11996, -inf
  %12288 = vmax.xlane.f32.xlu0 %v12287
  %v12289 = vpop.xlane.xlu0 %12288
  %v12290 = vsel %vm4652, %v12078, -inf
  %12291 = vmax.xlane.f32.xlu0 %v12290
  %v12292 = vpop.xlane.xlu0 %12291
  %v12293 = vsel %vm4656, %v12083, -inf
  %12294 = vmax.xlane.f32.xlu0 %v12293
  %v12295 = vpop.xlane.xlu0 %12294
  %v12296 = vsel %vm4652, %v12165, -inf
  %12297 = vmax.xlane.f32.xlu0 %v12296
  %v12298 = vpop.xlane.xlu0 %12297
  %v12299 = vsel %vm4656, %v12170, -inf
  %12300 = vmax.xlane.f32.xlu0 %v12299
  %v12301 = vpop.xlane.xlu0 %12300
  %v12302 = vsel %vm4652, %v12252, -inf
  %12303 = vmax.xlane.f32.xlu0 %v12302
  %v12304 = vpop.xlane.xlu0 %12303
  %v12305 = vsel %vm4656, %v12257, -inf
  %12306 = vmax.xlane.f32.xlu0 %v12305
  %v12307 = vpop.xlane.xlu0 %12306
  %v12308 = vsub.f32 %v11643, %v12262
  %v12309 = vsub.f32 %v11648, %v12265
  %v12310 = vsub.f32 %v11730, %v12268
  %v12311 = vsub.f32 %v11735, %v12271
  %v12312 = vsub.f32 %v11817, %v12274
  %v12313 = vsub.f32 %v11822, %v12277
  %v12314 = vsub.f32 %v11904, %v12280
  %v12315 = vsub.f32 %v11909, %v12283
  %v12316 = vsub.f32 %v11991, %v12286
  %v12317 = vsub.f32 %v11996, %v12289
  %v12318 = vsub.f32 %v12078, %v12292
  %v12319 = vsub.f32 %v12083, %v12295
  %v12320 = vsub.f32 %v12165, %v12298
  %v12321 = vsub.f32 %v12170, %v12301
  %v12322 = vsub.f32 %v12252, %v12304
  %v12323 = vsub.f32 %v12257, %v12307
  %v12324 = vmul.f32 %v12308, 1.442695
  %v12325 = vpow.pop %v12324
  %v12326 = vmul.f32 %v12309, 1.442695
  %v12327 = vpow.pop %v12326
  %v12328 = vmul.f32 %v12310, 1.442695
  %v12329 = vpow.pop %v12328
  %v12330 = vmul.f32 %v12311, 1.442695
  %v12331 = vpow.pop %v12330
  %v12332 = vmul.f32 %v12312, 1.442695
  %v12333 = vpow.pop %v12332
  %v12334 = vmul.f32 %v12313, 1.442695
  %v12335 = vpow.pop %v12334
  %v12336 = vmul.f32 %v12314, 1.442695
  %v12337 = vpow.pop %v12336
  %v12338 = vmul.f32 %v12315, 1.442695
  %v12339 = vpow.pop %v12338
  %v12340 = vmul.f32 %v12316, 1.442695
  %v12341 = vpow.pop %v12340
  %v12342 = vmul.f32 %v12317, 1.442695
  %v12343 = vpow.pop %v12342
  %v12344 = vmul.f32 %v12318, 1.442695
  %v12345 = vpow.pop %v12344
  %v12346 = vmul.f32 %v12319, 1.442695
  %v12347 = vpow.pop %v12346
  %v12348 = vmul.f32 %v12320, 1.442695
  %v12349 = vpow.pop %v12348
  %v12350 = vmul.f32 %v12321, 1.442695
  %v12351 = vpow.pop %v12350
  %v12352 = vmul.f32 %v12322, 1.442695
  %v12353 = vpow.pop %v12352
  %v12354 = vmul.f32 %v12323, 1.442695
  %v12355 = vpow.pop %v12354
  %v12356 = vsel %vm4652, %v12325, 0.0
  %12357 = vadd.xlane.f32.xlu0 %v12356
  %v12358 = vpop.xlane.xlu0 %12357
  %v12359 = vsel %vm4656, %v12327, 0.0
  %12360 = vadd.xlane.f32.xlu0 %v12359
  %v12361 = vpop.xlane.xlu0 %12360
  %v12362 = vsel %vm4652, %v12329, 0.0
  %12363 = vadd.xlane.f32.xlu0 %v12362
  %v12364 = vpop.xlane.xlu0 %12363
  %v12365 = vsel %vm4656, %v12331, 0.0
  %12366 = vadd.xlane.f32.xlu0 %v12365
  %v12367 = vpop.xlane.xlu0 %12366
  %v12368 = vsel %vm4652, %v12333, 0.0
  %12369 = vadd.xlane.f32.xlu0 %v12368
  %v12370 = vpop.xlane.xlu0 %12369
  %v12371 = vsel %vm4656, %v12335, 0.0
  %12372 = vadd.xlane.f32.xlu0 %v12371
  %v12373 = vpop.xlane.xlu0 %12372
  %v12374 = vsel %vm4652, %v12337, 0.0
  %12375 = vadd.xlane.f32.xlu0 %v12374
  %v12376 = vpop.xlane.xlu0 %12375
  %v12377 = vsel %vm4656, %v12339, 0.0
  %12378 = vadd.xlane.f32.xlu0 %v12377
  %v12379 = vpop.xlane.xlu0 %12378
  %v12380 = vsel %vm4652, %v12341, 0.0
  %12381 = vadd.xlane.f32.xlu0 %v12380
  %v12382 = vpop.xlane.xlu0 %12381
  %v12383 = vsel %vm4656, %v12343, 0.0
  %12384 = vadd.xlane.f32.xlu0 %v12383
  %v12385 = vpop.xlane.xlu0 %12384
  %v12386 = vsel %vm4652, %v12345, 0.0
  %12387 = vadd.xlane.f32.xlu0 %v12386
  %v12388 = vpop.xlane.xlu0 %12387
  %v12389 = vsel %vm4656, %v12347, 0.0
  %12390 = vadd.xlane.f32.xlu0 %v12389
  %v12391 = vpop.xlane.xlu0 %12390
  %v12392 = vsel %vm4652, %v12349, 0.0
  %12393 = vadd.xlane.f32.xlu0 %v12392
  %v12394 = vpop.xlane.xlu0 %12393
  %v12395 = vsel %vm4656, %v12351, 0.0
  %12396 = vadd.xlane.f32.xlu0 %v12395
  %v12397 = vpop.xlane.xlu0 %12396
  %v12398 = vsel %vm4652, %v12353, 0.0
  %12399 = vadd.xlane.f32.xlu0 %v12398
  %v12400 = vpop.xlane.xlu0 %12399
  %v12401 = vsel %vm4656, %v12355, 0.0
  %12402 = vadd.xlane.f32.xlu0 %v12401
  %v12403 = vpop.xlane.xlu0 %12402
  %v12404 = vrcp.pop %v12358
  %v12405 = vrcp.pop %v12361
  %v12406 = vrcp.pop %v12364
  %v12407 = vrcp.pop %v12367
  %v12408 = vrcp.pop %v12370
  %v12409 = vrcp.pop %v12373
  %v12410 = vrcp.pop %v12376
  %v12411 = vrcp.pop %v12379
  %v12412 = vrcp.pop %v12382
  %v12413 = vrcp.pop %v12385
  %v12414 = vrcp.pop %v12388
  %v12415 = vrcp.pop %v12391
  %v12416 = vrcp.pop %v12394
  %v12417 = vrcp.pop %v12397
  %v12418 = vrcp.pop %v12400
  %v12419 = vrcp.pop %v12403
  %v12420 = vmul.f32 %v12325, %v12404
  %v12421 = vmul.f32 %v12327, %v12405
  %v12422 = vmul.f32 %v12329, %v12406
  %v12423 = vmul.f32 %v12331, %v12407
  %v12424 = vmul.f32 %v12333, %v12408
  %v12425 = vmul.f32 %v12335, %v12409
  %v12426 = vmul.f32 %v12337, %v12410
  %v12427 = vmul.f32 %v12339, %v12411
  %v12428 = vmul.f32 %v12341, %v12412
  %v12429 = vmul.f32 %v12343, %v12413
  %v12430 = vmul.f32 %v12345, %v12414
  %v12431 = vmul.f32 %v12347, %v12415
  %v12432 = vmul.f32 %v12349, %v12416
  %v12433 = vmul.f32 %v12351, %v12417
  %v12434 = vmul.f32 %v12353, %v12418
  %v12435 = vmul.f32 %v12355, %v12419
  %v12437 = vsel %vm4652, %v12420, 0
  %v12440 = vsel %vm4652, %v12421, 0
  %v12443 = vsel %vm1272, %v11036, 0
  %12445 = vmatprep.subr.mxu0 0.0
  %12446 = vmatpush1.msra.mxu0 0.0
  %12447 = vmatprep.subr.mxu0 0.0
  %12448 = vmatpush1.msra.mxu0 0.0
  %12449 = vmatprep.subr.mxu0 0.0
  %12450 = vmatpush1.msra.mxu0 0.0
  %12451 = vmatprep.subr.mxu0 0.0
  %12452 = vmatpush1.msra.mxu0 0.0
  %12453 = vmatprep.subr.mxu0 0.0
  %12454 = vmatpush1.msra.mxu0 0.0
  %12455 = vmatprep.subr.mxu0 0.0
  %12456 = vmatpush1.msra.mxu0 0.0
  %12457 = vmatprep.subr.mxu0 0.0
  %12458 = vmatpush1.msra.mxu0 0.0
  %12459 = vmatprep.subr.mxu0 0.0
  %12460 = vmatpush1.msra.mxu0 0.0
  %12461 = vmatprep.subr.mxu0 0.0
  %12462 = vmatpush1.msra.mxu0 0.0
  %12463 = vmatprep.subr.mxu0 0.0
  %12464 = vmatpush1.msra.mxu0 0.0
  %12465 = vmatprep.subr.mxu0 0.0
  %12466 = vmatpush1.msra.mxu0 0.0
  %12467 = vmatprep.subr.mxu0 0.0
  %12468 = vmatpush1.msra.mxu0 0.0
  %12469 = vmatprep.subr.mxu0 0.0
  %12470 = vmatpush1.msra.mxu0 0.0
  %12471 = vmatprep.subr.mxu0 0.0
  %12472 = vmatpush1.msra.mxu0 0.0
  %12473 = vmatprep.subr.mxu0 0.0
  %12474 = vmatpush1.msra.mxu0 %v12443
  %12475 = vmatprep.subr.mxu0 0.0
  %12476 = vmatpush1.msra.mxu0 %v11031
  %12477 = vmatprep.subr.mxu0 0.0
  %12478 = vmatpush2.msra.mxu0 0.0
  %12479 = vmatprep.subr.mxu0 0.0
  %12480 = vmatpush2.msra.mxu0 0.0
  %12481 = vmatprep.subr.mxu0 0.0
  %12482 = vmatpush2.msra.mxu0 0.0
  %12483 = vmatprep.subr.mxu0 0.0
  %12484 = vmatpush2.msra.mxu0 0.0
  %12485 = vmatprep.subr.mxu0 0.0
  %12486 = vmatpush2.msra.mxu0 0.0
  %12487 = vmatprep.subr.mxu0 0.0
  %12488 = vmatpush2.msra.mxu0 0.0
  %12489 = vmatprep.subr.mxu0 0.0
  %12490 = vmatpush2.msra.mxu0 0.0
  %12491 = vmatprep.subr.mxu0 0.0
  %12492 = vmatpush2.msra.mxu0 0.0
  %12493 = vmatprep.subr.mxu0 0.0
  %12494 = vmatpush2.msra.mxu0 0.0
  %12495 = vmatprep.subr.mxu0 0.0
  %12496 = vmatpush2.msra.mxu0 0.0
  %12497 = vmatprep.subr.mxu0 0.0
  %12498 = vmatpush2.msra.mxu0 0.0
  %12499 = vmatprep.subr.mxu0 0.0
  %12500 = vmatpush2.msra.mxu0 0.0
  %12501 = vmatprep.subr.mxu0 0.0
  %12502 = vmatpush2.msra.mxu0 0.0
  %12503 = vmatprep.subr.mxu0 0.0
  %12504 = vmatpush2.msra.mxu0 0.0
  %12505 = vmatprep.subr.mxu0 0.0
  %12506 = vmatpush2.msra.mxu0 0.0
  %12507 = vmatprep.subr.mxu0 0.0
  %12508 = vmatpush2.msra.mxu0 0.0
  %12509 = vmatprep.mubr.f32.mxu0 0.0
  %12510 = vmatmul.mubr.f32.gmra.mxu0 %v12437
  %v12511 = vpop.f32.mrf.mxu0
  %v12512 = vadd.f32 0.0, %v12511
  %v12513 = vpop.f32.mrf.mxu0
  %12514 = vmatprep.mubr.f32.mxu0 0.0
  %12515 = vmatmul.mubr.f32.gmra.mxu0 %v12440
  %v12516 = vpop.f32.mrf.mxu0
  %v12517 = vadd.f32 0.0, %v12516
  %v12518 = vpop.f32.mrf.mxu0
  %12519 = vdwg.mxu0
  %v12521 = vsel %vm4652, %v12422, 0
  %v12524 = vsel %vm4652, %v12423, 0
  %v12527 = vsel %vm1272, %v11111, 0
  %12529 = vmatprep.subr.mxu0 0.0
  %12530 = vmatpush1.msra.mxu0 0.0
  %12531 = vmatprep.subr.mxu0 0.0
  %12532 = vmatpush1.msra.mxu0 0.0
  %12533 = vmatprep.subr.mxu0 0.0
  %12534 = vmatpush1.msra.mxu0 0.0
  %12535 = vmatprep.subr.mxu0 0.0
  %12536 = vmatpush1.msra.mxu0 0.0
  %12537 = vmatprep.subr.mxu0 0.0
  %12538 = vmatpush1.msra.mxu0 0.0
  %12539 = vmatprep.subr.mxu0 0.0
  %12540 = vmatpush1.msra.mxu0 0.0
  %12541 = vmatprep.subr.mxu0 0.0
  %12542 = vmatpush1.msra.mxu0 0.0
  %12543 = vmatprep.subr.mxu0 0.0
  %12544 = vmatpush1.msra.mxu0 0.0
  %12545 = vmatprep.subr.mxu0 0.0
  %12546 = vmatpush1.msra.mxu0 0.0
  %12547 = vmatprep.subr.mxu0 0.0
  %12548 = vmatpush1.msra.mxu0 0.0
  %12549 = vmatprep.subr.mxu0 0.0
  %12550 = vmatpush1.msra.mxu0 0.0
  %12551 = vmatprep.subr.mxu0 0.0
  %12552 = vmatpush1.msra.mxu0 0.0
  %12553 = vmatprep.subr.mxu0 0.0
  %12554 = vmatpush1.msra.mxu0 0.0
  %12555 = vmatprep.subr.mxu0 0.0
  %12556 = vmatpush1.msra.mxu0 0.0
  %12557 = vmatprep.subr.mxu0 0.0
  %12558 = vmatpush1.msra.mxu0 %v12527
  %12559 = vmatprep.subr.mxu0 0.0
  %12560 = vmatpush1.msra.mxu0 %v11106
  %12561 = vmatprep.subr.mxu0 0.0
  %12562 = vmatpush2.msra.mxu0 0.0
  %12563 = vmatprep.subr.mxu0 0.0
  %12564 = vmatpush2.msra.mxu0 0.0
  %12565 = vmatprep.subr.mxu0 0.0
  %12566 = vmatpush2.msra.mxu0 0.0
  %12567 = vmatprep.subr.mxu0 0.0
  %12568 = vmatpush2.msra.mxu0 0.0
  %12569 = vmatprep.subr.mxu0 0.0
  %12570 = vmatpush2.msra.mxu0 0.0
  %12571 = vmatprep.subr.mxu0 0.0
  %12572 = vmatpush2.msra.mxu0 0.0
  %12573 = vmatprep.subr.mxu0 0.0
  %12574 = vmatpush2.msra.mxu0 0.0
  %12575 = vmatprep.subr.mxu0 0.0
  %12576 = vmatpush2.msra.mxu0 0.0
  %12577 = vmatprep.subr.mxu0 0.0
  %12578 = vmatpush2.msra.mxu0 0.0
  %12579 = vmatprep.subr.mxu0 0.0
  %12580 = vmatpush2.msra.mxu0 0.0
  %12581 = vmatprep.subr.mxu0 0.0
  %12582 = vmatpush2.msra.mxu0 0.0
  %12583 = vmatprep.subr.mxu0 0.0
  %12584 = vmatpush2.msra.mxu0 0.0
  %12585 = vmatprep.subr.mxu0 0.0
  %12586 = vmatpush2.msra.mxu0 0.0
  %12587 = vmatprep.subr.mxu0 0.0
  %12588 = vmatpush2.msra.mxu0 0.0
  %12589 = vmatprep.subr.mxu0 0.0
  %12590 = vmatpush2.msra.mxu0 0.0
  %12591 = vmatprep.subr.mxu0 0.0
  %12592 = vmatpush2.msra.mxu0 0.0
  %12593 = vmatprep.mubr.f32.mxu0 0.0
  %12594 = vmatmul.mubr.f32.gmra.mxu0 %v12521
  %v12595 = vpop.f32.mrf.mxu0
  %v12596 = vadd.f32 0.0, %v12595
  %v12597 = vpop.f32.mrf.mxu0
  %12598 = vmatprep.mubr.f32.mxu0 0.0
  %12599 = vmatmul.mubr.f32.gmra.mxu0 %v12524
  %v12600 = vpop.f32.mrf.mxu0
  %v12601 = vadd.f32 0.0, %v12600
  %v12602 = vpop.f32.mrf.mxu0
  %12603 = vdwg.mxu0
  %v12605 = vsel %vm4652, %v12424, 0
  %v12608 = vsel %vm4652, %v12425, 0
  %v12611 = vsel %vm1272, %v11186, 0
  %12613 = vmatprep.subr.mxu0 0.0
  %12614 = vmatpush1.msra.mxu0 0.0
  %12615 = vmatprep.subr.mxu0 0.0
  %12616 = vmatpush1.msra.mxu0 0.0
  %12617 = vmatprep.subr.mxu0 0.0
  %12618 = vmatpush1.msra.mxu0 0.0
  %12619 = vmatprep.subr.mxu0 0.0
  %12620 = vmatpush1.msra.mxu0 0.0
  %12621 = vmatprep.subr.mxu0 0.0
  %12622 = vmatpush1.msra.mxu0 0.0
  %12623 = vmatprep.subr.mxu0 0.0
  %12624 = vmatpush1.msra.mxu0 0.0
  %12625 = vmatprep.subr.mxu0 0.0
  %12626 = vmatpush1.msra.mxu0 0.0
  %12627 = vmatprep.subr.mxu0 0.0
  %12628 = vmatpush1.msra.mxu0 0.0
  %12629 = vmatprep.subr.mxu0 0.0
  %12630 = vmatpush1.msra.mxu0 0.0
  %12631 = vmatprep.subr.mxu0 0.0
  %12632 = vmatpush1.msra.mxu0 0.0
  %12633 = vmatprep.subr.mxu0 0.0
  %12634 = vmatpush1.msra.mxu0 0.0
  %12635 = vmatprep.subr.mxu0 0.0
  %12636 = vmatpush1.msra.mxu0 0.0
  %12637 = vmatprep.subr.mxu0 0.0
  %12638 = vmatpush1.msra.mxu0 0.0
  %12639 = vmatprep.subr.mxu0 0.0
  %12640 = vmatpush1.msra.mxu0 0.0
  %12641 = vmatprep.subr.mxu0 0.0
  %12642 = vmatpush1.msra.mxu0 %v12611
  %12643 = vmatprep.subr.mxu0 0.0
  %12644 = vmatpush1.msra.mxu0 %v11181
  %12645 = vmatprep.subr.mxu0 0.0
  %12646 = vmatpush2.msra.mxu0 0.0
  %12647 = vmatprep.subr.mxu0 0.0
  %12648 = vmatpush2.msra.mxu0 0.0
  %12649 = vmatprep.subr.mxu0 0.0
  %12650 = vmatpush2.msra.mxu0 0.0
  %12651 = vmatprep.subr.mxu0 0.0
  %12652 = vmatpush2.msra.mxu0 0.0
  %12653 = vmatprep.subr.mxu0 0.0
  %12654 = vmatpush2.msra.mxu0 0.0
  %12655 = vmatprep.subr.mxu0 0.0
  %12656 = vmatpush2.msra.mxu0 0.0
  %12657 = vmatprep.subr.mxu0 0.0
  %12658 = vmatpush2.msra.mxu0 0.0
  %12659 = vmatprep.subr.mxu0 0.0
  %12660 = vmatpush2.msra.mxu0 0.0
  %12661 = vmatprep.subr.mxu0 0.0
  %12662 = vmatpush2.msra.mxu0 0.0
  %12663 = vmatprep.subr.mxu0 0.0
  %12664 = vmatpush2.msra.mxu0 0.0
  %12665 = vmatprep.subr.mxu0 0.0
  %12666 = vmatpush2.msra.mxu0 0.0
  %12667 = vmatprep.subr.mxu0 0.0
  %12668 = vmatpush2.msra.mxu0 0.0
  %12669 = vmatprep.subr.mxu0 0.0
  %12670 = vmatpush2.msra.mxu0 0.0
  %12671 = vmatprep.subr.mxu0 0.0
  %12672 = vmatpush2.msra.mxu0 0.0
  %12673 = vmatprep.subr.mxu0 0.0
  %12674 = vmatpush2.msra.mxu0 0.0
  %12675 = vmatprep.subr.mxu0 0.0
  %12676 = vmatpush2.msra.mxu0 0.0
  %12677 = vmatprep.mubr.f32.mxu0 0.0
  %12678 = vmatmul.mubr.f32.gmra.mxu0 %v12605
  %v12679 = vpop.f32.mrf.mxu0
  %v12680 = vadd.f32 0.0, %v12679
  %v12681 = vpop.f32.mrf.mxu0
  %12682 = vmatprep.mubr.f32.mxu0 0.0
  %12683 = vmatmul.mubr.f32.gmra.mxu0 %v12608
  %v12684 = vpop.f32.mrf.mxu0
  %v12685 = vadd.f32 0.0, %v12684
  %v12686 = vpop.f32.mrf.mxu0
  %12687 = vdwg.mxu0
  %v12689 = vsel %vm4652, %v12426, 0
  %v12692 = vsel %vm4652, %v12427, 0
  %v12695 = vsel %vm1272, %v11261, 0
  %12697 = vmatprep.subr.mxu0 0.0
  %12698 = vmatpush1.msra.mxu0 0.0
  %12699 = vmatprep.subr.mxu0 0.0
  %12700 = vmatpush1.msra.mxu0 0.0
  %12701 = vmatprep.subr.mxu0 0.0
  %12702 = vmatpush1.msra.mxu0 0.0
  %12703 = vmatprep.subr.mxu0 0.0
  %12704 = vmatpush1.msra.mxu0 0.0
  %12705 = vmatprep.subr.mxu0 0.0
  %12706 = vmatpush1.msra.mxu0 0.0
  %12707 = vmatprep.subr.mxu0 0.0
  %12708 = vmatpush1.msra.mxu0 0.0
  %12709 = vmatprep.subr.mxu0 0.0
  %12710 = vmatpush1.msra.mxu0 0.0
  %12711 = vmatprep.subr.mxu0 0.0
  %12712 = vmatpush1.msra.mxu0 0.0
  %12713 = vmatprep.subr.mxu0 0.0
  %12714 = vmatpush1.msra.mxu0 0.0
  %12715 = vmatprep.subr.mxu0 0.0
  %12716 = vmatpush1.msra.mxu0 0.0
  %12717 = vmatprep.subr.mxu0 0.0
  %12718 = vmatpush1.msra.mxu0 0.0
  %12719 = vmatprep.subr.mxu0 0.0
  %12720 = vmatpush1.msra.mxu0 0.0
  %12721 = vmatprep.subr.mxu0 0.0
  %12722 = vmatpush1.msra.mxu0 0.0
  %12723 = vmatprep.subr.mxu0 0.0
  %12724 = vmatpush1.msra.mxu0 0.0
  %12725 = vmatprep.subr.mxu0 0.0
  %12726 = vmatpush1.msra.mxu0 %v12695
  %12727 = vmatprep.subr.mxu0 0.0
  %12728 = vmatpush1.msra.mxu0 %v11256
  %12729 = vmatprep.subr.mxu0 0.0
  %12730 = vmatpush2.msra.mxu0 0.0
  %12731 = vmatprep.subr.mxu0 0.0
  %12732 = vmatpush2.msra.mxu0 0.0
  %12733 = vmatprep.subr.mxu0 0.0
  %12734 = vmatpush2.msra.mxu0 0.0
  %12735 = vmatprep.subr.mxu0 0.0
  %12736 = vmatpush2.msra.mxu0 0.0
  %12737 = vmatprep.subr.mxu0 0.0
  %12738 = vmatpush2.msra.mxu0 0.0
  %12739 = vmatprep.subr.mxu0 0.0
  %12740 = vmatpush2.msra.mxu0 0.0
  %12741 = vmatprep.subr.mxu0 0.0
  %12742 = vmatpush2.msra.mxu0 0.0
  %12743 = vmatprep.subr.mxu0 0.0
  %12744 = vmatpush2.msra.mxu0 0.0
  %12745 = vmatprep.subr.mxu0 0.0
  %12746 = vmatpush2.msra.mxu0 0.0
  %12747 = vmatprep.subr.mxu0 0.0
  %12748 = vmatpush2.msra.mxu0 0.0
  %12749 = vmatprep.subr.mxu0 0.0
  %12750 = vmatpush2.msra.mxu0 0.0
  %12751 = vmatprep.subr.mxu0 0.0
  %12752 = vmatpush2.msra.mxu0 0.0
  %12753 = vmatprep.subr.mxu0 0.0
  %12754 = vmatpush2.msra.mxu0 0.0
  %12755 = vmatprep.subr.mxu0 0.0
  %12756 = vmatpush2.msra.mxu0 0.0
  %12757 = vmatprep.subr.mxu0 0.0
  %12758 = vmatpush2.msra.mxu0 0.0
  %12759 = vmatprep.subr.mxu0 0.0
  %12760 = vmatpush2.msra.mxu0 0.0
  %12761 = vmatprep.mubr.f32.mxu0 0.0
  %12762 = vmatmul.mubr.f32.gmra.mxu0 %v12689
  %v12763 = vpop.f32.mrf.mxu0
  %v12764 = vadd.f32 0.0, %v12763
  %v12765 = vpop.f32.mrf.mxu0
  %12766 = vmatprep.mubr.f32.mxu0 0.0
  %12767 = vmatmul.mubr.f32.gmra.mxu0 %v12692
  %v12768 = vpop.f32.mrf.mxu0
  %v12769 = vadd.f32 0.0, %v12768
  %v12770 = vpop.f32.mrf.mxu0
  %12771 = vdwg.mxu0
  %v12773 = vsel %vm4652, %v12428, 0
  %v12776 = vsel %vm4652, %v12429, 0
  %v12779 = vsel %vm1272, %v11336, 0
  %12781 = vmatprep.subr.mxu0 0.0
  %12782 = vmatpush1.msra.mxu0 0.0
  %12783 = vmatprep.subr.mxu0 0.0
  %12784 = vmatpush1.msra.mxu0 0.0
  %12785 = vmatprep.subr.mxu0 0.0
  %12786 = vmatpush1.msra.mxu0 0.0
  %12787 = vmatprep.subr.mxu0 0.0
  %12788 = vmatpush1.msra.mxu0 0.0
  %12789 = vmatprep.subr.mxu0 0.0
  %12790 = vmatpush1.msra.mxu0 0.0
  %12791 = vmatprep.subr.mxu0 0.0
  %12792 = vmatpush1.msra.mxu0 0.0
  %12793 = vmatprep.subr.mxu0 0.0
  %12794 = vmatpush1.msra.mxu0 0.0
  %12795 = vmatprep.subr.mxu0 0.0
  %12796 = vmatpush1.msra.mxu0 0.0
  %12797 = vmatprep.subr.mxu0 0.0
  %12798 = vmatpush1.msra.mxu0 0.0
  %12799 = vmatprep.subr.mxu0 0.0
  %12800 = vmatpush1.msra.mxu0 0.0
  %12801 = vmatprep.subr.mxu0 0.0
  %12802 = vmatpush1.msra.mxu0 0.0
  %12803 = vmatprep.subr.mxu0 0.0
  %12804 = vmatpush1.msra.mxu0 0.0
  %12805 = vmatprep.subr.mxu0 0.0
  %12806 = vmatpush1.msra.mxu0 0.0
  %12807 = vmatprep.subr.mxu0 0.0
  %12808 = vmatpush1.msra.mxu0 0.0
  %12809 = vmatprep.subr.mxu0 0.0
  %12810 = vmatpush1.msra.mxu0 %v12779
  %12811 = vmatprep.subr.mxu0 0.0
  %12812 = vmatpush1.msra.mxu0 %v11331
  %12813 = vmatprep.subr.mxu0 0.0
  %12814 = vmatpush2.msra.mxu0 0.0
  %12815 = vmatprep.subr.mxu0 0.0
  %12816 = vmatpush2.msra.mxu0 0.0
  %12817 = vmatprep.subr.mxu0 0.0
  %12818 = vmatpush2.msra.mxu0 0.0
  %12819 = vmatprep.subr.mxu0 0.0
  %12820 = vmatpush2.msra.mxu0 0.0
  %12821 = vmatprep.subr.mxu0 0.0
  %12822 = vmatpush2.msra.mxu0 0.0
  %12823 = vmatprep.subr.mxu0 0.0
  %12824 = vmatpush2.msra.mxu0 0.0
  %12825 = vmatprep.subr.mxu0 0.0
  %12826 = vmatpush2.msra.mxu0 0.0
  %12827 = vmatprep.subr.mxu0 0.0
  %12828 = vmatpush2.msra.mxu0 0.0
  %12829 = vmatprep.subr.mxu0 0.0
  %12830 = vmatpush2.msra.mxu0 0.0
  %12831 = vmatprep.subr.mxu0 0.0
  %12832 = vmatpush2.msra.mxu0 0.0
  %12833 = vmatprep.subr.mxu0 0.0
  %12834 = vmatpush2.msra.mxu0 0.0
  %12835 = vmatprep.subr.mxu0 0.0
  %12836 = vmatpush2.msra.mxu0 0.0
  %12837 = vmatprep.subr.mxu0 0.0
  %12838 = vmatpush2.msra.mxu0 0.0
  %12839 = vmatprep.subr.mxu0 0.0
  %12840 = vmatpush2.msra.mxu0 0.0
  %12841 = vmatprep.subr.mxu0 0.0
  %12842 = vmatpush2.msra.mxu0 0.0
  %12843 = vmatprep.subr.mxu0 0.0
  %12844 = vmatpush2.msra.mxu0 0.0
  %12845 = vmatprep.mubr.f32.mxu0 0.0
  %12846 = vmatmul.mubr.f32.gmra.mxu0 %v12773
  %v12847 = vpop.f32.mrf.mxu0
  %v12848 = vadd.f32 0.0, %v12847
  %v12849 = vpop.f32.mrf.mxu0
  %12850 = vmatprep.mubr.f32.mxu0 0.0
  %12851 = vmatmul.mubr.f32.gmra.mxu0 %v12776
  %v12852 = vpop.f32.mrf.mxu0
  %v12853 = vadd.f32 0.0, %v12852
  %v12854 = vpop.f32.mrf.mxu0
  %12855 = vdwg.mxu0
  %v12857 = vsel %vm4652, %v12430, 0
  %v12860 = vsel %vm4652, %v12431, 0
  %v12863 = vsel %vm1272, %v11411, 0
  %12865 = vmatprep.subr.mxu0 0.0
  %12866 = vmatpush1.msra.mxu0 0.0
  %12867 = vmatprep.subr.mxu0 0.0
  %12868 = vmatpush1.msra.mxu0 0.0
  %12869 = vmatprep.subr.mxu0 0.0
  %12870 = vmatpush1.msra.mxu0 0.0
  %12871 = vmatprep.subr.mxu0 0.0
  %12872 = vmatpush1.msra.mxu0 0.0
  %12873 = vmatprep.subr.mxu0 0.0
  %12874 = vmatpush1.msra.mxu0 0.0
  %12875 = vmatprep.subr.mxu0 0.0
  %12876 = vmatpush1.msra.mxu0 0.0
  %12877 = vmatprep.subr.mxu0 0.0
  %12878 = vmatpush1.msra.mxu0 0.0
  %12879 = vmatprep.subr.mxu0 0.0
  %12880 = vmatpush1.msra.mxu0 0.0
  %12881 = vmatprep.subr.mxu0 0.0
  %12882 = vmatpush1.msra.mxu0 0.0
  %12883 = vmatprep.subr.mxu0 0.0
  %12884 = vmatpush1.msra.mxu0 0.0
  %12885 = vmatprep.subr.mxu0 0.0
  %12886 = vmatpush1.msra.mxu0 0.0
  %12887 = vmatprep.subr.mxu0 0.0
  %12888 = vmatpush1.msra.mxu0 0.0
  %12889 = vmatprep.subr.mxu0 0.0
  %12890 = vmatpush1.msra.mxu0 0.0
  %12891 = vmatprep.subr.mxu0 0.0
  %12892 = vmatpush1.msra.mxu0 0.0
  %12893 = vmatprep.subr.mxu0 0.0
  %12894 = vmatpush1.msra.mxu0 %v12863
  %12895 = vmatprep.subr.mxu0 0.0
  %12896 = vmatpush1.msra.mxu0 %v11406
  %12897 = vmatprep.subr.mxu0 0.0
  %12898 = vmatpush2.msra.mxu0 0.0
  %12899 = vmatprep.subr.mxu0 0.0
  %12900 = vmatpush2.msra.mxu0 0.0
  %12901 = vmatprep.subr.mxu0 0.0
  %12902 = vmatpush2.msra.mxu0 0.0
  %12903 = vmatprep.subr.mxu0 0.0
  %12904 = vmatpush2.msra.mxu0 0.0
  %12905 = vmatprep.subr.mxu0 0.0
  %12906 = vmatpush2.msra.mxu0 0.0
  %12907 = vmatprep.subr.mxu0 0.0
  %12908 = vmatpush2.msra.mxu0 0.0
  %12909 = vmatprep.subr.mxu0 0.0
  %12910 = vmatpush2.msra.mxu0 0.0
  %12911 = vmatprep.subr.mxu0 0.0
  %12912 = vmatpush2.msra.mxu0 0.0
  %12913 = vmatprep.subr.mxu0 0.0
  %12914 = vmatpush2.msra.mxu0 0.0
  %12915 = vmatprep.subr.mxu0 0.0
  %12916 = vmatpush2.msra.mxu0 0.0
  %12917 = vmatprep.subr.mxu0 0.0
  %12918 = vmatpush2.msra.mxu0 0.0
  %12919 = vmatprep.subr.mxu0 0.0
  %12920 = vmatpush2.msra.mxu0 0.0
  %12921 = vmatprep.subr.mxu0 0.0
  %12922 = vmatpush2.msra.mxu0 0.0
  %12923 = vmatprep.subr.mxu0 0.0
  %12924 = vmatpush2.msra.mxu0 0.0
  %12925 = vmatprep.subr.mxu0 0.0
  %12926 = vmatpush2.msra.mxu0 0.0
  %12927 = vmatprep.subr.mxu0 0.0
  %12928 = vmatpush2.msra.mxu0 0.0
  %12929 = vmatprep.mubr.f32.mxu0 0.0
  %12930 = vmatmul.mubr.f32.gmra.mxu0 %v12857
  %v12931 = vpop.f32.mrf.mxu0
  %v12932 = vadd.f32 0.0, %v12931
  %v12933 = vpop.f32.mrf.mxu0
  %12934 = vmatprep.mubr.f32.mxu0 0.0
  %12935 = vmatmul.mubr.f32.gmra.mxu0 %v12860
  %v12936 = vpop.f32.mrf.mxu0
  %v12937 = vadd.f32 0.0, %v12936
  %v12938 = vpop.f32.mrf.mxu0
  %12939 = vdwg.mxu0
  %v12941 = vsel %vm4652, %v12432, 0
  %v12944 = vsel %vm4652, %v12433, 0
  %v12947 = vsel %vm1272, %v11486, 0
  %12949 = vmatprep.subr.mxu0 0.0
  %12950 = vmatpush1.msra.mxu0 0.0
  %12951 = vmatprep.subr.mxu0 0.0
  %12952 = vmatpush1.msra.mxu0 0.0
  %12953 = vmatprep.subr.mxu0 0.0
  %12954 = vmatpush1.msra.mxu0 0.0
  %12955 = vmatprep.subr.mxu0 0.0
  %12956 = vmatpush1.msra.mxu0 0.0
  %12957 = vmatprep.subr.mxu0 0.0
  %12958 = vmatpush1.msra.mxu0 0.0
  %12959 = vmatprep.subr.mxu0 0.0
  %12960 = vmatpush1.msra.mxu0 0.0
  %12961 = vmatprep.subr.mxu0 0.0
  %12962 = vmatpush1.msra.mxu0 0.0
  %12963 = vmatprep.subr.mxu0 0.0
  %12964 = vmatpush1.msra.mxu0 0.0
  %12965 = vmatprep.subr.mxu0 0.0
  %12966 = vmatpush1.msra.mxu0 0.0
  %12967 = vmatprep.subr.mxu0 0.0
  %12968 = vmatpush1.msra.mxu0 0.0
  %12969 = vmatprep.subr.mxu0 0.0
  %12970 = vmatpush1.msra.mxu0 0.0
  %12971 = vmatprep.subr.mxu0 0.0
  %12972 = vmatpush1.msra.mxu0 0.0
  %12973 = vmatprep.subr.mxu0 0.0
  %12974 = vmatpush1.msra.mxu0 0.0
  %12975 = vmatprep.subr.mxu0 0.0
  %12976 = vmatpush1.msra.mxu0 0.0
  %12977 = vmatprep.subr.mxu0 0.0
  %12978 = vmatpush1.msra.mxu0 %v12947
  %12979 = vmatprep.subr.mxu0 0.0
  %12980 = vmatpush1.msra.mxu0 %v11481
  %12981 = vmatprep.subr.mxu0 0.0
  %12982 = vmatpush2.msra.mxu0 0.0
  %12983 = vmatprep.subr.mxu0 0.0
  %12984 = vmatpush2.msra.mxu0 0.0
  %12985 = vmatprep.subr.mxu0 0.0
  %12986 = vmatpush2.msra.mxu0 0.0
  %12987 = vmatprep.subr.mxu0 0.0
  %12988 = vmatpush2.msra.mxu0 0.0
  %12989 = vmatprep.subr.mxu0 0.0
  %12990 = vmatpush2.msra.mxu0 0.0
  %12991 = vmatprep.subr.mxu0 0.0
  %12992 = vmatpush2.msra.mxu0 0.0
  %12993 = vmatprep.subr.mxu0 0.0
  %12994 = vmatpush2.msra.mxu0 0.0
  %12995 = vmatprep.subr.mxu0 0.0
  %12996 = vmatpush2.msra.mxu0 0.0
  %12997 = vmatprep.subr.mxu0 0.0
  %12998 = vmatpush2.msra.mxu0 0.0
  %12999 = vmatprep.subr.mxu0 0.0
  %13000 = vmatpush2.msra.mxu0 0.0
  %13001 = vmatprep.subr.mxu0 0.0
  %13002 = vmatpush2.msra.mxu0 0.0
  %13003 = vmatprep.subr.mxu0 0.0
  %13004 = vmatpush2.msra.mxu0 0.0
  %13005 = vmatprep.subr.mxu0 0.0
  %13006 = vmatpush2.msra.mxu0 0.0
  %13007 = vmatprep.subr.mxu0 0.0
  %13008 = vmatpush2.msra.mxu0 0.0
  %13009 = vmatprep.subr.mxu0 0.0
  %13010 = vmatpush2.msra.mxu0 0.0
  %13011 = vmatprep.subr.mxu0 0.0
  %13012 = vmatpush2.msra.mxu0 0.0
  %13013 = vmatprep.mubr.f32.mxu0 0.0
  %13014 = vmatmul.mubr.f32.gmra.mxu0 %v12941
  %v13015 = vpop.f32.mrf.mxu0
  %v13016 = vadd.f32 0.0, %v13015
  %v13017 = vpop.f32.mrf.mxu0
  %13018 = vmatprep.mubr.f32.mxu0 0.0
  %13019 = vmatmul.mubr.f32.gmra.mxu0 %v12944
  %v13020 = vpop.f32.mrf.mxu0
  %v13021 = vadd.f32 0.0, %v13020
  %v13022 = vpop.f32.mrf.mxu0
  %13023 = vdwg.mxu0
  %v13025 = vsel %vm4652, %v12434, 0
  %v13028 = vsel %vm4652, %v12435, 0
  %v13031 = vsel %vm1272, %v11561, 0
  %13033 = vmatprep.subr.mxu0 0.0
  %13034 = vmatpush1.msra.mxu0 0.0
  %13035 = vmatprep.subr.mxu0 0.0
  %13036 = vmatpush1.msra.mxu0 0.0
  %13037 = vmatprep.subr.mxu0 0.0
  %13038 = vmatpush1.msra.mxu0 0.0
  %13039 = vmatprep.subr.mxu0 0.0
  %13040 = vmatpush1.msra.mxu0 0.0
  %13041 = vmatprep.subr.mxu0 0.0
  %13042 = vmatpush1.msra.mxu0 0.0
  %13043 = vmatprep.subr.mxu0 0.0
  %13044 = vmatpush1.msra.mxu0 0.0
  %13045 = vmatprep.subr.mxu0 0.0
  %13046 = vmatpush1.msra.mxu0 0.0
  %13047 = vmatprep.subr.mxu0 0.0
  %13048 = vmatpush1.msra.mxu0 0.0
  %13049 = vmatprep.subr.mxu0 0.0
  %13050 = vmatpush1.msra.mxu0 0.0
  %13051 = vmatprep.subr.mxu0 0.0
  %13052 = vmatpush1.msra.mxu0 0.0
  %13053 = vmatprep.subr.mxu0 0.0
  %13054 = vmatpush1.msra.mxu0 0.0
  %13055 = vmatprep.subr.mxu0 0.0
  %13056 = vmatpush1.msra.mxu0 0.0
  %13057 = vmatprep.subr.mxu0 0.0
  %13058 = vmatpush1.msra.mxu0 0.0
  %13059 = vmatprep.subr.mxu0 0.0
  %13060 = vmatpush1.msra.mxu0 0.0
  %13061 = vmatprep.subr.mxu0 0.0
  %13062 = vmatpush1.msra.mxu0 %v13031
  %13063 = vmatprep.subr.mxu0 0.0
  %13064 = vmatpush1.msra.mxu0 %v11556
  %13065 = vmatprep.subr.mxu0 0.0
  %13066 = vmatpush2.msra.mxu0 0.0
  %13067 = vmatprep.subr.mxu0 0.0
  %13068 = vmatpush2.msra.mxu0 0.0
  %13069 = vmatprep.subr.mxu0 0.0
  %13070 = vmatpush2.msra.mxu0 0.0
  %13071 = vmatprep.subr.mxu0 0.0
  %13072 = vmatpush2.msra.mxu0 0.0
  %13073 = vmatprep.subr.mxu0 0.0
  %13074 = vmatpush2.msra.mxu0 0.0
  %13075 = vmatprep.subr.mxu0 0.0
  %13076 = vmatpush2.msra.mxu0 0.0
  %13077 = vmatprep.subr.mxu0 0.0
  %13078 = vmatpush2.msra.mxu0 0.0
  %13079 = vmatprep.subr.mxu0 0.0
  %13080 = vmatpush2.msra.mxu0 0.0
  %13081 = vmatprep.subr.mxu0 0.0
  %13082 = vmatpush2.msra.mxu0 0.0
  %13083 = vmatprep.subr.mxu0 0.0
  %13084 = vmatpush2.msra.mxu0 0.0
  %13085 = vmatprep.subr.mxu0 0.0
  %13086 = vmatpush2.msra.mxu0 0.0
  %13087 = vmatprep.subr.mxu0 0.0
  %13088 = vmatpush2.msra.mxu0 0.0
  %13089 = vmatprep.subr.mxu0 0.0
  %13090 = vmatpush2.msra.mxu0 0.0
  %13091 = vmatprep.subr.mxu0 0.0
  %13092 = vmatpush2.msra.mxu0 0.0
  %13093 = vmatprep.subr.mxu0 0.0
  %13094 = vmatpush2.msra.mxu0 0.0
  %13095 = vmatprep.subr.mxu0 0.0
  %13096 = vmatpush2.msra.mxu0 0.0
  %13097 = vmatprep.mubr.f32.mxu0 0.0
  %13098 = vmatmul.mubr.f32.gmra.mxu0 %v13025
  %v13099 = vpop.f32.mrf.mxu0
  %v13100 = vadd.f32 0.0, %v13099
  %v13101 = vpop.f32.mrf.mxu0
  %13102 = vmatprep.mubr.f32.mxu0 0.0
  %13103 = vmatmul.mubr.f32.gmra.mxu0 %v13028
  %v13104 = vpop.f32.mrf.mxu0
  %v13105 = vadd.f32 0.0, %v13104
  %v13106 = vpop.f32.mrf.mxu0
  %13107 = vdwg.mxu0
  %v13108 = vmul.f32 %v12512, %v12512
  %v13109 = vmul.f32 %v12517, %v12517
  %v13110 = vmul.f32 %v12596, %v12596
  %v13111 = vmul.f32 %v12601, %v12601
  %v13112 = vmul.f32 %v12680, %v12680
  %v13113 = vmul.f32 %v12685, %v12685
  %v13114 = vmul.f32 %v12764, %v12764
  %v13115 = vmul.f32 %v12769, %v12769
  %v13116 = vmul.f32 %v12848, %v12848
  %v13117 = vmul.f32 %v12853, %v12853
  %v13118 = vmul.f32 %v12932, %v12932
  %v13119 = vmul.f32 %v12937, %v12937
  %v13120 = vmul.f32 %v13016, %v13016
  %v13121 = vmul.f32 %v13021, %v13021
  %v13122 = vmul.f32 %v13100, %v13100
  %v13123 = vmul.f32 %v13105, %v13105
  %v13124 = vsel %vm367, %v13108, 0.0
  %13125 = vadd.xlane.f32.xlu0 %v13124
  %v13126 = vpop.xlane.xlu0 %13125
  %v13127 = vsel %vm1950, %v13109, 0.0
  %13128 = vadd.xlane.f32.xlu0 %v13127
  %v13129 = vpop.xlane.xlu0 %13128
  %v13130 = vsel %vm367, %v13110, 0.0
  %13131 = vadd.xlane.f32.xlu0 %v13130
  %v13132 = vpop.xlane.xlu0 %13131
  %v13133 = vsel %vm1950, %v13111, 0.0
  %13134 = vadd.xlane.f32.xlu0 %v13133
  %v13135 = vpop.xlane.xlu0 %13134
  %v13136 = vsel %vm367, %v13112, 0.0
  %13137 = vadd.xlane.f32.xlu0 %v13136
  %v13138 = vpop.xlane.xlu0 %13137
  %v13139 = vsel %vm1950, %v13113, 0.0
  %13140 = vadd.xlane.f32.xlu0 %v13139
  %v13141 = vpop.xlane.xlu0 %13140
  %v13142 = vsel %vm367, %v13114, 0.0
  %13143 = vadd.xlane.f32.xlu0 %v13142
  %v13144 = vpop.xlane.xlu0 %13143
  %v13145 = vsel %vm1950, %v13115, 0.0
  %13146 = vadd.xlane.f32.xlu0 %v13145
  %v13147 = vpop.xlane.xlu0 %13146
  %v13148 = vsel %vm367, %v13116, 0.0
  %13149 = vadd.xlane.f32.xlu0 %v13148
  %v13150 = vpop.xlane.xlu0 %13149
  %v13151 = vsel %vm1950, %v13117, 0.0
  %13152 = vadd.xlane.f32.xlu0 %v13151
  %v13153 = vpop.xlane.xlu0 %13152
  %v13154 = vsel %vm367, %v13118, 0.0
  %13155 = vadd.xlane.f32.xlu0 %v13154
  %v13156 = vpop.xlane.xlu0 %13155
  %v13157 = vsel %vm1950, %v13119, 0.0
  %13158 = vadd.xlane.f32.xlu0 %v13157
  %v13159 = vpop.xlane.xlu0 %13158
  %v13160 = vsel %vm367, %v13120, 0.0
  %13161 = vadd.xlane.f32.xlu0 %v13160
  %v13162 = vpop.xlane.xlu0 %13161
  %v13163 = vsel %vm1950, %v13121, 0.0
  %13164 = vadd.xlane.f32.xlu0 %v13163
  %v13165 = vpop.xlane.xlu0 %13164
  %v13166 = vsel %vm367, %v13122, 0.0
  %13167 = vadd.xlane.f32.xlu0 %v13166
  %v13168 = vpop.xlane.xlu0 %13167
  %v13169 = vsel %vm1950, %v13123, 0.0
  %13170 = vadd.xlane.f32.xlu0 %v13169
  %v13171 = vpop.xlane.xlu0 %13170
  %v13172 = vmul.f32 %v1342, %v12512
  %v13173 = vmul.f32 %v1347, %v12517
  %v13174 = vmul.f32 %v1425, %v12596
  %v13175 = vmul.f32 %v1430, %v12601
  %v13176 = vmul.f32 %v1508, %v12680
  %v13177 = vmul.f32 %v1513, %v12685
  %v13178 = vmul.f32 %v1591, %v12764
  %v13179 = vmul.f32 %v1596, %v12769
  %v13180 = vmul.f32 %v1674, %v12848
  %v13181 = vmul.f32 %v1679, %v12853
  %v13182 = vmul.f32 %v1757, %v12932
  %v13183 = vmul.f32 %v1762, %v12937
  %v13184 = vmul.f32 %v1840, %v13016
  %v13185 = vmul.f32 %v1845, %v13021
  %v13186 = vmul.f32 %v1923, %v13100
  %v13187 = vmul.f32 %v1928, %v13105
  %v13188 = vsel %vm367, %v13172, 0.0
  %13189 = vadd.xlane.f32.xlu0 %v13188
  %v13190 = vpop.xlane.xlu0 %13189
  %v13191 = vsel %vm1950, %v13173, 0.0
  %13192 = vadd.xlane.f32.xlu0 %v13191
  %v13193 = vpop.xlane.xlu0 %13192
  %v13194 = vsel %vm367, %v13174, 0.0
  %13195 = vadd.xlane.f32.xlu0 %v13194
  %v13196 = vpop.xlane.xlu0 %13195
  %v13197 = vsel %vm1950, %v13175, 0.0
  %13198 = vadd.xlane.f32.xlu0 %v13197
  %v13199 = vpop.xlane.xlu0 %13198
  %v13200 = vsel %vm367, %v13176, 0.0
  %13201 = vadd.xlane.f32.xlu0 %v13200
  %v13202 = vpop.xlane.xlu0 %13201
  %v13203 = vsel %vm1950, %v13177, 0.0
  %13204 = vadd.xlane.f32.xlu0 %v13203
  %v13205 = vpop.xlane.xlu0 %13204
  %v13206 = vsel %vm367, %v13178, 0.0
  %13207 = vadd.xlane.f32.xlu0 %v13206
  %v13208 = vpop.xlane.xlu0 %13207
  %v13209 = vsel %vm1950, %v13179, 0.0
  %13210 = vadd.xlane.f32.xlu0 %v13209
  %v13211 = vpop.xlane.xlu0 %13210
  %v13212 = vsel %vm367, %v13180, 0.0
  %13213 = vadd.xlane.f32.xlu0 %v13212
  %v13214 = vpop.xlane.xlu0 %13213
  %v13215 = vsel %vm1950, %v13181, 0.0
  %13216 = vadd.xlane.f32.xlu0 %v13215
  %v13217 = vpop.xlane.xlu0 %13216
  %v13218 = vsel %vm367, %v13182, 0.0
  %13219 = vadd.xlane.f32.xlu0 %v13218
  %v13220 = vpop.xlane.xlu0 %13219
  %v13221 = vsel %vm1950, %v13183, 0.0
  %13222 = vadd.xlane.f32.xlu0 %v13221
  %v13223 = vpop.xlane.xlu0 %13222
  %v13224 = vsel %vm367, %v13184, 0.0
  %13225 = vadd.xlane.f32.xlu0 %v13224
  %v13226 = vpop.xlane.xlu0 %13225
  %v13227 = vsel %vm1950, %v13185, 0.0
  %13228 = vadd.xlane.f32.xlu0 %v13227
  %v13229 = vpop.xlane.xlu0 %13228
  %v13230 = vsel %vm367, %v13186, 0.0
  %13231 = vadd.xlane.f32.xlu0 %v13230
  %v13232 = vpop.xlane.xlu0 %13231
  %v13233 = vsel %vm1950, %v13187, 0.0
  %13234 = vadd.xlane.f32.xlu0 %v13233
  %v13235 = vpop.xlane.xlu0 %13234
  %v13236 = vmul.f32 %v1949, %v13126
  %v13237 = vmul.f32 %v1953, %v13129
  %v13238 = vmul.f32 %v1956, %v13132
  %v13239 = vmul.f32 %v1959, %v13135
  %v13240 = vmul.f32 %v1962, %v13138
  %v13241 = vmul.f32 %v1965, %v13141
  %v13242 = vmul.f32 %v1968, %v13144
  %v13243 = vmul.f32 %v1971, %v13147
  %v13244 = vmul.f32 %v1974, %v13150
  %v13245 = vmul.f32 %v1977, %v13153
  %v13246 = vmul.f32 %v1980, %v13156
  %v13247 = vmul.f32 %v1983, %v13159
  %v13248 = vmul.f32 %v1986, %v13162
  %v13249 = vmul.f32 %v1989, %v13165
  %v13250 = vmul.f32 %v1992, %v13168
  %v13251 = vmul.f32 %v1995, %v13171
  %v13252 = vmax.f32 %v13236, 1e-16
  %v13253 = vmax.f32 %v13237, 1e-16
  %v13254 = vmax.f32 %v13238, 1e-16
  %v13255 = vmax.f32 %v13239, 1e-16
  %v13256 = vmax.f32 %v13240, 1e-16
  %v13257 = vmax.f32 %v13241, 1e-16
  %v13258 = vmax.f32 %v13242, 1e-16
  %v13259 = vmax.f32 %v13243, 1e-16
  %v13260 = vmax.f32 %v13244, 1e-16
  %v13261 = vmax.f32 %v13245, 1e-16
  %v13262 = vmax.f32 %v13246, 1e-16
  %v13263 = vmax.f32 %v13247, 1e-16
  %v13264 = vmax.f32 %v13248, 1e-16
  %v13265 = vmax.f32 %v13249, 1e-16
  %v13266 = vmax.f32 %v13250, 1e-16
  %v13267 = vmax.f32 %v13251, 1e-16
  %v13268 = vrsqrt.pop %v13252
  %v13269 = vrsqrt.pop %v13253
  %v13270 = vrsqrt.pop %v13254
  %v13271 = vrsqrt.pop %v13255
  %v13272 = vrsqrt.pop %v13256
  %v13273 = vrsqrt.pop %v13257
  %v13274 = vrsqrt.pop %v13258
  %v13275 = vrsqrt.pop %v13259
  %v13276 = vrsqrt.pop %v13260
  %v13277 = vrsqrt.pop %v13261
  %v13278 = vrsqrt.pop %v13262
  %v13279 = vrsqrt.pop %v13263
  %v13280 = vrsqrt.pop %v13264
  %v13281 = vrsqrt.pop %v13265
  %v13282 = vrsqrt.pop %v13266
  %v13283 = vrsqrt.pop %v13267
  %v13284 = vmul.f32 %v13190, %v13268
  %v13285 = vmul.f32 %v13193, %v13269
  %v13286 = vmul.f32 %v13196, %v13270
  %v13287 = vmul.f32 %v13199, %v13271
  %v13288 = vmul.f32 %v13202, %v13272
  %v13289 = vmul.f32 %v13205, %v13273
  %v13290 = vmul.f32 %v13208, %v13274
  %v13291 = vmul.f32 %v13211, %v13275
  %v13292 = vmul.f32 %v13214, %v13276
  %v13293 = vmul.f32 %v13217, %v13277
  %v13294 = vmul.f32 %v13220, %v13278
  %v13295 = vmul.f32 %v13223, %v13279
  %v13296 = vmul.f32 %v13226, %v13280
  %v13297 = vmul.f32 %v13229, %v13281
  %v13298 = vmul.f32 %v13232, %v13282
  %v13299 = vmul.f32 %v13235, %v13283
  %v13316 = vlaneseq
  %v13317 = vshrl.u32 %v13316, 7
  %v13318 = vsub.s32 %v5711, %v13317
  %v13319 = vrot.slane %v13284, %v13318
  %v13320 = vlaneseq
  %v13321 = vshrl.u32 %v13320, 7
  %v13322 = vsub.s32 %v5716, %v13321
  %v13323 = vrot.slane %v13285, %v13322
  %v13324 = vsel %vm5721, %v13323, %v13319
  %v13325 = vlaneseq
  %v13326 = vshrl.u32 %v13325, 7
  %v13327 = vsub.s32 %v5711, %v13326
  %v13328 = vrot.slane %v13286, %v13327
  %v13329 = vlaneseq
  %v13330 = vshrl.u32 %v13329, 7
  %v13331 = vsub.s32 %v5716, %v13330
  %v13332 = vrot.slane %v13287, %v13331
  %v13333 = vsel %vm5721, %v13332, %v13328
  %v13334 = vlaneseq
  %v13335 = vshrl.u32 %v13334, 7
  %v13336 = vsub.s32 %v5711, %v13335
  %v13337 = vrot.slane %v13288, %v13336
  %v13338 = vlaneseq
  %v13339 = vshrl.u32 %v13338, 7
  %v13340 = vsub.s32 %v5716, %v13339
  %v13341 = vrot.slane %v13289, %v13340
  %v13342 = vsel %vm5721, %v13341, %v13337
  %v13343 = vlaneseq
  %v13344 = vshrl.u32 %v13343, 7
  %v13345 = vsub.s32 %v5711, %v13344
  %v13346 = vrot.slane %v13290, %v13345
  %v13347 = vlaneseq
  %v13348 = vshrl.u32 %v13347, 7
  %v13349 = vsub.s32 %v5716, %v13348
  %v13350 = vrot.slane %v13291, %v13349
  %v13351 = vsel %vm5721, %v13350, %v13346
  %v13352 = vlaneseq
  %v13353 = vshrl.u32 %v13352, 7
  %v13354 = vsub.s32 %v5711, %v13353
  %v13355 = vrot.slane %v13292, %v13354
  %v13356 = vlaneseq
  %v13357 = vshrl.u32 %v13356, 7
  %v13358 = vsub.s32 %v5716, %v13357
  %v13359 = vrot.slane %v13293, %v13358
  %v13360 = vsel %vm5721, %v13359, %v13355
  %v13361 = vlaneseq
  %v13362 = vshrl.u32 %v13361, 7
  %v13363 = vsub.s32 %v5711, %v13362
  %v13364 = vrot.slane %v13294, %v13363
  %v13365 = vlaneseq
  %v13366 = vshrl.u32 %v13365, 7
  %v13367 = vsub.s32 %v5716, %v13366
  %v13368 = vrot.slane %v13295, %v13367
  %v13369 = vsel %vm5721, %v13368, %v13364
  %v13370 = vlaneseq
  %v13371 = vshrl.u32 %v13370, 7
  %v13372 = vsub.s32 %v5711, %v13371
  %v13373 = vrot.slane %v13296, %v13372
  %v13374 = vlaneseq
  %v13375 = vshrl.u32 %v13374, 7
  %v13376 = vsub.s32 %v5716, %v13375
  %v13377 = vrot.slane %v13297, %v13376
  %v13378 = vsel %vm5721, %v13377, %v13373
  %v13379 = vlaneseq
  %v13380 = vshrl.u32 %v13379, 7
  %v13381 = vsub.s32 %v5711, %v13380
  %v13382 = vrot.slane %v13298, %v13381
  %v13383 = vlaneseq
  %v13384 = vshrl.u32 %v13383, 7
  %v13385 = vsub.s32 %v5716, %v13384
  %v13386 = vrot.slane %v13299, %v13385
  %v13387 = vsel %vm5721, %v13386, %v13382
  %v13388 = vsel %vm5786, %v13333, %v13324
  %v13389 = vsel %vm5788, %v13342, %v13388
  %v13390 = vsel %vm5790, %v13351, %v13389
  %v13391 = vsel %vm5792, %v13360, %v13390
  %v13392 = vsel %vm5794, %v13369, %v13391
  %v13393 = vsel %vm5796, %v13378, %v13392
  %v13394 = vsel %vm5798, %v13387, %v13393
  %s13396 = scalar_lea.vmem %s7, 16
  %13397 = vst.msk [vmem:[%s13396] sm:$0xff] %vm4652, %v13394
  // Predicated region
  $region30: #{memory_gate.1} parent=0 // pred_check
    _
  $region31: #{memory_gate.1} parent=0 // pred_check_branch
    %13399 = sbr.rel (0) target = $region33
  $region32: #{memory_gate.1} parent=0 // pred_region
    _
  $region33: #{memory_gate.1} parent=0 // pred_fallthru
    _
  // Predicated region
  $region34: #{memory_gate.1} parent=0 // pred_check
    _
  $region35: #{memory_gate.1} parent=0 // pred_check_branch
    %13401 = sbr.rel (0) target = $region37
  $region36: #{memory_gate.1} parent=0 // pred_region
    _
  $region37: #{memory_gate.1} parent=0 // pred_fallthru
    _

</llo_original>
